<compile_context>
chip_gen: v6e
topology: v6e:2x2x1
jax: 0.10.0
libtpu: 0.0.40
codegen_flags: <defaults>
</compile_context>

<pallas_src>
import jax
import jax.numpy as jnp
from jax.experimental import pallas as pl
from jax.experimental.pallas import tpu as pltpu


_TAPS = tuple((dy, dx) for dy in range(3) for dx in range(3))  # t = dy*3 + dx


# ----------------------------- Pallas kernel ------------------------------- #

def _fill_reflect_pad(p_ref, a, h, w):
    """Reflection-pad (pad=1) `a`'s two spatial axes into VMEM scratch `p_ref`.

    a     : (B, h, w[, C]) value
    p_ref : (B, h+2, w+2[, C]) VMEM scratch ref
    One interior store + 4 edge stores; no concatenates / padded temporaries.
    """
    tail = (slice(None),) * (a.ndim - 3)

    def idx(hs, ws):
        return (slice(None), hs, ws) + tail

    p_ref[idx(slice(1, h + 1), slice(1, w + 1))] = a
    # top / bottom rows reflect rows 1 and h-2
    p_ref[idx(slice(0, 1), slice(1, w + 1))] = a[idx(slice(1, 2), slice(None))]
    p_ref[idx(slice(h + 1, h + 2), slice(1, w + 1))] = (
        a[idx(slice(h - 2, h - 1), slice(None))])
    # left / right columns (corners come along for free)
    p_ref[idx(slice(None), slice(0, 1))] = p_ref[idx(slice(None), slice(2, 3))]
    p_ref[idx(slice(None), slice(w + 1, w + 2))] = (
        p_ref[idx(slice(None), slice(w - 1, w))])


def _recon_irnet_kernel(x_ref, w1_ref, b1_ref, w2_ref, b2_ref, w3_ref, b3_ref,
                        w4_ref, b4_ref, o_ref,
                        pad1_ref, pad16_ref, pad32_ref, col2_ref, col3_ref):
    """Fused ReconIRnet forward for one batch block.

    x_ref : (B, H, W)     single-channel input images
    w1_ref: (9, 16)       CIR1 weights (tap-major)            b1_ref: (1, 16)
    w2_ref: (9*16, 32)    CIR2 weights ((tap, cin)-major)     b2_ref: (1, 32)
    w3_ref: (9*32, 16)    CIR3 weights                        b3_ref: (1, 16)
    w4_ref: (9, 16)       CIR4 weights (cout=1 squeezed)      b4_ref: (1, 1)
    o_ref : (B, H, W)     output images
    scratches: reflect-pad buffers (C=1/16/32) + im2col buffers (K=144/288)
    """
    B, H, W = x_ref.shape
    M = B * H * W
    mxu_dtype = w2_ref.dtype

    # ---- CIR1: 1 -> 16, ReLU.  Cin=1 => 9 VPU broadcast-MACs (tiny). -------
    _fill_reflect_pad(pad1_ref, x_ref[...], H, W)
    w1 = w1_ref[...]                                          # (9, 16)
    acc1 = None
    for t, (dy, dx) in enumerate(_TAPS):
        tap = pad1_ref[:, dy:dy + H, dx:dx + W]               # (B, H, W)
        part = tap[:, :, :, None] * w1[t]                     # (B, H, W, 16)
        acc1 = part if acc1 is None else acc1 + part
    a = jnp.maximum(acc1 + b1_ref[...], 0.0)                  # (B, H, W, 16)

    # ---- CIR2 / CIR3: ONE (M, 9*Cin) @ (9*Cin, Cout) MXU dot per layer. ----
    def conv3x3_mxu(a_in, cin, p_ref, col_ref, w_ref, b_ref):
        _fill_reflect_pad(p_ref, a_in, H, W)
        for t, (dy, dx) in enumerate(_TAPS):
            tap = p_ref[:, dy:dy + H, dx:dx + W, :]           # (B, H, W, cin)
            col_ref[:, t * cin:(t + 1) * cin] = tap.reshape(M, cin)
        y = jnp.dot(col_ref[...].astype(mxu_dtype), w_ref[...],
                    preferred_element_type=jnp.float32)       # (M, cout)
        cout = w_ref.shape[-1]
        return (y + b_ref[...]).reshape(B, H, W, cout)

    a = jnp.maximum(conv3x3_mxu(a, 16, pad16_ref, col2_ref, w2_ref, b2_ref), 0.0)
    a = jnp.maximum(conv3x3_mxu(a, 32, pad32_ref, col3_ref, w3_ref, b3_ref), 0.0)

    # ---- CIR4: 16 -> 1, Tanh.  One weighted-tap accumulator + ONE reduce. --
    _fill_reflect_pad(pad16_ref, a, H, W)                     # reuse C=16 pad
    w4 = w4_ref[...]                                          # (9, 16)
    acc4 = None
    for t, (dy, dx) in enumerate(_TAPS):
        tap = pad16_ref[:, dy:dy + H, dx:dx + W, :]           # (B, H, W, 16)
        part = tap * w4[t]
        acc4 = part if acc4 is None else acc4 + part
    pre = jnp.sum(acc4, axis=-1) + b4_ref[...]                # (B, H, W)
    # fused Tanh + ReconIRnet's trailing `recIR / 2 + 0.5`
    o_ref[...] = jnp.tanh(pre) * 0.5 + 0.5


# ------------------------------- Wrapper ------------------------------------ #

def _vmem_limit_bytes():
    """Derive the scoped-VMEM limit from the chip (64 MiB v7x, 128 MiB v5e/v6e)."""
    cap = 128 * 1024 * 1024
    try:
        info = pltpu.get_tpu_info()
        cap = int(getattr(info, "vmem_capacity_bytes", cap) or cap)
    except Exception:
        pass
    return max(32 * 1024 * 1024, min(cap // 2, 96 * 1024 * 1024))


def _pick_batch_block(n, h, w, vmem_budget_bytes):
    """Images per grid step: amortize ~0.35us/step, fit VMEM, keep >=2 steps."""
    def scratch_bytes(blk):
        m = blk * h * w
        pads = blk * (h + 2) * (w + 2) * (1 + 16 + 32) * 4    # pad scratches
        cols = m * 9 * (16 + 32) * 4                          # im2col scratches
        io = 2 * 2 * blk * h * w * 4                          # 2x-buffered in/out
        return pads + cols + io

    blk = max(1, min(n, 8192 // max(1, h * w)))               # ~8K px per step
    if n >= 2:
        blk = max(1, min(blk, n // 2))                        # >=2 steps (megacore)
    while blk > 1 and scratch_bytes(blk) > vmem_budget_bytes // 2:
        blk -= 1
    while n % blk:
        blk -= 1
    return blk


def _pick_mxu_dtype():
    """bf16 MXU operands on v6e/v7x (native bf16 MXU); f32 elsewhere (v5e)."""
    try:
        kind = jax.devices()[0].device_kind.lower()
    except Exception:
        return jnp.float32
    if any(tag in kind for tag in ("v6", "v7", "trillium")):
        return jnp.bfloat16
    return jnp.float32


def recon_irnet_forward(fusion_nchw, params, mxu_dtype=jnp.float32):
    """ReconIRnet.forward.  Input/output are NCHW (N, 1, H, W)."""
    N, C, H, W = fusion_nchw.shape
    assert C == 1, "ReconIRnet takes a single-channel fusion image"
    assert H >= 2 and W >= 2, "ReflectionPad2d(1) requires H, W >= 2"
    x = fusion_nchw[:, 0, :, :].astype(jnp.float32)           # (N, H, W)

    (w1, b1), (w2, b2), (w3, b3), (w4, b4) = params
    # (3, 3, Cin, Cout) -> (9*Cin, Cout), (tap, cin)-major, matching im2col.
    w1m = w1.reshape(9, 16).astype(jnp.float32)               # VPU path: f32
    w2m = w2.reshape(9 * 16, 32).astype(mxu_dtype)            # MXU path
    w3m = w3.reshape(9 * 32, 16).astype(mxu_dtype)            # MXU path
    w4m = w4.reshape(9, 16).astype(jnp.float32)               # VPU path: f32
    b1m = b1.reshape(1, 16).astype(jnp.float32)
    b2m = b2.reshape(1, 32).astype(jnp.float32)
    b3m = b3.reshape(1, 16).astype(jnp.float32)
    b4m = b4.reshape(1, 1).astype(jnp.float32)

    vmem_limit = _vmem_limit_bytes()
    b_blk = _pick_batch_block(N, H, W, vmem_limit)
    m_blk = b_blk * H * W
    grid = (N // b_blk,)

    macs_per_px = 9 * (1 * 16 + 16 * 32 + 32 * 16 + 16 * 1)
    n_params = 9 * (16 + 16 * 32 + 32 * 16 + 16) + 16 + 32 + 16 + 1

    out = pl.pallas_call(
        _recon_irnet_kernel,
        out_shape=jax.ShapeDtypeStruct((N, H, W), jnp.float32),
        grid_spec=pltpu.PrefetchScalarGridSpec(
            num_scalar_prefetch=0,
            grid=grid,
            in_specs=[
                pl.BlockSpec((b_blk, H, W), lambda n: (n, 0, 0)),
                pl.BlockSpec((9, 16), lambda n: (0, 0)),
                pl.BlockSpec((1, 16), lambda n: (0, 0)),
                pl.BlockSpec((9 * 16, 32), lambda n: (0, 0)),
                pl.BlockSpec((1, 32), lambda n: (0, 0)),
                pl.BlockSpec((9 * 32, 16), lambda n: (0, 0)),
                pl.BlockSpec((1, 16), lambda n: (0, 0)),
                pl.BlockSpec((9, 16), lambda n: (0, 0)),
                pl.BlockSpec((1, 1), lambda n: (0, 0)),
            ],
            out_specs=pl.BlockSpec((b_blk, H, W), lambda n: (n, 0, 0)),
            scratch_shapes=[
                pltpu.VMEM((b_blk, H + 2, W + 2), jnp.float32),        # pad, C=1
                pltpu.VMEM((b_blk, H + 2, W + 2, 16), jnp.float32),    # pad, C=16
                pltpu.VMEM((b_blk, H + 2, W + 2, 32), jnp.float32),    # pad, C=32
                pltpu.VMEM((m_blk, 9 * 16), jnp.float32),              # im2col L2/L4
                pltpu.VMEM((m_blk, 9 * 32), jnp.float32),              # im2col L3
            ],
        ),
        compiler_params=pltpu.CompilerParams(
            dimension_semantics=("parallel",),          # megacore: split batch
            vmem_limit_bytes=vmem_limit,
        ),
        cost_estimate=pl.CostEstimate(
            flops=2 * macs_per_px * N * H * W,
            transcendentals=N * H * W,
            bytes_accessed=4 * (2 * N * H * W + n_params),
        ),
    )(x, w1m, b1m, w2m, b2m, w3m, b3m, w4m, b4m)

    return out[:, None, :, :]                                  # -> NCHW


# ------------------------------ Parameters --------------------------------- #

def init_params(key):
    """Deterministic init matching the module's layers (1->16->32->16->1).

    Mirrors PyTorch Conv2d default init: U(-1/sqrt(fan_in), 1/sqrt(fan_in)).
    Weights stored HWIO as (3, 3, Cin, Cout), biases as (Cout,).
    """
    layer_io = [(1, 16), (16, 32), (32, 16), (16, 1)]
    params = []
    for i, (cin, cout) in enumerate(layer_io):
        kw, kb = jax.random.split(jax.random.fold_in(key, i))
        bound = 1.0 / jnp.sqrt(9.0 * cin)
        w = jax.random.uniform(kw, (3, 3, cin, cout), jnp.float32, -bound, bound)
        b = jax.random.uniform(kb, (cout,), jnp.float32, -bound, bound)
        params.append((w, b))
    return params


# ------------------------- Pure-JAX reference ------------------------------- #

def _ref_layer(x, w, b, act, op_dtype):
    xp = jnp.pad(x, ((0, 0), (1, 1), (1, 1), (0, 0)), mode="reflect")
    y = jax.lax.conv_general_dilated(
        xp.astype(op_dtype), w.astype(op_dtype), window_strides=(1, 1),
        padding="VALID", dimension_numbers=("NHWC", "HWIO", "NHWC"),
        preferred_element_type=jnp.float32)
    y = y + b
    if act == "relu":
        return jnp.maximum(y, 0.0)
    return jnp.tanh(y) * 0.5 + 0.5


def recon_irnet_reference(fusion_nchw, params, mxu_dtype=jnp.float32):
    x = jnp.transpose(fusion_nchw, (0, 2, 3, 1)).astype(jnp.float32)
    acts = ["relu", "relu", "relu", "tanh_rescale"]
    # layers 2/3 use the same MXU-operand dtype as the kernel's big dots
    op_dtypes = [jnp.float32, mxu_dtype, mxu_dtype, jnp.float32]
    for (w, b), act, od in zip(params, acts, op_dtypes):
        x = _ref_layer(x, w.astype(jnp.float32), b.astype(jnp.float32), act, od)
    return jnp.transpose(x, (0, 3, 1, 2))


# --------------------------------- Main ------------------------------------ #

if __name__ == "__main__":
    key = jax.random.PRNGKey(0)
    k_in, k_par = jax.random.split(key)

    # fusion: NCHW single-channel image, small shape (2, 1, 16, 16)
    fusion = jax.random.uniform(k_in, (2, 1, 16, 16), jnp.float32)
    params = init_params(k_par)

    mxu_dtype = _pick_mxu_dtype()
    out = jax.block_until_ready(recon_irnet_forward(fusion, params, mxu_dtype))
    ref = jax.block_until_ready(recon_irnet_reference(fusion, params, mxu_dtype))

    assert out.shape == (2, 1, 16, 16), out.shape
    # bf16 MXU operands (v6e/v7x) -> compare against a matched-dtype reference
    # with a deliberately relaxed tolerance, per the performance review.
    tol = 5e-5 if mxu_dtype == jnp.float32 else 2e-3
    max_err = float(jnp.max(jnp.abs(out - ref)))
    assert max_err < tol, (max_err, str(mxu_dtype))

    print("KERNEL_OK")
</pallas_src>

<mosaic_0001>
module attributes {stable_mosaic.version = 11 : i64} {
  func.func @_recon_irnet_kernel(%arg0: i32, %arg1: memref<1x16x16xf32, #tpu.memory_space<vmem>>, %arg2: memref<9x16xf32, #tpu.memory_space<vmem>>, %arg3: memref<1x16xf32, #tpu.memory_space<vmem>>, %arg4: memref<144x32xf32, #tpu.memory_space<vmem>>, %arg5: memref<1x32xf32, #tpu.memory_space<vmem>>, %arg6: memref<288x16xf32, #tpu.memory_space<vmem>>, %arg7: memref<1x16xf32, #tpu.memory_space<vmem>>, %arg8: memref<9x16xf32, #tpu.memory_space<vmem>>, %arg9: memref<1x1xf32, #tpu.memory_space<vmem>>, %arg10: memref<1x16x16xf32, #tpu.memory_space<vmem>>, %arg11: memref<1x18x18xf32, #tpu.memory_space<vmem>>, %arg12: memref<1x18x18x16xf32, #tpu.memory_space<vmem>>, %arg13: memref<1x18x18x32xf32, #tpu.memory_space<vmem>>, %arg14: memref<256x144xf32, #tpu.memory_space<vmem>>, %arg15: memref<256x288xf32, #tpu.memory_space<vmem>>) attributes {dimension_semantics = [#tpu.dimension_semantics<parallel>], iteration_bounds = array<i64: 2>, scalar_prefetch = 0 : i64, scratch_operands = 5 : i64, tpu.core_type = #tpu.core_type<tc>, window_params = [{transform_indices = @transform_0, window_bounds = array<i64: 1, 16, 16>}, {pipeline_mode = #tpu.pipeline_mode<synchronous>, transform_indices = @transform_1, window_bounds = array<i64: 9, 16>}, {pipeline_mode = #tpu.pipeline_mode<synchronous>, transform_indices = @transform_2, window_bounds = array<i64: 1, 16>}, {pipeline_mode = #tpu.pipeline_mode<synchronous>, transform_indices = @transform_3, window_bounds = array<i64: 144, 32>}, {pipeline_mode = #tpu.pipeline_mode<synchronous>, transform_indices = @transform_4, window_bounds = array<i64: 1, 32>}, {pipeline_mode = #tpu.pipeline_mode<synchronous>, transform_indices = @transform_5, window_bounds = array<i64: 288, 16>}, {pipeline_mode = #tpu.pipeline_mode<synchronous>, transform_indices = @transform_6, window_bounds = array<i64: 1, 16>}, {pipeline_mode = #tpu.pipeline_mode<synchronous>, transform_indices = @transform_7, window_bounds = array<i64: 9, 16>}, {pipeline_mode = #tpu.pipeline_mode<synchronous>, transform_indices = @transform_8, window_bounds = array<i64: 1, 1>}, {transform_indices = @transform_9, window_bounds = array<i64: 1, 16, 16>}]} {
    %c0 = arith.constant 0 : index
    %c0_0 = arith.constant 0 : index
    %c0_1 = arith.constant 0 : index
    %0 = vector.load %arg1[%c0, %c0_0, %c0_1] : memref<1x16x16xf32, #tpu.memory_space<vmem>>, vector<1x16x16xf32>
    %c0_2 = arith.constant 0 : index
    %c1 = arith.constant 1 : index
    %c1_3 = arith.constant 1 : index
    %1 = vector.load %arg11[%c0_2, %c1, %c1_3] : memref<1x18x18xf32, #tpu.memory_space<vmem>>, vector<1x16x16xf32>
    tpu.vector_store %arg11[%c0_2, %c1, %c1_3], %0 {strides = array<i32>} : memref<1x18x18xf32, #tpu.memory_space<vmem>>, vector<1x16x16xf32>,
    %2 = vector.extract_strided_slice %0 {offsets = [0, 1, 0], sizes = [1, 1, 16], strides = [1, 1, 1]} : vector<1x16x16xf32> to vector<1x1x16xf32>
    %c0_4 = arith.constant 0 : index
    %c0_5 = arith.constant 0 : index
    %c1_6 = arith.constant 1 : index
    %3 = vector.load %arg11[%c0_4, %c0_5, %c1_6] : memref<1x18x18xf32, #tpu.memory_space<vmem>>, vector<1x1x16xf32>
    tpu.vector_store %arg11[%c0_4, %c0_5, %c1_6], %2 {strides = array<i32>} : memref<1x18x18xf32, #tpu.memory_space<vmem>>, vector<1x1x16xf32>,
    %4 = vector.extract_strided_slice %0 {offsets = [0, 14, 0], sizes = [1, 1, 16], strides = [1, 1, 1]} : vector<1x16x16xf32> to vector<1x1x16xf32>
    %c0_7 = arith.constant 0 : index
    %c17 = arith.constant 17 : index
    %c1_8 = arith.constant 1 : index
    %5 = vector.load %arg11[%c0_7, %c17, %c1_8] : memref<1x18x18xf32, #tpu.memory_space<vmem>>, vector<1x1x16xf32>
    tpu.vector_store %arg11[%c0_7, %c17, %c1_8], %4 {strides = array<i32>} : memref<1x18x18xf32, #tpu.memory_space<vmem>>, vector<1x1x16xf32>,
    %c0_9 = arith.constant 0 : index
    %c0_10 = arith.constant 0 : index
    %c2 = arith.constant 2 : index
    %6 = vector.load %arg11[%c0_9, %c0_10, %c2] : memref<1x18x18xf32, #tpu.memory_space<vmem>>, vector<1x18x1xf32>
    %c0_11 = arith.constant 0 : index
    %c0_12 = arith.constant 0 : index
    %c0_13 = arith.constant 0 : index
    %7 = vector.load %arg11[%c0_11, %c0_12, %c0_13] : memref<1x18x18xf32, #tpu.memory_space<vmem>>, vector<1x18x1xf32>
    tpu.vector_store %arg11[%c0_11, %c0_12, %c0_13], %6 {strides = array<i32>} : memref<1x18x18xf32, #tpu.memory_space<vmem>>, vector<1x18x1xf32>,
    %c0_14 = arith.constant 0 : index
    %c0_15 = arith.constant 0 : index
    %c15 = arith.constant 15 : index
    %8 = vector.load %arg11[%c0_14, %c0_15, %c15] : memref<1x18x18xf32, #tpu.memory_space<vmem>>, vector<1x18x1xf32>
    %c0_16 = arith.constant 0 : index
    %c0_17 = arith.constant 0 : index
    %c17_18 = arith.constant 17 : index
    %9 = vector.load %arg11[%c0_16, %c0_17, %c17_18] : memref<1x18x18xf32, #tpu.memory_space<vmem>>, vector<1x18x1xf32>
    tpu.vector_store %arg11[%c0_16, %c0_17, %c17_18], %8 {strides = array<i32>} : memref<1x18x18xf32, #tpu.memory_space<vmem>>, vector<1x18x1xf32>,
    %c0_19 = arith.constant 0 : index
    %c0_20 = arith.constant 0 : index
    %10 = vector.load %arg2[%c0_19, %c0_20] : memref<9x16xf32, #tpu.memory_space<vmem>>, vector<9x16xf32>
    %c0_21 = arith.constant 0 : index
    %c0_22 = arith.constant 0 : index
    %c0_23 = arith.constant 0 : index
    %11 = vector.load %arg11[%c0_21, %c0_22, %c0_23] : memref<1x18x18xf32, #tpu.memory_space<vmem>>, vector<1x16x16xf32>
    %12 = vector.shape_cast %11 : vector<1x16x16xf32> to vector<1x16x16x1xf32>
    %13 = vector.extract_strided_slice %10 {offsets = [0, 0], sizes = [1, 16], strides = [1, 1]} : vector<9x16xf32> to vector<1x16xf32>
    %14 = vector.shape_cast %13 : vector<1x16xf32> to vector<16xf32>
    %15 = vector.shape_cast %14 : vector<16xf32> to vector<1x1x1x16xf32>
    %16 = vector.broadcast %12 : vector<1x16x16x1xf32> to vector<1x16x16x16xf32>
    %17 = vector.broadcast %15 : vector<1x1x1x16xf32> to vector<1x16x16x16xf32>
    %18 = arith.mulf %16, %17 : vector<1x16x16x16xf32>
    %c0_24 = arith.constant 0 : index
    %c0_25 = arith.constant 0 : index
    %c1_26 = arith.constant 1 : index
    %19 = vector.load %arg11[%c0_24, %c0_25, %c1_26] : memref<1x18x18xf32, #tpu.memory_space<vmem>>, vector<1x16x16xf32>
    %20 = vector.shape_cast %19 : vector<1x16x16xf32> to vector<1x16x16x1xf32>
    %21 = vector.extract_strided_slice %10 {offsets = [1, 0], sizes = [1, 16], strides = [1, 1]} : vector<9x16xf32> to vector<1x16xf32>
    %22 = vector.shape_cast %21 : vector<1x16xf32> to vector<16xf32>
    %23 = vector.shape_cast %22 : vector<16xf32> to vector<1x1x1x16xf32>
    %24 = vector.broadcast %20 : vector<1x16x16x1xf32> to vector<1x16x16x16xf32>
    %25 = vector.broadcast %23 : vector<1x1x1x16xf32> to vector<1x16x16x16xf32>
    %26 = arith.mulf %24, %25 : vector<1x16x16x16xf32>
    %27 = arith.addf %18, %26 : vector<1x16x16x16xf32>
    %c0_27 = arith.constant 0 : index
    %c0_28 = arith.constant 0 : index
    %c2_29 = arith.constant 2 : index
    %28 = vector.load %arg11[%c0_27, %c0_28, %c2_29] : memref<1x18x18xf32, #tpu.memory_space<vmem>>, vector<1x16x16xf32>
    %29 = vector.shape_cast %28 : vector<1x16x16xf32> to vector<1x16x16x1xf32>
    %30 = vector.extract_strided_slice %10 {offsets = [2, 0], sizes = [1, 16], strides = [1, 1]} : vector<9x16xf32> to vector<1x16xf32>
    %31 = vector.shape_cast %30 : vector<1x16xf32> to vector<16xf32>
    %32 = vector.shape_cast %31 : vector<16xf32> to vector<1x1x1x16xf32>
    %33 = vector.broadcast %29 : vector<1x16x16x1xf32> to vector<1x16x16x16xf32>
    %34 = vector.broadcast %32 : vector<1x1x1x16xf32> to vector<1x16x16x16xf32>
    %35 = arith.mulf %33, %34 : vector<1x16x16x16xf32>
    %36 = arith.addf %27, %35 : vector<1x16x16x16xf32>
    %c0_30 = arith.constant 0 : index
    %c1_31 = arith.constant 1 : index
    %c0_32 = arith.constant 0 : index
    %37 = vector.load %arg11[%c0_30, %c1_31, %c0_32] : memref<1x18x18xf32, #tpu.memory_space<vmem>>, vector<1x16x16xf32>
    %38 = vector.shape_cast %37 : vector<1x16x16xf32> to vector<1x16x16x1xf32>
    %39 = vector.extract_strided_slice %10 {offsets = [3, 0], sizes = [1, 16], strides = [1, 1]} : vector<9x16xf32> to vector<1x16xf32>
    %40 = vector.shape_cast %39 : vector<1x16xf32> to vector<16xf32>
    %41 = vector.shape_cast %40 : vector<16xf32> to vector<1x1x1x16xf32>
    %42 = vector.broadcast %38 : vector<1x16x16x1xf32> to vector<1x16x16x16xf32>
    %43 = vector.broadcast %41 : vector<1x1x1x16xf32> to vector<1x16x16x16xf32>
    %44 = arith.mulf %42, %43 : vector<1x16x16x16xf32>
    %45 = arith.addf %36, %44 : vector<1x16x16x16xf32>
    %c0_33 = arith.constant 0 : index
    %c1_34 = arith.constant 1 : index
    %c1_35 = arith.constant 1 : index
    %46 = vector.load %arg11[%c0_33, %c1_34, %c1_35] : memref<1x18x18xf32, #tpu.memory_space<vmem>>, vector<1x16x16xf32>
    %47 = vector.shape_cast %46 : vector<1x16x16xf32> to vector<1x16x16x1xf32>
    %48 = vector.extract_strided_slice %10 {offsets = [4, 0], sizes = [1, 16], strides = [1, 1]} : vector<9x16xf32> to vector<1x16xf32>
    %49 = vector.shape_cast %48 : vector<1x16xf32> to vector<16xf32>
    %50 = vector.shape_cast %49 : vector<16xf32> to vector<1x1x1x16xf32>
    %51 = vector.broadcast %47 : vector<1x16x16x1xf32> to vector<1x16x16x16xf32>
    %52 = vector.broadcast %50 : vector<1x1x1x16xf32> to vector<1x16x16x16xf32>
    %53 = arith.mulf %51, %52 : vector<1x16x16x16xf32>
    %54 = arith.addf %45, %53 : vector<1x16x16x16xf32>
    %c0_36 = arith.constant 0 : index
    %c1_37 = arith.constant 1 : index
    %c2_38 = arith.constant 2 : index
    %55 = vector.load %arg11[%c0_36, %c1_37, %c2_38] : memref<1x18x18xf32, #tpu.memory_space<vmem>>, vector<1x16x16xf32>
    %56 = vector.shape_cast %55 : vector<1x16x16xf32> to vector<1x16x16x1xf32>
    %57 = vector.extract_strided_slice %10 {offsets = [5, 0], sizes = [1, 16], strides = [1, 1]} : vector<9x16xf32> to vector<1x16xf32>
    %58 = vector.shape_cast %57 : vector<1x16xf32> to vector<16xf32>
    %59 = vector.shape_cast %58 : vector<16xf32> to vector<1x1x1x16xf32>
    %60 = vector.broadcast %56 : vector<1x16x16x1xf32> to vector<1x16x16x16xf32>
    %61 = vector.broadcast %59 : vector<1x1x1x16xf32> to vector<1x16x16x16xf32>
    %62 = arith.mulf %60, %61 : vector<1x16x16x16xf32>
    %63 = arith.addf %54, %62 : vector<1x16x16x16xf32>
    %c0_39 = arith.constant 0 : index
    %c2_40 = arith.constant 2 : index
    %c0_41 = arith.constant 0 : index
    %64 = vector.load %arg11[%c0_39, %c2_40, %c0_41] : memref<1x18x18xf32, #tpu.memory_space<vmem>>, vector<1x16x16xf32>
    %65 = vector.shape_cast %64 : vector<1x16x16xf32> to vector<1x16x16x1xf32>
    %66 = vector.extract_strided_slice %10 {offsets = [6, 0], sizes = [1, 16], strides = [1, 1]} : vector<9x16xf32> to vector<1x16xf32>
    %67 = vector.shape_cast %66 : vector<1x16xf32> to vector<16xf32>
    %68 = vector.shape_cast %67 : vector<16xf32> to vector<1x1x1x16xf32>
    %69 = vector.broadcast %65 : vector<1x16x16x1xf32> to vector<1x16x16x16xf32>
    %70 = vector.broadcast %68 : vector<1x1x1x16xf32> to vector<1x16x16x16xf32>
    %71 = arith.mulf %69, %70 : vector<1x16x16x16xf32>
    %72 = arith.addf %63, %71 : vector<1x16x16x16xf32>
    %c0_42 = arith.constant 0 : index
    %c2_43 = arith.constant 2 : index
    %c1_44 = arith.constant 1 : index
    %73 = vector.load %arg11[%c0_42, %c2_43, %c1_44] : memref<1x18x18xf32, #tpu.memory_space<vmem>>, vector<1x16x16xf32>
    %74 = vector.shape_cast %73 : vector<1x16x16xf32> to vector<1x16x16x1xf32>
    %75 = vector.extract_strided_slice %10 {offsets = [7, 0], sizes = [1, 16], strides = [1, 1]} : vector<9x16xf32> to vector<1x16xf32>
    %76 = vector.shape_cast %75 : vector<1x16xf32> to vector<16xf32>
    %77 = vector.shape_cast %76 : vector<16xf32> to vector<1x1x1x16xf32>
    %78 = vector.broadcast %74 : vector<1x16x16x1xf32> to vector<1x16x16x16xf32>
    %79 = vector.broadcast %77 : vector<1x1x1x16xf32> to vector<1x16x16x16xf32>
    %80 = arith.mulf %78, %79 : vector<1x16x16x16xf32>
    %81 = arith.addf %72, %80 : vector<1x16x16x16xf32>
    %c0_45 = arith.constant 0 : index
    %c2_46 = arith.constant 2 : index
    %c2_47 = arith.constant 2 : index
    %82 = vector.load %arg11[%c0_45, %c2_46, %c2_47] : memref<1x18x18xf32, #tpu.memory_space<vmem>>, vector<1x16x16xf32>
    %83 = vector.shape_cast %82 : vector<1x16x16xf32> to vector<1x16x16x1xf32>
    %84 = vector.extract_strided_slice %10 {offsets = [8, 0], sizes = [1, 16], strides = [1, 1]} : vector<9x16xf32> to vector<1x16xf32>
    %85 = vector.shape_cast %84 : vector<1x16xf32> to vector<16xf32>
    %86 = vector.shape_cast %85 : vector<16xf32> to vector<1x1x1x16xf32>
    %87 = vector.broadcast %83 : vector<1x16x16x1xf32> to vector<1x16x16x16xf32>
    %88 = vector.broadcast %86 : vector<1x1x1x16xf32> to vector<1x16x16x16xf32>
    %89 = arith.mulf %87, %88 : vector<1x16x16x16xf32>
    %90 = arith.addf %81, %89 : vector<1x16x16x16xf32>
    %c0_48 = arith.constant 0 : index
    %c0_49 = arith.constant 0 : index
    %91 = vector.load %arg3[%c0_48, %c0_49] : memref<1x16xf32, #tpu.memory_space<vmem>>, vector<1x16xf32>
    %92 = vector.shape_cast %91 : vector<1x16xf32> to vector<1x1x1x16xf32>
    %93 = vector.broadcast %92 : vector<1x1x1x16xf32> to vector<1x16x16x16xf32>
    %94 = arith.addf %90, %93 : vector<1x16x16x16xf32>
    %cst = arith.constant 0.000000e+00 : f32
    %95 = vector.broadcast %cst : f32 to vector<1x16x16x16xf32>
    %96 = arith.maximumf %94, %95 : vector<1x16x16x16xf32>
    %c0_50 = arith.constant 0 : index
    %c1_51 = arith.constant 1 : index
    %c1_52 = arith.constant 1 : index
    %c0_53 = arith.constant 0 : index
    %97 = vector.load %arg12[%c0_50, %c1_51, %c1_52, %c0_53] : memref<1x18x18x16xf32, #tpu.memory_space<vmem>>, vector<1x16x16x16xf32>
    tpu.vector_store %arg12[%c0_50, %c1_51, %c1_52, %c0_53], %96 {strides = array<i32>} : memref<1x18x18x16xf32, #tpu.memory_space<vmem>>, vector<1x16x16x16xf32>,
    %98 = vector.extract_strided_slice %96 {offsets = [0, 1, 0, 0], sizes = [1, 1, 16, 16], strides = [1, 1, 1, 1]} : vector<1x16x16x16xf32> to vector<1x1x16x16xf32>
    %c0_54 = arith.constant 0 : index
    %c0_55 = arith.constant 0 : index
    %c1_56 = arith.constant 1 : index
    %c0_57 = arith.constant 0 : index
    %99 = vector.load %arg12[%c0_54, %c0_55, %c1_56, %c0_57] : memref<1x18x18x16xf32, #tpu.memory_space<vmem>>, vector<1x1x16x16xf32>
    tpu.vector_store %arg12[%c0_54, %c0_55, %c1_56, %c0_57], %98 {strides = array<i32>} : memref<1x18x18x16xf32, #tpu.memory_space<vmem>>, vector<1x1x16x16xf32>,
    %100 = vector.extract_strided_slice %96 {offsets = [0, 14, 0, 0], sizes = [1, 1, 16, 16], strides = [1, 1, 1, 1]} : vector<1x16x16x16xf32> to vector<1x1x16x16xf32>
    %c0_58 = arith.constant 0 : index
    %c17_59 = arith.constant 17 : index
    %c1_60 = arith.constant 1 : index
    %c0_61 = arith.constant 0 : index
    %101 = vector.load %arg12[%c0_58, %c17_59, %c1_60, %c0_61] : memref<1x18x18x16xf32, #tpu.memory_space<vmem>>, vector<1x1x16x16xf32>
    tpu.vector_store %arg12[%c0_58, %c17_59, %c1_60, %c0_61], %100 {strides = array<i32>} : memref<1x18x18x16xf32, #tpu.memory_space<vmem>>, vector<1x1x16x16xf32>,
    %c0_62 = arith.constant 0 : index
    %c0_63 = arith.constant 0 : index
    %c2_64 = arith.constant 2 : index
    %c0_65 = arith.constant 0 : index
    %102 = vector.load %arg12[%c0_62, %c0_63, %c2_64, %c0_65] : memref<1x18x18x16xf32, #tpu.memory_space<vmem>>, vector<1x18x1x16xf32>
    %c0_66 = arith.constant 0 : index
    %c0_67 = arith.constant 0 : index
    %c0_68 = arith.constant 0 : index
    %c0_69 = arith.constant 0 : index
    %103 = vector.load %arg12[%c0_66, %c0_67, %c0_68, %c0_69] : memref<1x18x18x16xf32, #tpu.memory_space<vmem>>, vector<1x18x1x16xf32>
    tpu.vector_store %arg12[%c0_66, %c0_67, %c0_68, %c0_69], %102 {strides = array<i32>} : memref<1x18x18x16xf32, #tpu.memory_space<vmem>>, vector<1x18x1x16xf32>,
    %c0_70 = arith.constant 0 : index
    %c0_71 = arith.constant 0 : index
    %c15_72 = arith.constant 15 : index
    %c0_73 = arith.constant 0 : index
    %104 = vector.load %arg12[%c0_70, %c0_71, %c15_72, %c0_73] : memref<1x18x18x16xf32, #tpu.memory_space<vmem>>, vector<1x18x1x16xf32>
    %c0_74 = arith.constant 0 : index
    %c0_75 = arith.constant 0 : index
    %c17_76 = arith.constant 17 : index
    %c0_77 = arith.constant 0 : index
    %105 = vector.load %arg12[%c0_74, %c0_75, %c17_76, %c0_77] : memref<1x18x18x16xf32, #tpu.memory_space<vmem>>, vector<1x18x1x16xf32>
    tpu.vector_store %arg12[%c0_74, %c0_75, %c17_76, %c0_77], %104 {strides = array<i32>} : memref<1x18x18x16xf32, #tpu.memory_space<vmem>>, vector<1x18x1x16xf32>,
    %c0_78 = arith.constant 0 : index
    %c0_79 = arith.constant 0 : index
    %c0_80 = arith.constant 0 : index
    %c0_81 = arith.constant 0 : index
    %106 = vector.load %arg12[%c0_78, %c0_79, %c0_80, %c0_81] : memref<1x18x18x16xf32, #tpu.memory_space<vmem>>, vector<1x16x16x16xf32>
    %107 = vector.shape_cast %106 : vector<1x16x16x16xf32> to vector<256x16xf32>
    %c0_82 = arith.constant 0 : index
    %c0_83 = arith.constant 0 : index
    %108 = vector.load %arg14[%c0_82, %c0_83] : memref<256x144xf32, #tpu.memory_space<vmem>>, vector<256x16xf32>
    tpu.vector_store %arg14[%c0_82, %c0_83], %107 {strides = array<i32>} : memref<256x144xf32, #tpu.memory_space<vmem>>, vector<256x16xf32>,
    %c0_84 = arith.constant 0 : index
    %c0_85 = arith.constant 0 : index
    %c1_86 = arith.constant 1 : index
    %c0_87 = arith.constant 0 : index
    %109 = vector.load %arg12[%c0_84, %c0_85, %c1_86, %c0_87] : memref<1x18x18x16xf32, #tpu.memory_space<vmem>>, vector<1x16x16x16xf32>
    %110 = vector.shape_cast %109 : vector<1x16x16x16xf32> to vector<256x16xf32>
    %c0_88 = arith.constant 0 : index
    %c16 = arith.constant 16 : index
    %111 = vector.load %arg14[%c0_88, %c16] : memref<256x144xf32, #tpu.memory_space<vmem>>, vector<256x16xf32>
    tpu.vector_store %arg14[%c0_88, %c16], %110 {strides = array<i32>} : memref<256x144xf32, #tpu.memory_space<vmem>>, vector<256x16xf32>,
    %c0_89 = arith.constant 0 : index
    %c0_90 = arith.constant 0 : index
    %c2_91 = arith.constant 2 : index
    %c0_92 = arith.constant 0 : index
    %112 = vector.load %arg12[%c0_89, %c0_90, %c2_91, %c0_92] : memref<1x18x18x16xf32, #tpu.memory_space<vmem>>, vector<1x16x16x16xf32>
    %113 = vector.shape_cast %112 : vector<1x16x16x16xf32> to vector<256x16xf32>
    %c0_93 = arith.constant 0 : index
    %c32 = arith.constant 32 : index
    %114 = vector.load %arg14[%c0_93, %c32] : memref<256x144xf32, #tpu.memory_space<vmem>>, vector<256x16xf32>
    tpu.vector_store %arg14[%c0_93, %c32], %113 {strides = array<i32>} : memref<256x144xf32, #tpu.memory_space<vmem>>, vector<256x16xf32>,
    %c0_94 = arith.constant 0 : index
    %c1_95 = arith.constant 1 : index
    %c0_96 = arith.constant 0 : index
    %c0_97 = arith.constant 0 : index
    %115 = vector.load %arg12[%c0_94, %c1_95, %c0_96, %c0_97] : memref<1x18x18x16xf32, #tpu.memory_space<vmem>>, vector<1x16x16x16xf32>
    %116 = vector.shape_cast %115 : vector<1x16x16x16xf32> to vector<256x16xf32>
    %c0_98 = arith.constant 0 : index
    %c48 = arith.constant 48 : index
    %117 = vector.load %arg14[%c0_98, %c48] : memref<256x144xf32, #tpu.memory_space<vmem>>, vector<256x16xf32>
    tpu.vector_store %arg14[%c0_98, %c48], %116 {strides = array<i32>} : memref<256x144xf32, #tpu.memory_space<vmem>>, vector<256x16xf32>,
    %c0_99 = arith.constant 0 : index
    %c1_100 = arith.constant 1 : index
    %c1_101 = arith.constant 1 : index
    %c0_102 = arith.constant 0 : index
    %118 = vector.load %arg12[%c0_99, %c1_100, %c1_101, %c0_102] : memref<1x18x18x16xf32, #tpu.memory_space<vmem>>, vector<1x16x16x16xf32>
    %119 = vector.shape_cast %118 : vector<1x16x16x16xf32> to vector<256x16xf32>
    %c0_103 = arith.constant 0 : index
    %c64 = arith.constant 64 : index
    %120 = vector.load %arg14[%c0_103, %c64] : memref<256x144xf32, #tpu.memory_space<vmem>>, vector<256x16xf32>
    tpu.vector_store %arg14[%c0_103, %c64], %119 {strides = array<i32>} : memref<256x144xf32, #tpu.memory_space<vmem>>, vector<256x16xf32>,
    %c0_104 = arith.constant 0 : index
    %c1_105 = arith.constant 1 : index
    %c2_106 = arith.constant 2 : index
    %c0_107 = arith.constant 0 : index
    %121 = vector.load %arg12[%c0_104, %c1_105, %c2_106, %c0_107] : memref<1x18x18x16xf32, #tpu.memory_space<vmem>>, vector<1x16x16x16xf32>
    %122 = vector.shape_cast %121 : vector<1x16x16x16xf32> to vector<256x16xf32>
    %c0_108 = arith.constant 0 : index
    %c80 = arith.constant 80 : index
    %123 = vector.load %arg14[%c0_108, %c80] : memref<256x144xf32, #tpu.memory_space<vmem>>, vector<256x16xf32>
    tpu.vector_store %arg14[%c0_108, %c80], %122 {strides = array<i32>} : memref<256x144xf32, #tpu.memory_space<vmem>>, vector<256x16xf32>,
    %c0_109 = arith.constant 0 : index
    %c2_110 = arith.constant 2 : index
    %c0_111 = arith.constant 0 : index
    %c0_112 = arith.constant 0 : index
    %124 = vector.load %arg12[%c0_109, %c2_110, %c0_111, %c0_112] : memref<1x18x18x16xf32, #tpu.memory_space<vmem>>, vector<1x16x16x16xf32>
    %125 = vector.shape_cast %124 : vector<1x16x16x16xf32> to vector<256x16xf32>
    %c0_113 = arith.constant 0 : index
    %c96 = arith.constant 96 : index
    %126 = vector.load %arg14[%c0_113, %c96] : memref<256x144xf32, #tpu.memory_space<vmem>>, vector<256x16xf32>
    tpu.vector_store %arg14[%c0_113, %c96], %125 {strides = array<i32>} : memref<256x144xf32, #tpu.memory_space<vmem>>, vector<256x16xf32>,
    %c0_114 = arith.constant 0 : index
    %c2_115 = arith.constant 2 : index
    %c1_116 = arith.constant 1 : index
    %c0_117 = arith.constant 0 : index
    %127 = vector.load %arg12[%c0_114, %c2_115, %c1_116, %c0_117] : memref<1x18x18x16xf32, #tpu.memory_space<vmem>>, vector<1x16x16x16xf32>
    %128 = vector.shape_cast %127 : vector<1x16x16x16xf32> to vector<256x16xf32>
    %c0_118 = arith.constant 0 : index
    %c112 = arith.constant 112 : index
    %129 = vector.load %arg14[%c0_118, %c112] : memref<256x144xf32, #tpu.memory_space<vmem>>, vector<256x16xf32>
    tpu.vector_store %arg14[%c0_118, %c112], %128 {strides = array<i32>} : memref<256x144xf32, #tpu.memory_space<vmem>>, vector<256x16xf32>,
    %c0_119 = arith.constant 0 : index
    %c2_120 = arith.constant 2 : index
    %c2_121 = arith.constant 2 : index
    %c0_122 = arith.constant 0 : index
    %130 = vector.load %arg12[%c0_119, %c2_120, %c2_121, %c0_122] : memref<1x18x18x16xf32, #tpu.memory_space<vmem>>, vector<1x16x16x16xf32>
    %131 = vector.shape_cast %130 : vector<1x16x16x16xf32> to vector<256x16xf32>
    %c0_123 = arith.constant 0 : index
    %c128 = arith.constant 128 : index
    %132 = vector.load %arg14[%c0_123, %c128] : memref<256x144xf32, #tpu.memory_space<vmem>>, vector<256x16xf32>
    tpu.vector_store %arg14[%c0_123, %c128], %131 {strides = array<i32>} : memref<256x144xf32, #tpu.memory_space<vmem>>, vector<256x16xf32>,
    %c0_124 = arith.constant 0 : index
    %c0_125 = arith.constant 0 : index
    %133 = vector.load %arg14[%c0_124, %c0_125] : memref<256x144xf32, #tpu.memory_space<vmem>>, vector<256x144xf32>
    %c0_126 = arith.constant 0 : index
    %c0_127 = arith.constant 0 : index
    %134 = vector.load %arg4[%c0_126, %c0_127] : memref<144x32xf32, #tpu.memory_space<vmem>>, vector<144x32xf32>
    %cst_128 = arith.constant dense<0.000000e+00> : vector<256x32xf32>
    %135 = tpu.matmul %133, %134, %cst_128 {dimension_numbers = #tpu.dot_dimension_numbers<[1], [0], [0], [1], [0, 0, 1, 1], [], []>} : vector<256x144xf32>, vector<144x32xf32>, vector<256x32xf32> -> vector<256x32xf32>
    %c0_129 = arith.constant 0 : index
    %c0_130 = arith.constant 0 : index
    %136 = vector.load %arg5[%c0_129, %c0_130] : memref<1x32xf32, #tpu.memory_space<vmem>>, vector<1x32xf32>
    %137 = vector.broadcast %136 : vector<1x32xf32> to vector<256x32xf32>
    %138 = arith.addf %135, %137 : vector<256x32xf32>
    %139 = vector.shape_cast %138 : vector<256x32xf32> to vector<1x16x16x32xf32>
    %cst_131 = arith.constant 0.000000e+00 : f32
    %140 = vector.broadcast %cst_131 : f32 to vector<1x16x16x32xf32>
    %141 = arith.maximumf %139, %140 : vector<1x16x16x32xf32>
    %c0_132 = arith.constant 0 : index
    %c1_133 = arith.constant 1 : index
    %c1_134 = arith.constant 1 : index
    %c0_135 = arith.constant 0 : index
    %142 = vector.load %arg13[%c0_132, %c1_133, %c1_134, %c0_135] : memref<1x18x18x32xf32, #tpu.memory_space<vmem>>, vector<1x16x16x32xf32>
    tpu.vector_store %arg13[%c0_132, %c1_133, %c1_134, %c0_135], %141 {strides = array<i32>} : memref<1x18x18x32xf32, #tpu.memory_space<vmem>>, vector<1x16x16x32xf32>,
    %143 = vector.extract_strided_slice %141 {offsets = [0, 1, 0, 0], sizes = [1, 1, 16, 32], strides = [1, 1, 1, 1]} : vector<1x16x16x32xf32> to vector<1x1x16x32xf32>
    %c0_136 = arith.constant 0 : index
    %c0_137 = arith.constant 0 : index
    %c1_138 = arith.constant 1 : index
    %c0_139 = arith.constant 0 : index
    %144 = vector.load %arg13[%c0_136, %c0_137, %c1_138, %c0_139] : memref<1x18x18x32xf32, #tpu.memory_space<vmem>>, vector<1x1x16x32xf32>
    tpu.vector_store %arg13[%c0_136, %c0_137, %c1_138, %c0_139], %143 {strides = array<i32>} : memref<1x18x18x32xf32, #tpu.memory_space<vmem>>, vector<1x1x16x32xf32>,
    %145 = vector.extract_strided_slice %141 {offsets = [0, 14, 0, 0], sizes = [1, 1, 16, 32], strides = [1, 1, 1, 1]} : vector<1x16x16x32xf32> to vector<1x1x16x32xf32>
    %c0_140 = arith.constant 0 : index
    %c17_141 = arith.constant 17 : index
    %c1_142 = arith.constant 1 : index
    %c0_143 = arith.constant 0 : index
    %146 = vector.load %arg13[%c0_140, %c17_141, %c1_142, %c0_143] : memref<1x18x18x32xf32, #tpu.memory_space<vmem>>, vector<1x1x16x32xf32>
    tpu.vector_store %arg13[%c0_140, %c17_141, %c1_142, %c0_143], %145 {strides = array<i32>} : memref<1x18x18x32xf32, #tpu.memory_space<vmem>>, vector<1x1x16x32xf32>,
    %c0_144 = arith.constant 0 : index
    %c0_145 = arith.constant 0 : index
    %c2_146 = arith.constant 2 : index
    %c0_147 = arith.constant 0 : index
    %147 = vector.load %arg13[%c0_144, %c0_145, %c2_146, %c0_147] : memref<1x18x18x32xf32, #tpu.memory_space<vmem>>, vector<1x18x1x32xf32>
    %c0_148 = arith.constant 0 : index
    %c0_149 = arith.constant 0 : index
    %c0_150 = arith.constant 0 : index
    %c0_151 = arith.constant 0 : index
    %148 = vector.load %arg13[%c0_148, %c0_149, %c0_150, %c0_151] : memref<1x18x18x32xf32, #tpu.memory_space<vmem>>, vector<1x18x1x32xf32>
    tpu.vector_store %arg13[%c0_148, %c0_149, %c0_150, %c0_151], %147 {strides = array<i32>} : memref<1x18x18x32xf32, #tpu.memory_space<vmem>>, vector<1x18x1x32xf32>,
    %c0_152 = arith.constant 0 : index
    %c0_153 = arith.constant 0 : index
    %c15_154 = arith.constant 15 : index
    %c0_155 = arith.constant 0 : index
    %149 = vector.load %arg13[%c0_152, %c0_153, %c15_154, %c0_155] : memref<1x18x18x32xf32, #tpu.memory_space<vmem>>, vector<1x18x1x32xf32>
    %c0_156 = arith.constant 0 : index
    %c0_157 = arith.constant 0 : index
    %c17_158 = arith.constant 17 : index
    %c0_159 = arith.constant 0 : index
    %150 = vector.load %arg13[%c0_156, %c0_157, %c17_158, %c0_159] : memref<1x18x18x32xf32, #tpu.memory_space<vmem>>, vector<1x18x1x32xf32>
    tpu.vector_store %arg13[%c0_156, %c0_157, %c17_158, %c0_159], %149 {strides = array<i32>} : memref<1x18x18x32xf32, #tpu.memory_space<vmem>>, vector<1x18x1x32xf32>,
    %c0_160 = arith.constant 0 : index
    %c0_161 = arith.constant 0 : index
    %c0_162 = arith.constant 0 : index
    %c0_163 = arith.constant 0 : index
    %151 = vector.load %arg13[%c0_160, %c0_161, %c0_162, %c0_163] : memref<1x18x18x32xf32, #tpu.memory_space<vmem>>, vector<1x16x16x32xf32>
    %152 = vector.shape_cast %151 : vector<1x16x16x32xf32> to vector<256x32xf32>
    %c0_164 = arith.constant 0 : index
    %c0_165 = arith.constant 0 : index
    %153 = vector.load %arg15[%c0_164, %c0_165] : memref<256x288xf32, #tpu.memory_space<vmem>>, vector<256x32xf32>
    tpu.vector_store %arg15[%c0_164, %c0_165], %152 {strides = array<i32>} : memref<256x288xf32, #tpu.memory_space<vmem>>, vector<256x32xf32>,
    %c0_166 = arith.constant 0 : index
    %c0_167 = arith.constant 0 : index
    %c1_168 = arith.constant 1 : index
    %c0_169 = arith.constant 0 : index
    %154 = vector.load %arg13[%c0_166, %c0_167, %c1_168, %c0_169] : memref<1x18x18x32xf32, #tpu.memory_space<vmem>>, vector<1x16x16x32xf32>
    %155 = vector.shape_cast %154 : vector<1x16x16x32xf32> to vector<256x32xf32>
    %c0_170 = arith.constant 0 : index
    %c32_171 = arith.constant 32 : index
    %156 = vector.load %arg15[%c0_170, %c32_171] : memref<256x288xf32, #tpu.memory_space<vmem>>, vector<256x32xf32>
    tpu.vector_store %arg15[%c0_170, %c32_171], %155 {strides = array<i32>} : memref<256x288xf32, #tpu.memory_space<vmem>>, vector<256x32xf32>,
    %c0_172 = arith.constant 0 : index
    %c0_173 = arith.constant 0 : index
    %c2_174 = arith.constant 2 : index
    %c0_175 = arith.constant 0 : index
    %157 = vector.load %arg13[%c0_172, %c0_173, %c2_174, %c0_175] : memref<1x18x18x32xf32, #tpu.memory_space<vmem>>, vector<1x16x16x32xf32>
    %158 = vector.shape_cast %157 : vector<1x16x16x32xf32> to vector<256x32xf32>
    %c0_176 = arith.constant 0 : index
    %c64_177 = arith.constant 64 : index
    %159 = vector.load %arg15[%c0_176, %c64_177] : memref<256x288xf32, #tpu.memory_space<vmem>>, vector<256x32xf32>
    tpu.vector_store %arg15[%c0_176, %c64_177], %158 {strides = array<i32>} : memref<256x288xf32, #tpu.memory_space<vmem>>, vector<256x32xf32>,
    %c0_178 = arith.constant 0 : index
    %c1_179 = arith.constant 1 : index
    %c0_180 = arith.constant 0 : index
    %c0_181 = arith.constant 0 : index
    %160 = vector.load %arg13[%c0_178, %c1_179, %c0_180, %c0_181] : memref<1x18x18x32xf32, #tpu.memory_space<vmem>>, vector<1x16x16x32xf32>
    %161 = vector.shape_cast %160 : vector<1x16x16x32xf32> to vector<256x32xf32>
    %c0_182 = arith.constant 0 : index
    %c96_183 = arith.constant 96 : index
    %162 = vector.load %arg15[%c0_182, %c96_183] : memref<256x288xf32, #tpu.memory_space<vmem>>, vector<256x32xf32>
    tpu.vector_store %arg15[%c0_182, %c96_183], %161 {strides = array<i32>} : memref<256x288xf32, #tpu.memory_space<vmem>>, vector<256x32xf32>,
    %c0_184 = arith.constant 0 : index
    %c1_185 = arith.constant 1 : index
    %c1_186 = arith.constant 1 : index
    %c0_187 = arith.constant 0 : index
    %163 = vector.load %arg13[%c0_184, %c1_185, %c1_186, %c0_187] : memref<1x18x18x32xf32, #tpu.memory_space<vmem>>, vector<1x16x16x32xf32>
    %164 = vector.shape_cast %163 : vector<1x16x16x32xf32> to vector<256x32xf32>
    %c0_188 = arith.constant 0 : index
    %c128_189 = arith.constant 128 : index
    %165 = vector.load %arg15[%c0_188, %c128_189] : memref<256x288xf32, #tpu.memory_space<vmem>>, vector<256x32xf32>
    tpu.vector_store %arg15[%c0_188, %c128_189], %164 {strides = array<i32>} : memref<256x288xf32, #tpu.memory_space<vmem>>, vector<256x32xf32>,
    %c0_190 = arith.constant 0 : index
    %c1_191 = arith.constant 1 : index
    %c2_192 = arith.constant 2 : index
    %c0_193 = arith.constant 0 : index
    %166 = vector.load %arg13[%c0_190, %c1_191, %c2_192, %c0_193] : memref<1x18x18x32xf32, #tpu.memory_space<vmem>>, vector<1x16x16x32xf32>
    %167 = vector.shape_cast %166 : vector<1x16x16x32xf32> to vector<256x32xf32>
    %c0_194 = arith.constant 0 : index
    %c160 = arith.constant 160 : index
    %168 = vector.load %arg15[%c0_194, %c160] : memref<256x288xf32, #tpu.memory_space<vmem>>, vector<256x32xf32>
    tpu.vector_store %arg15[%c0_194, %c160], %167 {strides = array<i32>} : memref<256x288xf32, #tpu.memory_space<vmem>>, vector<256x32xf32>,
    %c0_195 = arith.constant 0 : index
    %c2_196 = arith.constant 2 : index
    %c0_197 = arith.constant 0 : index
    %c0_198 = arith.constant 0 : index
    %169 = vector.load %arg13[%c0_195, %c2_196, %c0_197, %c0_198] : memref<1x18x18x32xf32, #tpu.memory_space<vmem>>, vector<1x16x16x32xf32>
    %170 = vector.shape_cast %169 : vector<1x16x16x32xf32> to vector<256x32xf32>
    %c0_199 = arith.constant 0 : index
    %c192 = arith.constant 192 : index
    %171 = vector.load %arg15[%c0_199, %c192] : memref<256x288xf32, #tpu.memory_space<vmem>>, vector<256x32xf32>
    tpu.vector_store %arg15[%c0_199, %c192], %170 {strides = array<i32>} : memref<256x288xf32, #tpu.memory_space<vmem>>, vector<256x32xf32>,
    %c0_200 = arith.constant 0 : index
    %c2_201 = arith.constant 2 : index
    %c1_202 = arith.constant 1 : index
    %c0_203 = arith.constant 0 : index
    %172 = vector.load %arg13[%c0_200, %c2_201, %c1_202, %c0_203] : memref<1x18x18x32xf32, #tpu.memory_space<vmem>>, vector<1x16x16x32xf32>
    %173 = vector.shape_cast %172 : vector<1x16x16x32xf32> to vector<256x32xf32>
    %c0_204 = arith.constant 0 : index
    %c224 = arith.constant 224 : index
    %174 = vector.load %arg15[%c0_204, %c224] : memref<256x288xf32, #tpu.memory_space<vmem>>, vector<256x32xf32>
    tpu.vector_store %arg15[%c0_204, %c224], %173 {strides = array<i32>} : memref<256x288xf32, #tpu.memory_space<vmem>>, vector<256x32xf32>,
    %c0_205 = arith.constant 0 : index
    %c2_206 = arith.constant 2 : index
    %c2_207 = arith.constant 2 : index
    %c0_208 = arith.constant 0 : index
    %175 = vector.load %arg13[%c0_205, %c2_206, %c2_207, %c0_208] : memref<1x18x18x32xf32, #tpu.memory_space<vmem>>, vector<1x16x16x32xf32>
    %176 = vector.shape_cast %175 : vector<1x16x16x32xf32> to vector<256x32xf32>
    %c0_209 = arith.constant 0 : index
    %c256 = arith.constant 256 : index
    %177 = vector.load %arg15[%c0_209, %c256] : memref<256x288xf32, #tpu.memory_space<vmem>>, vector<256x32xf32>
    tpu.vector_store %arg15[%c0_209, %c256], %176 {strides = array<i32>} : memref<256x288xf32, #tpu.memory_space<vmem>>, vector<256x32xf32>,
    %c0_210 = arith.constant 0 : index
    %c0_211 = arith.constant 0 : index
    %178 = vector.load %arg15[%c0_210, %c0_211] : memref<256x288xf32, #tpu.memory_space<vmem>>, vector<256x288xf32>
    %c0_212 = arith.constant 0 : index
    %c0_213 = arith.constant 0 : index
    %179 = vector.load %arg6[%c0_212, %c0_213] : memref<288x16xf32, #tpu.memory_space<vmem>>, vector<288x16xf32>
    %cst_214 = arith.constant dense<0.000000e+00> : vector<256x16xf32>
    %180 = tpu.matmul %178, %179, %cst_214 {dimension_numbers = #tpu.dot_dimension_numbers<[1], [0], [0], [1], [0, 0, 1, 1], [], []>} : vector<256x288xf32>, vector<288x16xf32>, vector<256x16xf32> -> vector<256x16xf32>
    %c0_215 = arith.constant 0 : index
    %c0_216 = arith.constant 0 : index
    %181 = vector.load %arg7[%c0_215, %c0_216] : memref<1x16xf32, #tpu.memory_space<vmem>>, vector<1x16xf32>
    %182 = vector.broadcast %181 : vector<1x16xf32> to vector<256x16xf32>
    %183 = arith.addf %180, %182 : vector<256x16xf32>
    %184 = vector.shape_cast %183 : vector<256x16xf32> to vector<1x16x16x16xf32>
    %cst_217 = arith.constant 0.000000e+00 : f32
    %185 = vector.broadcast %cst_217 : f32 to vector<1x16x16x16xf32>
    %186 = arith.maximumf %184, %185 : vector<1x16x16x16xf32>
    %c0_218 = arith.constant 0 : index
    %c1_219 = arith.constant 1 : index
    %c1_220 = arith.constant 1 : index
    %c0_221 = arith.constant 0 : index
    %187 = vector.load %arg12[%c0_218, %c1_219, %c1_220, %c0_221] : memref<1x18x18x16xf32, #tpu.memory_space<vmem>>, vector<1x16x16x16xf32>
    tpu.vector_store %arg12[%c0_218, %c1_219, %c1_220, %c0_221], %186 {strides = array<i32>} : memref<1x18x18x16xf32, #tpu.memory_space<vmem>>, vector<1x16x16x16xf32>,
    %188 = vector.extract_strided_slice %186 {offsets = [0, 1, 0, 0], sizes = [1, 1, 16, 16], strides = [1, 1, 1, 1]} : vector<1x16x16x16xf32> to vector<1x1x16x16xf32>
    %c0_222 = arith.constant 0 : index
    %c0_223 = arith.constant 0 : index
    %c1_224 = arith.constant 1 : index
    %c0_225 = arith.constant 0 : index
    %189 = vector.load %arg12[%c0_222, %c0_223, %c1_224, %c0_225] : memref<1x18x18x16xf32, #tpu.memory_space<vmem>>, vector<1x1x16x16xf32>
    tpu.vector_store %arg12[%c0_222, %c0_223, %c1_224, %c0_225], %188 {strides = array<i32>} : memref<1x18x18x16xf32, #tpu.memory_space<vmem>>, vector<1x1x16x16xf32>,
    %190 = vector.extract_strided_slice %186 {offsets = [0, 14, 0, 0], sizes = [1, 1, 16, 16], strides = [1, 1, 1, 1]} : vector<1x16x16x16xf32> to vector<1x1x16x16xf32>
    %c0_226 = arith.constant 0 : index
    %c17_227 = arith.constant 17 : index
    %c1_228 = arith.constant 1 : index
    %c0_229 = arith.constant 0 : index
    %191 = vector.load %arg12[%c0_226, %c17_227, %c1_228, %c0_229] : memref<1x18x18x16xf32, #tpu.memory_space<vmem>>, vector<1x1x16x16xf32>
    tpu.vector_store %arg12[%c0_226, %c17_227, %c1_228, %c0_229], %190 {strides = array<i32>} : memref<1x18x18x16xf32, #tpu.memory_space<vmem>>, vector<1x1x16x16xf32>,
    %c0_230 = arith.constant 0 : index
    %c0_231 = arith.constant 0 : index
    %c2_232 = arith.constant 2 : index
    %c0_233 = arith.constant 0 : index
    %192 = vector.load %arg12[%c0_230, %c0_231, %c2_232, %c0_233] : memref<1x18x18x16xf32, #tpu.memory_space<vmem>>, vector<1x18x1x16xf32>
    %c0_234 = arith.constant 0 : index
    %c0_235 = arith.constant 0 : index
    %c0_236 = arith.constant 0 : index
    %c0_237 = arith.constant 0 : index
    %193 = vector.load %arg12[%c0_234, %c0_235, %c0_236, %c0_237] : memref<1x18x18x16xf32, #tpu.memory_space<vmem>>, vector<1x18x1x16xf32>
    tpu.vector_store %arg12[%c0_234, %c0_235, %c0_236, %c0_237], %192 {strides = array<i32>} : memref<1x18x18x16xf32, #tpu.memory_space<vmem>>, vector<1x18x1x16xf32>,
    %c0_238 = arith.constant 0 : index
    %c0_239 = arith.constant 0 : index
    %c15_240 = arith.constant 15 : index
    %c0_241 = arith.constant 0 : index
    %194 = vector.load %arg12[%c0_238, %c0_239, %c15_240, %c0_241] : memref<1x18x18x16xf32, #tpu.memory_space<vmem>>, vector<1x18x1x16xf32>
    %c0_242 = arith.constant 0 : index
    %c0_243 = arith.constant 0 : index
    %c17_244 = arith.constant 17 : index
    %c0_245 = arith.constant 0 : index
    %195 = vector.load %arg12[%c0_242, %c0_243, %c17_244, %c0_245] : memref<1x18x18x16xf32, #tpu.memory_space<vmem>>, vector<1x18x1x16xf32>
    tpu.vector_store %arg12[%c0_242, %c0_243, %c17_244, %c0_245], %194 {strides = array<i32>} : memref<1x18x18x16xf32, #tpu.memory_space<vmem>>, vector<1x18x1x16xf32>,
    %c0_246 = arith.constant 0 : index
    %c0_247 = arith.constant 0 : index
    %196 = vector.load %arg8[%c0_246, %c0_247] : memref<9x16xf32, #tpu.memory_space<vmem>>, vector<9x16xf32>
    %c0_248 = arith.constant 0 : index
    %c0_249 = arith.constant 0 : index
    %c0_250 = arith.constant 0 : index
    %c0_251 = arith.constant 0 : index
    %197 = vector.load %arg12[%c0_248, %c0_249, %c0_250, %c0_251] : memref<1x18x18x16xf32, #tpu.memory_space<vmem>>, vector<1x16x16x16xf32>
    %198 = vector.extract_strided_slice %196 {offsets = [0, 0], sizes = [1, 16], strides = [1, 1]} : vector<9x16xf32> to vector<1x16xf32>
    %199 = vector.shape_cast %198 : vector<1x16xf32> to vector<16xf32>
    %200 = vector.shape_cast %199 : vector<16xf32> to vector<1x1x1x16xf32>
    %201 = vector.broadcast %200 : vector<1x1x1x16xf32> to vector<1x16x16x16xf32>
    %202 = arith.mulf %197, %201 : vector<1x16x16x16xf32>
    %c0_252 = arith.constant 0 : index
    %c0_253 = arith.constant 0 : index
    %c1_254 = arith.constant 1 : index
    %c0_255 = arith.constant 0 : index
    %203 = vector.load %arg12[%c0_252, %c0_253, %c1_254, %c0_255] : memref<1x18x18x16xf32, #tpu.memory_space<vmem>>, vector<1x16x16x16xf32>
    %204 = vector.extract_strided_slice %196 {offsets = [1, 0], sizes = [1, 16], strides = [1, 1]} : vector<9x16xf32> to vector<1x16xf32>
    %205 = vector.shape_cast %204 : vector<1x16xf32> to vector<16xf32>
    %206 = vector.shape_cast %205 : vector<16xf32> to vector<1x1x1x16xf32>
    %207 = vector.broadcast %206 : vector<1x1x1x16xf32> to vector<1x16x16x16xf32>
    %208 = arith.mulf %203, %207 : vector<1x16x16x16xf32>
    %209 = arith.addf %202, %208 : vector<1x16x16x16xf32>
    %c0_256 = arith.constant 0 : index
    %c0_257 = arith.constant 0 : index
    %c2_258 = arith.constant 2 : index
    %c0_259 = arith.constant 0 : index
    %210 = vector.load %arg12[%c0_256, %c0_257, %c2_258, %c0_259] : memref<1x18x18x16xf32, #tpu.memory_space<vmem>>, vector<1x16x16x16xf32>
    %211 = vector.extract_strided_slice %196 {offsets = [2, 0], sizes = [1, 16], strides = [1, 1]} : vector<9x16xf32> to vector<1x16xf32>
    %212 = vector.shape_cast %211 : vector<1x16xf32> to vector<16xf32>
    %213 = vector.shape_cast %212 : vector<16xf32> to vector<1x1x1x16xf32>
    %214 = vector.broadcast %213 : vector<1x1x1x16xf32> to vector<1x16x16x16xf32>
    %215 = arith.mulf %210, %214 : vector<1x16x16x16xf32>
    %216 = arith.addf %209, %215 : vector<1x16x16x16xf32>
    %c0_260 = arith.constant 0 : index
    %c1_261 = arith.constant 1 : index
    %c0_262 = arith.constant 0 : index
    %c0_263 = arith.constant 0 : index
    %217 = vector.load %arg12[%c0_260, %c1_261, %c0_262, %c0_263] : memref<1x18x18x16xf32, #tpu.memory_space<vmem>>, vector<1x16x16x16xf32>
    %218 = vector.extract_strided_slice %196 {offsets = [3, 0], sizes = [1, 16], strides = [1, 1]} : vector<9x16xf32> to vector<1x16xf32>
    %219 = vector.shape_cast %218 : vector<1x16xf32> to vector<16xf32>
    %220 = vector.shape_cast %219 : vector<16xf32> to vector<1x1x1x16xf32>
    %221 = vector.broadcast %220 : vector<1x1x1x16xf32> to vector<1x16x16x16xf32>
    %222 = arith.mulf %217, %221 : vector<1x16x16x16xf32>
    %223 = arith.addf %216, %222 : vector<1x16x16x16xf32>
    %c0_264 = arith.constant 0 : index
    %c1_265 = arith.constant 1 : index
    %c1_266 = arith.constant 1 : index
    %c0_267 = arith.constant 0 : index
    %224 = vector.load %arg12[%c0_264, %c1_265, %c1_266, %c0_267] : memref<1x18x18x16xf32, #tpu.memory_space<vmem>>, vector<1x16x16x16xf32>
    %225 = vector.extract_strided_slice %196 {offsets = [4, 0], sizes = [1, 16], strides = [1, 1]} : vector<9x16xf32> to vector<1x16xf32>
    %226 = vector.shape_cast %225 : vector<1x16xf32> to vector<16xf32>
    %227 = vector.shape_cast %226 : vector<16xf32> to vector<1x1x1x16xf32>
    %228 = vector.broadcast %227 : vector<1x1x1x16xf32> to vector<1x16x16x16xf32>
    %229 = arith.mulf %224, %228 : vector<1x16x16x16xf32>
    %230 = arith.addf %223, %229 : vector<1x16x16x16xf32>
    %c0_268 = arith.constant 0 : index
    %c1_269 = arith.constant 1 : index
    %c2_270 = arith.constant 2 : index
    %c0_271 = arith.constant 0 : index
    %231 = vector.load %arg12[%c0_268, %c1_269, %c2_270, %c0_271] : memref<1x18x18x16xf32, #tpu.memory_space<vmem>>, vector<1x16x16x16xf32>
    %232 = vector.extract_strided_slice %196 {offsets = [5, 0], sizes = [1, 16], strides = [1, 1]} : vector<9x16xf32> to vector<1x16xf32>
    %233 = vector.shape_cast %232 : vector<1x16xf32> to vector<16xf32>
    %234 = vector.shape_cast %233 : vector<16xf32> to vector<1x1x1x16xf32>
    %235 = vector.broadcast %234 : vector<1x1x1x16xf32> to vector<1x16x16x16xf32>
    %236 = arith.mulf %231, %235 : vector<1x16x16x16xf32>
    %237 = arith.addf %230, %236 : vector<1x16x16x16xf32>
    %c0_272 = arith.constant 0 : index
    %c2_273 = arith.constant 2 : index
    %c0_274 = arith.constant 0 : index
    %c0_275 = arith.constant 0 : index
    %238 = vector.load %arg12[%c0_272, %c2_273, %c0_274, %c0_275] : memref<1x18x18x16xf32, #tpu.memory_space<vmem>>, vector<1x16x16x16xf32>
    %239 = vector.extract_strided_slice %196 {offsets = [6, 0], sizes = [1, 16], strides = [1, 1]} : vector<9x16xf32> to vector<1x16xf32>
    %240 = vector.shape_cast %239 : vector<1x16xf32> to vector<16xf32>
    %241 = vector.shape_cast %240 : vector<16xf32> to vector<1x1x1x16xf32>
    %242 = vector.broadcast %241 : vector<1x1x1x16xf32> to vector<1x16x16x16xf32>
    %243 = arith.mulf %238, %242 : vector<1x16x16x16xf32>
    %244 = arith.addf %237, %243 : vector<1x16x16x16xf32>
    %c0_276 = arith.constant 0 : index
    %c2_277 = arith.constant 2 : index
    %c1_278 = arith.constant 1 : index
    %c0_279 = arith.constant 0 : index
    %245 = vector.load %arg12[%c0_276, %c2_277, %c1_278, %c0_279] : memref<1x18x18x16xf32, #tpu.memory_space<vmem>>, vector<1x16x16x16xf32>
    %246 = vector.extract_strided_slice %196 {offsets = [7, 0], sizes = [1, 16], strides = [1, 1]} : vector<9x16xf32> to vector<1x16xf32>
    %247 = vector.shape_cast %246 : vector<1x16xf32> to vector<16xf32>
    %248 = vector.shape_cast %247 : vector<16xf32> to vector<1x1x1x16xf32>
    %249 = vector.broadcast %248 : vector<1x1x1x16xf32> to vector<1x16x16x16xf32>
    %250 = arith.mulf %245, %249 : vector<1x16x16x16xf32>
    %251 = arith.addf %244, %250 : vector<1x16x16x16xf32>
    %c0_280 = arith.constant 0 : index
    %c2_281 = arith.constant 2 : index
    %c2_282 = arith.constant 2 : index
    %c0_283 = arith.constant 0 : index
    %252 = vector.load %arg12[%c0_280, %c2_281, %c2_282, %c0_283] : memref<1x18x18x16xf32, #tpu.memory_space<vmem>>, vector<1x16x16x16xf32>
    %253 = vector.extract_strided_slice %196 {offsets = [8, 0], sizes = [1, 16], strides = [1, 1]} : vector<9x16xf32> to vector<1x16xf32>
    %254 = vector.shape_cast %253 : vector<1x16xf32> to vector<16xf32>
    %255 = vector.shape_cast %254 : vector<16xf32> to vector<1x1x1x16xf32>
    %256 = vector.broadcast %255 : vector<1x1x1x16xf32> to vector<1x16x16x16xf32>
    %257 = arith.mulf %252, %256 : vector<1x16x16x16xf32>
    %258 = arith.addf %251, %257 : vector<1x16x16x16xf32>
    %cst_284 = arith.constant dense<0.000000e+00> : vector<1x16x16xf32>
    %259 = vector.multi_reduction <add>, %258, %cst_284 [3] : vector<1x16x16x16xf32> to vector<1x16x16xf32>
    %c0_285 = arith.constant 0 : index
    %c0_286 = arith.constant 0 : index
    %260 = vector.load %arg9[%c0_285, %c0_286] : memref<1x1xf32, #tpu.memory_space<vmem>>, vector<1x1xf32>
    %261 = vector.shape_cast %260 : vector<1x1xf32> to vector<1x1x1xf32>
    %262 = vector.broadcast %261 : vector<1x1x1xf32> to vector<1x16x16xf32>
    %263 = arith.addf %259, %262 : vector<1x16x16xf32>
    %264 = math.tanh %263 : vector<1x16x16xf32>
    %cst_287 = arith.constant 5.000000e-01 : f32
    %265 = vector.broadcast %cst_287 : f32 to vector<1x16x16xf32>
    %266 = arith.mulf %264, %265 : vector<1x16x16xf32>
    %cst_288 = arith.constant 5.000000e-01 : f32
    %267 = vector.broadcast %cst_288 : f32 to vector<1x16x16xf32>
    %268 = arith.addf %266, %267 : vector<1x16x16xf32>
    %c0_289 = arith.constant 0 : index
    %c0_290 = arith.constant 0 : index
    %c0_291 = arith.constant 0 : index
    %269 = vector.load %arg10[%c0_289, %c0_290, %c0_291] : memref<1x16x16xf32, #tpu.memory_space<vmem>>, vector<1x16x16xf32>
    tpu.vector_store %arg10[%c0_289, %c0_290, %c0_291], %268 {strides = array<i32>} : memref<1x16x16xf32, #tpu.memory_space<vmem>>, vector<1x16x16xf32>,
    return
  }
  func.func @transform_0(%arg0: i32) -> (i32, i32, i32) {
    %c0_i32 = arith.constant 0 : i32
    %c0_i32_0 = arith.constant 0 : i32
    %c0_i32_1 = arith.constant 0 : i32
    return %arg0, %c0_i32, %c0_i32_0 : i32, i32, i32
  }
  func.func @transform_1(%arg0: i32) -> (i32, i32) {
    %c0_i32 = arith.constant 0 : i32
    %c0_i32_0 = arith.constant 0 : i32
    %c0_i32_1 = arith.constant 0 : i32
    return %c0_i32, %c0_i32_0 : i32, i32
  }
  func.func @transform_2(%arg0: i32) -> (i32, i32) {
    %c0_i32 = arith.constant 0 : i32
    %c0_i32_0 = arith.constant 0 : i32
    %c0_i32_1 = arith.constant 0 : i32
    return %c0_i32, %c0_i32_0 : i32, i32
  }
  func.func @transform_3(%arg0: i32) -> (i32, i32) {
    %c0_i32 = arith.constant 0 : i32
    %c0_i32_0 = arith.constant 0 : i32
    %c0_i32_1 = arith.constant 0 : i32
    return %c0_i32, %c0_i32_0 : i32, i32
  }
  func.func @transform_4(%arg0: i32) -> (i32, i32) {
    %c0_i32 = arith.constant 0 : i32
    %c0_i32_0 = arith.constant 0 : i32
    %c0_i32_1 = arith.constant 0 : i32
    return %c0_i32, %c0_i32_0 : i32, i32
  }
  func.func @transform_5(%arg0: i32) -> (i32, i32) {
    %c0_i32 = arith.constant 0 : i32
    %c0_i32_0 = arith.constant 0 : i32
    %c0_i32_1 = arith.constant 0 : i32
    return %c0_i32, %c0_i32_0 : i32, i32
  }
  func.func @transform_6(%arg0: i32) -> (i32, i32) {
    %c0_i32 = arith.constant 0 : i32
    %c0_i32_0 = arith.constant 0 : i32
    %c0_i32_1 = arith.constant 0 : i32
    return %c0_i32, %c0_i32_0 : i32, i32
  }
  func.func @transform_7(%arg0: i32) -> (i32, i32) {
    %c0_i32 = arith.constant 0 : i32
    %c0_i32_0 = arith.constant 0 : i32
    %c0_i32_1 = arith.constant 0 : i32
    return %c0_i32, %c0_i32_0 : i32, i32
  }
  func.func @transform_8(%arg0: i32) -> (i32, i32) {
    %c0_i32 = arith.constant 0 : i32
    %c0_i32_0 = arith.constant 0 : i32
    %c0_i32_1 = arith.constant 0 : i32
    return %c0_i32, %c0_i32_0 : i32, i32
  }
  func.func @transform_9(%arg0: i32) -> (i32, i32, i32) {
    %c0_i32 = arith.constant 0 : i32
    %c0_i32_0 = arith.constant 0 : i32
    %c0_i32_1 = arith.constant 0 : i32
    return %arg0, %c0_i32, %c0_i32_0 : i32, i32, i32
  }
}

</mosaic_0001>

<llo_original>
// kernel: tpu_custom_call.1
$region0: #{tpu_custom_call.1}
  #allocation0 [shape = 'u32[]', space=smem, size = 0x4, offset = 0x4, fixed_abs, tag = 'smem constant byte address 0x4 - core index']
  #allocation1 [shape = 'u32[144,128]{1,0:T(1,128)}', space=vmem, size = 0x12000, scoped, tag = 'internal scratch']
  #allocation2 [shape = 'f32[1,18,18]{2,1,0:T(8,128)}', space=vmem, size = 0x3000, scoped, tag = 'scratch operand']
  #allocation3 [shape = 'f32[1,18,18,16]{3,2,1,0:T(8,128)}', space=vmem, size = 0x36000, scoped, tag = 'scratch operand']
  #allocation4 [shape = 'f32[1,18,18,32]{3,2,1,0:T(8,128)}', space=vmem, size = 0x36000, scoped, tag = 'scratch operand']
  #allocation5 [shape = 'f32[256,144]{1,0:T(8,128)}', space=vmem, size = 0x40000, scoped, tag = 'scratch operand']
  #allocation6 [shape = 'f32[256,288]{1,0:T(8,128)}', space=vmem, size = 0x60000, scoped, tag = 'scratch operand']
  #allocation7 [shape = 'f32[1,1]{1,0:T(1,128)S(1)}', space=vmem, size = 0x200, scoped, tag = 'scoped memory for tpu_custom_call.1']
  %s0 = inlined_call_operand.vmem [shape: f32[2,16,16], index: 0, kind: input, shape index: {}]
  %s1 = inlined_call_operand.vmem [shape: f32[9,16], index: 1, kind: input, shape index: {}]
  %s2 = inlined_call_operand.vmem [shape: f32[1,16], index: 2, kind: input, shape index: {}]
  %s3 = inlined_call_operand.vmem [shape: f32[144,32], index: 3, kind: input, shape index: {}]
  %s4 = inlined_call_operand.vmem [shape: f32[1,32], index: 4, kind: input, shape index: {}]
  %s5 = inlined_call_operand.vmem [shape: f32[288,16], index: 5, kind: input, shape index: {}]
  %s6 = inlined_call_operand.vmem [shape: f32[1,16], index: 6, kind: input, shape index: {}]
  %s7 = inlined_call_operand.vmem [shape: f32[9,16], index: 7, kind: input, shape index: {}]
  %s8 = inlined_call_operand.<no memory space> [shape: f32[1,1], index: 8, kind: input, shape index: {}]
  %s9 = inlined_call_operand.hbm [shape: f32[2,16,16], index: 9, kind: output, shape index: {}]
  %s10 = sld [smem:[#allocation0]]
  $region69: #{tpu_custom_call.1} parent=0
    _
  %s12 = ssub.s32 1, %s10
  %s13 = scalar_select 0, %s12, %s10
  %v14 = vstv %s8
  %15 = vst [vmem:[#allocation7] sm:$0x1] %v14
  $region1: #{tpu_custom_call.1} parent=0
    #allocation8 [shape = 'u8[16384]{0}', space=vmem, size = 0x4000, scoped, tag = 'output window, operand 0']
    #allocation9 [shape = 's32[2]{0}', space=sflag, size = 0x8, scoped, tag = 'scoped memory for tpu_custom_call.1']
    %16 = vsyncpa [#allocation9], 0
    %s17 = scalar_lea.sflag [#allocation9], 1
    %18 = vsyncpa %s17, 0
    loop: start=0, step=1, limit=4
    $region2: #{tpu_custom_call.1} parent=1 // loop_pre_header
      _
    $region3: #{tpu_custom_call.1} parent=1 // loop_header
      %s20 = sphi 0, %s24
      %p21 = scmp.ge.s32.totalorder %s20, 4
      %s30 = sphi 0, %s32
      %s33 = sphi 0, %s30
      %s34 = sphi 0, %s33
      %s50 = sphi 0, %s34
      %s54 = sphi 0, %s54
      %s56 = sphi 0, %s54
      %s57 = sphi 0, %s56
      %s71 = sphi 0, %s57
      %s75 = sphi 0, %s75
      %s77 = sphi 0, %s75
      %s78 = sphi 0, %s77
      %s92 = sphi 0, %s78
      %s96 = sphi 0, %s96
      %s98 = sphi 0, %s96
      %s99 = sphi 0, %s98
      %s113 = sphi 0, %s99
      %s117 = sphi 0, %s117
      %s119 = sphi 0, %s117
      %s120 = sphi 0, %s119
      %s134 = sphi 0, %s120
      %s138 = sphi 0, %s138
      %s140 = sphi 0, %s138
      %s141 = sphi 0, %s140
      %s155 = sphi 0, %s141
      %s159 = sphi 0, %s159
      %s161 = sphi 0, %s159
      %s162 = sphi 0, %s161
      %s176 = sphi 0, %s162
      %s180 = sphi 0, %s180
      %s182 = sphi 0, %s180
      %s183 = sphi 0, %s182
      %s197 = sphi 0, %s183
      %s201 = sphi 0, %s201
      %s203 = sphi 0, %s201
      %s204 = sphi 0, %s203
      %s218 = sphi 0, %s204
      %s224 = sphi 0, %s226
      %s227 = sphi 0, %s224
      %s228 = sphi 0, %s227
      %s244 = sphi 0, %s228
    $region4: #{tpu_custom_call.1} parent=1 // loop_header_branch
      %23 = sbr.rel (%p21) target = $region8
    $region5: #{tpu_custom_call.1} parent=1 // loop_body
      %s25 = ssub.s32 %s20, 1
      %s26 = ssub.s32 %s20, 2
      %s27 = sadd.s32 %s20, 1
      %s28 = ssub.s32 %s20, %s27
      %p29 = scmp.eq.s32.totalorder %s28, 0
      %s31 = sadd.s32 %s30, 1
      %s32 = scalar_select %p29, %s30, %s31
      %p35 = pneg %p29
      %p36 = scmp.eq.s32.totalorder %s20, 1
      %p37 = por %p35, %p36
      %p38 = scmp.ne.s32.totalorder %s30, %s33
      %p39 = scmp.eq.s32.totalorder %s20, 0
      %p40 = por %p38, %p39
      %p41 = scmp.ne.s32.totalorder %s30, %s33
      %p42 = scmp.eq.s32.totalorder %s25, 1
      %p43 = por %p41, %p42
      %p44 = scmp.ne.s32.totalorder %s33, %s34
      %p45 = scmp.eq.s32.totalorder %s25, 0
      %p46 = por %p44, %p45
      %p47 = scmp.ne.s32.totalorder %s33, %s34
      %p48 = scmp.eq.s32.totalorder %s26, 1
      %p49 = por %p47, %p48
      %p51 = scmp.ne.s32.totalorder %s34, %s50
      %p52 = scmp.eq.s32.totalorder %s26, 0
      %p53 = por %p51, %p52
      %s55 = sadd.s32 %s54, 1
      %p58 = scmp.eq.s32.totalorder %s20, 1
      %p59 = scmp.ne.s32.totalorder %s54, %s56
      %p60 = scmp.eq.s32.totalorder %s20, 0
      %p61 = por %p59, %p60
      %p62 = scmp.ne.s32.totalorder %s54, %s56
      %p63 = scmp.eq.s32.totalorder %s25, 1
      %p64 = por %p62, %p63
      %p65 = scmp.ne.s32.totalorder %s56, %s57
      %p66 = scmp.eq.s32.totalorder %s25, 0
      %p67 = por %p65, %p66
      %p68 = scmp.ne.s32.totalorder %s56, %s57
      %p69 = scmp.eq.s32.totalorder %s26, 1
      %p70 = por %p68, %p69
      %p72 = scmp.ne.s32.totalorder %s57, %s71
      %p73 = scmp.eq.s32.totalorder %s26, 0
      %p74 = por %p72, %p73
      %s76 = sadd.s32 %s75, 1
      %p79 = scmp.eq.s32.totalorder %s20, 1
      %p80 = scmp.ne.s32.totalorder %s75, %s77
      %p81 = scmp.eq.s32.totalorder %s20, 0
      %p82 = por %p80, %p81
      %p83 = scmp.ne.s32.totalorder %s75, %s77
      %p84 = scmp.eq.s32.totalorder %s25, 1
      %p85 = por %p83, %p84
      %p86 = scmp.ne.s32.totalorder %s77, %s78
      %p87 = scmp.eq.s32.totalorder %s25, 0
      %p88 = por %p86, %p87
      %p89 = scmp.ne.s32.totalorder %s77, %s78
      %p90 = scmp.eq.s32.totalorder %s26, 1
      %p91 = por %p89, %p90
      %p93 = scmp.ne.s32.totalorder %s78, %s92
      %p94 = scmp.eq.s32.totalorder %s26, 0
      %p95 = por %p93, %p94
      %s97 = sadd.s32 %s96, 1
      %p100 = scmp.eq.s32.totalorder %s20, 1
      %p101 = scmp.ne.s32.totalorder %s96, %s98
      %p102 = scmp.eq.s32.totalorder %s20, 0
      %p103 = por %p101, %p102
      %p104 = scmp.ne.s32.totalorder %s96, %s98
      %p105 = scmp.eq.s32.totalorder %s25, 1
      %p106 = por %p104, %p105
      %p107 = scmp.ne.s32.totalorder %s98, %s99
      %p108 = scmp.eq.s32.totalorder %s25, 0
      %p109 = por %p107, %p108
      %p110 = scmp.ne.s32.totalorder %s98, %s99
      %p111 = scmp.eq.s32.totalorder %s26, 1
      %p112 = por %p110, %p111
      %p114 = scmp.ne.s32.totalorder %s99, %s113
      %p115 = scmp.eq.s32.totalorder %s26, 0
      %p116 = por %p114, %p115
      %s118 = sadd.s32 %s117, 1
      %p121 = scmp.eq.s32.totalorder %s20, 1
      %p122 = scmp.ne.s32.totalorder %s117, %s119
      %p123 = scmp.eq.s32.totalorder %s20, 0
      %p124 = por %p122, %p123
      %p125 = scmp.ne.s32.totalorder %s117, %s119
      %p126 = scmp.eq.s32.totalorder %s25, 1
      %p127 = por %p125, %p126
      %p128 = scmp.ne.s32.totalorder %s119, %s120
      %p129 = scmp.eq.s32.totalorder %s25, 0
      %p130 = por %p128, %p129
      %p131 = scmp.ne.s32.totalorder %s119, %s120
      %p132 = scmp.eq.s32.totalorder %s26, 1
      %p133 = por %p131, %p132
      %p135 = scmp.ne.s32.totalorder %s120, %s134
      %p136 = scmp.eq.s32.totalorder %s26, 0
      %p137 = por %p135, %p136
      %s139 = sadd.s32 %s138, 1
      %p142 = scmp.eq.s32.totalorder %s20, 1
      %p143 = scmp.ne.s32.totalorder %s138, %s140
      %p144 = scmp.eq.s32.totalorder %s20, 0
      %p145 = por %p143, %p144
      %p146 = scmp.ne.s32.totalorder %s138, %s140
      %p147 = scmp.eq.s32.totalorder %s25, 1
      %p148 = por %p146, %p147
      %p149 = scmp.ne.s32.totalorder %s140, %s141
      %p150 = scmp.eq.s32.totalorder %s25, 0
      %p151 = por %p149, %p150
      %p152 = scmp.ne.s32.totalorder %s140, %s141
      %p153 = scmp.eq.s32.totalorder %s26, 1
      %p154 = por %p152, %p153
      %p156 = scmp.ne.s32.totalorder %s141, %s155
      %p157 = scmp.eq.s32.totalorder %s26, 0
      %p158 = por %p156, %p157
      %s160 = sadd.s32 %s159, 1
      %p163 = scmp.eq.s32.totalorder %s20, 1
      %p164 = scmp.ne.s32.totalorder %s159, %s161
      %p165 = scmp.eq.s32.totalorder %s20, 0
      %p166 = por %p164, %p165
      %p167 = scmp.ne.s32.totalorder %s159, %s161
      %p168 = scmp.eq.s32.totalorder %s25, 1
      %p169 = por %p167, %p168
      %p170 = scmp.ne.s32.totalorder %s161, %s162
      %p171 = scmp.eq.s32.totalorder %s25, 0
      %p172 = por %p170, %p171
      %p173 = scmp.ne.s32.totalorder %s161, %s162
      %p174 = scmp.eq.s32.totalorder %s26, 1
      %p175 = por %p173, %p174
      %p177 = scmp.ne.s32.totalorder %s162, %s176
      %p178 = scmp.eq.s32.totalorder %s26, 0
      %p179 = por %p177, %p178
      %s181 = sadd.s32 %s180, 1
      %p184 = scmp.eq.s32.totalorder %s20, 1
      %p185 = scmp.ne.s32.totalorder %s180, %s182
      %p186 = scmp.eq.s32.totalorder %s20, 0
      %p187 = por %p185, %p186
      %p188 = scmp.ne.s32.totalorder %s180, %s182
      %p189 = scmp.eq.s32.totalorder %s25, 1
      %p190 = por %p188, %p189
      %p191 = scmp.ne.s32.totalorder %s182, %s183
      %p192 = scmp.eq.s32.totalorder %s25, 0
      %p193 = por %p191, %p192
      %p194 = scmp.ne.s32.totalorder %s182, %s183
      %p195 = scmp.eq.s32.totalorder %s26, 1
      %p196 = por %p194, %p195
      %p198 = scmp.ne.s32.totalorder %s183, %s197
      %p199 = scmp.eq.s32.totalorder %s26, 0
      %p200 = por %p198, %p199
      %s202 = sadd.s32 %s201, 1
      %p205 = scmp.eq.s32.totalorder %s20, 1
      %p206 = scmp.ne.s32.totalorder %s201, %s203
      %p207 = scmp.eq.s32.totalorder %s20, 0
      %p208 = por %p206, %p207
      %p209 = scmp.ne.s32.totalorder %s201, %s203
      %p210 = scmp.eq.s32.totalorder %s25, 1
      %p211 = por %p209, %p210
      %p212 = scmp.ne.s32.totalorder %s203, %s204
      %p213 = scmp.eq.s32.totalorder %s25, 0
      %p214 = por %p212, %p213
      %p215 = scmp.ne.s32.totalorder %s203, %s204
      %p216 = scmp.eq.s32.totalorder %s26, 1
      %p217 = por %p215, %p216
      %p219 = scmp.ne.s32.totalorder %s204, %s218
      %p220 = scmp.eq.s32.totalorder %s26, 0
      %p221 = por %p219, %p220
      %s222 = ssub.s32 %s20, %s27
      %p223 = scmp.eq.s32.totalorder %s222, 0
      %s225 = sadd.s32 %s224, 1
      %s226 = scalar_select %p223, %s224, %s225
      %p229 = pneg %p223
      %p230 = scmp.eq.s32.totalorder %s20, 1
      %p231 = por %p229, %p230
      %p232 = scmp.ne.s32.totalorder %s224, %s227
      %p233 = scmp.eq.s32.totalorder %s20, 0
      %p234 = por %p232, %p233
      %p235 = scmp.ne.s32.totalorder %s224, %s227
      %p236 = scmp.eq.s32.totalorder %s25, 1
      %p237 = por %p235, %p236
      %p238 = scmp.ne.s32.totalorder %s227, %s228
      %p239 = scmp.eq.s32.totalorder %s25, 0
      %p240 = por %p238, %p239
      %p241 = scmp.ne.s32.totalorder %s227, %s228
      %p242 = scmp.eq.s32.totalorder %s26, 1
      %p243 = por %p241, %p242
      %p245 = scmp.ne.s32.totalorder %s228, %s244
      %p246 = scmp.eq.s32.totalorder %s26, 0
      %p247 = por %p245, %p246
      %p248 = scmp.le.s32.totalorder 1, %s20
      %p249 = scmp.lt.s32.totalorder %s20, 3
      %p250 = pnand %p248, %p249
      %p251 = pneg %p250
      // Predicated region
      $region9: #{tpu_custom_call.1} parent=5 // pred_check
        _
      $region10: #{tpu_custom_call.1} parent=5 // pred_check_branch
        %253 = sbr.rel (%p250) target = $region12
      $region11: #{tpu_custom_call.1} parent=5 // pred_region
        %s254 = ssub.s32 %s20, 1
        // Predicated region
        $region13: #{tpu_custom_call.1} parent=11 // pred_check
          %p255 = pneg %p67
        $region14: #{tpu_custom_call.1} parent=11 // pred_check_branch
          %257 = sbr.rel (%p255) target = $region16
        $region15: #{tpu_custom_call.1} parent=11 // pred_region
          _
        $region16: #{tpu_custom_call.1} parent=11 // pred_fallthru
          _
        // Predicated region
        $region17: #{tpu_custom_call.1} parent=11 // pred_check
          %p258 = pneg %p88
        $region18: #{tpu_custom_call.1} parent=11 // pred_check_branch
          %260 = sbr.rel (%p258) target = $region20
        $region19: #{tpu_custom_call.1} parent=11 // pred_region
          _
        $region20: #{tpu_custom_call.1} parent=11 // pred_fallthru
          _
        // Predicated region
        $region21: #{tpu_custom_call.1} parent=11 // pred_check
          %p261 = pneg %p109
        $region22: #{tpu_custom_call.1} parent=11 // pred_check_branch
          %263 = sbr.rel (%p261) target = $region24
        $region23: #{tpu_custom_call.1} parent=11 // pred_region
          _
        $region24: #{tpu_custom_call.1} parent=11 // pred_fallthru
          _
        // Predicated region
        $region25: #{tpu_custom_call.1} parent=11 // pred_check
          %p264 = pneg %p130
        $region26: #{tpu_custom_call.1} parent=11 // pred_check_branch
          %266 = sbr.rel (%p264) target = $region28
        $region27: #{tpu_custom_call.1} parent=11 // pred_region
          _
        $region28: #{tpu_custom_call.1} parent=11 // pred_fallthru
          _
        // Predicated region
        $region29: #{tpu_custom_call.1} parent=11 // pred_check
          %p267 = pneg %p151
        $region30: #{tpu_custom_call.1} parent=11 // pred_check_branch
          %269 = sbr.rel (%p267) target = $region32
        $region31: #{tpu_custom_call.1} parent=11 // pred_region
          _
        $region32: #{tpu_custom_call.1} parent=11 // pred_fallthru
          _
        // Predicated region
        $region33: #{tpu_custom_call.1} parent=11 // pred_check
          %p270 = pneg %p172
        $region34: #{tpu_custom_call.1} parent=11 // pred_check_branch
          %272 = sbr.rel (%p270) target = $region36
        $region35: #{tpu_custom_call.1} parent=11 // pred_region
          _
        $region36: #{tpu_custom_call.1} parent=11 // pred_fallthru
          _
        // Predicated region
        $region37: #{tpu_custom_call.1} parent=11 // pred_check
          %p273 = pneg %p193
        $region38: #{tpu_custom_call.1} parent=11 // pred_check_branch
          %275 = sbr.rel (%p273) target = $region40
        $region39: #{tpu_custom_call.1} parent=11 // pred_region
          _
        $region40: #{tpu_custom_call.1} parent=11 // pred_fallthru
          _
        // Predicated region
        $region41: #{tpu_custom_call.1} parent=11 // pred_check
          %p276 = pneg %p214
        $region42: #{tpu_custom_call.1} parent=11 // pred_check_branch
          %278 = sbr.rel (%p276) target = $region44
        $region43: #{tpu_custom_call.1} parent=11 // pred_region
          _
        $region44: #{tpu_custom_call.1} parent=11 // pred_fallthru
          _
      $region12: #{tpu_custom_call.1} parent=5 // pred_fallthru
        _
      %p279 = scmp.lt.s32.totalorder %s20, 2
      // Predicated region
      $region45: #{tpu_custom_call.1} parent=5 // pred_check
        %p280 = pneg %p279
      $region46: #{tpu_custom_call.1} parent=5 // pred_check_branch
        %282 = sbr.rel (%p280) target = $region48
      $region47: #{tpu_custom_call.1} parent=5 // pred_region
        // Predicated region
        $region49: #{tpu_custom_call.1} parent=47 // pred_check
          %p283 = pneg %p40
        $region50: #{tpu_custom_call.1} parent=47 // pred_check_branch
          %285 = sbr.rel (%p283) target = $region52
        $region51: #{tpu_custom_call.1} parent=47 // pred_region
          %p286 = scmp.lt.s32.totalorder %s20, 1
          %s287 = scalar_select %p286, %s20, 1
          %s288 = smul.addr %s287, 2
          %s289 = smul.addr %s288, 8
          %s290 = scalar_lea.vmem %s0, %s289
        $region52: #{tpu_custom_call.1} parent=47 // pred_fallthru
          _
      $region48: #{tpu_custom_call.1} parent=5 // pred_fallthru
        _
      %p291 = scmp.le.s32.totalorder 1, %s20
      %p292 = scmp.lt.s32.totalorder %s20, 3
      %p293 = pnand %p291, %p292
      %p294 = pneg %p293
      // Predicated region
      $region53: #{tpu_custom_call.1} parent=5 // pred_check
        _
      $region54: #{tpu_custom_call.1} parent=5 // pred_check_branch
        %296 = sbr.rel (%p293) target = $region56
      $region55: #{tpu_custom_call.1} parent=5 // pred_region
        %s297 = ssub.s32 %s20, 1
        %p298 = scmp.lt.s32.totalorder %s25, 1
        %s299 = scalar_select %p298, %s25, 1
        %s300 = smul.addr %s299, 2
        %s301 = smul.addr %s300, 8
        %s302 = scalar_lea.vmem %s0, %s301
        %p303 = pneg %p46
        %p304 = pneg %p43
        %p305 = pneg %p67
        %p306 = pneg %p64
        %p307 = pneg %p88
        %p308 = pneg %p85
        %p309 = pneg %p109
        %p310 = pneg %p106
        %p311 = pneg %p130
        %p312 = pneg %p127
        %p313 = pneg %p151
        %p314 = pneg %p148
        %p315 = pneg %p172
        %p316 = pneg %p169
        %p317 = pneg %p193
        %p318 = pneg %p190
        %p319 = pneg %p214
        %p320 = pneg %p211
        %p321 = pneg %p240
        %p322 = pneg %p237
        %s323 = sand.u32 %s227, 1
        %s324 = scalar_lea.sflag [#allocation9], %s323
        %s325 = sand.u32 %s227, 1
        %s326 = smul.addr %s325, 16
        %s327 = scalar_lea.vmem [#allocation8], %s326
        %p328 = scmp.lt.s32.totalorder %s25, 1
        %s329 = scalar_select %p328, %s25, 1
        %s330 = smul.addr %s329, 2
        %s331 = smul.addr %s330, 8
        %s332 = scalar_lea.vmem %s0, %s331
        %v333 = vld [vmem:[%s332] sm:$0xff]
        %v334 = vld [vmem:[%s332 + $0x8] sm:$0xff]
        %337 = vrot.lane.b32.xlu0 %v333, 1
        %v338 = vpop.permute.xlu0 %337
        %339 = vrot.lane.b32.xlu0 %v334, 1
        %v340 = vpop.permute.xlu0 %339
        %vm343 = vcmask 138248
        %344 = vst.msk [vmem:[#allocation2 + $0x1] sm:$0xff] %vm343, %v338
        %345 = vst.msk [vmem:[#allocation2 + $0x9] sm:$0xff] %vm343, %v340
        %vm346 = vcmask 132105
        %347 = vst.msk [vmem:[#allocation2 - $0x1] sm:$0x2] %vm346, %v338
        %vm348 = vcmask 137230
        %349 = vst.msk [vmem:[#allocation2 + $0xb] sm:$0x40] %vm348, %v340
        %v350 = vld [vmem:[#allocation2] sm:$0xff]
        %v351 = vld [vmem:[#allocation2 + $0x8] sm:$0xff]
        %v352 = vld [vmem:[#allocation2 + $0x10] sm:$0x3]
        %356 = vrot.lane.b32.xlu0 %v350, 126
        %v357 = vpop.permute.xlu0 %356
        %358 = vrot.lane.b32.xlu0 %v351, 126
        %v359 = vpop.permute.xlu0 %358
        %360 = vrot.lane.b32.xlu0 %v352, 126
        %v361 = vpop.permute.xlu0 %360
        %vm365 = vcmask 7168
        %366 = vst.msk [vmem:[#allocation2] sm:$0xff] %vm365, %v357
        %367 = vst.msk [vmem:[#allocation2 + $0x8] sm:$0xff] %vm365, %v359
        %vm368 = vcmask 1024
        %369 = vst.msk [vmem:[#allocation2 + $0x10] sm:$0x3] %vm368, %v361
        %v370 = vld [vmem:[#allocation2] sm:$0xff]
        %v371 = vld [vmem:[#allocation2 + $0x8] sm:$0xff]
        %v372 = vld [vmem:[#allocation2 + $0x10] sm:$0x3]
        %376 = vrot.lane.b32.xlu0 %v370, 2
        %v377 = vpop.permute.xlu0 %376
        %378 = vrot.lane.b32.xlu0 %v371, 2
        %v379 = vpop.permute.xlu0 %378
        %380 = vrot.lane.b32.xlu0 %v372, 2
        %v381 = vpop.permute.xlu0 %380
        %vm385 = vcmask 146568
        %386 = vst.msk [vmem:[#allocation2] sm:$0xff] %vm385, %v377
        %387 = vst.msk [vmem:[#allocation2 + $0x8] sm:$0xff] %vm385, %v379
        %vm388 = vcmask 140424
        %389 = vst.msk [vmem:[#allocation2 + $0x10] sm:$0x3] %vm388, %v381
        %v390 = vld [vmem:[%s1] sm:$0xff]
        %v391 = vld [vmem:[%s1 + $0x8] sm:$0x1]
        %v392 = vld [vmem:[#allocation2] sm:$0xff]
        %v393 = vld [vmem:[#allocation2 + $0x8] sm:$0xff]
        %v394 = vlaneseq
        %v395 = vshrl.u32 %v394, 7
        %v396 = vsub.s32 0, %v395
        %v397 = vrot.slane %v392, %v396
        %399 = vbcast.lane.b32.xlu0 %v397, 256
        %v400 = vpop.permute.xlu0 %399
        %s402 = sor.u32 256, 8
        %403 = vbcast.lane.b32.xlu0 %v397, %s402
        %v404 = vpop.permute.xlu0 %403
        %v405 = vlaneseq
        %v406 = vshrl.u32 %v405, 7
        %v407 = vsub.s32 1, %v406
        %v408 = vrot.slane %v392, %v407
        %410 = vbcast.lane.b32.xlu0 %v408, 256
        %v411 = vpop.permute.xlu0 %410
        %s413 = sor.u32 256, 8
        %414 = vbcast.lane.b32.xlu0 %v408, %s413
        %v415 = vpop.permute.xlu0 %414
        %v416 = vlaneseq
        %v417 = vshrl.u32 %v416, 7
        %v418 = vsub.s32 2, %v417
        %v419 = vrot.slane %v392, %v418
        %421 = vbcast.lane.b32.xlu0 %v419, 256
        %v422 = vpop.permute.xlu0 %421
        %s424 = sor.u32 256, 8
        %425 = vbcast.lane.b32.xlu0 %v419, %s424
        %v426 = vpop.permute.xlu0 %425
        %v427 = vlaneseq
        %v428 = vshrl.u32 %v427, 7
        %v429 = vsub.s32 3, %v428
        %v430 = vrot.slane %v392, %v429
        %432 = vbcast.lane.b32.xlu0 %v430, 256
        %v433 = vpop.permute.xlu0 %432
        %s435 = sor.u32 256, 8
        %436 = vbcast.lane.b32.xlu0 %v430, %s435
        %v437 = vpop.permute.xlu0 %436
        %v438 = vlaneseq
        %v439 = vshrl.u32 %v438, 7
        %v440 = vsub.s32 4, %v439
        %v441 = vrot.slane %v392, %v440
        %443 = vbcast.lane.b32.xlu0 %v441, 256
        %v444 = vpop.permute.xlu0 %443
        %s446 = sor.u32 256, 8
        %447 = vbcast.lane.b32.xlu0 %v441, %s446
        %v448 = vpop.permute.xlu0 %447
        %v449 = vlaneseq
        %v450 = vshrl.u32 %v449, 7
        %v451 = vsub.s32 5, %v450
        %v452 = vrot.slane %v392, %v451
        %454 = vbcast.lane.b32.xlu0 %v452, 256
        %v455 = vpop.permute.xlu0 %454
        %s457 = sor.u32 256, 8
        %458 = vbcast.lane.b32.xlu0 %v452, %s457
        %v459 = vpop.permute.xlu0 %458
        %v460 = vlaneseq
        %v461 = vshrl.u32 %v460, 7
        %v462 = vsub.s32 6, %v461
        %v463 = vrot.slane %v392, %v462
        %465 = vbcast.lane.b32.xlu0 %v463, 256
        %v466 = vpop.permute.xlu0 %465
        %s468 = sor.u32 256, 8
        %469 = vbcast.lane.b32.xlu0 %v463, %s468
        %v470 = vpop.permute.xlu0 %469
        %v471 = vlaneseq
        %v472 = vshrl.u32 %v471, 7
        %v473 = vsub.s32 7, %v472
        %v474 = vrot.slane %v392, %v473
        %476 = vbcast.lane.b32.xlu0 %v474, 256
        %v477 = vpop.permute.xlu0 %476
        %s479 = sor.u32 256, 8
        %480 = vbcast.lane.b32.xlu0 %v474, %s479
        %v481 = vpop.permute.xlu0 %480
        %v482 = vlaneseq
        %v483 = vshrl.u32 %v482, 7
        %v484 = vsub.s32 0, %v483
        %v485 = vrot.slane %v393, %v484
        %487 = vbcast.lane.b32.xlu0 %v485, 256
        %v488 = vpop.permute.xlu0 %487
        %s490 = sor.u32 256, 8
        %491 = vbcast.lane.b32.xlu0 %v485, %s490
        %v492 = vpop.permute.xlu0 %491
        %v493 = vlaneseq
        %v494 = vshrl.u32 %v493, 7
        %v495 = vsub.s32 1, %v494
        %v496 = vrot.slane %v393, %v495
        %498 = vbcast.lane.b32.xlu0 %v496, 256
        %v499 = vpop.permute.xlu0 %498
        %s501 = sor.u32 256, 8
        %502 = vbcast.lane.b32.xlu0 %v496, %s501
        %v503 = vpop.permute.xlu0 %502
        %v504 = vlaneseq
        %v505 = vshrl.u32 %v504, 7
        %v506 = vsub.s32 2, %v505
        %v507 = vrot.slane %v393, %v506
        %509 = vbcast.lane.b32.xlu0 %v507, 256
        %v510 = vpop.permute.xlu0 %509
        %s512 = sor.u32 256, 8
        %513 = vbcast.lane.b32.xlu0 %v507, %s512
        %v514 = vpop.permute.xlu0 %513
        %v515 = vlaneseq
        %v516 = vshrl.u32 %v515, 7
        %v517 = vsub.s32 3, %v516
        %v518 = vrot.slane %v393, %v517
        %520 = vbcast.lane.b32.xlu0 %v518, 256
        %v521 = vpop.permute.xlu0 %520
        %s523 = sor.u32 256, 8
        %524 = vbcast.lane.b32.xlu0 %v518, %s523
        %v525 = vpop.permute.xlu0 %524
        %v526 = vlaneseq
        %v527 = vshrl.u32 %v526, 7
        %v528 = vsub.s32 4, %v527
        %v529 = vrot.slane %v393, %v528
        %531 = vbcast.lane.b32.xlu0 %v529, 256
        %v532 = vpop.permute.xlu0 %531
        %s534 = sor.u32 256, 8
        %535 = vbcast.lane.b32.xlu0 %v529, %s534
        %v536 = vpop.permute.xlu0 %535
        %v537 = vlaneseq
        %v538 = vshrl.u32 %v537, 7
        %v539 = vsub.s32 5, %v538
        %v540 = vrot.slane %v393, %v539
        %542 = vbcast.lane.b32.xlu0 %v540, 256
        %v543 = vpop.permute.xlu0 %542
        %s545 = sor.u32 256, 8
        %546 = vbcast.lane.b32.xlu0 %v540, %s545
        %v547 = vpop.permute.xlu0 %546
        %v548 = vlaneseq
        %v549 = vshrl.u32 %v548, 7
        %v550 = vsub.s32 6, %v549
        %v551 = vrot.slane %v393, %v550
        %553 = vbcast.lane.b32.xlu0 %v551, 256
        %v554 = vpop.permute.xlu0 %553
        %s556 = sor.u32 256, 8
        %557 = vbcast.lane.b32.xlu0 %v551, %s556
        %v558 = vpop.permute.xlu0 %557
        %v559 = vlaneseq
        %v560 = vshrl.u32 %v559, 7
        %v561 = vsub.s32 7, %v560
        %v562 = vrot.slane %v393, %v561
        %564 = vbcast.lane.b32.xlu0 %v562, 256
        %v565 = vpop.permute.xlu0 %564
        %s567 = sor.u32 256, 8
        %568 = vbcast.lane.b32.xlu0 %v562, %s567
        %v569 = vpop.permute.xlu0 %568
        %v570 = vlaneseq
        %v571 = vshrl.u32 %v570, 7
        %v572 = vsub.s32 0, %v571
        %v573 = vrot.slane %v390, %v572
        %v574 = vmul.f32 %v400, %v573
        %v575 = vmul.f32 %v404, %v573
        %v576 = vmul.f32 %v411, %v573
        %v577 = vmul.f32 %v415, %v573
        %v578 = vmul.f32 %v422, %v573
        %v579 = vmul.f32 %v426, %v573
        %v580 = vmul.f32 %v433, %v573
        %v581 = vmul.f32 %v437, %v573
        %v582 = vmul.f32 %v444, %v573
        %v583 = vmul.f32 %v448, %v573
        %v584 = vmul.f32 %v455, %v573
        %v585 = vmul.f32 %v459, %v573
        %v586 = vmul.f32 %v466, %v573
        %v587 = vmul.f32 %v470, %v573
        %v588 = vmul.f32 %v477, %v573
        %v589 = vmul.f32 %v481, %v573
        %v590 = vmul.f32 %v488, %v573
        %v591 = vmul.f32 %v492, %v573
        %v592 = vmul.f32 %v499, %v573
        %v593 = vmul.f32 %v503, %v573
        %v594 = vmul.f32 %v510, %v573
        %v595 = vmul.f32 %v514, %v573
        %v596 = vmul.f32 %v521, %v573
        %v597 = vmul.f32 %v525, %v573
        %v598 = vmul.f32 %v532, %v573
        %v599 = vmul.f32 %v536, %v573
        %v600 = vmul.f32 %v543, %v573
        %v601 = vmul.f32 %v547, %v573
        %v602 = vmul.f32 %v554, %v573
        %v603 = vmul.f32 %v558, %v573
        %v604 = vmul.f32 %v565, %v573
        %v605 = vmul.f32 %v569, %v573
        %s607 = sor.u32 256, 1
        %608 = vbcast.lane.b32.xlu0 %v397, %s607
        %v609 = vpop.permute.xlu0 %608
        %s611 = sor.u32 256, 9
        %612 = vbcast.lane.b32.xlu0 %v397, %s611
        %v613 = vpop.permute.xlu0 %612
        %s615 = sor.u32 256, 1
        %616 = vbcast.lane.b32.xlu0 %v408, %s615
        %v617 = vpop.permute.xlu0 %616
        %s619 = sor.u32 256, 9
        %620 = vbcast.lane.b32.xlu0 %v408, %s619
        %v621 = vpop.permute.xlu0 %620
        %s623 = sor.u32 256, 1
        %624 = vbcast.lane.b32.xlu0 %v419, %s623
        %v625 = vpop.permute.xlu0 %624
        %s627 = sor.u32 256, 9
        %628 = vbcast.lane.b32.xlu0 %v419, %s627
        %v629 = vpop.permute.xlu0 %628
        %s631 = sor.u32 256, 1
        %632 = vbcast.lane.b32.xlu0 %v430, %s631
        %v633 = vpop.permute.xlu0 %632
        %s635 = sor.u32 256, 9
        %636 = vbcast.lane.b32.xlu0 %v430, %s635
        %v637 = vpop.permute.xlu0 %636
        %s639 = sor.u32 256, 1
        %640 = vbcast.lane.b32.xlu0 %v441, %s639
        %v641 = vpop.permute.xlu0 %640
        %s643 = sor.u32 256, 9
        %644 = vbcast.lane.b32.xlu0 %v441, %s643
        %v645 = vpop.permute.xlu0 %644
        %s647 = sor.u32 256, 1
        %648 = vbcast.lane.b32.xlu0 %v452, %s647
        %v649 = vpop.permute.xlu0 %648
        %s651 = sor.u32 256, 9
        %652 = vbcast.lane.b32.xlu0 %v452, %s651
        %v653 = vpop.permute.xlu0 %652
        %s655 = sor.u32 256, 1
        %656 = vbcast.lane.b32.xlu0 %v463, %s655
        %v657 = vpop.permute.xlu0 %656
        %s659 = sor.u32 256, 9
        %660 = vbcast.lane.b32.xlu0 %v463, %s659
        %v661 = vpop.permute.xlu0 %660
        %s663 = sor.u32 256, 1
        %664 = vbcast.lane.b32.xlu0 %v474, %s663
        %v665 = vpop.permute.xlu0 %664
        %s667 = sor.u32 256, 9
        %668 = vbcast.lane.b32.xlu0 %v474, %s667
        %v669 = vpop.permute.xlu0 %668
        %s671 = sor.u32 256, 1
        %672 = vbcast.lane.b32.xlu0 %v485, %s671
        %v673 = vpop.permute.xlu0 %672
        %s675 = sor.u32 256, 9
        %676 = vbcast.lane.b32.xlu0 %v485, %s675
        %v677 = vpop.permute.xlu0 %676
        %s679 = sor.u32 256, 1
        %680 = vbcast.lane.b32.xlu0 %v496, %s679
        %v681 = vpop.permute.xlu0 %680
        %s683 = sor.u32 256, 9
        %684 = vbcast.lane.b32.xlu0 %v496, %s683
        %v685 = vpop.permute.xlu0 %684
        %s687 = sor.u32 256, 1
        %688 = vbcast.lane.b32.xlu0 %v507, %s687
        %v689 = vpop.permute.xlu0 %688
        %s691 = sor.u32 256, 9
        %692 = vbcast.lane.b32.xlu0 %v507, %s691
        %v693 = vpop.permute.xlu0 %692
        %s695 = sor.u32 256, 1
        %696 = vbcast.lane.b32.xlu0 %v518, %s695
        %v697 = vpop.permute.xlu0 %696
        %s699 = sor.u32 256, 9
        %700 = vbcast.lane.b32.xlu0 %v518, %s699
        %v701 = vpop.permute.xlu0 %700
        %s703 = sor.u32 256, 1
        %704 = vbcast.lane.b32.xlu0 %v529, %s703
        %v705 = vpop.permute.xlu0 %704
        %s707 = sor.u32 256, 9
        %708 = vbcast.lane.b32.xlu0 %v529, %s707
        %v709 = vpop.permute.xlu0 %708
        %s711 = sor.u32 256, 1
        %712 = vbcast.lane.b32.xlu0 %v540, %s711
        %v713 = vpop.permute.xlu0 %712
        %s715 = sor.u32 256, 9
        %716 = vbcast.lane.b32.xlu0 %v540, %s715
        %v717 = vpop.permute.xlu0 %716
        %s719 = sor.u32 256, 1
        %720 = vbcast.lane.b32.xlu0 %v551, %s719
        %v721 = vpop.permute.xlu0 %720
        %s723 = sor.u32 256, 9
        %724 = vbcast.lane.b32.xlu0 %v551, %s723
        %v725 = vpop.permute.xlu0 %724
        %s727 = sor.u32 256, 1
        %728 = vbcast.lane.b32.xlu0 %v562, %s727
        %v729 = vpop.permute.xlu0 %728
        %s731 = sor.u32 256, 9
        %732 = vbcast.lane.b32.xlu0 %v562, %s731
        %v733 = vpop.permute.xlu0 %732
        %v734 = vlaneseq
        %v735 = vshrl.u32 %v734, 7
        %v736 = vsub.s32 1, %v735
        %v737 = vrot.slane %v390, %v736
        %v738 = vmul.f32 %v609, %v737
        %v739 = vmul.f32 %v613, %v737
        %v740 = vmul.f32 %v617, %v737
        %v741 = vmul.f32 %v621, %v737
        %v742 = vmul.f32 %v625, %v737
        %v743 = vmul.f32 %v629, %v737
        %v744 = vmul.f32 %v633, %v737
        %v745 = vmul.f32 %v637, %v737
        %v746 = vmul.f32 %v641, %v737
        %v747 = vmul.f32 %v645, %v737
        %v748 = vmul.f32 %v649, %v737
        %v749 = vmul.f32 %v653, %v737
        %v750 = vmul.f32 %v657, %v737
        %v751 = vmul.f32 %v661, %v737
        %v752 = vmul.f32 %v665, %v737
        %v753 = vmul.f32 %v669, %v737
        %v754 = vmul.f32 %v673, %v737
        %v755 = vmul.f32 %v677, %v737
        %v756 = vmul.f32 %v681, %v737
        %v757 = vmul.f32 %v685, %v737
        %v758 = vmul.f32 %v689, %v737
        %v759 = vmul.f32 %v693, %v737
        %v760 = vmul.f32 %v697, %v737
        %v761 = vmul.f32 %v701, %v737
        %v762 = vmul.f32 %v705, %v737
        %v763 = vmul.f32 %v709, %v737
        %v764 = vmul.f32 %v713, %v737
        %v765 = vmul.f32 %v717, %v737
        %v766 = vmul.f32 %v721, %v737
        %v767 = vmul.f32 %v725, %v737
        %v768 = vmul.f32 %v729, %v737
        %v769 = vmul.f32 %v733, %v737
        %v770 = vadd.f32 %v574, %v738
        %v771 = vadd.f32 %v575, %v739
        %v772 = vadd.f32 %v576, %v740
        %v773 = vadd.f32 %v577, %v741
        %v774 = vadd.f32 %v578, %v742
        %v775 = vadd.f32 %v579, %v743
        %v776 = vadd.f32 %v580, %v744
        %v777 = vadd.f32 %v581, %v745
        %v778 = vadd.f32 %v582, %v746
        %v779 = vadd.f32 %v583, %v747
        %v780 = vadd.f32 %v584, %v748
        %v781 = vadd.f32 %v585, %v749
        %v782 = vadd.f32 %v586, %v750
        %v783 = vadd.f32 %v587, %v751
        %v784 = vadd.f32 %v588, %v752
        %v785 = vadd.f32 %v589, %v753
        %v786 = vadd.f32 %v590, %v754
        %v787 = vadd.f32 %v591, %v755
        %v788 = vadd.f32 %v592, %v756
        %v789 = vadd.f32 %v593, %v757
        %v790 = vadd.f32 %v594, %v758
        %v791 = vadd.f32 %v595, %v759
        %v792 = vadd.f32 %v596, %v760
        %v793 = vadd.f32 %v597, %v761
        %v794 = vadd.f32 %v598, %v762
        %v795 = vadd.f32 %v599, %v763
        %v796 = vadd.f32 %v600, %v764
        %v797 = vadd.f32 %v601, %v765
        %v798 = vadd.f32 %v602, %v766
        %v799 = vadd.f32 %v603, %v767
        %v800 = vadd.f32 %v604, %v768
        %v801 = vadd.f32 %v605, %v769
        %s803 = sor.u32 256, 2
        %804 = vbcast.lane.b32.xlu0 %v397, %s803
        %v805 = vpop.permute.xlu0 %804
        %s807 = sor.u32 256, 10
        %808 = vbcast.lane.b32.xlu0 %v397, %s807
        %v809 = vpop.permute.xlu0 %808
        %s811 = sor.u32 256, 2
        %812 = vbcast.lane.b32.xlu0 %v408, %s811
        %v813 = vpop.permute.xlu0 %812
        %s815 = sor.u32 256, 10
        %816 = vbcast.lane.b32.xlu0 %v408, %s815
        %v817 = vpop.permute.xlu0 %816
        %s819 = sor.u32 256, 2
        %820 = vbcast.lane.b32.xlu0 %v419, %s819
        %v821 = vpop.permute.xlu0 %820
        %s823 = sor.u32 256, 10
        %824 = vbcast.lane.b32.xlu0 %v419, %s823
        %v825 = vpop.permute.xlu0 %824
        %s827 = sor.u32 256, 2
        %828 = vbcast.lane.b32.xlu0 %v430, %s827
        %v829 = vpop.permute.xlu0 %828
        %s831 = sor.u32 256, 10
        %832 = vbcast.lane.b32.xlu0 %v430, %s831
        %v833 = vpop.permute.xlu0 %832
        %s835 = sor.u32 256, 2
        %836 = vbcast.lane.b32.xlu0 %v441, %s835
        %v837 = vpop.permute.xlu0 %836
        %s839 = sor.u32 256, 10
        %840 = vbcast.lane.b32.xlu0 %v441, %s839
        %v841 = vpop.permute.xlu0 %840
        %s843 = sor.u32 256, 2
        %844 = vbcast.lane.b32.xlu0 %v452, %s843
        %v845 = vpop.permute.xlu0 %844
        %s847 = sor.u32 256, 10
        %848 = vbcast.lane.b32.xlu0 %v452, %s847
        %v849 = vpop.permute.xlu0 %848
        %s851 = sor.u32 256, 2
        %852 = vbcast.lane.b32.xlu0 %v463, %s851
        %v853 = vpop.permute.xlu0 %852
        %s855 = sor.u32 256, 10
        %856 = vbcast.lane.b32.xlu0 %v463, %s855
        %v857 = vpop.permute.xlu0 %856
        %s859 = sor.u32 256, 2
        %860 = vbcast.lane.b32.xlu0 %v474, %s859
        %v861 = vpop.permute.xlu0 %860
        %s863 = sor.u32 256, 10
        %864 = vbcast.lane.b32.xlu0 %v474, %s863
        %v865 = vpop.permute.xlu0 %864
        %s867 = sor.u32 256, 2
        %868 = vbcast.lane.b32.xlu0 %v485, %s867
        %v869 = vpop.permute.xlu0 %868
        %s871 = sor.u32 256, 10
        %872 = vbcast.lane.b32.xlu0 %v485, %s871
        %v873 = vpop.permute.xlu0 %872
        %s875 = sor.u32 256, 2
        %876 = vbcast.lane.b32.xlu0 %v496, %s875
        %v877 = vpop.permute.xlu0 %876
        %s879 = sor.u32 256, 10
        %880 = vbcast.lane.b32.xlu0 %v496, %s879
        %v881 = vpop.permute.xlu0 %880
        %s883 = sor.u32 256, 2
        %884 = vbcast.lane.b32.xlu0 %v507, %s883
        %v885 = vpop.permute.xlu0 %884
        %s887 = sor.u32 256, 10
        %888 = vbcast.lane.b32.xlu0 %v507, %s887
        %v889 = vpop.permute.xlu0 %888
        %s891 = sor.u32 256, 2
        %892 = vbcast.lane.b32.xlu0 %v518, %s891
        %v893 = vpop.permute.xlu0 %892
        %s895 = sor.u32 256, 10
        %896 = vbcast.lane.b32.xlu0 %v518, %s895
        %v897 = vpop.permute.xlu0 %896
        %s899 = sor.u32 256, 2
        %900 = vbcast.lane.b32.xlu0 %v529, %s899
        %v901 = vpop.permute.xlu0 %900
        %s903 = sor.u32 256, 10
        %904 = vbcast.lane.b32.xlu0 %v529, %s903
        %v905 = vpop.permute.xlu0 %904
        %s907 = sor.u32 256, 2
        %908 = vbcast.lane.b32.xlu0 %v540, %s907
        %v909 = vpop.permute.xlu0 %908
        %s911 = sor.u32 256, 10
        %912 = vbcast.lane.b32.xlu0 %v540, %s911
        %v913 = vpop.permute.xlu0 %912
        %s915 = sor.u32 256, 2
        %916 = vbcast.lane.b32.xlu0 %v551, %s915
        %v917 = vpop.permute.xlu0 %916
        %s919 = sor.u32 256, 10
        %920 = vbcast.lane.b32.xlu0 %v551, %s919
        %v921 = vpop.permute.xlu0 %920
        %s923 = sor.u32 256, 2
        %924 = vbcast.lane.b32.xlu0 %v562, %s923
        %v925 = vpop.permute.xlu0 %924
        %s927 = sor.u32 256, 10
        %928 = vbcast.lane.b32.xlu0 %v562, %s927
        %v929 = vpop.permute.xlu0 %928
        %v930 = vlaneseq
        %v931 = vshrl.u32 %v930, 7
        %v932 = vsub.s32 2, %v931
        %v933 = vrot.slane %v390, %v932
        %v934 = vmul.f32 %v805, %v933
        %v935 = vmul.f32 %v809, %v933
        %v936 = vmul.f32 %v813, %v933
        %v937 = vmul.f32 %v817, %v933
        %v938 = vmul.f32 %v821, %v933
        %v939 = vmul.f32 %v825, %v933
        %v940 = vmul.f32 %v829, %v933
        %v941 = vmul.f32 %v833, %v933
        %v942 = vmul.f32 %v837, %v933
        %v943 = vmul.f32 %v841, %v933
        %v944 = vmul.f32 %v845, %v933
        %v945 = vmul.f32 %v849, %v933
        %v946 = vmul.f32 %v853, %v933
        %v947 = vmul.f32 %v857, %v933
        %v948 = vmul.f32 %v861, %v933
        %v949 = vmul.f32 %v865, %v933
        %v950 = vmul.f32 %v869, %v933
        %v951 = vmul.f32 %v873, %v933
        %v952 = vmul.f32 %v877, %v933
        %v953 = vmul.f32 %v881, %v933
        %v954 = vmul.f32 %v885, %v933
        %v955 = vmul.f32 %v889, %v933
        %v956 = vmul.f32 %v893, %v933
        %v957 = vmul.f32 %v897, %v933
        %v958 = vmul.f32 %v901, %v933
        %v959 = vmul.f32 %v905, %v933
        %v960 = vmul.f32 %v909, %v933
        %v961 = vmul.f32 %v913, %v933
        %v962 = vmul.f32 %v917, %v933
        %v963 = vmul.f32 %v921, %v933
        %v964 = vmul.f32 %v925, %v933
        %v965 = vmul.f32 %v929, %v933
        %v966 = vadd.f32 %v770, %v934
        %v967 = vadd.f32 %v771, %v935
        %v968 = vadd.f32 %v772, %v936
        %v969 = vadd.f32 %v773, %v937
        %v970 = vadd.f32 %v774, %v938
        %v971 = vadd.f32 %v775, %v939
        %v972 = vadd.f32 %v776, %v940
        %v973 = vadd.f32 %v777, %v941
        %v974 = vadd.f32 %v778, %v942
        %v975 = vadd.f32 %v779, %v943
        %v976 = vadd.f32 %v780, %v944
        %v977 = vadd.f32 %v781, %v945
        %v978 = vadd.f32 %v782, %v946
        %v979 = vadd.f32 %v783, %v947
        %v980 = vadd.f32 %v784, %v948
        %v981 = vadd.f32 %v785, %v949
        %v982 = vadd.f32 %v786, %v950
        %v983 = vadd.f32 %v787, %v951
        %v984 = vadd.f32 %v788, %v952
        %v985 = vadd.f32 %v789, %v953
        %v986 = vadd.f32 %v790, %v954
        %v987 = vadd.f32 %v791, %v955
        %v988 = vadd.f32 %v792, %v956
        %v989 = vadd.f32 %v793, %v957
        %v990 = vadd.f32 %v794, %v958
        %v991 = vadd.f32 %v795, %v959
        %v992 = vadd.f32 %v796, %v960
        %v993 = vadd.f32 %v797, %v961
        %v994 = vadd.f32 %v798, %v962
        %v995 = vadd.f32 %v799, %v963
        %v996 = vadd.f32 %v800, %v964
        %v997 = vadd.f32 %v801, %v965
        %v998 = vld [vmem:[#allocation2 + $0x1] sm:$0xff]
        %v999 = vld [vmem:[#allocation2 + $0x9] sm:$0xff]
        %v1000 = vlaneseq
        %v1001 = vshrl.u32 %v1000, 7
        %v1002 = vsub.s32 0, %v1001
        %v1003 = vrot.slane %v998, %v1002
        %1005 = vbcast.lane.b32.xlu0 %v1003, 256
        %v1006 = vpop.permute.xlu0 %1005
        %s1008 = sor.u32 256, 8
        %1009 = vbcast.lane.b32.xlu0 %v1003, %s1008
        %v1010 = vpop.permute.xlu0 %1009
        %v1011 = vlaneseq
        %v1012 = vshrl.u32 %v1011, 7
        %v1013 = vsub.s32 1, %v1012
        %v1014 = vrot.slane %v998, %v1013
        %1016 = vbcast.lane.b32.xlu0 %v1014, 256
        %v1017 = vpop.permute.xlu0 %1016
        %s1019 = sor.u32 256, 8
        %1020 = vbcast.lane.b32.xlu0 %v1014, %s1019
        %v1021 = vpop.permute.xlu0 %1020
        %v1022 = vlaneseq
        %v1023 = vshrl.u32 %v1022, 7
        %v1024 = vsub.s32 2, %v1023
        %v1025 = vrot.slane %v998, %v1024
        %1027 = vbcast.lane.b32.xlu0 %v1025, 256
        %v1028 = vpop.permute.xlu0 %1027
        %s1030 = sor.u32 256, 8
        %1031 = vbcast.lane.b32.xlu0 %v1025, %s1030
        %v1032 = vpop.permute.xlu0 %1031
        %v1033 = vlaneseq
        %v1034 = vshrl.u32 %v1033, 7
        %v1035 = vsub.s32 3, %v1034
        %v1036 = vrot.slane %v998, %v1035
        %1038 = vbcast.lane.b32.xlu0 %v1036, 256
        %v1039 = vpop.permute.xlu0 %1038
        %s1041 = sor.u32 256, 8
        %1042 = vbcast.lane.b32.xlu0 %v1036, %s1041
        %v1043 = vpop.permute.xlu0 %1042
        %v1044 = vlaneseq
        %v1045 = vshrl.u32 %v1044, 7
        %v1046 = vsub.s32 4, %v1045
        %v1047 = vrot.slane %v998, %v1046
        %1049 = vbcast.lane.b32.xlu0 %v1047, 256
        %v1050 = vpop.permute.xlu0 %1049
        %s1052 = sor.u32 256, 8
        %1053 = vbcast.lane.b32.xlu0 %v1047, %s1052
        %v1054 = vpop.permute.xlu0 %1053
        %v1055 = vlaneseq
        %v1056 = vshrl.u32 %v1055, 7
        %v1057 = vsub.s32 5, %v1056
        %v1058 = vrot.slane %v998, %v1057
        %1060 = vbcast.lane.b32.xlu0 %v1058, 256
        %v1061 = vpop.permute.xlu0 %1060
        %s1063 = sor.u32 256, 8
        %1064 = vbcast.lane.b32.xlu0 %v1058, %s1063
        %v1065 = vpop.permute.xlu0 %1064
        %v1066 = vlaneseq
        %v1067 = vshrl.u32 %v1066, 7
        %v1068 = vsub.s32 6, %v1067
        %v1069 = vrot.slane %v998, %v1068
        %1071 = vbcast.lane.b32.xlu0 %v1069, 256
        %v1072 = vpop.permute.xlu0 %1071
        %s1074 = sor.u32 256, 8
        %1075 = vbcast.lane.b32.xlu0 %v1069, %s1074
        %v1076 = vpop.permute.xlu0 %1075
        %v1077 = vlaneseq
        %v1078 = vshrl.u32 %v1077, 7
        %v1079 = vsub.s32 7, %v1078
        %v1080 = vrot.slane %v998, %v1079
        %1082 = vbcast.lane.b32.xlu0 %v1080, 256
        %v1083 = vpop.permute.xlu0 %1082
        %s1085 = sor.u32 256, 8
        %1086 = vbcast.lane.b32.xlu0 %v1080, %s1085
        %v1087 = vpop.permute.xlu0 %1086
        %v1088 = vlaneseq
        %v1089 = vshrl.u32 %v1088, 7
        %v1090 = vsub.s32 0, %v1089
        %v1091 = vrot.slane %v999, %v1090
        %1093 = vbcast.lane.b32.xlu0 %v1091, 256
        %v1094 = vpop.permute.xlu0 %1093
        %s1096 = sor.u32 256, 8
        %1097 = vbcast.lane.b32.xlu0 %v1091, %s1096
        %v1098 = vpop.permute.xlu0 %1097
        %v1099 = vlaneseq
        %v1100 = vshrl.u32 %v1099, 7
        %v1101 = vsub.s32 1, %v1100
        %v1102 = vrot.slane %v999, %v1101
        %1104 = vbcast.lane.b32.xlu0 %v1102, 256
        %v1105 = vpop.permute.xlu0 %1104
        %s1107 = sor.u32 256, 8
        %1108 = vbcast.lane.b32.xlu0 %v1102, %s1107
        %v1109 = vpop.permute.xlu0 %1108
        %v1110 = vlaneseq
        %v1111 = vshrl.u32 %v1110, 7
        %v1112 = vsub.s32 2, %v1111
        %v1113 = vrot.slane %v999, %v1112
        %1115 = vbcast.lane.b32.xlu0 %v1113, 256
        %v1116 = vpop.permute.xlu0 %1115
        %s1118 = sor.u32 256, 8
        %1119 = vbcast.lane.b32.xlu0 %v1113, %s1118
        %v1120 = vpop.permute.xlu0 %1119
        %v1121 = vlaneseq
        %v1122 = vshrl.u32 %v1121, 7
        %v1123 = vsub.s32 3, %v1122
        %v1124 = vrot.slane %v999, %v1123
        %1126 = vbcast.lane.b32.xlu0 %v1124, 256
        %v1127 = vpop.permute.xlu0 %1126
        %s1129 = sor.u32 256, 8
        %1130 = vbcast.lane.b32.xlu0 %v1124, %s1129
        %v1131 = vpop.permute.xlu0 %1130
        %v1132 = vlaneseq
        %v1133 = vshrl.u32 %v1132, 7
        %v1134 = vsub.s32 4, %v1133
        %v1135 = vrot.slane %v999, %v1134
        %1137 = vbcast.lane.b32.xlu0 %v1135, 256
        %v1138 = vpop.permute.xlu0 %1137
        %s1140 = sor.u32 256, 8
        %1141 = vbcast.lane.b32.xlu0 %v1135, %s1140
        %v1142 = vpop.permute.xlu0 %1141
        %v1143 = vlaneseq
        %v1144 = vshrl.u32 %v1143, 7
        %v1145 = vsub.s32 5, %v1144
        %v1146 = vrot.slane %v999, %v1145
        %1148 = vbcast.lane.b32.xlu0 %v1146, 256
        %v1149 = vpop.permute.xlu0 %1148
        %s1151 = sor.u32 256, 8
        %1152 = vbcast.lane.b32.xlu0 %v1146, %s1151
        %v1153 = vpop.permute.xlu0 %1152
        %v1154 = vlaneseq
        %v1155 = vshrl.u32 %v1154, 7
        %v1156 = vsub.s32 6, %v1155
        %v1157 = vrot.slane %v999, %v1156
        %1159 = vbcast.lane.b32.xlu0 %v1157, 256
        %v1160 = vpop.permute.xlu0 %1159
        %s1162 = sor.u32 256, 8
        %1163 = vbcast.lane.b32.xlu0 %v1157, %s1162
        %v1164 = vpop.permute.xlu0 %1163
        %v1165 = vlaneseq
        %v1166 = vshrl.u32 %v1165, 7
        %v1167 = vsub.s32 7, %v1166
        %v1168 = vrot.slane %v999, %v1167
        %1170 = vbcast.lane.b32.xlu0 %v1168, 256
        %v1171 = vpop.permute.xlu0 %1170
        %s1173 = sor.u32 256, 8
        %1174 = vbcast.lane.b32.xlu0 %v1168, %s1173
        %v1175 = vpop.permute.xlu0 %1174
        %v1176 = vlaneseq
        %v1177 = vshrl.u32 %v1176, 7
        %v1178 = vsub.s32 3, %v1177
        %v1179 = vrot.slane %v390, %v1178
        %v1180 = vmul.f32 %v1006, %v1179
        %v1181 = vmul.f32 %v1010, %v1179
        %v1182 = vmul.f32 %v1017, %v1179
        %v1183 = vmul.f32 %v1021, %v1179
        %v1184 = vmul.f32 %v1028, %v1179
        %v1185 = vmul.f32 %v1032, %v1179
        %v1186 = vmul.f32 %v1039, %v1179
        %v1187 = vmul.f32 %v1043, %v1179
        %v1188 = vmul.f32 %v1050, %v1179
        %v1189 = vmul.f32 %v1054, %v1179
        %v1190 = vmul.f32 %v1061, %v1179
        %v1191 = vmul.f32 %v1065, %v1179
        %v1192 = vmul.f32 %v1072, %v1179
        %v1193 = vmul.f32 %v1076, %v1179
        %v1194 = vmul.f32 %v1083, %v1179
        %v1195 = vmul.f32 %v1087, %v1179
        %v1196 = vmul.f32 %v1094, %v1179
        %v1197 = vmul.f32 %v1098, %v1179
        %v1198 = vmul.f32 %v1105, %v1179
        %v1199 = vmul.f32 %v1109, %v1179
        %v1200 = vmul.f32 %v1116, %v1179
        %v1201 = vmul.f32 %v1120, %v1179
        %v1202 = vmul.f32 %v1127, %v1179
        %v1203 = vmul.f32 %v1131, %v1179
        %v1204 = vmul.f32 %v1138, %v1179
        %v1205 = vmul.f32 %v1142, %v1179
        %v1206 = vmul.f32 %v1149, %v1179
        %v1207 = vmul.f32 %v1153, %v1179
        %v1208 = vmul.f32 %v1160, %v1179
        %v1209 = vmul.f32 %v1164, %v1179
        %v1210 = vmul.f32 %v1171, %v1179
        %v1211 = vmul.f32 %v1175, %v1179
        %v1212 = vadd.f32 %v966, %v1180
        %v1213 = vadd.f32 %v967, %v1181
        %v1214 = vadd.f32 %v968, %v1182
        %v1215 = vadd.f32 %v969, %v1183
        %v1216 = vadd.f32 %v970, %v1184
        %v1217 = vadd.f32 %v971, %v1185
        %v1218 = vadd.f32 %v972, %v1186
        %v1219 = vadd.f32 %v973, %v1187
        %v1220 = vadd.f32 %v974, %v1188
        %v1221 = vadd.f32 %v975, %v1189
        %v1222 = vadd.f32 %v976, %v1190
        %v1223 = vadd.f32 %v977, %v1191
        %v1224 = vadd.f32 %v978, %v1192
        %v1225 = vadd.f32 %v979, %v1193
        %v1226 = vadd.f32 %v980, %v1194
        %v1227 = vadd.f32 %v981, %v1195
        %v1228 = vadd.f32 %v982, %v1196
        %v1229 = vadd.f32 %v983, %v1197
        %v1230 = vadd.f32 %v984, %v1198
        %v1231 = vadd.f32 %v985, %v1199
        %v1232 = vadd.f32 %v986, %v1200
        %v1233 = vadd.f32 %v987, %v1201
        %v1234 = vadd.f32 %v988, %v1202
        %v1235 = vadd.f32 %v989, %v1203
        %v1236 = vadd.f32 %v990, %v1204
        %v1237 = vadd.f32 %v991, %v1205
        %v1238 = vadd.f32 %v992, %v1206
        %v1239 = vadd.f32 %v993, %v1207
        %v1240 = vadd.f32 %v994, %v1208
        %v1241 = vadd.f32 %v995, %v1209
        %v1242 = vadd.f32 %v996, %v1210
        %v1243 = vadd.f32 %v997, %v1211
        %s1245 = sor.u32 256, 1
        %1246 = vbcast.lane.b32.xlu0 %v1003, %s1245
        %v1247 = vpop.permute.xlu0 %1246
        %s1249 = sor.u32 256, 9
        %1250 = vbcast.lane.b32.xlu0 %v1003, %s1249
        %v1251 = vpop.permute.xlu0 %1250
        %s1253 = sor.u32 256, 1
        %1254 = vbcast.lane.b32.xlu0 %v1014, %s1253
        %v1255 = vpop.permute.xlu0 %1254
        %s1257 = sor.u32 256, 9
        %1258 = vbcast.lane.b32.xlu0 %v1014, %s1257
        %v1259 = vpop.permute.xlu0 %1258
        %s1261 = sor.u32 256, 1
        %1262 = vbcast.lane.b32.xlu0 %v1025, %s1261
        %v1263 = vpop.permute.xlu0 %1262
        %s1265 = sor.u32 256, 9
        %1266 = vbcast.lane.b32.xlu0 %v1025, %s1265
        %v1267 = vpop.permute.xlu0 %1266
        %s1269 = sor.u32 256, 1
        %1270 = vbcast.lane.b32.xlu0 %v1036, %s1269
        %v1271 = vpop.permute.xlu0 %1270
        %s1273 = sor.u32 256, 9
        %1274 = vbcast.lane.b32.xlu0 %v1036, %s1273
        %v1275 = vpop.permute.xlu0 %1274
        %s1277 = sor.u32 256, 1
        %1278 = vbcast.lane.b32.xlu0 %v1047, %s1277
        %v1279 = vpop.permute.xlu0 %1278
        %s1281 = sor.u32 256, 9
        %1282 = vbcast.lane.b32.xlu0 %v1047, %s1281
        %v1283 = vpop.permute.xlu0 %1282
        %s1285 = sor.u32 256, 1
        %1286 = vbcast.lane.b32.xlu0 %v1058, %s1285
        %v1287 = vpop.permute.xlu0 %1286
        %s1289 = sor.u32 256, 9
        %1290 = vbcast.lane.b32.xlu0 %v1058, %s1289
        %v1291 = vpop.permute.xlu0 %1290
        %s1293 = sor.u32 256, 1
        %1294 = vbcast.lane.b32.xlu0 %v1069, %s1293
        %v1295 = vpop.permute.xlu0 %1294
        %s1297 = sor.u32 256, 9
        %1298 = vbcast.lane.b32.xlu0 %v1069, %s1297
        %v1299 = vpop.permute.xlu0 %1298
        %s1301 = sor.u32 256, 1
        %1302 = vbcast.lane.b32.xlu0 %v1080, %s1301
        %v1303 = vpop.permute.xlu0 %1302
        %s1305 = sor.u32 256, 9
        %1306 = vbcast.lane.b32.xlu0 %v1080, %s1305
        %v1307 = vpop.permute.xlu0 %1306
        %s1309 = sor.u32 256, 1
        %1310 = vbcast.lane.b32.xlu0 %v1091, %s1309
        %v1311 = vpop.permute.xlu0 %1310
        %s1313 = sor.u32 256, 9
        %1314 = vbcast.lane.b32.xlu0 %v1091, %s1313
        %v1315 = vpop.permute.xlu0 %1314
        %s1317 = sor.u32 256, 1
        %1318 = vbcast.lane.b32.xlu0 %v1102, %s1317
        %v1319 = vpop.permute.xlu0 %1318
        %s1321 = sor.u32 256, 9
        %1322 = vbcast.lane.b32.xlu0 %v1102, %s1321
        %v1323 = vpop.permute.xlu0 %1322
        %s1325 = sor.u32 256, 1
        %1326 = vbcast.lane.b32.xlu0 %v1113, %s1325
        %v1327 = vpop.permute.xlu0 %1326
        %s1329 = sor.u32 256, 9
        %1330 = vbcast.lane.b32.xlu0 %v1113, %s1329
        %v1331 = vpop.permute.xlu0 %1330
        %s1333 = sor.u32 256, 1
        %1334 = vbcast.lane.b32.xlu0 %v1124, %s1333
        %v1335 = vpop.permute.xlu0 %1334
        %s1337 = sor.u32 256, 9
        %1338 = vbcast.lane.b32.xlu0 %v1124, %s1337
        %v1339 = vpop.permute.xlu0 %1338
        %s1341 = sor.u32 256, 1
        %1342 = vbcast.lane.b32.xlu0 %v1135, %s1341
        %v1343 = vpop.permute.xlu0 %1342
        %s1345 = sor.u32 256, 9
        %1346 = vbcast.lane.b32.xlu0 %v1135, %s1345
        %v1347 = vpop.permute.xlu0 %1346
        %s1349 = sor.u32 256, 1
        %1350 = vbcast.lane.b32.xlu0 %v1146, %s1349
        %v1351 = vpop.permute.xlu0 %1350
        %s1353 = sor.u32 256, 9
        %1354 = vbcast.lane.b32.xlu0 %v1146, %s1353
        %v1355 = vpop.permute.xlu0 %1354
        %s1357 = sor.u32 256, 1
        %1358 = vbcast.lane.b32.xlu0 %v1157, %s1357
        %v1359 = vpop.permute.xlu0 %1358
        %s1361 = sor.u32 256, 9
        %1362 = vbcast.lane.b32.xlu0 %v1157, %s1361
        %v1363 = vpop.permute.xlu0 %1362
        %s1365 = sor.u32 256, 1
        %1366 = vbcast.lane.b32.xlu0 %v1168, %s1365
        %v1367 = vpop.permute.xlu0 %1366
        %s1369 = sor.u32 256, 9
        %1370 = vbcast.lane.b32.xlu0 %v1168, %s1369
        %v1371 = vpop.permute.xlu0 %1370
        %v1372 = vlaneseq
        %v1373 = vshrl.u32 %v1372, 7
        %v1374 = vsub.s32 4, %v1373
        %v1375 = vrot.slane %v390, %v1374
        %v1376 = vmul.f32 %v1247, %v1375
        %v1377 = vmul.f32 %v1251, %v1375
        %v1378 = vmul.f32 %v1255, %v1375
        %v1379 = vmul.f32 %v1259, %v1375
        %v1380 = vmul.f32 %v1263, %v1375
        %v1381 = vmul.f32 %v1267, %v1375
        %v1382 = vmul.f32 %v1271, %v1375
        %v1383 = vmul.f32 %v1275, %v1375
        %v1384 = vmul.f32 %v1279, %v1375
        %v1385 = vmul.f32 %v1283, %v1375
        %v1386 = vmul.f32 %v1287, %v1375
        %v1387 = vmul.f32 %v1291, %v1375
        %v1388 = vmul.f32 %v1295, %v1375
        %v1389 = vmul.f32 %v1299, %v1375
        %v1390 = vmul.f32 %v1303, %v1375
        %v1391 = vmul.f32 %v1307, %v1375
        %v1392 = vmul.f32 %v1311, %v1375
        %v1393 = vmul.f32 %v1315, %v1375
        %v1394 = vmul.f32 %v1319, %v1375
        %v1395 = vmul.f32 %v1323, %v1375
        %v1396 = vmul.f32 %v1327, %v1375
        %v1397 = vmul.f32 %v1331, %v1375
        %v1398 = vmul.f32 %v1335, %v1375
        %v1399 = vmul.f32 %v1339, %v1375
        %v1400 = vmul.f32 %v1343, %v1375
        %v1401 = vmul.f32 %v1347, %v1375
        %v1402 = vmul.f32 %v1351, %v1375
        %v1403 = vmul.f32 %v1355, %v1375
        %v1404 = vmul.f32 %v1359, %v1375
        %v1405 = vmul.f32 %v1363, %v1375
        %v1406 = vmul.f32 %v1367, %v1375
        %v1407 = vmul.f32 %v1371, %v1375
        %v1408 = vadd.f32 %v1212, %v1376
        %v1409 = vadd.f32 %v1213, %v1377
        %v1410 = vadd.f32 %v1214, %v1378
        %v1411 = vadd.f32 %v1215, %v1379
        %v1412 = vadd.f32 %v1216, %v1380
        %v1413 = vadd.f32 %v1217, %v1381
        %v1414 = vadd.f32 %v1218, %v1382
        %v1415 = vadd.f32 %v1219, %v1383
        %v1416 = vadd.f32 %v1220, %v1384
        %v1417 = vadd.f32 %v1221, %v1385
        %v1418 = vadd.f32 %v1222, %v1386
        %v1419 = vadd.f32 %v1223, %v1387
        %v1420 = vadd.f32 %v1224, %v1388
        %v1421 = vadd.f32 %v1225, %v1389
        %v1422 = vadd.f32 %v1226, %v1390
        %v1423 = vadd.f32 %v1227, %v1391
        %v1424 = vadd.f32 %v1228, %v1392
        %v1425 = vadd.f32 %v1229, %v1393
        %v1426 = vadd.f32 %v1230, %v1394
        %v1427 = vadd.f32 %v1231, %v1395
        %v1428 = vadd.f32 %v1232, %v1396
        %v1429 = vadd.f32 %v1233, %v1397
        %v1430 = vadd.f32 %v1234, %v1398
        %v1431 = vadd.f32 %v1235, %v1399
        %v1432 = vadd.f32 %v1236, %v1400
        %v1433 = vadd.f32 %v1237, %v1401
        %v1434 = vadd.f32 %v1238, %v1402
        %v1435 = vadd.f32 %v1239, %v1403
        %v1436 = vadd.f32 %v1240, %v1404
        %v1437 = vadd.f32 %v1241, %v1405
        %v1438 = vadd.f32 %v1242, %v1406
        %v1439 = vadd.f32 %v1243, %v1407
        %s1441 = sor.u32 256, 2
        %1442 = vbcast.lane.b32.xlu0 %v1003, %s1441
        %v1443 = vpop.permute.xlu0 %1442
        %s1445 = sor.u32 256, 10
        %1446 = vbcast.lane.b32.xlu0 %v1003, %s1445
        %v1447 = vpop.permute.xlu0 %1446
        %s1449 = sor.u32 256, 2
        %1450 = vbcast.lane.b32.xlu0 %v1014, %s1449
        %v1451 = vpop.permute.xlu0 %1450
        %s1453 = sor.u32 256, 10
        %1454 = vbcast.lane.b32.xlu0 %v1014, %s1453
        %v1455 = vpop.permute.xlu0 %1454
        %s1457 = sor.u32 256, 2
        %1458 = vbcast.lane.b32.xlu0 %v1025, %s1457
        %v1459 = vpop.permute.xlu0 %1458
        %s1461 = sor.u32 256, 10
        %1462 = vbcast.lane.b32.xlu0 %v1025, %s1461
        %v1463 = vpop.permute.xlu0 %1462
        %s1465 = sor.u32 256, 2
        %1466 = vbcast.lane.b32.xlu0 %v1036, %s1465
        %v1467 = vpop.permute.xlu0 %1466
        %s1469 = sor.u32 256, 10
        %1470 = vbcast.lane.b32.xlu0 %v1036, %s1469
        %v1471 = vpop.permute.xlu0 %1470
        %s1473 = sor.u32 256, 2
        %1474 = vbcast.lane.b32.xlu0 %v1047, %s1473
        %v1475 = vpop.permute.xlu0 %1474
        %s1477 = sor.u32 256, 10
        %1478 = vbcast.lane.b32.xlu0 %v1047, %s1477
        %v1479 = vpop.permute.xlu0 %1478
        %s1481 = sor.u32 256, 2
        %1482 = vbcast.lane.b32.xlu0 %v1058, %s1481
        %v1483 = vpop.permute.xlu0 %1482
        %s1485 = sor.u32 256, 10
        %1486 = vbcast.lane.b32.xlu0 %v1058, %s1485
        %v1487 = vpop.permute.xlu0 %1486
        %s1489 = sor.u32 256, 2
        %1490 = vbcast.lane.b32.xlu0 %v1069, %s1489
        %v1491 = vpop.permute.xlu0 %1490
        %s1493 = sor.u32 256, 10
        %1494 = vbcast.lane.b32.xlu0 %v1069, %s1493
        %v1495 = vpop.permute.xlu0 %1494
        %s1497 = sor.u32 256, 2
        %1498 = vbcast.lane.b32.xlu0 %v1080, %s1497
        %v1499 = vpop.permute.xlu0 %1498
        %s1501 = sor.u32 256, 10
        %1502 = vbcast.lane.b32.xlu0 %v1080, %s1501
        %v1503 = vpop.permute.xlu0 %1502
        %s1505 = sor.u32 256, 2
        %1506 = vbcast.lane.b32.xlu0 %v1091, %s1505
        %v1507 = vpop.permute.xlu0 %1506
        %s1509 = sor.u32 256, 10
        %1510 = vbcast.lane.b32.xlu0 %v1091, %s1509
        %v1511 = vpop.permute.xlu0 %1510
        %s1513 = sor.u32 256, 2
        %1514 = vbcast.lane.b32.xlu0 %v1102, %s1513
        %v1515 = vpop.permute.xlu0 %1514
        %s1517 = sor.u32 256, 10
        %1518 = vbcast.lane.b32.xlu0 %v1102, %s1517
        %v1519 = vpop.permute.xlu0 %1518
        %s1521 = sor.u32 256, 2
        %1522 = vbcast.lane.b32.xlu0 %v1113, %s1521
        %v1523 = vpop.permute.xlu0 %1522
        %s1525 = sor.u32 256, 10
        %1526 = vbcast.lane.b32.xlu0 %v1113, %s1525
        %v1527 = vpop.permute.xlu0 %1526
        %s1529 = sor.u32 256, 2
        %1530 = vbcast.lane.b32.xlu0 %v1124, %s1529
        %v1531 = vpop.permute.xlu0 %1530
        %s1533 = sor.u32 256, 10
        %1534 = vbcast.lane.b32.xlu0 %v1124, %s1533
        %v1535 = vpop.permute.xlu0 %1534
        %s1537 = sor.u32 256, 2
        %1538 = vbcast.lane.b32.xlu0 %v1135, %s1537
        %v1539 = vpop.permute.xlu0 %1538
        %s1541 = sor.u32 256, 10
        %1542 = vbcast.lane.b32.xlu0 %v1135, %s1541
        %v1543 = vpop.permute.xlu0 %1542
        %s1545 = sor.u32 256, 2
        %1546 = vbcast.lane.b32.xlu0 %v1146, %s1545
        %v1547 = vpop.permute.xlu0 %1546
        %s1549 = sor.u32 256, 10
        %1550 = vbcast.lane.b32.xlu0 %v1146, %s1549
        %v1551 = vpop.permute.xlu0 %1550
        %s1553 = sor.u32 256, 2
        %1554 = vbcast.lane.b32.xlu0 %v1157, %s1553
        %v1555 = vpop.permute.xlu0 %1554
        %s1557 = sor.u32 256, 10
        %1558 = vbcast.lane.b32.xlu0 %v1157, %s1557
        %v1559 = vpop.permute.xlu0 %1558
        %s1561 = sor.u32 256, 2
        %1562 = vbcast.lane.b32.xlu0 %v1168, %s1561
        %v1563 = vpop.permute.xlu0 %1562
        %s1565 = sor.u32 256, 10
        %1566 = vbcast.lane.b32.xlu0 %v1168, %s1565
        %v1567 = vpop.permute.xlu0 %1566
        %v1568 = vlaneseq
        %v1569 = vshrl.u32 %v1568, 7
        %v1570 = vsub.s32 5, %v1569
        %v1571 = vrot.slane %v390, %v1570
        %v1572 = vmul.f32 %v1443, %v1571
        %v1573 = vmul.f32 %v1447, %v1571
        %v1574 = vmul.f32 %v1451, %v1571
        %v1575 = vmul.f32 %v1455, %v1571
        %v1576 = vmul.f32 %v1459, %v1571
        %v1577 = vmul.f32 %v1463, %v1571
        %v1578 = vmul.f32 %v1467, %v1571
        %v1579 = vmul.f32 %v1471, %v1571
        %v1580 = vmul.f32 %v1475, %v1571
        %v1581 = vmul.f32 %v1479, %v1571
        %v1582 = vmul.f32 %v1483, %v1571
        %v1583 = vmul.f32 %v1487, %v1571
        %v1584 = vmul.f32 %v1491, %v1571
        %v1585 = vmul.f32 %v1495, %v1571
        %v1586 = vmul.f32 %v1499, %v1571
        %v1587 = vmul.f32 %v1503, %v1571
        %v1588 = vmul.f32 %v1507, %v1571
        %v1589 = vmul.f32 %v1511, %v1571
        %v1590 = vmul.f32 %v1515, %v1571
        %v1591 = vmul.f32 %v1519, %v1571
        %v1592 = vmul.f32 %v1523, %v1571
        %v1593 = vmul.f32 %v1527, %v1571
        %v1594 = vmul.f32 %v1531, %v1571
        %v1595 = vmul.f32 %v1535, %v1571
        %v1596 = vmul.f32 %v1539, %v1571
        %v1597 = vmul.f32 %v1543, %v1571
        %v1598 = vmul.f32 %v1547, %v1571
        %v1599 = vmul.f32 %v1551, %v1571
        %v1600 = vmul.f32 %v1555, %v1571
        %v1601 = vmul.f32 %v1559, %v1571
        %v1602 = vmul.f32 %v1563, %v1571
        %v1603 = vmul.f32 %v1567, %v1571
        %v1604 = vadd.f32 %v1408, %v1572
        %v1605 = vadd.f32 %v1409, %v1573
        %v1606 = vadd.f32 %v1410, %v1574
        %v1607 = vadd.f32 %v1411, %v1575
        %v1608 = vadd.f32 %v1412, %v1576
        %v1609 = vadd.f32 %v1413, %v1577
        %v1610 = vadd.f32 %v1414, %v1578
        %v1611 = vadd.f32 %v1415, %v1579
        %v1612 = vadd.f32 %v1416, %v1580
        %v1613 = vadd.f32 %v1417, %v1581
        %v1614 = vadd.f32 %v1418, %v1582
        %v1615 = vadd.f32 %v1419, %v1583
        %v1616 = vadd.f32 %v1420, %v1584
        %v1617 = vadd.f32 %v1421, %v1585
        %v1618 = vadd.f32 %v1422, %v1586
        %v1619 = vadd.f32 %v1423, %v1587
        %v1620 = vadd.f32 %v1424, %v1588
        %v1621 = vadd.f32 %v1425, %v1589
        %v1622 = vadd.f32 %v1426, %v1590
        %v1623 = vadd.f32 %v1427, %v1591
        %v1624 = vadd.f32 %v1428, %v1592
        %v1625 = vadd.f32 %v1429, %v1593
        %v1626 = vadd.f32 %v1430, %v1594
        %v1627 = vadd.f32 %v1431, %v1595
        %v1628 = vadd.f32 %v1432, %v1596
        %v1629 = vadd.f32 %v1433, %v1597
        %v1630 = vadd.f32 %v1434, %v1598
        %v1631 = vadd.f32 %v1435, %v1599
        %v1632 = vadd.f32 %v1436, %v1600
        %v1633 = vadd.f32 %v1437, %v1601
        %v1634 = vadd.f32 %v1438, %v1602
        %v1635 = vadd.f32 %v1439, %v1603
        %v1636 = vld [vmem:[#allocation2 + $0x2] sm:$0xff]
        %v1637 = vld [vmem:[#allocation2 + $0xa] sm:$0xff]
        %v1638 = vlaneseq
        %v1639 = vshrl.u32 %v1638, 7
        %v1640 = vsub.s32 0, %v1639
        %v1641 = vrot.slane %v1636, %v1640
        %1643 = vbcast.lane.b32.xlu0 %v1641, 256
        %v1644 = vpop.permute.xlu0 %1643
        %s1646 = sor.u32 256, 8
        %1647 = vbcast.lane.b32.xlu0 %v1641, %s1646
        %v1648 = vpop.permute.xlu0 %1647
        %v1649 = vlaneseq
        %v1650 = vshrl.u32 %v1649, 7
        %v1651 = vsub.s32 1, %v1650
        %v1652 = vrot.slane %v1636, %v1651
        %1654 = vbcast.lane.b32.xlu0 %v1652, 256
        %v1655 = vpop.permute.xlu0 %1654
        %s1657 = sor.u32 256, 8
        %1658 = vbcast.lane.b32.xlu0 %v1652, %s1657
        %v1659 = vpop.permute.xlu0 %1658
        %v1660 = vlaneseq
        %v1661 = vshrl.u32 %v1660, 7
        %v1662 = vsub.s32 2, %v1661
        %v1663 = vrot.slane %v1636, %v1662
        %1665 = vbcast.lane.b32.xlu0 %v1663, 256
        %v1666 = vpop.permute.xlu0 %1665
        %s1668 = sor.u32 256, 8
        %1669 = vbcast.lane.b32.xlu0 %v1663, %s1668
        %v1670 = vpop.permute.xlu0 %1669
        %v1671 = vlaneseq
        %v1672 = vshrl.u32 %v1671, 7
        %v1673 = vsub.s32 3, %v1672
        %v1674 = vrot.slane %v1636, %v1673
        %1676 = vbcast.lane.b32.xlu0 %v1674, 256
        %v1677 = vpop.permute.xlu0 %1676
        %s1679 = sor.u32 256, 8
        %1680 = vbcast.lane.b32.xlu0 %v1674, %s1679
        %v1681 = vpop.permute.xlu0 %1680
        %v1682 = vlaneseq
        %v1683 = vshrl.u32 %v1682, 7
        %v1684 = vsub.s32 4, %v1683
        %v1685 = vrot.slane %v1636, %v1684
        %1687 = vbcast.lane.b32.xlu0 %v1685, 256
        %v1688 = vpop.permute.xlu0 %1687
        %s1690 = sor.u32 256, 8
        %1691 = vbcast.lane.b32.xlu0 %v1685, %s1690
        %v1692 = vpop.permute.xlu0 %1691
        %v1693 = vlaneseq
        %v1694 = vshrl.u32 %v1693, 7
        %v1695 = vsub.s32 5, %v1694
        %v1696 = vrot.slane %v1636, %v1695
        %1698 = vbcast.lane.b32.xlu0 %v1696, 256
        %v1699 = vpop.permute.xlu0 %1698
        %s1701 = sor.u32 256, 8
        %1702 = vbcast.lane.b32.xlu0 %v1696, %s1701
        %v1703 = vpop.permute.xlu0 %1702
        %v1704 = vlaneseq
        %v1705 = vshrl.u32 %v1704, 7
        %v1706 = vsub.s32 6, %v1705
        %v1707 = vrot.slane %v1636, %v1706
        %1709 = vbcast.lane.b32.xlu0 %v1707, 256
        %v1710 = vpop.permute.xlu0 %1709
        %s1712 = sor.u32 256, 8
        %1713 = vbcast.lane.b32.xlu0 %v1707, %s1712
        %v1714 = vpop.permute.xlu0 %1713
        %v1715 = vlaneseq
        %v1716 = vshrl.u32 %v1715, 7
        %v1717 = vsub.s32 7, %v1716
        %v1718 = vrot.slane %v1636, %v1717
        %1720 = vbcast.lane.b32.xlu0 %v1718, 256
        %v1721 = vpop.permute.xlu0 %1720
        %s1723 = sor.u32 256, 8
        %1724 = vbcast.lane.b32.xlu0 %v1718, %s1723
        %v1725 = vpop.permute.xlu0 %1724
        %v1726 = vlaneseq
        %v1727 = vshrl.u32 %v1726, 7
        %v1728 = vsub.s32 0, %v1727
        %v1729 = vrot.slane %v1637, %v1728
        %1731 = vbcast.lane.b32.xlu0 %v1729, 256
        %v1732 = vpop.permute.xlu0 %1731
        %s1734 = sor.u32 256, 8
        %1735 = vbcast.lane.b32.xlu0 %v1729, %s1734
        %v1736 = vpop.permute.xlu0 %1735
        %v1737 = vlaneseq
        %v1738 = vshrl.u32 %v1737, 7
        %v1739 = vsub.s32 1, %v1738
        %v1740 = vrot.slane %v1637, %v1739
        %1742 = vbcast.lane.b32.xlu0 %v1740, 256
        %v1743 = vpop.permute.xlu0 %1742
        %s1745 = sor.u32 256, 8
        %1746 = vbcast.lane.b32.xlu0 %v1740, %s1745
        %v1747 = vpop.permute.xlu0 %1746
        %v1748 = vlaneseq
        %v1749 = vshrl.u32 %v1748, 7
        %v1750 = vsub.s32 2, %v1749
        %v1751 = vrot.slane %v1637, %v1750
        %1753 = vbcast.lane.b32.xlu0 %v1751, 256
        %v1754 = vpop.permute.xlu0 %1753
        %s1756 = sor.u32 256, 8
        %1757 = vbcast.lane.b32.xlu0 %v1751, %s1756
        %v1758 = vpop.permute.xlu0 %1757
        %v1759 = vlaneseq
        %v1760 = vshrl.u32 %v1759, 7
        %v1761 = vsub.s32 3, %v1760
        %v1762 = vrot.slane %v1637, %v1761
        %1764 = vbcast.lane.b32.xlu0 %v1762, 256
        %v1765 = vpop.permute.xlu0 %1764
        %s1767 = sor.u32 256, 8
        %1768 = vbcast.lane.b32.xlu0 %v1762, %s1767
        %v1769 = vpop.permute.xlu0 %1768
        %v1770 = vlaneseq
        %v1771 = vshrl.u32 %v1770, 7
        %v1772 = vsub.s32 4, %v1771
        %v1773 = vrot.slane %v1637, %v1772
        %1775 = vbcast.lane.b32.xlu0 %v1773, 256
        %v1776 = vpop.permute.xlu0 %1775
        %s1778 = sor.u32 256, 8
        %1779 = vbcast.lane.b32.xlu0 %v1773, %s1778
        %v1780 = vpop.permute.xlu0 %1779
        %v1781 = vlaneseq
        %v1782 = vshrl.u32 %v1781, 7
        %v1783 = vsub.s32 5, %v1782
        %v1784 = vrot.slane %v1637, %v1783
        %1786 = vbcast.lane.b32.xlu0 %v1784, 256
        %v1787 = vpop.permute.xlu0 %1786
        %s1789 = sor.u32 256, 8
        %1790 = vbcast.lane.b32.xlu0 %v1784, %s1789
        %v1791 = vpop.permute.xlu0 %1790
        %v1792 = vlaneseq
        %v1793 = vshrl.u32 %v1792, 7
        %v1794 = vsub.s32 6, %v1793
        %v1795 = vrot.slane %v1637, %v1794
        %1797 = vbcast.lane.b32.xlu0 %v1795, 256
        %v1798 = vpop.permute.xlu0 %1797
        %s1800 = sor.u32 256, 8
        %1801 = vbcast.lane.b32.xlu0 %v1795, %s1800
        %v1802 = vpop.permute.xlu0 %1801
        %v1803 = vlaneseq
        %v1804 = vshrl.u32 %v1803, 7
        %v1805 = vsub.s32 7, %v1804
        %v1806 = vrot.slane %v1637, %v1805
        %1808 = vbcast.lane.b32.xlu0 %v1806, 256
        %v1809 = vpop.permute.xlu0 %1808
        %s1811 = sor.u32 256, 8
        %1812 = vbcast.lane.b32.xlu0 %v1806, %s1811
        %v1813 = vpop.permute.xlu0 %1812
        %v1814 = vlaneseq
        %v1815 = vshrl.u32 %v1814, 7
        %v1816 = vsub.s32 6, %v1815
        %v1817 = vrot.slane %v390, %v1816
        %v1818 = vmul.f32 %v1644, %v1817
        %v1819 = vmul.f32 %v1648, %v1817
        %v1820 = vmul.f32 %v1655, %v1817
        %v1821 = vmul.f32 %v1659, %v1817
        %v1822 = vmul.f32 %v1666, %v1817
        %v1823 = vmul.f32 %v1670, %v1817
        %v1824 = vmul.f32 %v1677, %v1817
        %v1825 = vmul.f32 %v1681, %v1817
        %v1826 = vmul.f32 %v1688, %v1817
        %v1827 = vmul.f32 %v1692, %v1817
        %v1828 = vmul.f32 %v1699, %v1817
        %v1829 = vmul.f32 %v1703, %v1817
        %v1830 = vmul.f32 %v1710, %v1817
        %v1831 = vmul.f32 %v1714, %v1817
        %v1832 = vmul.f32 %v1721, %v1817
        %v1833 = vmul.f32 %v1725, %v1817
        %v1834 = vmul.f32 %v1732, %v1817
        %v1835 = vmul.f32 %v1736, %v1817
        %v1836 = vmul.f32 %v1743, %v1817
        %v1837 = vmul.f32 %v1747, %v1817
        %v1838 = vmul.f32 %v1754, %v1817
        %v1839 = vmul.f32 %v1758, %v1817
        %v1840 = vmul.f32 %v1765, %v1817
        %v1841 = vmul.f32 %v1769, %v1817
        %v1842 = vmul.f32 %v1776, %v1817
        %v1843 = vmul.f32 %v1780, %v1817
        %v1844 = vmul.f32 %v1787, %v1817
        %v1845 = vmul.f32 %v1791, %v1817
        %v1846 = vmul.f32 %v1798, %v1817
        %v1847 = vmul.f32 %v1802, %v1817
        %v1848 = vmul.f32 %v1809, %v1817
        %v1849 = vmul.f32 %v1813, %v1817
        %v1850 = vadd.f32 %v1604, %v1818
        %v1851 = vadd.f32 %v1605, %v1819
        %v1852 = vadd.f32 %v1606, %v1820
        %v1853 = vadd.f32 %v1607, %v1821
        %v1854 = vadd.f32 %v1608, %v1822
        %v1855 = vadd.f32 %v1609, %v1823
        %v1856 = vadd.f32 %v1610, %v1824
        %v1857 = vadd.f32 %v1611, %v1825
        %v1858 = vadd.f32 %v1612, %v1826
        %v1859 = vadd.f32 %v1613, %v1827
        %v1860 = vadd.f32 %v1614, %v1828
        %v1861 = vadd.f32 %v1615, %v1829
        %v1862 = vadd.f32 %v1616, %v1830
        %v1863 = vadd.f32 %v1617, %v1831
        %v1864 = vadd.f32 %v1618, %v1832
        %v1865 = vadd.f32 %v1619, %v1833
        %v1866 = vadd.f32 %v1620, %v1834
        %v1867 = vadd.f32 %v1621, %v1835
        %v1868 = vadd.f32 %v1622, %v1836
        %v1869 = vadd.f32 %v1623, %v1837
        %v1870 = vadd.f32 %v1624, %v1838
        %v1871 = vadd.f32 %v1625, %v1839
        %v1872 = vadd.f32 %v1626, %v1840
        %v1873 = vadd.f32 %v1627, %v1841
        %v1874 = vadd.f32 %v1628, %v1842
        %v1875 = vadd.f32 %v1629, %v1843
        %v1876 = vadd.f32 %v1630, %v1844
        %v1877 = vadd.f32 %v1631, %v1845
        %v1878 = vadd.f32 %v1632, %v1846
        %v1879 = vadd.f32 %v1633, %v1847
        %v1880 = vadd.f32 %v1634, %v1848
        %v1881 = vadd.f32 %v1635, %v1849
        %s1883 = sor.u32 256, 1
        %1884 = vbcast.lane.b32.xlu0 %v1641, %s1883
        %v1885 = vpop.permute.xlu0 %1884
        %s1887 = sor.u32 256, 9
        %1888 = vbcast.lane.b32.xlu0 %v1641, %s1887
        %v1889 = vpop.permute.xlu0 %1888
        %s1891 = sor.u32 256, 1
        %1892 = vbcast.lane.b32.xlu0 %v1652, %s1891
        %v1893 = vpop.permute.xlu0 %1892
        %s1895 = sor.u32 256, 9
        %1896 = vbcast.lane.b32.xlu0 %v1652, %s1895
        %v1897 = vpop.permute.xlu0 %1896
        %s1899 = sor.u32 256, 1
        %1900 = vbcast.lane.b32.xlu0 %v1663, %s1899
        %v1901 = vpop.permute.xlu0 %1900
        %s1903 = sor.u32 256, 9
        %1904 = vbcast.lane.b32.xlu0 %v1663, %s1903
        %v1905 = vpop.permute.xlu0 %1904
        %s1907 = sor.u32 256, 1
        %1908 = vbcast.lane.b32.xlu0 %v1674, %s1907
        %v1909 = vpop.permute.xlu0 %1908
        %s1911 = sor.u32 256, 9
        %1912 = vbcast.lane.b32.xlu0 %v1674, %s1911
        %v1913 = vpop.permute.xlu0 %1912
        %s1915 = sor.u32 256, 1
        %1916 = vbcast.lane.b32.xlu0 %v1685, %s1915
        %v1917 = vpop.permute.xlu0 %1916
        %s1919 = sor.u32 256, 9
        %1920 = vbcast.lane.b32.xlu0 %v1685, %s1919
        %v1921 = vpop.permute.xlu0 %1920
        %s1923 = sor.u32 256, 1
        %1924 = vbcast.lane.b32.xlu0 %v1696, %s1923
        %v1925 = vpop.permute.xlu0 %1924
        %s1927 = sor.u32 256, 9
        %1928 = vbcast.lane.b32.xlu0 %v1696, %s1927
        %v1929 = vpop.permute.xlu0 %1928
        %s1931 = sor.u32 256, 1
        %1932 = vbcast.lane.b32.xlu0 %v1707, %s1931
        %v1933 = vpop.permute.xlu0 %1932
        %s1935 = sor.u32 256, 9
        %1936 = vbcast.lane.b32.xlu0 %v1707, %s1935
        %v1937 = vpop.permute.xlu0 %1936
        %s1939 = sor.u32 256, 1
        %1940 = vbcast.lane.b32.xlu0 %v1718, %s1939
        %v1941 = vpop.permute.xlu0 %1940
        %s1943 = sor.u32 256, 9
        %1944 = vbcast.lane.b32.xlu0 %v1718, %s1943
        %v1945 = vpop.permute.xlu0 %1944
        %s1947 = sor.u32 256, 1
        %1948 = vbcast.lane.b32.xlu0 %v1729, %s1947
        %v1949 = vpop.permute.xlu0 %1948
        %s1951 = sor.u32 256, 9
        %1952 = vbcast.lane.b32.xlu0 %v1729, %s1951
        %v1953 = vpop.permute.xlu0 %1952
        %s1955 = sor.u32 256, 1
        %1956 = vbcast.lane.b32.xlu0 %v1740, %s1955
        %v1957 = vpop.permute.xlu0 %1956
        %s1959 = sor.u32 256, 9
        %1960 = vbcast.lane.b32.xlu0 %v1740, %s1959
        %v1961 = vpop.permute.xlu0 %1960
        %s1963 = sor.u32 256, 1
        %1964 = vbcast.lane.b32.xlu0 %v1751, %s1963
        %v1965 = vpop.permute.xlu0 %1964
        %s1967 = sor.u32 256, 9
        %1968 = vbcast.lane.b32.xlu0 %v1751, %s1967
        %v1969 = vpop.permute.xlu0 %1968
        %s1971 = sor.u32 256, 1
        %1972 = vbcast.lane.b32.xlu0 %v1762, %s1971
        %v1973 = vpop.permute.xlu0 %1972
        %s1975 = sor.u32 256, 9
        %1976 = vbcast.lane.b32.xlu0 %v1762, %s1975
        %v1977 = vpop.permute.xlu0 %1976
        %s1979 = sor.u32 256, 1
        %1980 = vbcast.lane.b32.xlu0 %v1773, %s1979
        %v1981 = vpop.permute.xlu0 %1980
        %s1983 = sor.u32 256, 9
        %1984 = vbcast.lane.b32.xlu0 %v1773, %s1983
        %v1985 = vpop.permute.xlu0 %1984
        %s1987 = sor.u32 256, 1
        %1988 = vbcast.lane.b32.xlu0 %v1784, %s1987
        %v1989 = vpop.permute.xlu0 %1988
        %s1991 = sor.u32 256, 9
        %1992 = vbcast.lane.b32.xlu0 %v1784, %s1991
        %v1993 = vpop.permute.xlu0 %1992
        %s1995 = sor.u32 256, 1
        %1996 = vbcast.lane.b32.xlu0 %v1795, %s1995
        %v1997 = vpop.permute.xlu0 %1996
        %s1999 = sor.u32 256, 9
        %2000 = vbcast.lane.b32.xlu0 %v1795, %s1999
        %v2001 = vpop.permute.xlu0 %2000
        %s2003 = sor.u32 256, 1
        %2004 = vbcast.lane.b32.xlu0 %v1806, %s2003
        %v2005 = vpop.permute.xlu0 %2004
        %s2007 = sor.u32 256, 9
        %2008 = vbcast.lane.b32.xlu0 %v1806, %s2007
        %v2009 = vpop.permute.xlu0 %2008
        %v2010 = vlaneseq
        %v2011 = vshrl.u32 %v2010, 7
        %v2012 = vsub.s32 7, %v2011
        %v2013 = vrot.slane %v390, %v2012
        %v2014 = vmul.f32 %v1885, %v2013
        %v2015 = vmul.f32 %v1889, %v2013
        %v2016 = vmul.f32 %v1893, %v2013
        %v2017 = vmul.f32 %v1897, %v2013
        %v2018 = vmul.f32 %v1901, %v2013
        %v2019 = vmul.f32 %v1905, %v2013
        %v2020 = vmul.f32 %v1909, %v2013
        %v2021 = vmul.f32 %v1913, %v2013
        %v2022 = vmul.f32 %v1917, %v2013
        %v2023 = vmul.f32 %v1921, %v2013
        %v2024 = vmul.f32 %v1925, %v2013
        %v2025 = vmul.f32 %v1929, %v2013
        %v2026 = vmul.f32 %v1933, %v2013
        %v2027 = vmul.f32 %v1937, %v2013
        %v2028 = vmul.f32 %v1941, %v2013
        %v2029 = vmul.f32 %v1945, %v2013
        %v2030 = vmul.f32 %v1949, %v2013
        %v2031 = vmul.f32 %v1953, %v2013
        %v2032 = vmul.f32 %v1957, %v2013
        %v2033 = vmul.f32 %v1961, %v2013
        %v2034 = vmul.f32 %v1965, %v2013
        %v2035 = vmul.f32 %v1969, %v2013
        %v2036 = vmul.f32 %v1973, %v2013
        %v2037 = vmul.f32 %v1977, %v2013
        %v2038 = vmul.f32 %v1981, %v2013
        %v2039 = vmul.f32 %v1985, %v2013
        %v2040 = vmul.f32 %v1989, %v2013
        %v2041 = vmul.f32 %v1993, %v2013
        %v2042 = vmul.f32 %v1997, %v2013
        %v2043 = vmul.f32 %v2001, %v2013
        %v2044 = vmul.f32 %v2005, %v2013
        %v2045 = vmul.f32 %v2009, %v2013
        %v2046 = vadd.f32 %v1850, %v2014
        %v2047 = vadd.f32 %v1851, %v2015
        %v2048 = vadd.f32 %v1852, %v2016
        %v2049 = vadd.f32 %v1853, %v2017
        %v2050 = vadd.f32 %v1854, %v2018
        %v2051 = vadd.f32 %v1855, %v2019
        %v2052 = vadd.f32 %v1856, %v2020
        %v2053 = vadd.f32 %v1857, %v2021
        %v2054 = vadd.f32 %v1858, %v2022
        %v2055 = vadd.f32 %v1859, %v2023
        %v2056 = vadd.f32 %v1860, %v2024
        %v2057 = vadd.f32 %v1861, %v2025
        %v2058 = vadd.f32 %v1862, %v2026
        %v2059 = vadd.f32 %v1863, %v2027
        %v2060 = vadd.f32 %v1864, %v2028
        %v2061 = vadd.f32 %v1865, %v2029
        %v2062 = vadd.f32 %v1866, %v2030
        %v2063 = vadd.f32 %v1867, %v2031
        %v2064 = vadd.f32 %v1868, %v2032
        %v2065 = vadd.f32 %v1869, %v2033
        %v2066 = vadd.f32 %v1870, %v2034
        %v2067 = vadd.f32 %v1871, %v2035
        %v2068 = vadd.f32 %v1872, %v2036
        %v2069 = vadd.f32 %v1873, %v2037
        %v2070 = vadd.f32 %v1874, %v2038
        %v2071 = vadd.f32 %v1875, %v2039
        %v2072 = vadd.f32 %v1876, %v2040
        %v2073 = vadd.f32 %v1877, %v2041
        %v2074 = vadd.f32 %v1878, %v2042
        %v2075 = vadd.f32 %v1879, %v2043
        %v2076 = vadd.f32 %v1880, %v2044
        %v2077 = vadd.f32 %v1881, %v2045
        %s2079 = sor.u32 256, 2
        %2080 = vbcast.lane.b32.xlu0 %v1641, %s2079
        %v2081 = vpop.permute.xlu0 %2080
        %s2083 = sor.u32 256, 10
        %2084 = vbcast.lane.b32.xlu0 %v1641, %s2083
        %v2085 = vpop.permute.xlu0 %2084
        %s2087 = sor.u32 256, 2
        %2088 = vbcast.lane.b32.xlu0 %v1652, %s2087
        %v2089 = vpop.permute.xlu0 %2088
        %s2091 = sor.u32 256, 10
        %2092 = vbcast.lane.b32.xlu0 %v1652, %s2091
        %v2093 = vpop.permute.xlu0 %2092
        %s2095 = sor.u32 256, 2
        %2096 = vbcast.lane.b32.xlu0 %v1663, %s2095
        %v2097 = vpop.permute.xlu0 %2096
        %s2099 = sor.u32 256, 10
        %2100 = vbcast.lane.b32.xlu0 %v1663, %s2099
        %v2101 = vpop.permute.xlu0 %2100
        %s2103 = sor.u32 256, 2
        %2104 = vbcast.lane.b32.xlu0 %v1674, %s2103
        %v2105 = vpop.permute.xlu0 %2104
        %s2107 = sor.u32 256, 10
        %2108 = vbcast.lane.b32.xlu0 %v1674, %s2107
        %v2109 = vpop.permute.xlu0 %2108
        %s2111 = sor.u32 256, 2
        %2112 = vbcast.lane.b32.xlu0 %v1685, %s2111
        %v2113 = vpop.permute.xlu0 %2112
        %s2115 = sor.u32 256, 10
        %2116 = vbcast.lane.b32.xlu0 %v1685, %s2115
        %v2117 = vpop.permute.xlu0 %2116
        %s2119 = sor.u32 256, 2
        %2120 = vbcast.lane.b32.xlu0 %v1696, %s2119
        %v2121 = vpop.permute.xlu0 %2120
        %s2123 = sor.u32 256, 10
        %2124 = vbcast.lane.b32.xlu0 %v1696, %s2123
        %v2125 = vpop.permute.xlu0 %2124
        %s2127 = sor.u32 256, 2
        %2128 = vbcast.lane.b32.xlu0 %v1707, %s2127
        %v2129 = vpop.permute.xlu0 %2128
        %s2131 = sor.u32 256, 10
        %2132 = vbcast.lane.b32.xlu0 %v1707, %s2131
        %v2133 = vpop.permute.xlu0 %2132
        %s2135 = sor.u32 256, 2
        %2136 = vbcast.lane.b32.xlu0 %v1718, %s2135
        %v2137 = vpop.permute.xlu0 %2136
        %s2139 = sor.u32 256, 10
        %2140 = vbcast.lane.b32.xlu0 %v1718, %s2139
        %v2141 = vpop.permute.xlu0 %2140
        %s2143 = sor.u32 256, 2
        %2144 = vbcast.lane.b32.xlu0 %v1729, %s2143
        %v2145 = vpop.permute.xlu0 %2144
        %s2147 = sor.u32 256, 10
        %2148 = vbcast.lane.b32.xlu0 %v1729, %s2147
        %v2149 = vpop.permute.xlu0 %2148
        %s2151 = sor.u32 256, 2
        %2152 = vbcast.lane.b32.xlu0 %v1740, %s2151
        %v2153 = vpop.permute.xlu0 %2152
        %s2155 = sor.u32 256, 10
        %2156 = vbcast.lane.b32.xlu0 %v1740, %s2155
        %v2157 = vpop.permute.xlu0 %2156
        %s2159 = sor.u32 256, 2
        %2160 = vbcast.lane.b32.xlu0 %v1751, %s2159
        %v2161 = vpop.permute.xlu0 %2160
        %s2163 = sor.u32 256, 10
        %2164 = vbcast.lane.b32.xlu0 %v1751, %s2163
        %v2165 = vpop.permute.xlu0 %2164
        %s2167 = sor.u32 256, 2
        %2168 = vbcast.lane.b32.xlu0 %v1762, %s2167
        %v2169 = vpop.permute.xlu0 %2168
        %s2171 = sor.u32 256, 10
        %2172 = vbcast.lane.b32.xlu0 %v1762, %s2171
        %v2173 = vpop.permute.xlu0 %2172
        %s2175 = sor.u32 256, 2
        %2176 = vbcast.lane.b32.xlu0 %v1773, %s2175
        %v2177 = vpop.permute.xlu0 %2176
        %s2179 = sor.u32 256, 10
        %2180 = vbcast.lane.b32.xlu0 %v1773, %s2179
        %v2181 = vpop.permute.xlu0 %2180
        %s2183 = sor.u32 256, 2
        %2184 = vbcast.lane.b32.xlu0 %v1784, %s2183
        %v2185 = vpop.permute.xlu0 %2184
        %s2187 = sor.u32 256, 10
        %2188 = vbcast.lane.b32.xlu0 %v1784, %s2187
        %v2189 = vpop.permute.xlu0 %2188
        %s2191 = sor.u32 256, 2
        %2192 = vbcast.lane.b32.xlu0 %v1795, %s2191
        %v2193 = vpop.permute.xlu0 %2192
        %s2195 = sor.u32 256, 10
        %2196 = vbcast.lane.b32.xlu0 %v1795, %s2195
        %v2197 = vpop.permute.xlu0 %2196
        %s2199 = sor.u32 256, 2
        %2200 = vbcast.lane.b32.xlu0 %v1806, %s2199
        %v2201 = vpop.permute.xlu0 %2200
        %s2203 = sor.u32 256, 10
        %2204 = vbcast.lane.b32.xlu0 %v1806, %s2203
        %v2205 = vpop.permute.xlu0 %2204
        %v2206 = vlaneseq
        %v2207 = vshrl.u32 %v2206, 7
        %v2208 = vsub.s32 0, %v2207
        %v2209 = vrot.slane %v391, %v2208
        %v2210 = vmul.f32 %v2081, %v2209
        %v2211 = vmul.f32 %v2085, %v2209
        %v2212 = vmul.f32 %v2089, %v2209
        %v2213 = vmul.f32 %v2093, %v2209
        %v2214 = vmul.f32 %v2097, %v2209
        %v2215 = vmul.f32 %v2101, %v2209
        %v2216 = vmul.f32 %v2105, %v2209
        %v2217 = vmul.f32 %v2109, %v2209
        %v2218 = vmul.f32 %v2113, %v2209
        %v2219 = vmul.f32 %v2117, %v2209
        %v2220 = vmul.f32 %v2121, %v2209
        %v2221 = vmul.f32 %v2125, %v2209
        %v2222 = vmul.f32 %v2129, %v2209
        %v2223 = vmul.f32 %v2133, %v2209
        %v2224 = vmul.f32 %v2137, %v2209
        %v2225 = vmul.f32 %v2141, %v2209
        %v2226 = vmul.f32 %v2145, %v2209
        %v2227 = vmul.f32 %v2149, %v2209
        %v2228 = vmul.f32 %v2153, %v2209
        %v2229 = vmul.f32 %v2157, %v2209
        %v2230 = vmul.f32 %v2161, %v2209
        %v2231 = vmul.f32 %v2165, %v2209
        %v2232 = vmul.f32 %v2169, %v2209
        %v2233 = vmul.f32 %v2173, %v2209
        %v2234 = vmul.f32 %v2177, %v2209
        %v2235 = vmul.f32 %v2181, %v2209
        %v2236 = vmul.f32 %v2185, %v2209
        %v2237 = vmul.f32 %v2189, %v2209
        %v2238 = vmul.f32 %v2193, %v2209
        %v2239 = vmul.f32 %v2197, %v2209
        %v2240 = vmul.f32 %v2201, %v2209
        %v2241 = vmul.f32 %v2205, %v2209
        %v2242 = vadd.f32 %v2046, %v2210
        %v2243 = vadd.f32 %v2047, %v2211
        %v2244 = vadd.f32 %v2048, %v2212
        %v2245 = vadd.f32 %v2049, %v2213
        %v2246 = vadd.f32 %v2050, %v2214
        %v2247 = vadd.f32 %v2051, %v2215
        %v2248 = vadd.f32 %v2052, %v2216
        %v2249 = vadd.f32 %v2053, %v2217
        %v2250 = vadd.f32 %v2054, %v2218
        %v2251 = vadd.f32 %v2055, %v2219
        %v2252 = vadd.f32 %v2056, %v2220
        %v2253 = vadd.f32 %v2057, %v2221
        %v2254 = vadd.f32 %v2058, %v2222
        %v2255 = vadd.f32 %v2059, %v2223
        %v2256 = vadd.f32 %v2060, %v2224
        %v2257 = vadd.f32 %v2061, %v2225
        %v2258 = vadd.f32 %v2062, %v2226
        %v2259 = vadd.f32 %v2063, %v2227
        %v2260 = vadd.f32 %v2064, %v2228
        %v2261 = vadd.f32 %v2065, %v2229
        %v2262 = vadd.f32 %v2066, %v2230
        %v2263 = vadd.f32 %v2067, %v2231
        %v2264 = vadd.f32 %v2068, %v2232
        %v2265 = vadd.f32 %v2069, %v2233
        %v2266 = vadd.f32 %v2070, %v2234
        %v2267 = vadd.f32 %v2071, %v2235
        %v2268 = vadd.f32 %v2072, %v2236
        %v2269 = vadd.f32 %v2073, %v2237
        %v2270 = vadd.f32 %v2074, %v2238
        %v2271 = vadd.f32 %v2075, %v2239
        %v2272 = vadd.f32 %v2076, %v2240
        %v2273 = vadd.f32 %v2077, %v2241
        %v2274 = vld [vmem:[%s2] sm:$0x1]
        %v2276 = vlaneseq
        %v2277 = vshrl.u32 %v2276, 7
        %v2278 = vsub.s32 0, %v2277
        %v2279 = vrot.slane %v2274, %v2278
        %v2281 = vadd.f32 %v2242, %v2279
        %v2282 = vadd.f32 %v2243, %v2279
        %v2283 = vadd.f32 %v2244, %v2279
        %v2284 = vadd.f32 %v2245, %v2279
        %v2285 = vadd.f32 %v2246, %v2279
        %v2286 = vadd.f32 %v2247, %v2279
        %v2287 = vadd.f32 %v2248, %v2279
        %v2288 = vadd.f32 %v2249, %v2279
        %v2289 = vadd.f32 %v2250, %v2279
        %v2290 = vadd.f32 %v2251, %v2279
        %v2291 = vadd.f32 %v2252, %v2279
        %v2292 = vadd.f32 %v2253, %v2279
        %v2293 = vadd.f32 %v2254, %v2279
        %v2294 = vadd.f32 %v2255, %v2279
        %v2295 = vadd.f32 %v2256, %v2279
        %v2296 = vadd.f32 %v2257, %v2279
        %v2297 = vadd.f32 %v2258, %v2279
        %v2298 = vadd.f32 %v2259, %v2279
        %v2299 = vadd.f32 %v2260, %v2279
        %v2300 = vadd.f32 %v2261, %v2279
        %v2301 = vadd.f32 %v2262, %v2279
        %v2302 = vadd.f32 %v2263, %v2279
        %v2303 = vadd.f32 %v2264, %v2279
        %v2304 = vadd.f32 %v2265, %v2279
        %v2305 = vadd.f32 %v2266, %v2279
        %v2306 = vadd.f32 %v2267, %v2279
        %v2307 = vadd.f32 %v2268, %v2279
        %v2308 = vadd.f32 %v2269, %v2279
        %v2309 = vadd.f32 %v2270, %v2279
        %v2310 = vadd.f32 %v2271, %v2279
        %v2311 = vadd.f32 %v2272, %v2279
        %v2312 = vadd.f32 %v2273, %v2279
        %v2313 = vmax.f32 %v2281, 0.0
        %v2314 = vmax.f32 %v2282, 0.0
        %v2315 = vmax.f32 %v2283, 0.0
        %v2316 = vmax.f32 %v2284, 0.0
        %v2317 = vmax.f32 %v2285, 0.0
        %v2318 = vmax.f32 %v2286, 0.0
        %v2319 = vmax.f32 %v2287, 0.0
        %v2320 = vmax.f32 %v2288, 0.0
        %v2321 = vmax.f32 %v2289, 0.0
        %v2322 = vmax.f32 %v2290, 0.0
        %v2323 = vmax.f32 %v2291, 0.0
        %v2324 = vmax.f32 %v2292, 0.0
        %v2325 = vmax.f32 %v2293, 0.0
        %v2326 = vmax.f32 %v2294, 0.0
        %v2327 = vmax.f32 %v2295, 0.0
        %v2328 = vmax.f32 %v2296, 0.0
        %v2329 = vmax.f32 %v2297, 0.0
        %v2330 = vmax.f32 %v2298, 0.0
        %v2331 = vmax.f32 %v2299, 0.0
        %v2332 = vmax.f32 %v2300, 0.0
        %v2333 = vmax.f32 %v2301, 0.0
        %v2334 = vmax.f32 %v2302, 0.0
        %v2335 = vmax.f32 %v2303, 0.0
        %v2336 = vmax.f32 %v2304, 0.0
        %v2337 = vmax.f32 %v2305, 0.0
        %v2338 = vmax.f32 %v2306, 0.0
        %v2339 = vmax.f32 %v2307, 0.0
        %v2340 = vmax.f32 %v2308, 0.0
        %v2341 = vmax.f32 %v2309, 0.0
        %v2342 = vmax.f32 %v2310, 0.0
        %v2343 = vmax.f32 %v2311, 0.0
        %v2344 = vmax.f32 %v2312, 0.0
        %s2345 = scalar_lea.vmem [#allocation3], 24
        %vm2346 = vcmask 130048
        %2347 = vst.msk [vmem:[%s2345 + $0x1] sm:$0xff] %vm2346, %v2313
        %2348 = vst.msk [vmem:[%s2345 + $0x9] sm:$0xff] %vm2346, %v2314
        %2349 = vst.msk [vmem:[%s2345 + $0x19] sm:$0xff] %vm2346, %v2315
        %2350 = vst.msk [vmem:[%s2345 + $0x21] sm:$0xff] %vm2346, %v2316
        %2351 = vst.msk [vmem:[%s2345 + $0x31] sm:$0xff] %vm2346, %v2317
        %2352 = vst.msk [vmem:[%s2345 + $0x39] sm:$0xff] %vm2346, %v2318
        %2353 = vst.msk [vmem:[%s2345 + $0x49] sm:$0xff] %vm2346, %v2319
        %2354 = vst.msk [vmem:[%s2345 + $0x51] sm:$0xff] %vm2346, %v2320
        %2355 = vst.msk [vmem:[%s2345 + $0x61] sm:$0xff] %vm2346, %v2321
        %2356 = vst.msk [vmem:[%s2345 + $0x69] sm:$0xff] %vm2346, %v2322
        %2357 = vst.msk [vmem:[%s2345 + $0x79] sm:$0xff] %vm2346, %v2323
        %2358 = vst.msk [vmem:[%s2345 + $0x81] sm:$0xff] %vm2346, %v2324
        %2359 = vst.msk [vmem:[%s2345 + $0x91] sm:$0xff] %vm2346, %v2325
        %2360 = vst.msk [vmem:[%s2345 + $0x99] sm:$0xff] %vm2346, %v2326
        %2361 = vst.msk [vmem:[%s2345 + $0xa9] sm:$0xff] %vm2346, %v2327
        %2362 = vst.msk [vmem:[%s2345 + $0xb1] sm:$0xff] %vm2346, %v2328
        %2363 = vst.msk [vmem:[%s2345 + $0xc1] sm:$0xff] %vm2346, %v2329
        %2364 = vst.msk [vmem:[%s2345 + $0xc9] sm:$0xff] %vm2346, %v2330
        %2365 = vst.msk [vmem:[%s2345 + $0xd9] sm:$0xff] %vm2346, %v2331
        %2366 = vst.msk [vmem:[%s2345 + $0xe1] sm:$0xff] %vm2346, %v2332
        %2367 = vst.msk [vmem:[%s2345 + $0xf1] sm:$0xff] %vm2346, %v2333
        %2368 = vst.msk [vmem:[%s2345 + $0xf9] sm:$0xff] %vm2346, %v2334
        %2369 = vst.msk [vmem:[%s2345 + $0x109] sm:$0xff] %vm2346, %v2335
        %2370 = vst.msk [vmem:[%s2345 + $0x111] sm:$0xff] %vm2346, %v2336
        %2371 = vst.msk [vmem:[%s2345 + $0x121] sm:$0xff] %vm2346, %v2337
        %2372 = vst.msk [vmem:[%s2345 + $0x129] sm:$0xff] %vm2346, %v2338
        %2373 = vst.msk [vmem:[%s2345 + $0x139] sm:$0xff] %vm2346, %v2339
        %2374 = vst.msk [vmem:[%s2345 + $0x141] sm:$0xff] %vm2346, %v2340
        %2375 = vst.msk [vmem:[%s2345 + $0x151] sm:$0xff] %vm2346, %v2341
        %2376 = vst.msk [vmem:[%s2345 + $0x159] sm:$0xff] %vm2346, %v2342
        %2377 = vst.msk [vmem:[%s2345 + $0x169] sm:$0xff] %vm2346, %v2343
        %2378 = vst.msk [vmem:[%s2345 + $0x171] sm:$0xff] %vm2346, %v2344
        %2379 = vst.msk [vmem:[#allocation3 + $0x1] sm:$0xff] %vm2346, %v2315
        %2380 = vst.msk [vmem:[#allocation3 + $0x9] sm:$0xff] %vm2346, %v2316
        %s2381 = scalar_lea.vmem [#allocation3], 408
        %2382 = vst.msk [vmem:[%s2381 + $0x1] sm:$0xff] %vm2346, %v2341
        %2383 = vst.msk [vmem:[%s2381 + $0x9] sm:$0xff] %vm2346, %v2342
        %v2384 = vld [vmem:[#allocation3 + $0x2] sm:$0x1]
        %v2385 = vld [vmem:[#allocation3 + $0x1a] sm:$0x1]
        %v2386 = vld [vmem:[#allocation3 + $0x32] sm:$0x1]
        %v2387 = vld [vmem:[#allocation3 + $0x4a] sm:$0x1]
        %v2388 = vld [vmem:[#allocation3 + $0x62] sm:$0x1]
        %v2389 = vld [vmem:[#allocation3 + $0x7a] sm:$0x1]
        %v2390 = vld [vmem:[#allocation3 + $0x92] sm:$0x1]
        %v2391 = vld [vmem:[#allocation3 + $0xaa] sm:$0x1]
        %v2392 = vld [vmem:[#allocation3 + $0xc2] sm:$0x1]
        %v2393 = vld [vmem:[#allocation3 + $0xda] sm:$0x1]
        %v2394 = vld [vmem:[#allocation3 + $0xf2] sm:$0x1]
        %v2395 = vld [vmem:[#allocation3 + $0x10a] sm:$0x1]
        %v2396 = vld [vmem:[#allocation3 + $0x122] sm:$0x1]
        %v2397 = vld [vmem:[#allocation3 + $0x13a] sm:$0x1]
        %v2398 = vld [vmem:[#allocation3 + $0x152] sm:$0x1]
        %v2399 = vld [vmem:[#allocation3 + $0x16a] sm:$0x1]
        %v2400 = vld [vmem:[#allocation3 + $0x182] sm:$0x1]
        %v2401 = vld [vmem:[#allocation3 + $0x19a] sm:$0x1]
        %vm2402 = vcmask 122880
        %2403 = vst.msk [vmem:[#allocation3] sm:$0x1] %vm2402, %v2384
        %2404 = vst.msk [vmem:[#allocation3 + $0x18] sm:$0x1] %vm2402, %v2385
        %2405 = vst.msk [vmem:[#allocation3 + $0x30] sm:$0x1] %vm2402, %v2386
        %2406 = vst.msk [vmem:[#allocation3 + $0x48] sm:$0x1] %vm2402, %v2387
        %2407 = vst.msk [vmem:[#allocation3 + $0x60] sm:$0x1] %vm2402, %v2388
        %2408 = vst.msk [vmem:[#allocation3 + $0x78] sm:$0x1] %vm2402, %v2389
        %2409 = vst.msk [vmem:[#allocation3 + $0x90] sm:$0x1] %vm2402, %v2390
        %2410 = vst.msk [vmem:[#allocation3 + $0xa8] sm:$0x1] %vm2402, %v2391
        %2411 = vst.msk [vmem:[#allocation3 + $0xc0] sm:$0x1] %vm2402, %v2392
        %2412 = vst.msk [vmem:[#allocation3 + $0xd8] sm:$0x1] %vm2402, %v2393
        %2413 = vst.msk [vmem:[#allocation3 + $0xf0] sm:$0x1] %vm2402, %v2394
        %2414 = vst.msk [vmem:[#allocation3 + $0x108] sm:$0x1] %vm2402, %v2395
        %2415 = vst.msk [vmem:[#allocation3 + $0x120] sm:$0x1] %vm2402, %v2396
        %2416 = vst.msk [vmem:[#allocation3 + $0x138] sm:$0x1] %vm2402, %v2397
        %2417 = vst.msk [vmem:[#allocation3 + $0x150] sm:$0x1] %vm2402, %v2398
        %2418 = vst.msk [vmem:[#allocation3 + $0x168] sm:$0x1] %vm2402, %v2399
        %2419 = vst.msk [vmem:[#allocation3 + $0x180] sm:$0x1] %vm2402, %v2400
        %2420 = vst.msk [vmem:[#allocation3 + $0x198] sm:$0x1] %vm2402, %v2401
        %v2421 = vld [vmem:[#allocation3 + $0xf] sm:$0x1]
        %v2422 = vld [vmem:[#allocation3 + $0x27] sm:$0x1]
        %v2423 = vld [vmem:[#allocation3 + $0x3f] sm:$0x1]
        %v2424 = vld [vmem:[#allocation3 + $0x57] sm:$0x1]
        %v2425 = vld [vmem:[#allocation3 + $0x6f] sm:$0x1]
        %v2426 = vld [vmem:[#allocation3 + $0x87] sm:$0x1]
        %v2427 = vld [vmem:[#allocation3 + $0x9f] sm:$0x1]
        %v2428 = vld [vmem:[#allocation3 + $0xb7] sm:$0x1]
        %v2429 = vld [vmem:[#allocation3 + $0xcf] sm:$0x1]
        %v2430 = vld [vmem:[#allocation3 + $0xe7] sm:$0x1]
        %v2431 = vld [vmem:[#allocation3 + $0xff] sm:$0x1]
        %v2432 = vld [vmem:[#allocation3 + $0x117] sm:$0x1]
        %v2433 = vld [vmem:[#allocation3 + $0x12f] sm:$0x1]
        %v2434 = vld [vmem:[#allocation3 + $0x147] sm:$0x1]
        %v2435 = vld [vmem:[#allocation3 + $0x15f] sm:$0x1]
        %v2436 = vld [vmem:[#allocation3 + $0x177] sm:$0x1]
        %v2437 = vld [vmem:[#allocation3 + $0x18f] sm:$0x1]
        %v2438 = vld [vmem:[#allocation3 + $0x1a7] sm:$0x1]
        %2439 = vst.msk [vmem:[#allocation3 + $0x11] sm:$0x1] %vm2402, %v2421
        %2440 = vst.msk [vmem:[#allocation3 + $0x29] sm:$0x1] %vm2402, %v2422
        %2441 = vst.msk [vmem:[#allocation3 + $0x41] sm:$0x1] %vm2402, %v2423
        %2442 = vst.msk [vmem:[#allocation3 + $0x59] sm:$0x1] %vm2402, %v2424
        %2443 = vst.msk [vmem:[#allocation3 + $0x71] sm:$0x1] %vm2402, %v2425
        %2444 = vst.msk [vmem:[#allocation3 + $0x89] sm:$0x1] %vm2402, %v2426
        %2445 = vst.msk [vmem:[#allocation3 + $0xa1] sm:$0x1] %vm2402, %v2427
        %2446 = vst.msk [vmem:[#allocation3 + $0xb9] sm:$0x1] %vm2402, %v2428
        %2447 = vst.msk [vmem:[#allocation3 + $0xd1] sm:$0x1] %vm2402, %v2429
        %2448 = vst.msk [vmem:[#allocation3 + $0xe9] sm:$0x1] %vm2402, %v2430
        %2449 = vst.msk [vmem:[#allocation3 + $0x101] sm:$0x1] %vm2402, %v2431
        %2450 = vst.msk [vmem:[#allocation3 + $0x119] sm:$0x1] %vm2402, %v2432
        %2451 = vst.msk [vmem:[#allocation3 + $0x131] sm:$0x1] %vm2402, %v2433
        %2452 = vst.msk [vmem:[#allocation3 + $0x149] sm:$0x1] %vm2402, %v2434
        %2453 = vst.msk [vmem:[#allocation3 + $0x161] sm:$0x1] %vm2402, %v2435
        %2454 = vst.msk [vmem:[#allocation3 + $0x179] sm:$0x1] %vm2402, %v2436
        %2455 = vst.msk [vmem:[#allocation3 + $0x191] sm:$0x1] %vm2402, %v2437
        %2456 = vst.msk [vmem:[#allocation3 + $0x1a9] sm:$0x1] %vm2402, %v2438
        %v2457 = vld [vmem:[#allocation3] sm:$0xff]
        %v2458 = vld [vmem:[#allocation3 + $0x8] sm:$0xff]
        %v2459 = vld [vmem:[#allocation3 + $0x18] sm:$0xff]
        %v2460 = vld [vmem:[#allocation3 + $0x20] sm:$0xff]
        %v2461 = vld [vmem:[#allocation3 + $0x30] sm:$0xff]
        %v2462 = vld [vmem:[#allocation3 + $0x38] sm:$0xff]
        %v2463 = vld [vmem:[#allocation3 + $0x48] sm:$0xff]
        %v2464 = vld [vmem:[#allocation3 + $0x50] sm:$0xff]
        %v2465 = vld [vmem:[#allocation3 + $0x60] sm:$0xff]
        %v2466 = vld [vmem:[#allocation3 + $0x68] sm:$0xff]
        %v2467 = vld [vmem:[#allocation3 + $0x78] sm:$0xff]
        %v2468 = vld [vmem:[#allocation3 + $0x80] sm:$0xff]
        %v2469 = vld [vmem:[#allocation3 + $0x90] sm:$0xff]
        %v2470 = vld [vmem:[#allocation3 + $0x98] sm:$0xff]
        %v2471 = vld [vmem:[#allocation3 + $0xa8] sm:$0xff]
        %v2472 = vld [vmem:[#allocation3 + $0xb0] sm:$0xff]
        %v2473 = vld [vmem:[#allocation3 + $0xc0] sm:$0xff]
        %v2474 = vld [vmem:[#allocation3 + $0xc8] sm:$0xff]
        %v2475 = vld [vmem:[#allocation3 + $0xd8] sm:$0xff]
        %v2476 = vld [vmem:[#allocation3 + $0xe0] sm:$0xff]
        %v2477 = vld [vmem:[#allocation3 + $0xf0] sm:$0xff]
        %v2478 = vld [vmem:[#allocation3 + $0xf8] sm:$0xff]
        %v2479 = vld [vmem:[#allocation3 + $0x108] sm:$0xff]
        %v2480 = vld [vmem:[#allocation3 + $0x110] sm:$0xff]
        %v2481 = vld [vmem:[#allocation3 + $0x120] sm:$0xff]
        %v2482 = vld [vmem:[#allocation3 + $0x128] sm:$0xff]
        %v2483 = vld [vmem:[#allocation3 + $0x138] sm:$0xff]
        %v2484 = vld [vmem:[#allocation3 + $0x140] sm:$0xff]
        %v2485 = vld [vmem:[#allocation3 + $0x150] sm:$0xff]
        %v2486 = vld [vmem:[#allocation3 + $0x158] sm:$0xff]
        %v2487 = vld [vmem:[#allocation3 + $0x168] sm:$0xff]
        %v2488 = vld [vmem:[#allocation3 + $0x170] sm:$0xff]
        %2489 = vst.msk [vmem:[#allocation5] sm:$0xff] %vm2346, %v2457
        %2490 = vst.msk [vmem:[#allocation5 + $0x10] sm:$0xff] %vm2346, %v2458
        %2491 = vst.msk [vmem:[#allocation5 + $0x20] sm:$0xff] %vm2346, %v2459
        %2492 = vst.msk [vmem:[#allocation5 + $0x30] sm:$0xff] %vm2346, %v2460
        %2493 = vst.msk [vmem:[#allocation5 + $0x40] sm:$0xff] %vm2346, %v2461
        %2494 = vst.msk [vmem:[#allocation5 + $0x50] sm:$0xff] %vm2346, %v2462
        %2495 = vst.msk [vmem:[#allocation5 + $0x60] sm:$0xff] %vm2346, %v2463
        %2496 = vst.msk [vmem:[#allocation5 + $0x70] sm:$0xff] %vm2346, %v2464
        %2497 = vst.msk [vmem:[#allocation5 + $0x80] sm:$0xff] %vm2346, %v2465
        %2498 = vst.msk [vmem:[#allocation5 + $0x90] sm:$0xff] %vm2346, %v2466
        %2499 = vst.msk [vmem:[#allocation5 + $0xa0] sm:$0xff] %vm2346, %v2467
        %2500 = vst.msk [vmem:[#allocation5 + $0xb0] sm:$0xff] %vm2346, %v2468
        %2501 = vst.msk [vmem:[#allocation5 + $0xc0] sm:$0xff] %vm2346, %v2469
        %2502 = vst.msk [vmem:[#allocation5 + $0xd0] sm:$0xff] %vm2346, %v2470
        %2503 = vst.msk [vmem:[#allocation5 + $0xe0] sm:$0xff] %vm2346, %v2471
        %2504 = vst.msk [vmem:[#allocation5 + $0xf0] sm:$0xff] %vm2346, %v2472
        %2505 = vst.msk [vmem:[#allocation5 + $0x100] sm:$0xff] %vm2346, %v2473
        %2506 = vst.msk [vmem:[#allocation5 + $0x110] sm:$0xff] %vm2346, %v2474
        %2507 = vst.msk [vmem:[#allocation5 + $0x120] sm:$0xff] %vm2346, %v2475
        %2508 = vst.msk [vmem:[#allocation5 + $0x130] sm:$0xff] %vm2346, %v2476
        %2509 = vst.msk [vmem:[#allocation5 + $0x140] sm:$0xff] %vm2346, %v2477
        %2510 = vst.msk [vmem:[#allocation5 + $0x150] sm:$0xff] %vm2346, %v2478
        %2511 = vst.msk [vmem:[#allocation5 + $0x160] sm:$0xff] %vm2346, %v2479
        %2512 = vst.msk [vmem:[#allocation5 + $0x170] sm:$0xff] %vm2346, %v2480
        %2513 = vst.msk [vmem:[#allocation5 + $0x180] sm:$0xff] %vm2346, %v2481
        %2514 = vst.msk [vmem:[#allocation5 + $0x190] sm:$0xff] %vm2346, %v2482
        %2515 = vst.msk [vmem:[#allocation5 + $0x1a0] sm:$0xff] %vm2346, %v2483
        %2516 = vst.msk [vmem:[#allocation5 + $0x1b0] sm:$0xff] %vm2346, %v2484
        %2517 = vst.msk [vmem:[#allocation5 + $0x1c0] sm:$0xff] %vm2346, %v2485
        %2518 = vst.msk [vmem:[#allocation5 + $0x1d0] sm:$0xff] %vm2346, %v2486
        %2519 = vst.msk [vmem:[#allocation5 + $0x1e0] sm:$0xff] %vm2346, %v2487
        %2520 = vst.msk [vmem:[#allocation5 + $0x1f0] sm:$0xff] %vm2346, %v2488
        %v2521 = vld [vmem:[#allocation3 + $0x1] sm:$0xff]
        %v2522 = vld [vmem:[#allocation3 + $0x9] sm:$0xff]
        %v2523 = vld [vmem:[#allocation3 + $0x19] sm:$0xff]
        %v2524 = vld [vmem:[#allocation3 + $0x21] sm:$0xff]
        %v2525 = vld [vmem:[#allocation3 + $0x31] sm:$0xff]
        %v2526 = vld [vmem:[#allocation3 + $0x39] sm:$0xff]
        %v2527 = vld [vmem:[#allocation3 + $0x49] sm:$0xff]
        %v2528 = vld [vmem:[#allocation3 + $0x51] sm:$0xff]
        %v2529 = vld [vmem:[#allocation3 + $0x61] sm:$0xff]
        %v2530 = vld [vmem:[#allocation3 + $0x69] sm:$0xff]
        %v2531 = vld [vmem:[#allocation3 + $0x79] sm:$0xff]
        %v2532 = vld [vmem:[#allocation3 + $0x81] sm:$0xff]
        %v2533 = vld [vmem:[#allocation3 + $0x91] sm:$0xff]
        %v2534 = vld [vmem:[#allocation3 + $0x99] sm:$0xff]
        %v2535 = vld [vmem:[#allocation3 + $0xa9] sm:$0xff]
        %v2536 = vld [vmem:[#allocation3 + $0xb1] sm:$0xff]
        %v2537 = vld [vmem:[#allocation3 + $0xc1] sm:$0xff]
        %v2538 = vld [vmem:[#allocation3 + $0xc9] sm:$0xff]
        %v2539 = vld [vmem:[#allocation3 + $0xd9] sm:$0xff]
        %v2540 = vld [vmem:[#allocation3 + $0xe1] sm:$0xff]
        %v2541 = vld [vmem:[#allocation3 + $0xf1] sm:$0xff]
        %v2542 = vld [vmem:[#allocation3 + $0xf9] sm:$0xff]
        %v2543 = vld [vmem:[#allocation3 + $0x109] sm:$0xff]
        %v2544 = vld [vmem:[#allocation3 + $0x111] sm:$0xff]
        %v2545 = vld [vmem:[#allocation3 + $0x121] sm:$0xff]
        %v2546 = vld [vmem:[#allocation3 + $0x129] sm:$0xff]
        %v2547 = vld [vmem:[#allocation3 + $0x139] sm:$0xff]
        %v2548 = vld [vmem:[#allocation3 + $0x141] sm:$0xff]
        %v2549 = vld [vmem:[#allocation3 + $0x151] sm:$0xff]
        %v2550 = vld [vmem:[#allocation3 + $0x159] sm:$0xff]
        %v2551 = vld [vmem:[#allocation3 + $0x169] sm:$0xff]
        %v2552 = vld [vmem:[#allocation3 + $0x171] sm:$0xff]
        %2585 = vrot.lane.b32.xlu0 %v2521, 16
        %v2586 = vpop.permute.xlu0 %2585
        %2587 = vrot.lane.b32.xlu0 %v2522, 16
        %v2588 = vpop.permute.xlu0 %2587
        %2589 = vrot.lane.b32.xlu0 %v2523, 16
        %v2590 = vpop.permute.xlu0 %2589
        %2591 = vrot.lane.b32.xlu0 %v2524, 16
        %v2592 = vpop.permute.xlu0 %2591
        %2593 = vrot.lane.b32.xlu0 %v2525, 16
        %v2594 = vpop.permute.xlu0 %2593
        %2595 = vrot.lane.b32.xlu0 %v2526, 16
        %v2596 = vpop.permute.xlu0 %2595
        %2597 = vrot.lane.b32.xlu0 %v2527, 16
        %v2598 = vpop.permute.xlu0 %2597
        %2599 = vrot.lane.b32.xlu0 %v2528, 16
        %v2600 = vpop.permute.xlu0 %2599
        %2601 = vrot.lane.b32.xlu0 %v2529, 16
        %v2602 = vpop.permute.xlu0 %2601
        %2603 = vrot.lane.b32.xlu0 %v2530, 16
        %v2604 = vpop.permute.xlu0 %2603
        %2605 = vrot.lane.b32.xlu0 %v2531, 16
        %v2606 = vpop.permute.xlu0 %2605
        %2607 = vrot.lane.b32.xlu0 %v2532, 16
        %v2608 = vpop.permute.xlu0 %2607
        %2609 = vrot.lane.b32.xlu0 %v2533, 16
        %v2610 = vpop.permute.xlu0 %2609
        %2611 = vrot.lane.b32.xlu0 %v2534, 16
        %v2612 = vpop.permute.xlu0 %2611
        %2613 = vrot.lane.b32.xlu0 %v2535, 16
        %v2614 = vpop.permute.xlu0 %2613
        %2615 = vrot.lane.b32.xlu0 %v2536, 16
        %v2616 = vpop.permute.xlu0 %2615
        %2617 = vrot.lane.b32.xlu0 %v2537, 16
        %v2618 = vpop.permute.xlu0 %2617
        %2619 = vrot.lane.b32.xlu0 %v2538, 16
        %v2620 = vpop.permute.xlu0 %2619
        %2621 = vrot.lane.b32.xlu0 %v2539, 16
        %v2622 = vpop.permute.xlu0 %2621
        %2623 = vrot.lane.b32.xlu0 %v2540, 16
        %v2624 = vpop.permute.xlu0 %2623
        %2625 = vrot.lane.b32.xlu0 %v2541, 16
        %v2626 = vpop.permute.xlu0 %2625
        %2627 = vrot.lane.b32.xlu0 %v2542, 16
        %v2628 = vpop.permute.xlu0 %2627
        %2629 = vrot.lane.b32.xlu0 %v2543, 16
        %v2630 = vpop.permute.xlu0 %2629
        %2631 = vrot.lane.b32.xlu0 %v2544, 16
        %v2632 = vpop.permute.xlu0 %2631
        %2633 = vrot.lane.b32.xlu0 %v2545, 16
        %v2634 = vpop.permute.xlu0 %2633
        %2635 = vrot.lane.b32.xlu0 %v2546, 16
        %v2636 = vpop.permute.xlu0 %2635
        %2637 = vrot.lane.b32.xlu0 %v2547, 16
        %v2638 = vpop.permute.xlu0 %2637
        %2639 = vrot.lane.b32.xlu0 %v2548, 16
        %v2640 = vpop.permute.xlu0 %2639
        %2641 = vrot.lane.b32.xlu0 %v2549, 16
        %v2642 = vpop.permute.xlu0 %2641
        %2643 = vrot.lane.b32.xlu0 %v2550, 16
        %v2644 = vpop.permute.xlu0 %2643
        %2645 = vrot.lane.b32.xlu0 %v2551, 16
        %v2646 = vpop.permute.xlu0 %2645
        %2647 = vrot.lane.b32.xlu0 %v2552, 16
        %v2648 = vpop.permute.xlu0 %2647
        %vm2681 = vcmask 261248
        %2682 = vst.msk [vmem:[#allocation5] sm:$0xff] %vm2681, %v2586
        %2683 = vst.msk [vmem:[#allocation5 + $0x10] sm:$0xff] %vm2681, %v2588
        %2684 = vst.msk [vmem:[#allocation5 + $0x20] sm:$0xff] %vm2681, %v2590
        %2685 = vst.msk [vmem:[#allocation5 + $0x30] sm:$0xff] %vm2681, %v2592
        %2686 = vst.msk [vmem:[#allocation5 + $0x40] sm:$0xff] %vm2681, %v2594
        %2687 = vst.msk [vmem:[#allocation5 + $0x50] sm:$0xff] %vm2681, %v2596
        %2688 = vst.msk [vmem:[#allocation5 + $0x60] sm:$0xff] %vm2681, %v2598
        %2689 = vst.msk [vmem:[#allocation5 + $0x70] sm:$0xff] %vm2681, %v2600
        %2690 = vst.msk [vmem:[#allocation5 + $0x80] sm:$0xff] %vm2681, %v2602
        %2691 = vst.msk [vmem:[#allocation5 + $0x90] sm:$0xff] %vm2681, %v2604
        %2692 = vst.msk [vmem:[#allocation5 + $0xa0] sm:$0xff] %vm2681, %v2606
        %2693 = vst.msk [vmem:[#allocation5 + $0xb0] sm:$0xff] %vm2681, %v2608
        %2694 = vst.msk [vmem:[#allocation5 + $0xc0] sm:$0xff] %vm2681, %v2610
        %2695 = vst.msk [vmem:[#allocation5 + $0xd0] sm:$0xff] %vm2681, %v2612
        %2696 = vst.msk [vmem:[#allocation5 + $0xe0] sm:$0xff] %vm2681, %v2614
        %2697 = vst.msk [vmem:[#allocation5 + $0xf0] sm:$0xff] %vm2681, %v2616
        %2698 = vst.msk [vmem:[#allocation5 + $0x100] sm:$0xff] %vm2681, %v2618
        %2699 = vst.msk [vmem:[#allocation5 + $0x110] sm:$0xff] %vm2681, %v2620
        %2700 = vst.msk [vmem:[#allocation5 + $0x120] sm:$0xff] %vm2681, %v2622
        %2701 = vst.msk [vmem:[#allocation5 + $0x130] sm:$0xff] %vm2681, %v2624
        %2702 = vst.msk [vmem:[#allocation5 + $0x140] sm:$0xff] %vm2681, %v2626
        %2703 = vst.msk [vmem:[#allocation5 + $0x150] sm:$0xff] %vm2681, %v2628
        %2704 = vst.msk [vmem:[#allocation5 + $0x160] sm:$0xff] %vm2681, %v2630
        %2705 = vst.msk [vmem:[#allocation5 + $0x170] sm:$0xff] %vm2681, %v2632
        %2706 = vst.msk [vmem:[#allocation5 + $0x180] sm:$0xff] %vm2681, %v2634
        %2707 = vst.msk [vmem:[#allocation5 + $0x190] sm:$0xff] %vm2681, %v2636
        %2708 = vst.msk [vmem:[#allocation5 + $0x1a0] sm:$0xff] %vm2681, %v2638
        %2709 = vst.msk [vmem:[#allocation5 + $0x1b0] sm:$0xff] %vm2681, %v2640
        %2710 = vst.msk [vmem:[#allocation5 + $0x1c0] sm:$0xff] %vm2681, %v2642
        %2711 = vst.msk [vmem:[#allocation5 + $0x1d0] sm:$0xff] %vm2681, %v2644
        %2712 = vst.msk [vmem:[#allocation5 + $0x1e0] sm:$0xff] %vm2681, %v2646
        %2713 = vst.msk [vmem:[#allocation5 + $0x1f0] sm:$0xff] %vm2681, %v2648
        %v2714 = vld [vmem:[#allocation3 + $0x2] sm:$0xff]
        %v2715 = vld [vmem:[#allocation3 + $0xa] sm:$0xff]
        %v2716 = vld [vmem:[#allocation3 + $0x1a] sm:$0xff]
        %v2717 = vld [vmem:[#allocation3 + $0x22] sm:$0xff]
        %v2718 = vld [vmem:[#allocation3 + $0x32] sm:$0xff]
        %v2719 = vld [vmem:[#allocation3 + $0x3a] sm:$0xff]
        %v2720 = vld [vmem:[#allocation3 + $0x4a] sm:$0xff]
        %v2721 = vld [vmem:[#allocation3 + $0x52] sm:$0xff]
        %v2722 = vld [vmem:[#allocation3 + $0x62] sm:$0xff]
        %v2723 = vld [vmem:[#allocation3 + $0x6a] sm:$0xff]
        %v2724 = vld [vmem:[#allocation3 + $0x7a] sm:$0xff]
        %v2725 = vld [vmem:[#allocation3 + $0x82] sm:$0xff]
        %v2726 = vld [vmem:[#allocation3 + $0x92] sm:$0xff]
        %v2727 = vld [vmem:[#allocation3 + $0x9a] sm:$0xff]
        %v2728 = vld [vmem:[#allocation3 + $0xaa] sm:$0xff]
        %v2729 = vld [vmem:[#allocation3 + $0xb2] sm:$0xff]
        %v2730 = vld [vmem:[#allocation3 + $0xc2] sm:$0xff]
        %v2731 = vld [vmem:[#allocation3 + $0xca] sm:$0xff]
        %v2732 = vld [vmem:[#allocation3 + $0xda] sm:$0xff]
        %v2733 = vld [vmem:[#allocation3 + $0xe2] sm:$0xff]
        %v2734 = vld [vmem:[#allocation3 + $0xf2] sm:$0xff]
        %v2735 = vld [vmem:[#allocation3 + $0xfa] sm:$0xff]
        %v2736 = vld [vmem:[#allocation3 + $0x10a] sm:$0xff]
        %v2737 = vld [vmem:[#allocation3 + $0x112] sm:$0xff]
        %v2738 = vld [vmem:[#allocation3 + $0x122] sm:$0xff]
        %v2739 = vld [vmem:[#allocation3 + $0x12a] sm:$0xff]
        %v2740 = vld [vmem:[#allocation3 + $0x13a] sm:$0xff]
        %v2741 = vld [vmem:[#allocation3 + $0x142] sm:$0xff]
        %v2742 = vld [vmem:[#allocation3 + $0x152] sm:$0xff]
        %v2743 = vld [vmem:[#allocation3 + $0x15a] sm:$0xff]
        %v2744 = vld [vmem:[#allocation3 + $0x16a] sm:$0xff]
        %v2745 = vld [vmem:[#allocation3 + $0x172] sm:$0xff]
        %2778 = vrot.lane.b32.xlu0 %v2714, 32
        %v2779 = vpop.permute.xlu0 %2778
        %2780 = vrot.lane.b32.xlu0 %v2715, 32
        %v2781 = vpop.permute.xlu0 %2780
        %2782 = vrot.lane.b32.xlu0 %v2716, 32
        %v2783 = vpop.permute.xlu0 %2782
        %2784 = vrot.lane.b32.xlu0 %v2717, 32
        %v2785 = vpop.permute.xlu0 %2784
        %2786 = vrot.lane.b32.xlu0 %v2718, 32
        %v2787 = vpop.permute.xlu0 %2786
        %2788 = vrot.lane.b32.xlu0 %v2719, 32
        %v2789 = vpop.permute.xlu0 %2788
        %2790 = vrot.lane.b32.xlu0 %v2720, 32
        %v2791 = vpop.permute.xlu0 %2790
        %2792 = vrot.lane.b32.xlu0 %v2721, 32
        %v2793 = vpop.permute.xlu0 %2792
        %2794 = vrot.lane.b32.xlu0 %v2722, 32
        %v2795 = vpop.permute.xlu0 %2794
        %2796 = vrot.lane.b32.xlu0 %v2723, 32
        %v2797 = vpop.permute.xlu0 %2796
        %2798 = vrot.lane.b32.xlu0 %v2724, 32
        %v2799 = vpop.permute.xlu0 %2798
        %2800 = vrot.lane.b32.xlu0 %v2725, 32
        %v2801 = vpop.permute.xlu0 %2800
        %2802 = vrot.lane.b32.xlu0 %v2726, 32
        %v2803 = vpop.permute.xlu0 %2802
        %2804 = vrot.lane.b32.xlu0 %v2727, 32
        %v2805 = vpop.permute.xlu0 %2804
        %2806 = vrot.lane.b32.xlu0 %v2728, 32
        %v2807 = vpop.permute.xlu0 %2806
        %2808 = vrot.lane.b32.xlu0 %v2729, 32
        %v2809 = vpop.permute.xlu0 %2808
        %2810 = vrot.lane.b32.xlu0 %v2730, 32
        %v2811 = vpop.permute.xlu0 %2810
        %2812 = vrot.lane.b32.xlu0 %v2731, 32
        %v2813 = vpop.permute.xlu0 %2812
        %2814 = vrot.lane.b32.xlu0 %v2732, 32
        %v2815 = vpop.permute.xlu0 %2814
        %2816 = vrot.lane.b32.xlu0 %v2733, 32
        %v2817 = vpop.permute.xlu0 %2816
        %2818 = vrot.lane.b32.xlu0 %v2734, 32
        %v2819 = vpop.permute.xlu0 %2818
        %2820 = vrot.lane.b32.xlu0 %v2735, 32
        %v2821 = vpop.permute.xlu0 %2820
        %2822 = vrot.lane.b32.xlu0 %v2736, 32
        %v2823 = vpop.permute.xlu0 %2822
        %2824 = vrot.lane.b32.xlu0 %v2737, 32
        %v2825 = vpop.permute.xlu0 %2824
        %2826 = vrot.lane.b32.xlu0 %v2738, 32
        %v2827 = vpop.permute.xlu0 %2826
        %2828 = vrot.lane.b32.xlu0 %v2739, 32
        %v2829 = vpop.permute.xlu0 %2828
        %2830 = vrot.lane.b32.xlu0 %v2740, 32
        %v2831 = vpop.permute.xlu0 %2830
        %2832 = vrot.lane.b32.xlu0 %v2741, 32
        %v2833 = vpop.permute.xlu0 %2832
        %2834 = vrot.lane.b32.xlu0 %v2742, 32
        %v2835 = vpop.permute.xlu0 %2834
        %2836 = vrot.lane.b32.xlu0 %v2743, 32
        %v2837 = vpop.permute.xlu0 %2836
        %2838 = vrot.lane.b32.xlu0 %v2744, 32
        %v2839 = vpop.permute.xlu0 %2838
        %2840 = vrot.lane.b32.xlu0 %v2745, 32
        %v2841 = vpop.permute.xlu0 %2840
        %vm2874 = vcmask 392448
        %2875 = vst.msk [vmem:[#allocation5] sm:$0xff] %vm2874, %v2779
        %2876 = vst.msk [vmem:[#allocation5 + $0x10] sm:$0xff] %vm2874, %v2781
        %2877 = vst.msk [vmem:[#allocation5 + $0x20] sm:$0xff] %vm2874, %v2783
        %2878 = vst.msk [vmem:[#allocation5 + $0x30] sm:$0xff] %vm2874, %v2785
        %2879 = vst.msk [vmem:[#allocation5 + $0x40] sm:$0xff] %vm2874, %v2787
        %2880 = vst.msk [vmem:[#allocation5 + $0x50] sm:$0xff] %vm2874, %v2789
        %2881 = vst.msk [vmem:[#allocation5 + $0x60] sm:$0xff] %vm2874, %v2791
        %2882 = vst.msk [vmem:[#allocation5 + $0x70] sm:$0xff] %vm2874, %v2793
        %2883 = vst.msk [vmem:[#allocation5 + $0x80] sm:$0xff] %vm2874, %v2795
        %2884 = vst.msk [vmem:[#allocation5 + $0x90] sm:$0xff] %vm2874, %v2797
        %2885 = vst.msk [vmem:[#allocation5 + $0xa0] sm:$0xff] %vm2874, %v2799
        %2886 = vst.msk [vmem:[#allocation5 + $0xb0] sm:$0xff] %vm2874, %v2801
        %2887 = vst.msk [vmem:[#allocation5 + $0xc0] sm:$0xff] %vm2874, %v2803
        %2888 = vst.msk [vmem:[#allocation5 + $0xd0] sm:$0xff] %vm2874, %v2805
        %2889 = vst.msk [vmem:[#allocation5 + $0xe0] sm:$0xff] %vm2874, %v2807
        %2890 = vst.msk [vmem:[#allocation5 + $0xf0] sm:$0xff] %vm2874, %v2809
        %2891 = vst.msk [vmem:[#allocation5 + $0x100] sm:$0xff] %vm2874, %v2811
        %2892 = vst.msk [vmem:[#allocation5 + $0x110] sm:$0xff] %vm2874, %v2813
        %2893 = vst.msk [vmem:[#allocation5 + $0x120] sm:$0xff] %vm2874, %v2815
        %2894 = vst.msk [vmem:[#allocation5 + $0x130] sm:$0xff] %vm2874, %v2817
        %2895 = vst.msk [vmem:[#allocation5 + $0x140] sm:$0xff] %vm2874, %v2819
        %2896 = vst.msk [vmem:[#allocation5 + $0x150] sm:$0xff] %vm2874, %v2821
        %2897 = vst.msk [vmem:[#allocation5 + $0x160] sm:$0xff] %vm2874, %v2823
        %2898 = vst.msk [vmem:[#allocation5 + $0x170] sm:$0xff] %vm2874, %v2825
        %2899 = vst.msk [vmem:[#allocation5 + $0x180] sm:$0xff] %vm2874, %v2827
        %2900 = vst.msk [vmem:[#allocation5 + $0x190] sm:$0xff] %vm2874, %v2829
        %2901 = vst.msk [vmem:[#allocation5 + $0x1a0] sm:$0xff] %vm2874, %v2831
        %2902 = vst.msk [vmem:[#allocation5 + $0x1b0] sm:$0xff] %vm2874, %v2833
        %2903 = vst.msk [vmem:[#allocation5 + $0x1c0] sm:$0xff] %vm2874, %v2835
        %2904 = vst.msk [vmem:[#allocation5 + $0x1d0] sm:$0xff] %vm2874, %v2837
        %2905 = vst.msk [vmem:[#allocation5 + $0x1e0] sm:$0xff] %vm2874, %v2839
        %2906 = vst.msk [vmem:[#allocation5 + $0x1f0] sm:$0xff] %vm2874, %v2841
        %v2907 = vld [vmem:[%s2345] sm:$0xff]
        %v2908 = vld [vmem:[%s2345 + $0x8] sm:$0xff]
        %v2909 = vld [vmem:[%s2345 + $0x18] sm:$0xff]
        %v2910 = vld [vmem:[%s2345 + $0x20] sm:$0xff]
        %v2911 = vld [vmem:[%s2345 + $0x30] sm:$0xff]
        %v2912 = vld [vmem:[%s2345 + $0x38] sm:$0xff]
        %v2913 = vld [vmem:[%s2345 + $0x48] sm:$0xff]
        %v2914 = vld [vmem:[%s2345 + $0x50] sm:$0xff]
        %v2915 = vld [vmem:[%s2345 + $0x60] sm:$0xff]
        %v2916 = vld [vmem:[%s2345 + $0x68] sm:$0xff]
        %v2917 = vld [vmem:[%s2345 + $0x78] sm:$0xff]
        %v2918 = vld [vmem:[%s2345 + $0x80] sm:$0xff]
        %v2919 = vld [vmem:[%s2345 + $0x90] sm:$0xff]
        %v2920 = vld [vmem:[%s2345 + $0x98] sm:$0xff]
        %v2921 = vld [vmem:[%s2345 + $0xa8] sm:$0xff]
        %v2922 = vld [vmem:[%s2345 + $0xb0] sm:$0xff]
        %v2923 = vld [vmem:[%s2345 + $0xc0] sm:$0xff]
        %v2924 = vld [vmem:[%s2345 + $0xc8] sm:$0xff]
        %v2925 = vld [vmem:[%s2345 + $0xd8] sm:$0xff]
        %v2926 = vld [vmem:[%s2345 + $0xe0] sm:$0xff]
        %v2927 = vld [vmem:[%s2345 + $0xf0] sm:$0xff]
        %v2928 = vld [vmem:[%s2345 + $0xf8] sm:$0xff]
        %v2929 = vld [vmem:[%s2345 + $0x108] sm:$0xff]
        %v2930 = vld [vmem:[%s2345 + $0x110] sm:$0xff]
        %v2931 = vld [vmem:[%s2345 + $0x120] sm:$0xff]
        %v2932 = vld [vmem:[%s2345 + $0x128] sm:$0xff]
        %v2933 = vld [vmem:[%s2345 + $0x138] sm:$0xff]
        %v2934 = vld [vmem:[%s2345 + $0x140] sm:$0xff]
        %v2935 = vld [vmem:[%s2345 + $0x150] sm:$0xff]
        %v2936 = vld [vmem:[%s2345 + $0x158] sm:$0xff]
        %v2937 = vld [vmem:[%s2345 + $0x168] sm:$0xff]
        %v2938 = vld [vmem:[%s2345 + $0x170] sm:$0xff]
        %2971 = vrot.lane.b32.xlu0 %v2907, 48
        %v2972 = vpop.permute.xlu0 %2971
        %2973 = vrot.lane.b32.xlu0 %v2908, 48
        %v2974 = vpop.permute.xlu0 %2973
        %2975 = vrot.lane.b32.xlu0 %v2909, 48
        %v2976 = vpop.permute.xlu0 %2975
        %2977 = vrot.lane.b32.xlu0 %v2910, 48
        %v2978 = vpop.permute.xlu0 %2977
        %2979 = vrot.lane.b32.xlu0 %v2911, 48
        %v2980 = vpop.permute.xlu0 %2979
        %2981 = vrot.lane.b32.xlu0 %v2912, 48
        %v2982 = vpop.permute.xlu0 %2981
        %2983 = vrot.lane.b32.xlu0 %v2913, 48
        %v2984 = vpop.permute.xlu0 %2983
        %2985 = vrot.lane.b32.xlu0 %v2914, 48
        %v2986 = vpop.permute.xlu0 %2985
        %2987 = vrot.lane.b32.xlu0 %v2915, 48
        %v2988 = vpop.permute.xlu0 %2987
        %2989 = vrot.lane.b32.xlu0 %v2916, 48
        %v2990 = vpop.permute.xlu0 %2989
        %2991 = vrot.lane.b32.xlu0 %v2917, 48
        %v2992 = vpop.permute.xlu0 %2991
        %2993 = vrot.lane.b32.xlu0 %v2918, 48
        %v2994 = vpop.permute.xlu0 %2993
        %2995 = vrot.lane.b32.xlu0 %v2919, 48
        %v2996 = vpop.permute.xlu0 %2995
        %2997 = vrot.lane.b32.xlu0 %v2920, 48
        %v2998 = vpop.permute.xlu0 %2997
        %2999 = vrot.lane.b32.xlu0 %v2921, 48
        %v3000 = vpop.permute.xlu0 %2999
        %3001 = vrot.lane.b32.xlu0 %v2922, 48
        %v3002 = vpop.permute.xlu0 %3001
        %3003 = vrot.lane.b32.xlu0 %v2923, 48
        %v3004 = vpop.permute.xlu0 %3003
        %3005 = vrot.lane.b32.xlu0 %v2924, 48
        %v3006 = vpop.permute.xlu0 %3005
        %3007 = vrot.lane.b32.xlu0 %v2925, 48
        %v3008 = vpop.permute.xlu0 %3007
        %3009 = vrot.lane.b32.xlu0 %v2926, 48
        %v3010 = vpop.permute.xlu0 %3009
        %3011 = vrot.lane.b32.xlu0 %v2927, 48
        %v3012 = vpop.permute.xlu0 %3011
        %3013 = vrot.lane.b32.xlu0 %v2928, 48
        %v3014 = vpop.permute.xlu0 %3013
        %3015 = vrot.lane.b32.xlu0 %v2929, 48
        %v3016 = vpop.permute.xlu0 %3015
        %3017 = vrot.lane.b32.xlu0 %v2930, 48
        %v3018 = vpop.permute.xlu0 %3017
        %3019 = vrot.lane.b32.xlu0 %v2931, 48
        %v3020 = vpop.permute.xlu0 %3019
        %3021 = vrot.lane.b32.xlu0 %v2932, 48
        %v3022 = vpop.permute.xlu0 %3021
        %3023 = vrot.lane.b32.xlu0 %v2933, 48
        %v3024 = vpop.permute.xlu0 %3023
        %3025 = vrot.lane.b32.xlu0 %v2934, 48
        %v3026 = vpop.permute.xlu0 %3025
        %3027 = vrot.lane.b32.xlu0 %v2935, 48
        %v3028 = vpop.permute.xlu0 %3027
        %3029 = vrot.lane.b32.xlu0 %v2936, 48
        %v3030 = vpop.permute.xlu0 %3029
        %3031 = vrot.lane.b32.xlu0 %v2937, 48
        %v3032 = vpop.permute.xlu0 %3031
        %3033 = vrot.lane.b32.xlu0 %v2938, 48
        %v3034 = vpop.permute.xlu0 %3033
        %vm3067 = vcmask 523648
        %3068 = vst.msk [vmem:[#allocation5] sm:$0xff] %vm3067, %v2972
        %3069 = vst.msk [vmem:[#allocation5 + $0x10] sm:$0xff] %vm3067, %v2974
        %3070 = vst.msk [vmem:[#allocation5 + $0x20] sm:$0xff] %vm3067, %v2976
        %3071 = vst.msk [vmem:[#allocation5 + $0x30] sm:$0xff] %vm3067, %v2978
        %3072 = vst.msk [vmem:[#allocation5 + $0x40] sm:$0xff] %vm3067, %v2980
        %3073 = vst.msk [vmem:[#allocation5 + $0x50] sm:$0xff] %vm3067, %v2982
        %3074 = vst.msk [vmem:[#allocation5 + $0x60] sm:$0xff] %vm3067, %v2984
        %3075 = vst.msk [vmem:[#allocation5 + $0x70] sm:$0xff] %vm3067, %v2986
        %3076 = vst.msk [vmem:[#allocation5 + $0x80] sm:$0xff] %vm3067, %v2988
        %3077 = vst.msk [vmem:[#allocation5 + $0x90] sm:$0xff] %vm3067, %v2990
        %3078 = vst.msk [vmem:[#allocation5 + $0xa0] sm:$0xff] %vm3067, %v2992
        %3079 = vst.msk [vmem:[#allocation5 + $0xb0] sm:$0xff] %vm3067, %v2994
        %3080 = vst.msk [vmem:[#allocation5 + $0xc0] sm:$0xff] %vm3067, %v2996
        %3081 = vst.msk [vmem:[#allocation5 + $0xd0] sm:$0xff] %vm3067, %v2998
        %3082 = vst.msk [vmem:[#allocation5 + $0xe0] sm:$0xff] %vm3067, %v3000
        %3083 = vst.msk [vmem:[#allocation5 + $0xf0] sm:$0xff] %vm3067, %v3002
        %3084 = vst.msk [vmem:[#allocation5 + $0x100] sm:$0xff] %vm3067, %v3004
        %3085 = vst.msk [vmem:[#allocation5 + $0x110] sm:$0xff] %vm3067, %v3006
        %3086 = vst.msk [vmem:[#allocation5 + $0x120] sm:$0xff] %vm3067, %v3008
        %3087 = vst.msk [vmem:[#allocation5 + $0x130] sm:$0xff] %vm3067, %v3010
        %3088 = vst.msk [vmem:[#allocation5 + $0x140] sm:$0xff] %vm3067, %v3012
        %3089 = vst.msk [vmem:[#allocation5 + $0x150] sm:$0xff] %vm3067, %v3014
        %3090 = vst.msk [vmem:[#allocation5 + $0x160] sm:$0xff] %vm3067, %v3016
        %3091 = vst.msk [vmem:[#allocation5 + $0x170] sm:$0xff] %vm3067, %v3018
        %3092 = vst.msk [vmem:[#allocation5 + $0x180] sm:$0xff] %vm3067, %v3020
        %3093 = vst.msk [vmem:[#allocation5 + $0x190] sm:$0xff] %vm3067, %v3022
        %3094 = vst.msk [vmem:[#allocation5 + $0x1a0] sm:$0xff] %vm3067, %v3024
        %3095 = vst.msk [vmem:[#allocation5 + $0x1b0] sm:$0xff] %vm3067, %v3026
        %3096 = vst.msk [vmem:[#allocation5 + $0x1c0] sm:$0xff] %vm3067, %v3028
        %3097 = vst.msk [vmem:[#allocation5 + $0x1d0] sm:$0xff] %vm3067, %v3030
        %3098 = vst.msk [vmem:[#allocation5 + $0x1e0] sm:$0xff] %vm3067, %v3032
        %3099 = vst.msk [vmem:[#allocation5 + $0x1f0] sm:$0xff] %vm3067, %v3034
        %v3100 = vld [vmem:[%s2345 + $0x1] sm:$0xff]
        %v3101 = vld [vmem:[%s2345 + $0x9] sm:$0xff]
        %v3102 = vld [vmem:[%s2345 + $0x19] sm:$0xff]
        %v3103 = vld [vmem:[%s2345 + $0x21] sm:$0xff]
        %v3104 = vld [vmem:[%s2345 + $0x31] sm:$0xff]
        %v3105 = vld [vmem:[%s2345 + $0x39] sm:$0xff]
        %v3106 = vld [vmem:[%s2345 + $0x49] sm:$0xff]
        %v3107 = vld [vmem:[%s2345 + $0x51] sm:$0xff]
        %v3108 = vld [vmem:[%s2345 + $0x61] sm:$0xff]
        %v3109 = vld [vmem:[%s2345 + $0x69] sm:$0xff]
        %v3110 = vld [vmem:[%s2345 + $0x79] sm:$0xff]
        %v3111 = vld [vmem:[%s2345 + $0x81] sm:$0xff]
        %v3112 = vld [vmem:[%s2345 + $0x91] sm:$0xff]
        %v3113 = vld [vmem:[%s2345 + $0x99] sm:$0xff]
        %v3114 = vld [vmem:[%s2345 + $0xa9] sm:$0xff]
        %v3115 = vld [vmem:[%s2345 + $0xb1] sm:$0xff]
        %v3116 = vld [vmem:[%s2345 + $0xc1] sm:$0xff]
        %v3117 = vld [vmem:[%s2345 + $0xc9] sm:$0xff]
        %v3118 = vld [vmem:[%s2345 + $0xd9] sm:$0xff]
        %v3119 = vld [vmem:[%s2345 + $0xe1] sm:$0xff]
        %v3120 = vld [vmem:[%s2345 + $0xf1] sm:$0xff]
        %v3121 = vld [vmem:[%s2345 + $0xf9] sm:$0xff]
        %v3122 = vld [vmem:[%s2345 + $0x109] sm:$0xff]
        %v3123 = vld [vmem:[%s2345 + $0x111] sm:$0xff]
        %v3124 = vld [vmem:[%s2345 + $0x121] sm:$0xff]
        %v3125 = vld [vmem:[%s2345 + $0x129] sm:$0xff]
        %v3126 = vld [vmem:[%s2345 + $0x139] sm:$0xff]
        %v3127 = vld [vmem:[%s2345 + $0x141] sm:$0xff]
        %v3128 = vld [vmem:[%s2345 + $0x151] sm:$0xff]
        %v3129 = vld [vmem:[%s2345 + $0x159] sm:$0xff]
        %v3130 = vld [vmem:[%s2345 + $0x169] sm:$0xff]
        %v3131 = vld [vmem:[%s2345 + $0x171] sm:$0xff]
        %3164 = vrot.lane.b32.xlu0 %v3100, 64
        %v3165 = vpop.permute.xlu0 %3164
        %3166 = vrot.lane.b32.xlu0 %v3101, 64
        %v3167 = vpop.permute.xlu0 %3166
        %3168 = vrot.lane.b32.xlu0 %v3102, 64
        %v3169 = vpop.permute.xlu0 %3168
        %3170 = vrot.lane.b32.xlu0 %v3103, 64
        %v3171 = vpop.permute.xlu0 %3170
        %3172 = vrot.lane.b32.xlu0 %v3104, 64
        %v3173 = vpop.permute.xlu0 %3172
        %3174 = vrot.lane.b32.xlu0 %v3105, 64
        %v3175 = vpop.permute.xlu0 %3174
        %3176 = vrot.lane.b32.xlu0 %v3106, 64
        %v3177 = vpop.permute.xlu0 %3176
        %3178 = vrot.lane.b32.xlu0 %v3107, 64
        %v3179 = vpop.permute.xlu0 %3178
        %3180 = vrot.lane.b32.xlu0 %v3108, 64
        %v3181 = vpop.permute.xlu0 %3180
        %3182 = vrot.lane.b32.xlu0 %v3109, 64
        %v3183 = vpop.permute.xlu0 %3182
        %3184 = vrot.lane.b32.xlu0 %v3110, 64
        %v3185 = vpop.permute.xlu0 %3184
        %3186 = vrot.lane.b32.xlu0 %v3111, 64
        %v3187 = vpop.permute.xlu0 %3186
        %3188 = vrot.lane.b32.xlu0 %v3112, 64
        %v3189 = vpop.permute.xlu0 %3188
        %3190 = vrot.lane.b32.xlu0 %v3113, 64
        %v3191 = vpop.permute.xlu0 %3190
        %3192 = vrot.lane.b32.xlu0 %v3114, 64
        %v3193 = vpop.permute.xlu0 %3192
        %3194 = vrot.lane.b32.xlu0 %v3115, 64
        %v3195 = vpop.permute.xlu0 %3194
        %3196 = vrot.lane.b32.xlu0 %v3116, 64
        %v3197 = vpop.permute.xlu0 %3196
        %3198 = vrot.lane.b32.xlu0 %v3117, 64
        %v3199 = vpop.permute.xlu0 %3198
        %3200 = vrot.lane.b32.xlu0 %v3118, 64
        %v3201 = vpop.permute.xlu0 %3200
        %3202 = vrot.lane.b32.xlu0 %v3119, 64
        %v3203 = vpop.permute.xlu0 %3202
        %3204 = vrot.lane.b32.xlu0 %v3120, 64
        %v3205 = vpop.permute.xlu0 %3204
        %3206 = vrot.lane.b32.xlu0 %v3121, 64
        %v3207 = vpop.permute.xlu0 %3206
        %3208 = vrot.lane.b32.xlu0 %v3122, 64
        %v3209 = vpop.permute.xlu0 %3208
        %3210 = vrot.lane.b32.xlu0 %v3123, 64
        %v3211 = vpop.permute.xlu0 %3210
        %3212 = vrot.lane.b32.xlu0 %v3124, 64
        %v3213 = vpop.permute.xlu0 %3212
        %3214 = vrot.lane.b32.xlu0 %v3125, 64
        %v3215 = vpop.permute.xlu0 %3214
        %3216 = vrot.lane.b32.xlu0 %v3126, 64
        %v3217 = vpop.permute.xlu0 %3216
        %3218 = vrot.lane.b32.xlu0 %v3127, 64
        %v3219 = vpop.permute.xlu0 %3218
        %3220 = vrot.lane.b32.xlu0 %v3128, 64
        %v3221 = vpop.permute.xlu0 %3220
        %3222 = vrot.lane.b32.xlu0 %v3129, 64
        %v3223 = vpop.permute.xlu0 %3222
        %3224 = vrot.lane.b32.xlu0 %v3130, 64
        %v3225 = vpop.permute.xlu0 %3224
        %3226 = vrot.lane.b32.xlu0 %v3131, 64
        %v3227 = vpop.permute.xlu0 %3226
        %vm3260 = vcmask 654848
        %3261 = vst.msk [vmem:[#allocation5] sm:$0xff] %vm3260, %v3165
        %3262 = vst.msk [vmem:[#allocation5 + $0x10] sm:$0xff] %vm3260, %v3167
        %3263 = vst.msk [vmem:[#allocation5 + $0x20] sm:$0xff] %vm3260, %v3169
        %3264 = vst.msk [vmem:[#allocation5 + $0x30] sm:$0xff] %vm3260, %v3171
        %3265 = vst.msk [vmem:[#allocation5 + $0x40] sm:$0xff] %vm3260, %v3173
        %3266 = vst.msk [vmem:[#allocation5 + $0x50] sm:$0xff] %vm3260, %v3175
        %3267 = vst.msk [vmem:[#allocation5 + $0x60] sm:$0xff] %vm3260, %v3177
        %3268 = vst.msk [vmem:[#allocation5 + $0x70] sm:$0xff] %vm3260, %v3179
        %3269 = vst.msk [vmem:[#allocation5 + $0x80] sm:$0xff] %vm3260, %v3181
        %3270 = vst.msk [vmem:[#allocation5 + $0x90] sm:$0xff] %vm3260, %v3183
        %3271 = vst.msk [vmem:[#allocation5 + $0xa0] sm:$0xff] %vm3260, %v3185
        %3272 = vst.msk [vmem:[#allocation5 + $0xb0] sm:$0xff] %vm3260, %v3187
        %3273 = vst.msk [vmem:[#allocation5 + $0xc0] sm:$0xff] %vm3260, %v3189
        %3274 = vst.msk [vmem:[#allocation5 + $0xd0] sm:$0xff] %vm3260, %v3191
        %3275 = vst.msk [vmem:[#allocation5 + $0xe0] sm:$0xff] %vm3260, %v3193
        %3276 = vst.msk [vmem:[#allocation5 + $0xf0] sm:$0xff] %vm3260, %v3195
        %3277 = vst.msk [vmem:[#allocation5 + $0x100] sm:$0xff] %vm3260, %v3197
        %3278 = vst.msk [vmem:[#allocation5 + $0x110] sm:$0xff] %vm3260, %v3199
        %3279 = vst.msk [vmem:[#allocation5 + $0x120] sm:$0xff] %vm3260, %v3201
        %3280 = vst.msk [vmem:[#allocation5 + $0x130] sm:$0xff] %vm3260, %v3203
        %3281 = vst.msk [vmem:[#allocation5 + $0x140] sm:$0xff] %vm3260, %v3205
        %3282 = vst.msk [vmem:[#allocation5 + $0x150] sm:$0xff] %vm3260, %v3207
        %3283 = vst.msk [vmem:[#allocation5 + $0x160] sm:$0xff] %vm3260, %v3209
        %3284 = vst.msk [vmem:[#allocation5 + $0x170] sm:$0xff] %vm3260, %v3211
        %3285 = vst.msk [vmem:[#allocation5 + $0x180] sm:$0xff] %vm3260, %v3213
        %3286 = vst.msk [vmem:[#allocation5 + $0x190] sm:$0xff] %vm3260, %v3215
        %3287 = vst.msk [vmem:[#allocation5 + $0x1a0] sm:$0xff] %vm3260, %v3217
        %3288 = vst.msk [vmem:[#allocation5 + $0x1b0] sm:$0xff] %vm3260, %v3219
        %3289 = vst.msk [vmem:[#allocation5 + $0x1c0] sm:$0xff] %vm3260, %v3221
        %3290 = vst.msk [vmem:[#allocation5 + $0x1d0] sm:$0xff] %vm3260, %v3223
        %3291 = vst.msk [vmem:[#allocation5 + $0x1e0] sm:$0xff] %vm3260, %v3225
        %3292 = vst.msk [vmem:[#allocation5 + $0x1f0] sm:$0xff] %vm3260, %v3227
        %v3293 = vld [vmem:[%s2345 + $0x2] sm:$0xff]
        %v3294 = vld [vmem:[%s2345 + $0xa] sm:$0xff]
        %v3295 = vld [vmem:[%s2345 + $0x1a] sm:$0xff]
        %v3296 = vld [vmem:[%s2345 + $0x22] sm:$0xff]
        %v3297 = vld [vmem:[%s2345 + $0x32] sm:$0xff]
        %v3298 = vld [vmem:[%s2345 + $0x3a] sm:$0xff]
        %v3299 = vld [vmem:[%s2345 + $0x4a] sm:$0xff]
        %v3300 = vld [vmem:[%s2345 + $0x52] sm:$0xff]
        %v3301 = vld [vmem:[%s2345 + $0x62] sm:$0xff]
        %v3302 = vld [vmem:[%s2345 + $0x6a] sm:$0xff]
        %v3303 = vld [vmem:[%s2345 + $0x7a] sm:$0xff]
        %v3304 = vld [vmem:[%s2345 + $0x82] sm:$0xff]
        %v3305 = vld [vmem:[%s2345 + $0x92] sm:$0xff]
        %v3306 = vld [vmem:[%s2345 + $0x9a] sm:$0xff]
        %v3307 = vld [vmem:[%s2345 + $0xaa] sm:$0xff]
        %v3308 = vld [vmem:[%s2345 + $0xb2] sm:$0xff]
        %v3309 = vld [vmem:[%s2345 + $0xc2] sm:$0xff]
        %v3310 = vld [vmem:[%s2345 + $0xca] sm:$0xff]
        %v3311 = vld [vmem:[%s2345 + $0xda] sm:$0xff]
        %v3312 = vld [vmem:[%s2345 + $0xe2] sm:$0xff]
        %v3313 = vld [vmem:[%s2345 + $0xf2] sm:$0xff]
        %v3314 = vld [vmem:[%s2345 + $0xfa] sm:$0xff]
        %v3315 = vld [vmem:[%s2345 + $0x10a] sm:$0xff]
        %v3316 = vld [vmem:[%s2345 + $0x112] sm:$0xff]
        %v3317 = vld [vmem:[%s2345 + $0x122] sm:$0xff]
        %v3318 = vld [vmem:[%s2345 + $0x12a] sm:$0xff]
        %v3319 = vld [vmem:[%s2345 + $0x13a] sm:$0xff]
        %v3320 = vld [vmem:[%s2345 + $0x142] sm:$0xff]
        %v3321 = vld [vmem:[%s2345 + $0x152] sm:$0xff]
        %v3322 = vld [vmem:[%s2345 + $0x15a] sm:$0xff]
        %v3323 = vld [vmem:[%s2345 + $0x16a] sm:$0xff]
        %v3324 = vld [vmem:[%s2345 + $0x172] sm:$0xff]
        %3357 = vrot.lane.b32.xlu0 %v3293, 80
        %v3358 = vpop.permute.xlu0 %3357
        %3359 = vrot.lane.b32.xlu0 %v3294, 80
        %v3360 = vpop.permute.xlu0 %3359
        %3361 = vrot.lane.b32.xlu0 %v3295, 80
        %v3362 = vpop.permute.xlu0 %3361
        %3363 = vrot.lane.b32.xlu0 %v3296, 80
        %v3364 = vpop.permute.xlu0 %3363
        %3365 = vrot.lane.b32.xlu0 %v3297, 80
        %v3366 = vpop.permute.xlu0 %3365
        %3367 = vrot.lane.b32.xlu0 %v3298, 80
        %v3368 = vpop.permute.xlu0 %3367
        %3369 = vrot.lane.b32.xlu0 %v3299, 80
        %v3370 = vpop.permute.xlu0 %3369
        %3371 = vrot.lane.b32.xlu0 %v3300, 80
        %v3372 = vpop.permute.xlu0 %3371
        %3373 = vrot.lane.b32.xlu0 %v3301, 80
        %v3374 = vpop.permute.xlu0 %3373
        %3375 = vrot.lane.b32.xlu0 %v3302, 80
        %v3376 = vpop.permute.xlu0 %3375
        %3377 = vrot.lane.b32.xlu0 %v3303, 80
        %v3378 = vpop.permute.xlu0 %3377
        %3379 = vrot.lane.b32.xlu0 %v3304, 80
        %v3380 = vpop.permute.xlu0 %3379
        %3381 = vrot.lane.b32.xlu0 %v3305, 80
        %v3382 = vpop.permute.xlu0 %3381
        %3383 = vrot.lane.b32.xlu0 %v3306, 80
        %v3384 = vpop.permute.xlu0 %3383
        %3385 = vrot.lane.b32.xlu0 %v3307, 80
        %v3386 = vpop.permute.xlu0 %3385
        %3387 = vrot.lane.b32.xlu0 %v3308, 80
        %v3388 = vpop.permute.xlu0 %3387
        %3389 = vrot.lane.b32.xlu0 %v3309, 80
        %v3390 = vpop.permute.xlu0 %3389
        %3391 = vrot.lane.b32.xlu0 %v3310, 80
        %v3392 = vpop.permute.xlu0 %3391
        %3393 = vrot.lane.b32.xlu0 %v3311, 80
        %v3394 = vpop.permute.xlu0 %3393
        %3395 = vrot.lane.b32.xlu0 %v3312, 80
        %v3396 = vpop.permute.xlu0 %3395
        %3397 = vrot.lane.b32.xlu0 %v3313, 80
        %v3398 = vpop.permute.xlu0 %3397
        %3399 = vrot.lane.b32.xlu0 %v3314, 80
        %v3400 = vpop.permute.xlu0 %3399
        %3401 = vrot.lane.b32.xlu0 %v3315, 80
        %v3402 = vpop.permute.xlu0 %3401
        %3403 = vrot.lane.b32.xlu0 %v3316, 80
        %v3404 = vpop.permute.xlu0 %3403
        %3405 = vrot.lane.b32.xlu0 %v3317, 80
        %v3406 = vpop.permute.xlu0 %3405
        %3407 = vrot.lane.b32.xlu0 %v3318, 80
        %v3408 = vpop.permute.xlu0 %3407
        %3409 = vrot.lane.b32.xlu0 %v3319, 80
        %v3410 = vpop.permute.xlu0 %3409
        %3411 = vrot.lane.b32.xlu0 %v3320, 80
        %v3412 = vpop.permute.xlu0 %3411
        %3413 = vrot.lane.b32.xlu0 %v3321, 80
        %v3414 = vpop.permute.xlu0 %3413
        %3415 = vrot.lane.b32.xlu0 %v3322, 80
        %v3416 = vpop.permute.xlu0 %3415
        %3417 = vrot.lane.b32.xlu0 %v3323, 80
        %v3418 = vpop.permute.xlu0 %3417
        %3419 = vrot.lane.b32.xlu0 %v3324, 80
        %v3420 = vpop.permute.xlu0 %3419
        %vm3453 = vcmask 786048
        %3454 = vst.msk [vmem:[#allocation5] sm:$0xff] %vm3453, %v3358
        %3455 = vst.msk [vmem:[#allocation5 + $0x10] sm:$0xff] %vm3453, %v3360
        %3456 = vst.msk [vmem:[#allocation5 + $0x20] sm:$0xff] %vm3453, %v3362
        %3457 = vst.msk [vmem:[#allocation5 + $0x30] sm:$0xff] %vm3453, %v3364
        %3458 = vst.msk [vmem:[#allocation5 + $0x40] sm:$0xff] %vm3453, %v3366
        %3459 = vst.msk [vmem:[#allocation5 + $0x50] sm:$0xff] %vm3453, %v3368
        %3460 = vst.msk [vmem:[#allocation5 + $0x60] sm:$0xff] %vm3453, %v3370
        %3461 = vst.msk [vmem:[#allocation5 + $0x70] sm:$0xff] %vm3453, %v3372
        %3462 = vst.msk [vmem:[#allocation5 + $0x80] sm:$0xff] %vm3453, %v3374
        %3463 = vst.msk [vmem:[#allocation5 + $0x90] sm:$0xff] %vm3453, %v3376
        %3464 = vst.msk [vmem:[#allocation5 + $0xa0] sm:$0xff] %vm3453, %v3378
        %3465 = vst.msk [vmem:[#allocation5 + $0xb0] sm:$0xff] %vm3453, %v3380
        %3466 = vst.msk [vmem:[#allocation5 + $0xc0] sm:$0xff] %vm3453, %v3382
        %3467 = vst.msk [vmem:[#allocation5 + $0xd0] sm:$0xff] %vm3453, %v3384
        %3468 = vst.msk [vmem:[#allocation5 + $0xe0] sm:$0xff] %vm3453, %v3386
        %3469 = vst.msk [vmem:[#allocation5 + $0xf0] sm:$0xff] %vm3453, %v3388
        %3470 = vst.msk [vmem:[#allocation5 + $0x100] sm:$0xff] %vm3453, %v3390
        %3471 = vst.msk [vmem:[#allocation5 + $0x110] sm:$0xff] %vm3453, %v3392
        %3472 = vst.msk [vmem:[#allocation5 + $0x120] sm:$0xff] %vm3453, %v3394
        %3473 = vst.msk [vmem:[#allocation5 + $0x130] sm:$0xff] %vm3453, %v3396
        %3474 = vst.msk [vmem:[#allocation5 + $0x140] sm:$0xff] %vm3453, %v3398
        %3475 = vst.msk [vmem:[#allocation5 + $0x150] sm:$0xff] %vm3453, %v3400
        %3476 = vst.msk [vmem:[#allocation5 + $0x160] sm:$0xff] %vm3453, %v3402
        %3477 = vst.msk [vmem:[#allocation5 + $0x170] sm:$0xff] %vm3453, %v3404
        %3478 = vst.msk [vmem:[#allocation5 + $0x180] sm:$0xff] %vm3453, %v3406
        %3479 = vst.msk [vmem:[#allocation5 + $0x190] sm:$0xff] %vm3453, %v3408
        %3480 = vst.msk [vmem:[#allocation5 + $0x1a0] sm:$0xff] %vm3453, %v3410
        %3481 = vst.msk [vmem:[#allocation5 + $0x1b0] sm:$0xff] %vm3453, %v3412
        %3482 = vst.msk [vmem:[#allocation5 + $0x1c0] sm:$0xff] %vm3453, %v3414
        %3483 = vst.msk [vmem:[#allocation5 + $0x1d0] sm:$0xff] %vm3453, %v3416
        %3484 = vst.msk [vmem:[#allocation5 + $0x1e0] sm:$0xff] %vm3453, %v3418
        %3485 = vst.msk [vmem:[#allocation5 + $0x1f0] sm:$0xff] %vm3453, %v3420
        %s3486 = scalar_lea.vmem [#allocation3], 48
        %v3487 = vld [vmem:[%s3486] sm:$0xff]
        %v3488 = vld [vmem:[%s3486 + $0x8] sm:$0xff]
        %v3489 = vld [vmem:[%s3486 + $0x18] sm:$0xff]
        %v3490 = vld [vmem:[%s3486 + $0x20] sm:$0xff]
        %v3491 = vld [vmem:[%s3486 + $0x30] sm:$0xff]
        %v3492 = vld [vmem:[%s3486 + $0x38] sm:$0xff]
        %v3493 = vld [vmem:[%s3486 + $0x48] sm:$0xff]
        %v3494 = vld [vmem:[%s3486 + $0x50] sm:$0xff]
        %v3495 = vld [vmem:[%s3486 + $0x60] sm:$0xff]
        %v3496 = vld [vmem:[%s3486 + $0x68] sm:$0xff]
        %v3497 = vld [vmem:[%s3486 + $0x78] sm:$0xff]
        %v3498 = vld [vmem:[%s3486 + $0x80] sm:$0xff]
        %v3499 = vld [vmem:[%s3486 + $0x90] sm:$0xff]
        %v3500 = vld [vmem:[%s3486 + $0x98] sm:$0xff]
        %v3501 = vld [vmem:[%s3486 + $0xa8] sm:$0xff]
        %v3502 = vld [vmem:[%s3486 + $0xb0] sm:$0xff]
        %v3503 = vld [vmem:[%s3486 + $0xc0] sm:$0xff]
        %v3504 = vld [vmem:[%s3486 + $0xc8] sm:$0xff]
        %v3505 = vld [vmem:[%s3486 + $0xd8] sm:$0xff]
        %v3506 = vld [vmem:[%s3486 + $0xe0] sm:$0xff]
        %v3507 = vld [vmem:[%s3486 + $0xf0] sm:$0xff]
        %v3508 = vld [vmem:[%s3486 + $0xf8] sm:$0xff]
        %v3509 = vld [vmem:[%s3486 + $0x108] sm:$0xff]
        %v3510 = vld [vmem:[%s3486 + $0x110] sm:$0xff]
        %v3511 = vld [vmem:[%s3486 + $0x120] sm:$0xff]
        %v3512 = vld [vmem:[%s3486 + $0x128] sm:$0xff]
        %v3513 = vld [vmem:[%s3486 + $0x138] sm:$0xff]
        %v3514 = vld [vmem:[%s3486 + $0x140] sm:$0xff]
        %v3515 = vld [vmem:[%s3486 + $0x150] sm:$0xff]
        %v3516 = vld [vmem:[%s3486 + $0x158] sm:$0xff]
        %v3517 = vld [vmem:[%s3486 + $0x168] sm:$0xff]
        %v3518 = vld [vmem:[%s3486 + $0x170] sm:$0xff]
        %3551 = vrot.lane.b32.xlu0 %v3487, 96
        %v3552 = vpop.permute.xlu0 %3551
        %3553 = vrot.lane.b32.xlu0 %v3488, 96
        %v3554 = vpop.permute.xlu0 %3553
        %3555 = vrot.lane.b32.xlu0 %v3489, 96
        %v3556 = vpop.permute.xlu0 %3555
        %3557 = vrot.lane.b32.xlu0 %v3490, 96
        %v3558 = vpop.permute.xlu0 %3557
        %3559 = vrot.lane.b32.xlu0 %v3491, 96
        %v3560 = vpop.permute.xlu0 %3559
        %3561 = vrot.lane.b32.xlu0 %v3492, 96
        %v3562 = vpop.permute.xlu0 %3561
        %3563 = vrot.lane.b32.xlu0 %v3493, 96
        %v3564 = vpop.permute.xlu0 %3563
        %3565 = vrot.lane.b32.xlu0 %v3494, 96
        %v3566 = vpop.permute.xlu0 %3565
        %3567 = vrot.lane.b32.xlu0 %v3495, 96
        %v3568 = vpop.permute.xlu0 %3567
        %3569 = vrot.lane.b32.xlu0 %v3496, 96
        %v3570 = vpop.permute.xlu0 %3569
        %3571 = vrot.lane.b32.xlu0 %v3497, 96
        %v3572 = vpop.permute.xlu0 %3571
        %3573 = vrot.lane.b32.xlu0 %v3498, 96
        %v3574 = vpop.permute.xlu0 %3573
        %3575 = vrot.lane.b32.xlu0 %v3499, 96
        %v3576 = vpop.permute.xlu0 %3575
        %3577 = vrot.lane.b32.xlu0 %v3500, 96
        %v3578 = vpop.permute.xlu0 %3577
        %3579 = vrot.lane.b32.xlu0 %v3501, 96
        %v3580 = vpop.permute.xlu0 %3579
        %3581 = vrot.lane.b32.xlu0 %v3502, 96
        %v3582 = vpop.permute.xlu0 %3581
        %3583 = vrot.lane.b32.xlu0 %v3503, 96
        %v3584 = vpop.permute.xlu0 %3583
        %3585 = vrot.lane.b32.xlu0 %v3504, 96
        %v3586 = vpop.permute.xlu0 %3585
        %3587 = vrot.lane.b32.xlu0 %v3505, 96
        %v3588 = vpop.permute.xlu0 %3587
        %3589 = vrot.lane.b32.xlu0 %v3506, 96
        %v3590 = vpop.permute.xlu0 %3589
        %3591 = vrot.lane.b32.xlu0 %v3507, 96
        %v3592 = vpop.permute.xlu0 %3591
        %3593 = vrot.lane.b32.xlu0 %v3508, 96
        %v3594 = vpop.permute.xlu0 %3593
        %3595 = vrot.lane.b32.xlu0 %v3509, 96
        %v3596 = vpop.permute.xlu0 %3595
        %3597 = vrot.lane.b32.xlu0 %v3510, 96
        %v3598 = vpop.permute.xlu0 %3597
        %3599 = vrot.lane.b32.xlu0 %v3511, 96
        %v3600 = vpop.permute.xlu0 %3599
        %3601 = vrot.lane.b32.xlu0 %v3512, 96
        %v3602 = vpop.permute.xlu0 %3601
        %3603 = vrot.lane.b32.xlu0 %v3513, 96
        %v3604 = vpop.permute.xlu0 %3603
        %3605 = vrot.lane.b32.xlu0 %v3514, 96
        %v3606 = vpop.permute.xlu0 %3605
        %3607 = vrot.lane.b32.xlu0 %v3515, 96
        %v3608 = vpop.permute.xlu0 %3607
        %3609 = vrot.lane.b32.xlu0 %v3516, 96
        %v3610 = vpop.permute.xlu0 %3609
        %3611 = vrot.lane.b32.xlu0 %v3517, 96
        %v3612 = vpop.permute.xlu0 %3611
        %3613 = vrot.lane.b32.xlu0 %v3518, 96
        %v3614 = vpop.permute.xlu0 %3613
        %vm3647 = vcmask 917248
        %3648 = vst.msk [vmem:[#allocation5] sm:$0xff] %vm3647, %v3552
        %3649 = vst.msk [vmem:[#allocation5 + $0x10] sm:$0xff] %vm3647, %v3554
        %3650 = vst.msk [vmem:[#allocation5 + $0x20] sm:$0xff] %vm3647, %v3556
        %3651 = vst.msk [vmem:[#allocation5 + $0x30] sm:$0xff] %vm3647, %v3558
        %3652 = vst.msk [vmem:[#allocation5 + $0x40] sm:$0xff] %vm3647, %v3560
        %3653 = vst.msk [vmem:[#allocation5 + $0x50] sm:$0xff] %vm3647, %v3562
        %3654 = vst.msk [vmem:[#allocation5 + $0x60] sm:$0xff] %vm3647, %v3564
        %3655 = vst.msk [vmem:[#allocation5 + $0x70] sm:$0xff] %vm3647, %v3566
        %3656 = vst.msk [vmem:[#allocation5 + $0x80] sm:$0xff] %vm3647, %v3568
        %3657 = vst.msk [vmem:[#allocation5 + $0x90] sm:$0xff] %vm3647, %v3570
        %3658 = vst.msk [vmem:[#allocation5 + $0xa0] sm:$0xff] %vm3647, %v3572
        %3659 = vst.msk [vmem:[#allocation5 + $0xb0] sm:$0xff] %vm3647, %v3574
        %3660 = vst.msk [vmem:[#allocation5 + $0xc0] sm:$0xff] %vm3647, %v3576
        %3661 = vst.msk [vmem:[#allocation5 + $0xd0] sm:$0xff] %vm3647, %v3578
        %3662 = vst.msk [vmem:[#allocation5 + $0xe0] sm:$0xff] %vm3647, %v3580
        %3663 = vst.msk [vmem:[#allocation5 + $0xf0] sm:$0xff] %vm3647, %v3582
        %3664 = vst.msk [vmem:[#allocation5 + $0x100] sm:$0xff] %vm3647, %v3584
        %3665 = vst.msk [vmem:[#allocation5 + $0x110] sm:$0xff] %vm3647, %v3586
        %3666 = vst.msk [vmem:[#allocation5 + $0x120] sm:$0xff] %vm3647, %v3588
        %3667 = vst.msk [vmem:[#allocation5 + $0x130] sm:$0xff] %vm3647, %v3590
        %3668 = vst.msk [vmem:[#allocation5 + $0x140] sm:$0xff] %vm3647, %v3592
        %3669 = vst.msk [vmem:[#allocation5 + $0x150] sm:$0xff] %vm3647, %v3594
        %3670 = vst.msk [vmem:[#allocation5 + $0x160] sm:$0xff] %vm3647, %v3596
        %3671 = vst.msk [vmem:[#allocation5 + $0x170] sm:$0xff] %vm3647, %v3598
        %3672 = vst.msk [vmem:[#allocation5 + $0x180] sm:$0xff] %vm3647, %v3600
        %3673 = vst.msk [vmem:[#allocation5 + $0x190] sm:$0xff] %vm3647, %v3602
        %3674 = vst.msk [vmem:[#allocation5 + $0x1a0] sm:$0xff] %vm3647, %v3604
        %3675 = vst.msk [vmem:[#allocation5 + $0x1b0] sm:$0xff] %vm3647, %v3606
        %3676 = vst.msk [vmem:[#allocation5 + $0x1c0] sm:$0xff] %vm3647, %v3608
        %3677 = vst.msk [vmem:[#allocation5 + $0x1d0] sm:$0xff] %vm3647, %v3610
        %3678 = vst.msk [vmem:[#allocation5 + $0x1e0] sm:$0xff] %vm3647, %v3612
        %3679 = vst.msk [vmem:[#allocation5 + $0x1f0] sm:$0xff] %vm3647, %v3614
        %v3680 = vld [vmem:[%s3486 + $0x1] sm:$0xff]
        %v3681 = vld [vmem:[%s3486 + $0x9] sm:$0xff]
        %v3682 = vld [vmem:[%s3486 + $0x19] sm:$0xff]
        %v3683 = vld [vmem:[%s3486 + $0x21] sm:$0xff]
        %v3684 = vld [vmem:[%s3486 + $0x31] sm:$0xff]
        %v3685 = vld [vmem:[%s3486 + $0x39] sm:$0xff]
        %v3686 = vld [vmem:[%s3486 + $0x49] sm:$0xff]
        %v3687 = vld [vmem:[%s3486 + $0x51] sm:$0xff]
        %v3688 = vld [vmem:[%s3486 + $0x61] sm:$0xff]
        %v3689 = vld [vmem:[%s3486 + $0x69] sm:$0xff]
        %v3690 = vld [vmem:[%s3486 + $0x79] sm:$0xff]
        %v3691 = vld [vmem:[%s3486 + $0x81] sm:$0xff]
        %v3692 = vld [vmem:[%s3486 + $0x91] sm:$0xff]
        %v3693 = vld [vmem:[%s3486 + $0x99] sm:$0xff]
        %v3694 = vld [vmem:[%s3486 + $0xa9] sm:$0xff]
        %v3695 = vld [vmem:[%s3486 + $0xb1] sm:$0xff]
        %v3696 = vld [vmem:[%s3486 + $0xc1] sm:$0xff]
        %v3697 = vld [vmem:[%s3486 + $0xc9] sm:$0xff]
        %v3698 = vld [vmem:[%s3486 + $0xd9] sm:$0xff]
        %v3699 = vld [vmem:[%s3486 + $0xe1] sm:$0xff]
        %v3700 = vld [vmem:[%s3486 + $0xf1] sm:$0xff]
        %v3701 = vld [vmem:[%s3486 + $0xf9] sm:$0xff]
        %v3702 = vld [vmem:[%s3486 + $0x109] sm:$0xff]
        %v3703 = vld [vmem:[%s3486 + $0x111] sm:$0xff]
        %v3704 = vld [vmem:[%s3486 + $0x121] sm:$0xff]
        %v3705 = vld [vmem:[%s3486 + $0x129] sm:$0xff]
        %v3706 = vld [vmem:[%s3486 + $0x139] sm:$0xff]
        %v3707 = vld [vmem:[%s3486 + $0x141] sm:$0xff]
        %v3708 = vld [vmem:[%s3486 + $0x151] sm:$0xff]
        %v3709 = vld [vmem:[%s3486 + $0x159] sm:$0xff]
        %v3710 = vld [vmem:[%s3486 + $0x169] sm:$0xff]
        %v3711 = vld [vmem:[%s3486 + $0x171] sm:$0xff]
        %3744 = vrot.lane.b32.xlu0 %v3680, 112
        %v3745 = vpop.permute.xlu0 %3744
        %3746 = vrot.lane.b32.xlu0 %v3681, 112
        %v3747 = vpop.permute.xlu0 %3746
        %3748 = vrot.lane.b32.xlu0 %v3682, 112
        %v3749 = vpop.permute.xlu0 %3748
        %3750 = vrot.lane.b32.xlu0 %v3683, 112
        %v3751 = vpop.permute.xlu0 %3750
        %3752 = vrot.lane.b32.xlu0 %v3684, 112
        %v3753 = vpop.permute.xlu0 %3752
        %3754 = vrot.lane.b32.xlu0 %v3685, 112
        %v3755 = vpop.permute.xlu0 %3754
        %3756 = vrot.lane.b32.xlu0 %v3686, 112
        %v3757 = vpop.permute.xlu0 %3756
        %3758 = vrot.lane.b32.xlu0 %v3687, 112
        %v3759 = vpop.permute.xlu0 %3758
        %3760 = vrot.lane.b32.xlu0 %v3688, 112
        %v3761 = vpop.permute.xlu0 %3760
        %3762 = vrot.lane.b32.xlu0 %v3689, 112
        %v3763 = vpop.permute.xlu0 %3762
        %3764 = vrot.lane.b32.xlu0 %v3690, 112
        %v3765 = vpop.permute.xlu0 %3764
        %3766 = vrot.lane.b32.xlu0 %v3691, 112
        %v3767 = vpop.permute.xlu0 %3766
        %3768 = vrot.lane.b32.xlu0 %v3692, 112
        %v3769 = vpop.permute.xlu0 %3768
        %3770 = vrot.lane.b32.xlu0 %v3693, 112
        %v3771 = vpop.permute.xlu0 %3770
        %3772 = vrot.lane.b32.xlu0 %v3694, 112
        %v3773 = vpop.permute.xlu0 %3772
        %3774 = vrot.lane.b32.xlu0 %v3695, 112
        %v3775 = vpop.permute.xlu0 %3774
        %3776 = vrot.lane.b32.xlu0 %v3696, 112
        %v3777 = vpop.permute.xlu0 %3776
        %3778 = vrot.lane.b32.xlu0 %v3697, 112
        %v3779 = vpop.permute.xlu0 %3778
        %3780 = vrot.lane.b32.xlu0 %v3698, 112
        %v3781 = vpop.permute.xlu0 %3780
        %3782 = vrot.lane.b32.xlu0 %v3699, 112
        %v3783 = vpop.permute.xlu0 %3782
        %3784 = vrot.lane.b32.xlu0 %v3700, 112
        %v3785 = vpop.permute.xlu0 %3784
        %3786 = vrot.lane.b32.xlu0 %v3701, 112
        %v3787 = vpop.permute.xlu0 %3786
        %3788 = vrot.lane.b32.xlu0 %v3702, 112
        %v3789 = vpop.permute.xlu0 %3788
        %3790 = vrot.lane.b32.xlu0 %v3703, 112
        %v3791 = vpop.permute.xlu0 %3790
        %3792 = vrot.lane.b32.xlu0 %v3704, 112
        %v3793 = vpop.permute.xlu0 %3792
        %3794 = vrot.lane.b32.xlu0 %v3705, 112
        %v3795 = vpop.permute.xlu0 %3794
        %3796 = vrot.lane.b32.xlu0 %v3706, 112
        %v3797 = vpop.permute.xlu0 %3796
        %3798 = vrot.lane.b32.xlu0 %v3707, 112
        %v3799 = vpop.permute.xlu0 %3798
        %3800 = vrot.lane.b32.xlu0 %v3708, 112
        %v3801 = vpop.permute.xlu0 %3800
        %3802 = vrot.lane.b32.xlu0 %v3709, 112
        %v3803 = vpop.permute.xlu0 %3802
        %3804 = vrot.lane.b32.xlu0 %v3710, 112
        %v3805 = vpop.permute.xlu0 %3804
        %3806 = vrot.lane.b32.xlu0 %v3711, 112
        %v3807 = vpop.permute.xlu0 %3806
        %vm3840 = vcmask 1048448
        %3841 = vst.msk [vmem:[#allocation5] sm:$0xff] %vm3840, %v3745
        %3842 = vst.msk [vmem:[#allocation5 + $0x10] sm:$0xff] %vm3840, %v3747
        %3843 = vst.msk [vmem:[#allocation5 + $0x20] sm:$0xff] %vm3840, %v3749
        %3844 = vst.msk [vmem:[#allocation5 + $0x30] sm:$0xff] %vm3840, %v3751
        %3845 = vst.msk [vmem:[#allocation5 + $0x40] sm:$0xff] %vm3840, %v3753
        %3846 = vst.msk [vmem:[#allocation5 + $0x50] sm:$0xff] %vm3840, %v3755
        %3847 = vst.msk [vmem:[#allocation5 + $0x60] sm:$0xff] %vm3840, %v3757
        %3848 = vst.msk [vmem:[#allocation5 + $0x70] sm:$0xff] %vm3840, %v3759
        %3849 = vst.msk [vmem:[#allocation5 + $0x80] sm:$0xff] %vm3840, %v3761
        %3850 = vst.msk [vmem:[#allocation5 + $0x90] sm:$0xff] %vm3840, %v3763
        %3851 = vst.msk [vmem:[#allocation5 + $0xa0] sm:$0xff] %vm3840, %v3765
        %3852 = vst.msk [vmem:[#allocation5 + $0xb0] sm:$0xff] %vm3840, %v3767
        %3853 = vst.msk [vmem:[#allocation5 + $0xc0] sm:$0xff] %vm3840, %v3769
        %3854 = vst.msk [vmem:[#allocation5 + $0xd0] sm:$0xff] %vm3840, %v3771
        %3855 = vst.msk [vmem:[#allocation5 + $0xe0] sm:$0xff] %vm3840, %v3773
        %3856 = vst.msk [vmem:[#allocation5 + $0xf0] sm:$0xff] %vm3840, %v3775
        %3857 = vst.msk [vmem:[#allocation5 + $0x100] sm:$0xff] %vm3840, %v3777
        %3858 = vst.msk [vmem:[#allocation5 + $0x110] sm:$0xff] %vm3840, %v3779
        %3859 = vst.msk [vmem:[#allocation5 + $0x120] sm:$0xff] %vm3840, %v3781
        %3860 = vst.msk [vmem:[#allocation5 + $0x130] sm:$0xff] %vm3840, %v3783
        %3861 = vst.msk [vmem:[#allocation5 + $0x140] sm:$0xff] %vm3840, %v3785
        %3862 = vst.msk [vmem:[#allocation5 + $0x150] sm:$0xff] %vm3840, %v3787
        %3863 = vst.msk [vmem:[#allocation5 + $0x160] sm:$0xff] %vm3840, %v3789
        %3864 = vst.msk [vmem:[#allocation5 + $0x170] sm:$0xff] %vm3840, %v3791
        %3865 = vst.msk [vmem:[#allocation5 + $0x180] sm:$0xff] %vm3840, %v3793
        %3866 = vst.msk [vmem:[#allocation5 + $0x190] sm:$0xff] %vm3840, %v3795
        %3867 = vst.msk [vmem:[#allocation5 + $0x1a0] sm:$0xff] %vm3840, %v3797
        %3868 = vst.msk [vmem:[#allocation5 + $0x1b0] sm:$0xff] %vm3840, %v3799
        %3869 = vst.msk [vmem:[#allocation5 + $0x1c0] sm:$0xff] %vm3840, %v3801
        %3870 = vst.msk [vmem:[#allocation5 + $0x1d0] sm:$0xff] %vm3840, %v3803
        %3871 = vst.msk [vmem:[#allocation5 + $0x1e0] sm:$0xff] %vm3840, %v3805
        %3872 = vst.msk [vmem:[#allocation5 + $0x1f0] sm:$0xff] %vm3840, %v3807
        %v3873 = vld [vmem:[%s3486 + $0x2] sm:$0xff]
        %v3874 = vld [vmem:[%s3486 + $0xa] sm:$0xff]
        %v3875 = vld [vmem:[%s3486 + $0x1a] sm:$0xff]
        %v3876 = vld [vmem:[%s3486 + $0x22] sm:$0xff]
        %v3877 = vld [vmem:[%s3486 + $0x32] sm:$0xff]
        %v3878 = vld [vmem:[%s3486 + $0x3a] sm:$0xff]
        %v3879 = vld [vmem:[%s3486 + $0x4a] sm:$0xff]
        %v3880 = vld [vmem:[%s3486 + $0x52] sm:$0xff]
        %v3881 = vld [vmem:[%s3486 + $0x62] sm:$0xff]
        %v3882 = vld [vmem:[%s3486 + $0x6a] sm:$0xff]
        %v3883 = vld [vmem:[%s3486 + $0x7a] sm:$0xff]
        %v3884 = vld [vmem:[%s3486 + $0x82] sm:$0xff]
        %v3885 = vld [vmem:[%s3486 + $0x92] sm:$0xff]
        %v3886 = vld [vmem:[%s3486 + $0x9a] sm:$0xff]
        %v3887 = vld [vmem:[%s3486 + $0xaa] sm:$0xff]
        %v3888 = vld [vmem:[%s3486 + $0xb2] sm:$0xff]
        %v3889 = vld [vmem:[%s3486 + $0xc2] sm:$0xff]
        %v3890 = vld [vmem:[%s3486 + $0xca] sm:$0xff]
        %v3891 = vld [vmem:[%s3486 + $0xda] sm:$0xff]
        %v3892 = vld [vmem:[%s3486 + $0xe2] sm:$0xff]
        %v3893 = vld [vmem:[%s3486 + $0xf2] sm:$0xff]
        %v3894 = vld [vmem:[%s3486 + $0xfa] sm:$0xff]
        %v3895 = vld [vmem:[%s3486 + $0x10a] sm:$0xff]
        %v3896 = vld [vmem:[%s3486 + $0x112] sm:$0xff]
        %v3897 = vld [vmem:[%s3486 + $0x122] sm:$0xff]
        %v3898 = vld [vmem:[%s3486 + $0x12a] sm:$0xff]
        %v3899 = vld [vmem:[%s3486 + $0x13a] sm:$0xff]
        %v3900 = vld [vmem:[%s3486 + $0x142] sm:$0xff]
        %v3901 = vld [vmem:[%s3486 + $0x152] sm:$0xff]
        %v3902 = vld [vmem:[%s3486 + $0x15a] sm:$0xff]
        %v3903 = vld [vmem:[%s3486 + $0x16a] sm:$0xff]
        %v3904 = vld [vmem:[%s3486 + $0x172] sm:$0xff]
        %3905 = vst.msk [vmem:[#allocation5 + $0x8] sm:$0xff] %vm2346, %v3873
        %3906 = vst.msk [vmem:[#allocation5 + $0x18] sm:$0xff] %vm2346, %v3874
        %3907 = vst.msk [vmem:[#allocation5 + $0x28] sm:$0xff] %vm2346, %v3875
        %3908 = vst.msk [vmem:[#allocation5 + $0x38] sm:$0xff] %vm2346, %v3876
        %3909 = vst.msk [vmem:[#allocation5 + $0x48] sm:$0xff] %vm2346, %v3877
        %3910 = vst.msk [vmem:[#allocation5 + $0x58] sm:$0xff] %vm2346, %v3878
        %3911 = vst.msk [vmem:[#allocation5 + $0x68] sm:$0xff] %vm2346, %v3879
        %3912 = vst.msk [vmem:[#allocation5 + $0x78] sm:$0xff] %vm2346, %v3880
        %3913 = vst.msk [vmem:[#allocation5 + $0x88] sm:$0xff] %vm2346, %v3881
        %3914 = vst.msk [vmem:[#allocation5 + $0x98] sm:$0xff] %vm2346, %v3882
        %3915 = vst.msk [vmem:[#allocation5 + $0xa8] sm:$0xff] %vm2346, %v3883
        %3916 = vst.msk [vmem:[#allocation5 + $0xb8] sm:$0xff] %vm2346, %v3884
        %3917 = vst.msk [vmem:[#allocation5 + $0xc8] sm:$0xff] %vm2346, %v3885
        %3918 = vst.msk [vmem:[#allocation5 + $0xd8] sm:$0xff] %vm2346, %v3886
        %3919 = vst.msk [vmem:[#allocation5 + $0xe8] sm:$0xff] %vm2346, %v3887
        %3920 = vst.msk [vmem:[#allocation5 + $0xf8] sm:$0xff] %vm2346, %v3888
        %3921 = vst.msk [vmem:[#allocation5 + $0x108] sm:$0xff] %vm2346, %v3889
        %3922 = vst.msk [vmem:[#allocation5 + $0x118] sm:$0xff] %vm2346, %v3890
        %3923 = vst.msk [vmem:[#allocation5 + $0x128] sm:$0xff] %vm2346, %v3891
        %3924 = vst.msk [vmem:[#allocation5 + $0x138] sm:$0xff] %vm2346, %v3892
        %3925 = vst.msk [vmem:[#allocation5 + $0x148] sm:$0xff] %vm2346, %v3893
        %3926 = vst.msk [vmem:[#allocation5 + $0x158] sm:$0xff] %vm2346, %v3894
        %3927 = vst.msk [vmem:[#allocation5 + $0x168] sm:$0xff] %vm2346, %v3895
        %3928 = vst.msk [vmem:[#allocation5 + $0x178] sm:$0xff] %vm2346, %v3896
        %3929 = vst.msk [vmem:[#allocation5 + $0x188] sm:$0xff] %vm2346, %v3897
        %3930 = vst.msk [vmem:[#allocation5 + $0x198] sm:$0xff] %vm2346, %v3898
        %3931 = vst.msk [vmem:[#allocation5 + $0x1a8] sm:$0xff] %vm2346, %v3899
        %3932 = vst.msk [vmem:[#allocation5 + $0x1b8] sm:$0xff] %vm2346, %v3900
        %3933 = vst.msk [vmem:[#allocation5 + $0x1c8] sm:$0xff] %vm2346, %v3901
        %3934 = vst.msk [vmem:[#allocation5 + $0x1d8] sm:$0xff] %vm2346, %v3902
        %3935 = vst.msk [vmem:[#allocation5 + $0x1e8] sm:$0xff] %vm2346, %v3903
        %3936 = vst.msk [vmem:[#allocation5 + $0x1f8] sm:$0xff] %vm2346, %v3904
        %v3937 = vld [vmem:[#allocation5] sm:$0xff]
        %v3938 = vld [vmem:[#allocation5 + $0x8] sm:$0xff]
        %v3939 = vld [vmem:[#allocation5 + $0x10] sm:$0xff]
        %v3940 = vld [vmem:[#allocation5 + $0x18] sm:$0xff]
        %v3941 = vld [vmem:[#allocation5 + $0x20] sm:$0xff]
        %v3942 = vld [vmem:[#allocation5 + $0x28] sm:$0xff]
        %v3943 = vld [vmem:[#allocation5 + $0x30] sm:$0xff]
        %v3944 = vld [vmem:[#allocation5 + $0x38] sm:$0xff]
        %v3945 = vld [vmem:[#allocation5 + $0x40] sm:$0xff]
        %v3946 = vld [vmem:[#allocation5 + $0x48] sm:$0xff]
        %v3947 = vld [vmem:[#allocation5 + $0x50] sm:$0xff]
        %v3948 = vld [vmem:[#allocation5 + $0x58] sm:$0xff]
        %v3949 = vld [vmem:[#allocation5 + $0x60] sm:$0xff]
        %v3950 = vld [vmem:[#allocation5 + $0x68] sm:$0xff]
        %v3951 = vld [vmem:[#allocation5 + $0x70] sm:$0xff]
        %v3952 = vld [vmem:[#allocation5 + $0x78] sm:$0xff]
        %v3953 = vld [vmem:[#allocation5 + $0x80] sm:$0xff]
        %v3954 = vld [vmem:[#allocation5 + $0x88] sm:$0xff]
        %v3955 = vld [vmem:[#allocation5 + $0x90] sm:$0xff]
        %v3956 = vld [vmem:[#allocation5 + $0x98] sm:$0xff]
        %v3957 = vld [vmem:[#allocation5 + $0xa0] sm:$0xff]
        %v3958 = vld [vmem:[#allocation5 + $0xa8] sm:$0xff]
        %v3959 = vld [vmem:[#allocation5 + $0xb0] sm:$0xff]
        %v3960 = vld [vmem:[#allocation5 + $0xb8] sm:$0xff]
        %v3961 = vld [vmem:[#allocation5 + $0xc0] sm:$0xff]
        %v3962 = vld [vmem:[#allocation5 + $0xc8] sm:$0xff]
        %v3963 = vld [vmem:[#allocation5 + $0xd0] sm:$0xff]
        %v3964 = vld [vmem:[#allocation5 + $0xd8] sm:$0xff]
        %v3965 = vld [vmem:[#allocation5 + $0xe0] sm:$0xff]
        %v3966 = vld [vmem:[#allocation5 + $0xe8] sm:$0xff]
        %v3967 = vld [vmem:[#allocation5 + $0xf0] sm:$0xff]
        %v3968 = vld [vmem:[#allocation5 + $0xf8] sm:$0xff]
        %v3969 = vld [vmem:[#allocation5 + $0x100] sm:$0xff]
        %v3970 = vld [vmem:[#allocation5 + $0x108] sm:$0xff]
        %v3971 = vld [vmem:[#allocation5 + $0x110] sm:$0xff]
        %v3972 = vld [vmem:[#allocation5 + $0x118] sm:$0xff]
        %v3973 = vld [vmem:[#allocation5 + $0x120] sm:$0xff]
        %v3974 = vld [vmem:[#allocation5 + $0x128] sm:$0xff]
        %v3975 = vld [vmem:[#allocation5 + $0x130] sm:$0xff]
        %v3976 = vld [vmem:[#allocation5 + $0x138] sm:$0xff]
        %v3977 = vld [vmem:[#allocation5 + $0x140] sm:$0xff]
        %v3978 = vld [vmem:[#allocation5 + $0x148] sm:$0xff]
        %v3979 = vld [vmem:[#allocation5 + $0x150] sm:$0xff]
        %v3980 = vld [vmem:[#allocation5 + $0x158] sm:$0xff]
        %v3981 = vld [vmem:[#allocation5 + $0x160] sm:$0xff]
        %v3982 = vld [vmem:[#allocation5 + $0x168] sm:$0xff]
        %v3983 = vld [vmem:[#allocation5 + $0x170] sm:$0xff]
        %v3984 = vld [vmem:[#allocation5 + $0x178] sm:$0xff]
        %v3985 = vld [vmem:[#allocation5 + $0x180] sm:$0xff]
        %v3986 = vld [vmem:[#allocation5 + $0x188] sm:$0xff]
        %v3987 = vld [vmem:[#allocation5 + $0x190] sm:$0xff]
        %v3988 = vld [vmem:[#allocation5 + $0x198] sm:$0xff]
        %v3989 = vld [vmem:[#allocation5 + $0x1a0] sm:$0xff]
        %v3990 = vld [vmem:[#allocation5 + $0x1a8] sm:$0xff]
        %v3991 = vld [vmem:[#allocation5 + $0x1b0] sm:$0xff]
        %v3992 = vld [vmem:[#allocation5 + $0x1b8] sm:$0xff]
        %v3993 = vld [vmem:[#allocation5 + $0x1c0] sm:$0xff]
        %v3994 = vld [vmem:[#allocation5 + $0x1c8] sm:$0xff]
        %v3995 = vld [vmem:[#allocation5 + $0x1d0] sm:$0xff]
        %v3996 = vld [vmem:[#allocation5 + $0x1d8] sm:$0xff]
        %v3997 = vld [vmem:[#allocation5 + $0x1e0] sm:$0xff]
        %v3998 = vld [vmem:[#allocation5 + $0x1e8] sm:$0xff]
        %v3999 = vld [vmem:[#allocation5 + $0x1f0] sm:$0xff]
        %v4000 = vld [vmem:[#allocation5 + $0x1f8] sm:$0xff]
        %v4001 = vld [vmem:[%s3] sm:$0xff]
        %v4002 = vld [vmem:[%s3 + $0x8] sm:$0xff]
        %v4003 = vld [vmem:[%s3 + $0x10] sm:$0xff]
        %v4004 = vld [vmem:[%s3 + $0x18] sm:$0xff]
        %v4005 = vld [vmem:[%s3 + $0x20] sm:$0xff]
        %v4006 = vld [vmem:[%s3 + $0x28] sm:$0xff]
        %v4007 = vld [vmem:[%s3 + $0x30] sm:$0xff]
        %v4008 = vld [vmem:[%s3 + $0x38] sm:$0xff]
        %v4009 = vld [vmem:[%s3 + $0x40] sm:$0xff]
        %v4010 = vld [vmem:[%s3 + $0x48] sm:$0xff]
        %v4011 = vld [vmem:[%s3 + $0x50] sm:$0xff]
        %v4012 = vld [vmem:[%s3 + $0x58] sm:$0xff]
        %v4013 = vld [vmem:[%s3 + $0x60] sm:$0xff]
        %v4014 = vld [vmem:[%s3 + $0x68] sm:$0xff]
        %v4015 = vld [vmem:[%s3 + $0x70] sm:$0xff]
        %v4016 = vld [vmem:[%s3 + $0x78] sm:$0xff]
        %v4017 = vld [vmem:[%s3 + $0x80] sm:$0xff]
        %v4018 = vld [vmem:[%s3 + $0x88] sm:$0xff]
        %v4019 = vld [vmem:[%s4] sm:$0x1]
        %v4021 = vlaneseq
        %v4022 = vshrl.u32 %v4021, 7
        %v4023 = vsub.s32 0, %v4022
        %v4024 = vrot.slane %v4019, %v4023
        %v4027 = vsel %vm2346, %v3938, 0
        %v4030 = vsel %vm2346, %v3940, 0
        %v4033 = vsel %vm2346, %v3942, 0
        %v4036 = vsel %vm2346, %v3944, 0
        %v4039 = vsel %vm2346, %v3946, 0
        %v4042 = vsel %vm2346, %v3948, 0
        %v4045 = vsel %vm2346, %v3950, 0
        %v4048 = vsel %vm2346, %v3952, 0
        %v4051 = vsel %vm2346, %v3954, 0
        %v4054 = vsel %vm2346, %v3956, 0
        %v4057 = vsel %vm2346, %v3958, 0
        %v4060 = vsel %vm2346, %v3960, 0
        %v4063 = vsel %vm2346, %v3962, 0
        %v4066 = vsel %vm2346, %v3964, 0
        %v4069 = vsel %vm2346, %v3966, 0
        %v4072 = vsel %vm2346, %v3968, 0
        %v4075 = vsel %vm2346, %v3970, 0
        %v4078 = vsel %vm2346, %v3972, 0
        %v4081 = vsel %vm2346, %v3974, 0
        %v4084 = vsel %vm2346, %v3976, 0
        %v4087 = vsel %vm2346, %v3978, 0
        %v4090 = vsel %vm2346, %v3980, 0
        %v4093 = vsel %vm2346, %v3982, 0
        %v4096 = vsel %vm2346, %v3984, 0
        %v4099 = vsel %vm2346, %v3986, 0
        %v4102 = vsel %vm2346, %v3988, 0
        %v4105 = vsel %vm2346, %v3990, 0
        %v4108 = vsel %vm2346, %v3992, 0
        %v4111 = vsel %vm2346, %v3994, 0
        %v4114 = vsel %vm2346, %v3996, 0
        %v4117 = vsel %vm2346, %v3998, 0
        %v4120 = vsel %vm2346, %v4000, 0
        %4122 = vmatprep.subr.mxu0 0.0
        %4123 = vmatpush1.msra.mxu0 %v4016
        %4124 = vmatprep.subr.mxu0 0.0
        %4125 = vmatpush1.msra.mxu0 %v4015
        %4126 = vmatprep.subr.mxu0 0.0
        %4127 = vmatpush1.msra.mxu0 %v4014
        %4128 = vmatprep.subr.mxu0 0.0
        %4129 = vmatpush1.msra.mxu0 %v4013
        %4130 = vmatprep.subr.mxu0 0.0
        %4131 = vmatpush1.msra.mxu0 %v4012
        %4132 = vmatprep.subr.mxu0 0.0
        %4133 = vmatpush1.msra.mxu0 %v4011
        %4134 = vmatprep.subr.mxu0 0.0
        %4135 = vmatpush1.msra.mxu0 %v4010
        %4136 = vmatprep.subr.mxu0 0.0
        %4137 = vmatpush1.msra.mxu0 %v4009
        %4138 = vmatprep.subr.mxu0 0.0
        %4139 = vmatpush1.msra.mxu0 %v4008
        %4140 = vmatprep.subr.mxu0 0.0
        %4141 = vmatpush1.msra.mxu0 %v4007
        %4142 = vmatprep.subr.mxu0 0.0
        %4143 = vmatpush1.msra.mxu0 %v4006
        %4144 = vmatprep.subr.mxu0 0.0
        %4145 = vmatpush1.msra.mxu0 %v4005
        %4146 = vmatprep.subr.mxu0 0.0
        %4147 = vmatpush1.msra.mxu0 %v4004
        %4148 = vmatprep.subr.mxu0 0.0
        %4149 = vmatpush1.msra.mxu0 %v4003
        %4150 = vmatprep.subr.mxu0 0.0
        %4151 = vmatpush1.msra.mxu0 %v4002
        %4152 = vmatprep.subr.mxu0 0.0
        %4153 = vmatpush1.msra.mxu0 %v4001
        %4154 = vmatprep.subr.mxu0 0.0
        %4155 = vmatpush2.msra.mxu0 0.0
        %4156 = vmatprep.subr.mxu0 0.0
        %4157 = vmatpush2.msra.mxu0 0.0
        %4158 = vmatprep.subr.mxu0 0.0
        %4159 = vmatpush2.msra.mxu0 0.0
        %4160 = vmatprep.subr.mxu0 0.0
        %4161 = vmatpush2.msra.mxu0 0.0
        %4162 = vmatprep.subr.mxu0 0.0
        %4163 = vmatpush2.msra.mxu0 0.0
        %4164 = vmatprep.subr.mxu0 0.0
        %4165 = vmatpush2.msra.mxu0 0.0
        %4166 = vmatprep.subr.mxu0 0.0
        %4167 = vmatpush2.msra.mxu0 0.0
        %4168 = vmatprep.subr.mxu0 0.0
        %4169 = vmatpush2.msra.mxu0 0.0
        %4170 = vmatprep.subr.mxu0 0.0
        %4171 = vmatpush2.msra.mxu0 0.0
        %4172 = vmatprep.subr.mxu0 0.0
        %4173 = vmatpush2.msra.mxu0 0.0
        %4174 = vmatprep.subr.mxu0 0.0
        %4175 = vmatpush2.msra.mxu0 0.0
        %4176 = vmatprep.subr.mxu0 0.0
        %4177 = vmatpush2.msra.mxu0 0.0
        %4178 = vmatprep.subr.mxu0 0.0
        %4179 = vmatpush2.msra.mxu0 0.0
        %4180 = vmatprep.subr.mxu0 0.0
        %4181 = vmatpush2.msra.mxu0 0.0
        %4182 = vmatprep.subr.mxu0 0.0
        %4183 = vmatpush2.msra.mxu0 %v4018
        %4184 = vmatprep.subr.mxu0 0.0
        %4185 = vmatpush2.msra.mxu0 %v4017
        %4186 = vmatprep.mubr.f32.mxu0 %v4027
        %4187 = vmatmul.mubr.f32.gmra.mxu0 %v3937
        %v4188 = vpop.f32.mrf.mxu0
        %v4189 = vadd.f32 %v4024, %v4188
        %v4190 = vpop.f32.mrf.mxu0
        %4191 = vmatprep.mubr.f32.mxu0 %v4030
        %4192 = vmatmul.mubr.f32.gmra.mxu0 %v3939
        %v4193 = vpop.f32.mrf.mxu0
        %v4194 = vadd.f32 %v4024, %v4193
        %v4195 = vpop.f32.mrf.mxu0
        %4196 = vmatprep.mubr.f32.mxu0 %v4033
        %4197 = vmatmul.mubr.f32.gmra.mxu0 %v3941
        %v4198 = vpop.f32.mrf.mxu0
        %v4199 = vadd.f32 %v4024, %v4198
        %v4200 = vpop.f32.mrf.mxu0
        %4201 = vmatprep.mubr.f32.mxu0 %v4036
        %4202 = vmatmul.mubr.f32.gmra.mxu0 %v3943
        %v4203 = vpop.f32.mrf.mxu0
        %v4204 = vadd.f32 %v4024, %v4203
        %v4205 = vpop.f32.mrf.mxu0
        %4206 = vmatprep.mubr.f32.mxu0 %v4039
        %4207 = vmatmul.mubr.f32.gmra.mxu0 %v3945
        %v4208 = vpop.f32.mrf.mxu0
        %v4209 = vadd.f32 %v4024, %v4208
        %v4210 = vpop.f32.mrf.mxu0
        %4211 = vmatprep.mubr.f32.mxu0 %v4042
        %4212 = vmatmul.mubr.f32.gmra.mxu0 %v3947
        %v4213 = vpop.f32.mrf.mxu0
        %v4214 = vadd.f32 %v4024, %v4213
        %v4215 = vpop.f32.mrf.mxu0
        %4216 = vmatprep.mubr.f32.mxu0 %v4045
        %4217 = vmatmul.mubr.f32.gmra.mxu0 %v3949
        %v4218 = vpop.f32.mrf.mxu0
        %v4219 = vadd.f32 %v4024, %v4218
        %v4220 = vpop.f32.mrf.mxu0
        %4221 = vmatprep.mubr.f32.mxu0 %v4048
        %4222 = vmatmul.mubr.f32.gmra.mxu0 %v3951
        %v4223 = vpop.f32.mrf.mxu0
        %v4224 = vadd.f32 %v4024, %v4223
        %v4225 = vpop.f32.mrf.mxu0
        %4226 = vmatprep.mubr.f32.mxu0 %v4051
        %4227 = vmatmul.mubr.f32.gmra.mxu0 %v3953
        %v4228 = vpop.f32.mrf.mxu0
        %v4229 = vadd.f32 %v4024, %v4228
        %v4230 = vpop.f32.mrf.mxu0
        %4231 = vmatprep.mubr.f32.mxu0 %v4054
        %4232 = vmatmul.mubr.f32.gmra.mxu0 %v3955
        %v4233 = vpop.f32.mrf.mxu0
        %v4234 = vadd.f32 %v4024, %v4233
        %v4235 = vpop.f32.mrf.mxu0
        %4236 = vmatprep.mubr.f32.mxu0 %v4057
        %4237 = vmatmul.mubr.f32.gmra.mxu0 %v3957
        %v4238 = vpop.f32.mrf.mxu0
        %v4239 = vadd.f32 %v4024, %v4238
        %v4240 = vpop.f32.mrf.mxu0
        %4241 = vmatprep.mubr.f32.mxu0 %v4060
        %4242 = vmatmul.mubr.f32.gmra.mxu0 %v3959
        %v4243 = vpop.f32.mrf.mxu0
        %v4244 = vadd.f32 %v4024, %v4243
        %v4245 = vpop.f32.mrf.mxu0
        %4246 = vmatprep.mubr.f32.mxu0 %v4063
        %4247 = vmatmul.mubr.f32.gmra.mxu0 %v3961
        %v4248 = vpop.f32.mrf.mxu0
        %v4249 = vadd.f32 %v4024, %v4248
        %v4250 = vpop.f32.mrf.mxu0
        %4251 = vmatprep.mubr.f32.mxu0 %v4066
        %4252 = vmatmul.mubr.f32.gmra.mxu0 %v3963
        %v4253 = vpop.f32.mrf.mxu0
        %v4254 = vadd.f32 %v4024, %v4253
        %v4255 = vpop.f32.mrf.mxu0
        %4256 = vmatprep.mubr.f32.mxu0 %v4069
        %4257 = vmatmul.mubr.f32.gmra.mxu0 %v3965
        %v4258 = vpop.f32.mrf.mxu0
        %v4259 = vadd.f32 %v4024, %v4258
        %v4260 = vpop.f32.mrf.mxu0
        %4261 = vmatprep.mubr.f32.mxu0 %v4072
        %4262 = vmatmul.mubr.f32.gmra.mxu0 %v3967
        %v4263 = vpop.f32.mrf.mxu0
        %v4264 = vadd.f32 %v4024, %v4263
        %v4265 = vpop.f32.mrf.mxu0
        %4266 = vmatprep.mubr.f32.mxu0 %v4075
        %4267 = vmatmul.mubr.f32.gmra.mxu0 %v3969
        %v4268 = vpop.f32.mrf.mxu0
        %v4269 = vadd.f32 %v4024, %v4268
        %v4270 = vpop.f32.mrf.mxu0
        %4271 = vmatprep.mubr.f32.mxu0 %v4078
        %4272 = vmatmul.mubr.f32.gmra.mxu0 %v3971
        %v4273 = vpop.f32.mrf.mxu0
        %v4274 = vadd.f32 %v4024, %v4273
        %v4275 = vpop.f32.mrf.mxu0
        %4276 = vmatprep.mubr.f32.mxu0 %v4081
        %4277 = vmatmul.mubr.f32.gmra.mxu0 %v3973
        %v4278 = vpop.f32.mrf.mxu0
        %v4279 = vadd.f32 %v4024, %v4278
        %v4280 = vpop.f32.mrf.mxu0
        %4281 = vmatprep.mubr.f32.mxu0 %v4084
        %4282 = vmatmul.mubr.f32.gmra.mxu0 %v3975
        %v4283 = vpop.f32.mrf.mxu0
        %v4284 = vadd.f32 %v4024, %v4283
        %v4285 = vpop.f32.mrf.mxu0
        %4286 = vmatprep.mubr.f32.mxu0 %v4087
        %4287 = vmatmul.mubr.f32.gmra.mxu0 %v3977
        %v4288 = vpop.f32.mrf.mxu0
        %v4289 = vadd.f32 %v4024, %v4288
        %v4290 = vpop.f32.mrf.mxu0
        %4291 = vmatprep.mubr.f32.mxu0 %v4090
        %4292 = vmatmul.mubr.f32.gmra.mxu0 %v3979
        %v4293 = vpop.f32.mrf.mxu0
        %v4294 = vadd.f32 %v4024, %v4293
        %v4295 = vpop.f32.mrf.mxu0
        %4296 = vmatprep.mubr.f32.mxu0 %v4093
        %4297 = vmatmul.mubr.f32.gmra.mxu0 %v3981
        %v4298 = vpop.f32.mrf.mxu0
        %v4299 = vadd.f32 %v4024, %v4298
        %v4300 = vpop.f32.mrf.mxu0
        %4301 = vmatprep.mubr.f32.mxu0 %v4096
        %4302 = vmatmul.mubr.f32.gmra.mxu0 %v3983
        %v4303 = vpop.f32.mrf.mxu0
        %v4304 = vadd.f32 %v4024, %v4303
        %v4305 = vpop.f32.mrf.mxu0
        %4306 = vmatprep.mubr.f32.mxu0 %v4099
        %4307 = vmatmul.mubr.f32.gmra.mxu0 %v3985
        %v4308 = vpop.f32.mrf.mxu0
        %v4309 = vadd.f32 %v4024, %v4308
        %v4310 = vpop.f32.mrf.mxu0
        %4311 = vmatprep.mubr.f32.mxu0 %v4102
        %4312 = vmatmul.mubr.f32.gmra.mxu0 %v3987
        %v4313 = vpop.f32.mrf.mxu0
        %v4314 = vadd.f32 %v4024, %v4313
        %v4315 = vpop.f32.mrf.mxu0
        %4316 = vmatprep.mubr.f32.mxu0 %v4105
        %4317 = vmatmul.mubr.f32.gmra.mxu0 %v3989
        %v4318 = vpop.f32.mrf.mxu0
        %v4319 = vadd.f32 %v4024, %v4318
        %v4320 = vpop.f32.mrf.mxu0
        %4321 = vmatprep.mubr.f32.mxu0 %v4108
        %4322 = vmatmul.mubr.f32.gmra.mxu0 %v3991
        %v4323 = vpop.f32.mrf.mxu0
        %v4324 = vadd.f32 %v4024, %v4323
        %v4325 = vpop.f32.mrf.mxu0
        %4326 = vmatprep.mubr.f32.mxu0 %v4111
        %4327 = vmatmul.mubr.f32.gmra.mxu0 %v3993
        %v4328 = vpop.f32.mrf.mxu0
        %v4329 = vadd.f32 %v4024, %v4328
        %v4330 = vpop.f32.mrf.mxu0
        %4331 = vmatprep.mubr.f32.mxu0 %v4114
        %4332 = vmatmul.mubr.f32.gmra.mxu0 %v3995
        %v4333 = vpop.f32.mrf.mxu0
        %v4334 = vadd.f32 %v4024, %v4333
        %v4335 = vpop.f32.mrf.mxu0
        %4336 = vmatprep.mubr.f32.mxu0 %v4117
        %4337 = vmatmul.mubr.f32.gmra.mxu0 %v3997
        %v4338 = vpop.f32.mrf.mxu0
        %v4339 = vadd.f32 %v4024, %v4338
        %v4340 = vpop.f32.mrf.mxu0
        %4341 = vmatprep.mubr.f32.mxu0 %v4120
        %4342 = vmatmul.mubr.f32.gmra.mxu0 %v3999
        %v4343 = vpop.f32.mrf.mxu0
        %v4344 = vadd.f32 %v4024, %v4343
        %v4345 = vpop.f32.mrf.mxu0
        %4346 = vdwg.mxu0
        %v4347 = vmax.f32 %v4189, 0.0
        %v4348 = vmax.f32 %v4194, 0.0
        %v4349 = vmax.f32 %v4199, 0.0
        %v4350 = vmax.f32 %v4204, 0.0
        %v4351 = vmax.f32 %v4209, 0.0
        %v4352 = vmax.f32 %v4214, 0.0
        %v4353 = vmax.f32 %v4219, 0.0
        %v4354 = vmax.f32 %v4224, 0.0
        %v4355 = vmax.f32 %v4229, 0.0
        %v4356 = vmax.f32 %v4234, 0.0
        %v4357 = vmax.f32 %v4239, 0.0
        %v4358 = vmax.f32 %v4244, 0.0
        %v4359 = vmax.f32 %v4249, 0.0
        %v4360 = vmax.f32 %v4254, 0.0
        %v4361 = vmax.f32 %v4259, 0.0
        %v4362 = vmax.f32 %v4264, 0.0
        %v4363 = vmax.f32 %v4269, 0.0
        %v4364 = vmax.f32 %v4274, 0.0
        %v4365 = vmax.f32 %v4279, 0.0
        %v4366 = vmax.f32 %v4284, 0.0
        %v4367 = vmax.f32 %v4289, 0.0
        %v4368 = vmax.f32 %v4294, 0.0
        %v4369 = vmax.f32 %v4299, 0.0
        %v4370 = vmax.f32 %v4304, 0.0
        %v4371 = vmax.f32 %v4309, 0.0
        %v4372 = vmax.f32 %v4314, 0.0
        %v4373 = vmax.f32 %v4319, 0.0
        %v4374 = vmax.f32 %v4324, 0.0
        %v4375 = vmax.f32 %v4329, 0.0
        %v4376 = vmax.f32 %v4334, 0.0
        %v4377 = vmax.f32 %v4339, 0.0
        %v4378 = vmax.f32 %v4344, 0.0
        %s4379 = scalar_lea.vmem [#allocation4], 24
        %vm4380 = vcmask 261120
        %4381 = vst.msk [vmem:[%s4379 + $0x1] sm:$0xff] %vm4380, %v4347
        %4382 = vst.msk [vmem:[%s4379 + $0x9] sm:$0xff] %vm4380, %v4348
        %4383 = vst.msk [vmem:[%s4379 + $0x19] sm:$0xff] %vm4380, %v4349
        %4384 = vst.msk [vmem:[%s4379 + $0x21] sm:$0xff] %vm4380, %v4350
        %4385 = vst.msk [vmem:[%s4379 + $0x31] sm:$0xff] %vm4380, %v4351
        %4386 = vst.msk [vmem:[%s4379 + $0x39] sm:$0xff] %vm4380, %v4352
        %4387 = vst.msk [vmem:[%s4379 + $0x49] sm:$0xff] %vm4380, %v4353
        %4388 = vst.msk [vmem:[%s4379 + $0x51] sm:$0xff] %vm4380, %v4354
        %4389 = vst.msk [vmem:[%s4379 + $0x61] sm:$0xff] %vm4380, %v4355
        %4390 = vst.msk [vmem:[%s4379 + $0x69] sm:$0xff] %vm4380, %v4356
        %4391 = vst.msk [vmem:[%s4379 + $0x79] sm:$0xff] %vm4380, %v4357
        %4392 = vst.msk [vmem:[%s4379 + $0x81] sm:$0xff] %vm4380, %v4358
        %4393 = vst.msk [vmem:[%s4379 + $0x91] sm:$0xff] %vm4380, %v4359
        %4394 = vst.msk [vmem:[%s4379 + $0x99] sm:$0xff] %vm4380, %v4360
        %4395 = vst.msk [vmem:[%s4379 + $0xa9] sm:$0xff] %vm4380, %v4361
        %4396 = vst.msk [vmem:[%s4379 + $0xb1] sm:$0xff] %vm4380, %v4362
        %4397 = vst.msk [vmem:[%s4379 + $0xc1] sm:$0xff] %vm4380, %v4363
        %4398 = vst.msk [vmem:[%s4379 + $0xc9] sm:$0xff] %vm4380, %v4364
        %4399 = vst.msk [vmem:[%s4379 + $0xd9] sm:$0xff] %vm4380, %v4365
        %4400 = vst.msk [vmem:[%s4379 + $0xe1] sm:$0xff] %vm4380, %v4366
        %4401 = vst.msk [vmem:[%s4379 + $0xf1] sm:$0xff] %vm4380, %v4367
        %4402 = vst.msk [vmem:[%s4379 + $0xf9] sm:$0xff] %vm4380, %v4368
        %4403 = vst.msk [vmem:[%s4379 + $0x109] sm:$0xff] %vm4380, %v4369
        %4404 = vst.msk [vmem:[%s4379 + $0x111] sm:$0xff] %vm4380, %v4370
        %4405 = vst.msk [vmem:[%s4379 + $0x121] sm:$0xff] %vm4380, %v4371
        %4406 = vst.msk [vmem:[%s4379 + $0x129] sm:$0xff] %vm4380, %v4372
        %4407 = vst.msk [vmem:[%s4379 + $0x139] sm:$0xff] %vm4380, %v4373
        %4408 = vst.msk [vmem:[%s4379 + $0x141] sm:$0xff] %vm4380, %v4374
        %4409 = vst.msk [vmem:[%s4379 + $0x151] sm:$0xff] %vm4380, %v4375
        %4410 = vst.msk [vmem:[%s4379 + $0x159] sm:$0xff] %vm4380, %v4376
        %4411 = vst.msk [vmem:[%s4379 + $0x169] sm:$0xff] %vm4380, %v4377
        %4412 = vst.msk [vmem:[%s4379 + $0x171] sm:$0xff] %vm4380, %v4378
        %4413 = vst.msk [vmem:[#allocation4 + $0x1] sm:$0xff] %vm4380, %v4349
        %4414 = vst.msk [vmem:[#allocation4 + $0x9] sm:$0xff] %vm4380, %v4350
        %s4415 = scalar_lea.vmem [#allocation4], 408
        %4416 = vst.msk [vmem:[%s4415 + $0x1] sm:$0xff] %vm4380, %v4375
        %4417 = vst.msk [vmem:[%s4415 + $0x9] sm:$0xff] %vm4380, %v4376
        %v4418 = vld [vmem:[#allocation4 + $0x2] sm:$0x1]
        %v4419 = vld [vmem:[#allocation4 + $0x1a] sm:$0x1]
        %v4420 = vld [vmem:[#allocation4 + $0x32] sm:$0x1]
        %v4421 = vld [vmem:[#allocation4 + $0x4a] sm:$0x1]
        %v4422 = vld [vmem:[#allocation4 + $0x62] sm:$0x1]
        %v4423 = vld [vmem:[#allocation4 + $0x7a] sm:$0x1]
        %v4424 = vld [vmem:[#allocation4 + $0x92] sm:$0x1]
        %v4425 = vld [vmem:[#allocation4 + $0xaa] sm:$0x1]
        %v4426 = vld [vmem:[#allocation4 + $0xc2] sm:$0x1]
        %v4427 = vld [vmem:[#allocation4 + $0xda] sm:$0x1]
        %v4428 = vld [vmem:[#allocation4 + $0xf2] sm:$0x1]
        %v4429 = vld [vmem:[#allocation4 + $0x10a] sm:$0x1]
        %v4430 = vld [vmem:[#allocation4 + $0x122] sm:$0x1]
        %v4431 = vld [vmem:[#allocation4 + $0x13a] sm:$0x1]
        %v4432 = vld [vmem:[#allocation4 + $0x152] sm:$0x1]
        %v4433 = vld [vmem:[#allocation4 + $0x16a] sm:$0x1]
        %v4434 = vld [vmem:[#allocation4 + $0x182] sm:$0x1]
        %v4435 = vld [vmem:[#allocation4 + $0x19a] sm:$0x1]
        %vm4436 = vcmask 253952
        %4437 = vst.msk [vmem:[#allocation4] sm:$0x1] %vm4436, %v4418
        %4438 = vst.msk [vmem:[#allocation4 + $0x18] sm:$0x1] %vm4436, %v4419
        %4439 = vst.msk [vmem:[#allocation4 + $0x30] sm:$0x1] %vm4436, %v4420
        %4440 = vst.msk [vmem:[#allocation4 + $0x48] sm:$0x1] %vm4436, %v4421
        %4441 = vst.msk [vmem:[#allocation4 + $0x60] sm:$0x1] %vm4436, %v4422
        %4442 = vst.msk [vmem:[#allocation4 + $0x78] sm:$0x1] %vm4436, %v4423
        %4443 = vst.msk [vmem:[#allocation4 + $0x90] sm:$0x1] %vm4436, %v4424
        %4444 = vst.msk [vmem:[#allocation4 + $0xa8] sm:$0x1] %vm4436, %v4425
        %4445 = vst.msk [vmem:[#allocation4 + $0xc0] sm:$0x1] %vm4436, %v4426
        %4446 = vst.msk [vmem:[#allocation4 + $0xd8] sm:$0x1] %vm4436, %v4427
        %4447 = vst.msk [vmem:[#allocation4 + $0xf0] sm:$0x1] %vm4436, %v4428
        %4448 = vst.msk [vmem:[#allocation4 + $0x108] sm:$0x1] %vm4436, %v4429
        %4449 = vst.msk [vmem:[#allocation4 + $0x120] sm:$0x1] %vm4436, %v4430
        %4450 = vst.msk [vmem:[#allocation4 + $0x138] sm:$0x1] %vm4436, %v4431
        %4451 = vst.msk [vmem:[#allocation4 + $0x150] sm:$0x1] %vm4436, %v4432
        %4452 = vst.msk [vmem:[#allocation4 + $0x168] sm:$0x1] %vm4436, %v4433
        %4453 = vst.msk [vmem:[#allocation4 + $0x180] sm:$0x1] %vm4436, %v4434
        %4454 = vst.msk [vmem:[#allocation4 + $0x198] sm:$0x1] %vm4436, %v4435
        %v4455 = vld [vmem:[#allocation4 + $0xf] sm:$0x1]
        %v4456 = vld [vmem:[#allocation4 + $0x27] sm:$0x1]
        %v4457 = vld [vmem:[#allocation4 + $0x3f] sm:$0x1]
        %v4458 = vld [vmem:[#allocation4 + $0x57] sm:$0x1]
        %v4459 = vld [vmem:[#allocation4 + $0x6f] sm:$0x1]
        %v4460 = vld [vmem:[#allocation4 + $0x87] sm:$0x1]
        %v4461 = vld [vmem:[#allocation4 + $0x9f] sm:$0x1]
        %v4462 = vld [vmem:[#allocation4 + $0xb7] sm:$0x1]
        %v4463 = vld [vmem:[#allocation4 + $0xcf] sm:$0x1]
        %v4464 = vld [vmem:[#allocation4 + $0xe7] sm:$0x1]
        %v4465 = vld [vmem:[#allocation4 + $0xff] sm:$0x1]
        %v4466 = vld [vmem:[#allocation4 + $0x117] sm:$0x1]
        %v4467 = vld [vmem:[#allocation4 + $0x12f] sm:$0x1]
        %v4468 = vld [vmem:[#allocation4 + $0x147] sm:$0x1]
        %v4469 = vld [vmem:[#allocation4 + $0x15f] sm:$0x1]
        %v4470 = vld [vmem:[#allocation4 + $0x177] sm:$0x1]
        %v4471 = vld [vmem:[#allocation4 + $0x18f] sm:$0x1]
        %v4472 = vld [vmem:[#allocation4 + $0x1a7] sm:$0x1]
        %4473 = vst.msk [vmem:[#allocation4 + $0x11] sm:$0x1] %vm4436, %v4455
        %4474 = vst.msk [vmem:[#allocation4 + $0x29] sm:$0x1] %vm4436, %v4456
        %4475 = vst.msk [vmem:[#allocation4 + $0x41] sm:$0x1] %vm4436, %v4457
        %4476 = vst.msk [vmem:[#allocation4 + $0x59] sm:$0x1] %vm4436, %v4458
        %4477 = vst.msk [vmem:[#allocation4 + $0x71] sm:$0x1] %vm4436, %v4459
        %4478 = vst.msk [vmem:[#allocation4 + $0x89] sm:$0x1] %vm4436, %v4460
        %4479 = vst.msk [vmem:[#allocation4 + $0xa1] sm:$0x1] %vm4436, %v4461
        %4480 = vst.msk [vmem:[#allocation4 + $0xb9] sm:$0x1] %vm4436, %v4462
        %4481 = vst.msk [vmem:[#allocation4 + $0xd1] sm:$0x1] %vm4436, %v4463
        %4482 = vst.msk [vmem:[#allocation4 + $0xe9] sm:$0x1] %vm4436, %v4464
        %4483 = vst.msk [vmem:[#allocation4 + $0x101] sm:$0x1] %vm4436, %v4465
        %4484 = vst.msk [vmem:[#allocation4 + $0x119] sm:$0x1] %vm4436, %v4466
        %4485 = vst.msk [vmem:[#allocation4 + $0x131] sm:$0x1] %vm4436, %v4467
        %4486 = vst.msk [vmem:[#allocation4 + $0x149] sm:$0x1] %vm4436, %v4468
        %4487 = vst.msk [vmem:[#allocation4 + $0x161] sm:$0x1] %vm4436, %v4469
        %4488 = vst.msk [vmem:[#allocation4 + $0x179] sm:$0x1] %vm4436, %v4470
        %4489 = vst.msk [vmem:[#allocation4 + $0x191] sm:$0x1] %vm4436, %v4471
        %4490 = vst.msk [vmem:[#allocation4 + $0x1a9] sm:$0x1] %vm4436, %v4472
        %v4491 = vld [vmem:[#allocation4] sm:$0xff]
        %v4492 = vld [vmem:[#allocation4 + $0x8] sm:$0xff]
        %v4493 = vld [vmem:[#allocation4 + $0x18] sm:$0xff]
        %v4494 = vld [vmem:[#allocation4 + $0x20] sm:$0xff]
        %v4495 = vld [vmem:[#allocation4 + $0x30] sm:$0xff]
        %v4496 = vld [vmem:[#allocation4 + $0x38] sm:$0xff]
        %v4497 = vld [vmem:[#allocation4 + $0x48] sm:$0xff]
        %v4498 = vld [vmem:[#allocation4 + $0x50] sm:$0xff]
        %v4499 = vld [vmem:[#allocation4 + $0x60] sm:$0xff]
        %v4500 = vld [vmem:[#allocation4 + $0x68] sm:$0xff]
        %v4501 = vld [vmem:[#allocation4 + $0x78] sm:$0xff]
        %v4502 = vld [vmem:[#allocation4 + $0x80] sm:$0xff]
        %v4503 = vld [vmem:[#allocation4 + $0x90] sm:$0xff]
        %v4504 = vld [vmem:[#allocation4 + $0x98] sm:$0xff]
        %v4505 = vld [vmem:[#allocation4 + $0xa8] sm:$0xff]
        %v4506 = vld [vmem:[#allocation4 + $0xb0] sm:$0xff]
        %v4507 = vld [vmem:[#allocation4 + $0xc0] sm:$0xff]
        %v4508 = vld [vmem:[#allocation4 + $0xc8] sm:$0xff]
        %v4509 = vld [vmem:[#allocation4 + $0xd8] sm:$0xff]
        %v4510 = vld [vmem:[#allocation4 + $0xe0] sm:$0xff]
        %v4511 = vld [vmem:[#allocation4 + $0xf0] sm:$0xff]
        %v4512 = vld [vmem:[#allocation4 + $0xf8] sm:$0xff]
        %v4513 = vld [vmem:[#allocation4 + $0x108] sm:$0xff]
        %v4514 = vld [vmem:[#allocation4 + $0x110] sm:$0xff]
        %v4515 = vld [vmem:[#allocation4 + $0x120] sm:$0xff]
        %v4516 = vld [vmem:[#allocation4 + $0x128] sm:$0xff]
        %v4517 = vld [vmem:[#allocation4 + $0x138] sm:$0xff]
        %v4518 = vld [vmem:[#allocation4 + $0x140] sm:$0xff]
        %v4519 = vld [vmem:[#allocation4 + $0x150] sm:$0xff]
        %v4520 = vld [vmem:[#allocation4 + $0x158] sm:$0xff]
        %v4521 = vld [vmem:[#allocation4 + $0x168] sm:$0xff]
        %v4522 = vld [vmem:[#allocation4 + $0x170] sm:$0xff]
        %4523 = vst.msk [vmem:[#allocation6] sm:$0xff] %vm4380, %v4491
        %4524 = vst.msk [vmem:[#allocation6 + $0x18] sm:$0xff] %vm4380, %v4492
        %4525 = vst.msk [vmem:[#allocation6 + $0x30] sm:$0xff] %vm4380, %v4493
        %4526 = vst.msk [vmem:[#allocation6 + $0x48] sm:$0xff] %vm4380, %v4494
        %4527 = vst.msk [vmem:[#allocation6 + $0x60] sm:$0xff] %vm4380, %v4495
        %4528 = vst.msk [vmem:[#allocation6 + $0x78] sm:$0xff] %vm4380, %v4496
        %4529 = vst.msk [vmem:[#allocation6 + $0x90] sm:$0xff] %vm4380, %v4497
        %4530 = vst.msk [vmem:[#allocation6 + $0xa8] sm:$0xff] %vm4380, %v4498
        %4531 = vst.msk [vmem:[#allocation6 + $0xc0] sm:$0xff] %vm4380, %v4499
        %4532 = vst.msk [vmem:[#allocation6 + $0xd8] sm:$0xff] %vm4380, %v4500
        %4533 = vst.msk [vmem:[#allocation6 + $0xf0] sm:$0xff] %vm4380, %v4501
        %4534 = vst.msk [vmem:[#allocation6 + $0x108] sm:$0xff] %vm4380, %v4502
        %4535 = vst.msk [vmem:[#allocation6 + $0x120] sm:$0xff] %vm4380, %v4503
        %4536 = vst.msk [vmem:[#allocation6 + $0x138] sm:$0xff] %vm4380, %v4504
        %4537 = vst.msk [vmem:[#allocation6 + $0x150] sm:$0xff] %vm4380, %v4505
        %4538 = vst.msk [vmem:[#allocation6 + $0x168] sm:$0xff] %vm4380, %v4506
        %4539 = vst.msk [vmem:[#allocation6 + $0x180] sm:$0xff] %vm4380, %v4507
        %4540 = vst.msk [vmem:[#allocation6 + $0x198] sm:$0xff] %vm4380, %v4508
        %4541 = vst.msk [vmem:[#allocation6 + $0x1b0] sm:$0xff] %vm4380, %v4509
        %4542 = vst.msk [vmem:[#allocation6 + $0x1c8] sm:$0xff] %vm4380, %v4510
        %4543 = vst.msk [vmem:[#allocation6 + $0x1e0] sm:$0xff] %vm4380, %v4511
        %4544 = vst.msk [vmem:[#allocation6 + $0x1f8] sm:$0xff] %vm4380, %v4512
        %4545 = vst.msk [vmem:[#allocation6 + $0x210] sm:$0xff] %vm4380, %v4513
        %4546 = vst.msk [vmem:[#allocation6 + $0x228] sm:$0xff] %vm4380, %v4514
        %4547 = vst.msk [vmem:[#allocation6 + $0x240] sm:$0xff] %vm4380, %v4515
        %4548 = vst.msk [vmem:[#allocation6 + $0x258] sm:$0xff] %vm4380, %v4516
        %4549 = vst.msk [vmem:[#allocation6 + $0x270] sm:$0xff] %vm4380, %v4517
        %4550 = vst.msk [vmem:[#allocation6 + $0x288] sm:$0xff] %vm4380, %v4518
        %4551 = vst.msk [vmem:[#allocation6 + $0x2a0] sm:$0xff] %vm4380, %v4519
        %4552 = vst.msk [vmem:[#allocation6 + $0x2b8] sm:$0xff] %vm4380, %v4520
        %4553 = vst.msk [vmem:[#allocation6 + $0x2d0] sm:$0xff] %vm4380, %v4521
        %4554 = vst.msk [vmem:[#allocation6 + $0x2e8] sm:$0xff] %vm4380, %v4522
        %v4555 = vld [vmem:[#allocation4 + $0x1] sm:$0xff]
        %v4556 = vld [vmem:[#allocation4 + $0x9] sm:$0xff]
        %v4557 = vld [vmem:[#allocation4 + $0x19] sm:$0xff]
        %v4558 = vld [vmem:[#allocation4 + $0x21] sm:$0xff]
        %v4559 = vld [vmem:[#allocation4 + $0x31] sm:$0xff]
        %v4560 = vld [vmem:[#allocation4 + $0x39] sm:$0xff]
        %v4561 = vld [vmem:[#allocation4 + $0x49] sm:$0xff]
        %v4562 = vld [vmem:[#allocation4 + $0x51] sm:$0xff]
        %v4563 = vld [vmem:[#allocation4 + $0x61] sm:$0xff]
        %v4564 = vld [vmem:[#allocation4 + $0x69] sm:$0xff]
        %v4565 = vld [vmem:[#allocation4 + $0x79] sm:$0xff]
        %v4566 = vld [vmem:[#allocation4 + $0x81] sm:$0xff]
        %v4567 = vld [vmem:[#allocation4 + $0x91] sm:$0xff]
        %v4568 = vld [vmem:[#allocation4 + $0x99] sm:$0xff]
        %v4569 = vld [vmem:[#allocation4 + $0xa9] sm:$0xff]
        %v4570 = vld [vmem:[#allocation4 + $0xb1] sm:$0xff]
        %v4571 = vld [vmem:[#allocation4 + $0xc1] sm:$0xff]
        %v4572 = vld [vmem:[#allocation4 + $0xc9] sm:$0xff]
        %v4573 = vld [vmem:[#allocation4 + $0xd9] sm:$0xff]
        %v4574 = vld [vmem:[#allocation4 + $0xe1] sm:$0xff]
        %v4575 = vld [vmem:[#allocation4 + $0xf1] sm:$0xff]
        %v4576 = vld [vmem:[#allocation4 + $0xf9] sm:$0xff]
        %v4577 = vld [vmem:[#allocation4 + $0x109] sm:$0xff]
        %v4578 = vld [vmem:[#allocation4 + $0x111] sm:$0xff]
        %v4579 = vld [vmem:[#allocation4 + $0x121] sm:$0xff]
        %v4580 = vld [vmem:[#allocation4 + $0x129] sm:$0xff]
        %v4581 = vld [vmem:[#allocation4 + $0x139] sm:$0xff]
        %v4582 = vld [vmem:[#allocation4 + $0x141] sm:$0xff]
        %v4583 = vld [vmem:[#allocation4 + $0x151] sm:$0xff]
        %v4584 = vld [vmem:[#allocation4 + $0x159] sm:$0xff]
        %v4585 = vld [vmem:[#allocation4 + $0x169] sm:$0xff]
        %v4586 = vld [vmem:[#allocation4 + $0x171] sm:$0xff]
        %4619 = vrot.lane.b32.xlu0 %v4555, 32
        %v4620 = vpop.permute.xlu0 %4619
        %4621 = vrot.lane.b32.xlu0 %v4556, 32
        %v4622 = vpop.permute.xlu0 %4621
        %4623 = vrot.lane.b32.xlu0 %v4557, 32
        %v4624 = vpop.permute.xlu0 %4623
        %4625 = vrot.lane.b32.xlu0 %v4558, 32
        %v4626 = vpop.permute.xlu0 %4625
        %4627 = vrot.lane.b32.xlu0 %v4559, 32
        %v4628 = vpop.permute.xlu0 %4627
        %4629 = vrot.lane.b32.xlu0 %v4560, 32
        %v4630 = vpop.permute.xlu0 %4629
        %4631 = vrot.lane.b32.xlu0 %v4561, 32
        %v4632 = vpop.permute.xlu0 %4631
        %4633 = vrot.lane.b32.xlu0 %v4562, 32
        %v4634 = vpop.permute.xlu0 %4633
        %4635 = vrot.lane.b32.xlu0 %v4563, 32
        %v4636 = vpop.permute.xlu0 %4635
        %4637 = vrot.lane.b32.xlu0 %v4564, 32
        %v4638 = vpop.permute.xlu0 %4637
        %4639 = vrot.lane.b32.xlu0 %v4565, 32
        %v4640 = vpop.permute.xlu0 %4639
        %4641 = vrot.lane.b32.xlu0 %v4566, 32
        %v4642 = vpop.permute.xlu0 %4641
        %4643 = vrot.lane.b32.xlu0 %v4567, 32
        %v4644 = vpop.permute.xlu0 %4643
        %4645 = vrot.lane.b32.xlu0 %v4568, 32
        %v4646 = vpop.permute.xlu0 %4645
        %4647 = vrot.lane.b32.xlu0 %v4569, 32
        %v4648 = vpop.permute.xlu0 %4647
        %4649 = vrot.lane.b32.xlu0 %v4570, 32
        %v4650 = vpop.permute.xlu0 %4649
        %4651 = vrot.lane.b32.xlu0 %v4571, 32
        %v4652 = vpop.permute.xlu0 %4651
        %4653 = vrot.lane.b32.xlu0 %v4572, 32
        %v4654 = vpop.permute.xlu0 %4653
        %4655 = vrot.lane.b32.xlu0 %v4573, 32
        %v4656 = vpop.permute.xlu0 %4655
        %4657 = vrot.lane.b32.xlu0 %v4574, 32
        %v4658 = vpop.permute.xlu0 %4657
        %4659 = vrot.lane.b32.xlu0 %v4575, 32
        %v4660 = vpop.permute.xlu0 %4659
        %4661 = vrot.lane.b32.xlu0 %v4576, 32
        %v4662 = vpop.permute.xlu0 %4661
        %4663 = vrot.lane.b32.xlu0 %v4577, 32
        %v4664 = vpop.permute.xlu0 %4663
        %4665 = vrot.lane.b32.xlu0 %v4578, 32
        %v4666 = vpop.permute.xlu0 %4665
        %4667 = vrot.lane.b32.xlu0 %v4579, 32
        %v4668 = vpop.permute.xlu0 %4667
        %4669 = vrot.lane.b32.xlu0 %v4580, 32
        %v4670 = vpop.permute.xlu0 %4669
        %4671 = vrot.lane.b32.xlu0 %v4581, 32
        %v4672 = vpop.permute.xlu0 %4671
        %4673 = vrot.lane.b32.xlu0 %v4582, 32
        %v4674 = vpop.permute.xlu0 %4673
        %4675 = vrot.lane.b32.xlu0 %v4583, 32
        %v4676 = vpop.permute.xlu0 %4675
        %4677 = vrot.lane.b32.xlu0 %v4584, 32
        %v4678 = vpop.permute.xlu0 %4677
        %4679 = vrot.lane.b32.xlu0 %v4585, 32
        %v4680 = vpop.permute.xlu0 %4679
        %4681 = vrot.lane.b32.xlu0 %v4586, 32
        %v4682 = vpop.permute.xlu0 %4681
        %vm4715 = vcmask 523520
        %4716 = vst.msk [vmem:[#allocation6] sm:$0xff] %vm4715, %v4620
        %4717 = vst.msk [vmem:[#allocation6 + $0x18] sm:$0xff] %vm4715, %v4622
        %4718 = vst.msk [vmem:[#allocation6 + $0x30] sm:$0xff] %vm4715, %v4624
        %4719 = vst.msk [vmem:[#allocation6 + $0x48] sm:$0xff] %vm4715, %v4626
        %4720 = vst.msk [vmem:[#allocation6 + $0x60] sm:$0xff] %vm4715, %v4628
        %4721 = vst.msk [vmem:[#allocation6 + $0x78] sm:$0xff] %vm4715, %v4630
        %4722 = vst.msk [vmem:[#allocation6 + $0x90] sm:$0xff] %vm4715, %v4632
        %4723 = vst.msk [vmem:[#allocation6 + $0xa8] sm:$0xff] %vm4715, %v4634
        %4724 = vst.msk [vmem:[#allocation6 + $0xc0] sm:$0xff] %vm4715, %v4636
        %4725 = vst.msk [vmem:[#allocation6 + $0xd8] sm:$0xff] %vm4715, %v4638
        %4726 = vst.msk [vmem:[#allocation6 + $0xf0] sm:$0xff] %vm4715, %v4640
        %4727 = vst.msk [vmem:[#allocation6 + $0x108] sm:$0xff] %vm4715, %v4642
        %4728 = vst.msk [vmem:[#allocation6 + $0x120] sm:$0xff] %vm4715, %v4644
        %4729 = vst.msk [vmem:[#allocation6 + $0x138] sm:$0xff] %vm4715, %v4646
        %4730 = vst.msk [vmem:[#allocation6 + $0x150] sm:$0xff] %vm4715, %v4648
        %4731 = vst.msk [vmem:[#allocation6 + $0x168] sm:$0xff] %vm4715, %v4650
        %4732 = vst.msk [vmem:[#allocation6 + $0x180] sm:$0xff] %vm4715, %v4652
        %4733 = vst.msk [vmem:[#allocation6 + $0x198] sm:$0xff] %vm4715, %v4654
        %4734 = vst.msk [vmem:[#allocation6 + $0x1b0] sm:$0xff] %vm4715, %v4656
        %4735 = vst.msk [vmem:[#allocation6 + $0x1c8] sm:$0xff] %vm4715, %v4658
        %4736 = vst.msk [vmem:[#allocation6 + $0x1e0] sm:$0xff] %vm4715, %v4660
        %4737 = vst.msk [vmem:[#allocation6 + $0x1f8] sm:$0xff] %vm4715, %v4662
        %4738 = vst.msk [vmem:[#allocation6 + $0x210] sm:$0xff] %vm4715, %v4664
        %4739 = vst.msk [vmem:[#allocation6 + $0x228] sm:$0xff] %vm4715, %v4666
        %4740 = vst.msk [vmem:[#allocation6 + $0x240] sm:$0xff] %vm4715, %v4668
        %4741 = vst.msk [vmem:[#allocation6 + $0x258] sm:$0xff] %vm4715, %v4670
        %4742 = vst.msk [vmem:[#allocation6 + $0x270] sm:$0xff] %vm4715, %v4672
        %4743 = vst.msk [vmem:[#allocation6 + $0x288] sm:$0xff] %vm4715, %v4674
        %4744 = vst.msk [vmem:[#allocation6 + $0x2a0] sm:$0xff] %vm4715, %v4676
        %4745 = vst.msk [vmem:[#allocation6 + $0x2b8] sm:$0xff] %vm4715, %v4678
        %4746 = vst.msk [vmem:[#allocation6 + $0x2d0] sm:$0xff] %vm4715, %v4680
        %4747 = vst.msk [vmem:[#allocation6 + $0x2e8] sm:$0xff] %vm4715, %v4682
        %v4748 = vld [vmem:[#allocation4 + $0x2] sm:$0xff]
        %v4749 = vld [vmem:[#allocation4 + $0xa] sm:$0xff]
        %v4750 = vld [vmem:[#allocation4 + $0x1a] sm:$0xff]
        %v4751 = vld [vmem:[#allocation4 + $0x22] sm:$0xff]
        %v4752 = vld [vmem:[#allocation4 + $0x32] sm:$0xff]
        %v4753 = vld [vmem:[#allocation4 + $0x3a] sm:$0xff]
        %v4754 = vld [vmem:[#allocation4 + $0x4a] sm:$0xff]
        %v4755 = vld [vmem:[#allocation4 + $0x52] sm:$0xff]
        %v4756 = vld [vmem:[#allocation4 + $0x62] sm:$0xff]
        %v4757 = vld [vmem:[#allocation4 + $0x6a] sm:$0xff]
        %v4758 = vld [vmem:[#allocation4 + $0x7a] sm:$0xff]
        %v4759 = vld [vmem:[#allocation4 + $0x82] sm:$0xff]
        %v4760 = vld [vmem:[#allocation4 + $0x92] sm:$0xff]
        %v4761 = vld [vmem:[#allocation4 + $0x9a] sm:$0xff]
        %v4762 = vld [vmem:[#allocation4 + $0xaa] sm:$0xff]
        %v4763 = vld [vmem:[#allocation4 + $0xb2] sm:$0xff]
        %v4764 = vld [vmem:[#allocation4 + $0xc2] sm:$0xff]
        %v4765 = vld [vmem:[#allocation4 + $0xca] sm:$0xff]
        %v4766 = vld [vmem:[#allocation4 + $0xda] sm:$0xff]
        %v4767 = vld [vmem:[#allocation4 + $0xe2] sm:$0xff]
        %v4768 = vld [vmem:[#allocation4 + $0xf2] sm:$0xff]
        %v4769 = vld [vmem:[#allocation4 + $0xfa] sm:$0xff]
        %v4770 = vld [vmem:[#allocation4 + $0x10a] sm:$0xff]
        %v4771 = vld [vmem:[#allocation4 + $0x112] sm:$0xff]
        %v4772 = vld [vmem:[#allocation4 + $0x122] sm:$0xff]
        %v4773 = vld [vmem:[#allocation4 + $0x12a] sm:$0xff]
        %v4774 = vld [vmem:[#allocation4 + $0x13a] sm:$0xff]
        %v4775 = vld [vmem:[#allocation4 + $0x142] sm:$0xff]
        %v4776 = vld [vmem:[#allocation4 + $0x152] sm:$0xff]
        %v4777 = vld [vmem:[#allocation4 + $0x15a] sm:$0xff]
        %v4778 = vld [vmem:[#allocation4 + $0x16a] sm:$0xff]
        %v4779 = vld [vmem:[#allocation4 + $0x172] sm:$0xff]
        %4812 = vrot.lane.b32.xlu0 %v4748, 64
        %v4813 = vpop.permute.xlu0 %4812
        %4814 = vrot.lane.b32.xlu0 %v4749, 64
        %v4815 = vpop.permute.xlu0 %4814
        %4816 = vrot.lane.b32.xlu0 %v4750, 64
        %v4817 = vpop.permute.xlu0 %4816
        %4818 = vrot.lane.b32.xlu0 %v4751, 64
        %v4819 = vpop.permute.xlu0 %4818
        %4820 = vrot.lane.b32.xlu0 %v4752, 64
        %v4821 = vpop.permute.xlu0 %4820
        %4822 = vrot.lane.b32.xlu0 %v4753, 64
        %v4823 = vpop.permute.xlu0 %4822
        %4824 = vrot.lane.b32.xlu0 %v4754, 64
        %v4825 = vpop.permute.xlu0 %4824
        %4826 = vrot.lane.b32.xlu0 %v4755, 64
        %v4827 = vpop.permute.xlu0 %4826
        %4828 = vrot.lane.b32.xlu0 %v4756, 64
        %v4829 = vpop.permute.xlu0 %4828
        %4830 = vrot.lane.b32.xlu0 %v4757, 64
        %v4831 = vpop.permute.xlu0 %4830
        %4832 = vrot.lane.b32.xlu0 %v4758, 64
        %v4833 = vpop.permute.xlu0 %4832
        %4834 = vrot.lane.b32.xlu0 %v4759, 64
        %v4835 = vpop.permute.xlu0 %4834
        %4836 = vrot.lane.b32.xlu0 %v4760, 64
        %v4837 = vpop.permute.xlu0 %4836
        %4838 = vrot.lane.b32.xlu0 %v4761, 64
        %v4839 = vpop.permute.xlu0 %4838
        %4840 = vrot.lane.b32.xlu0 %v4762, 64
        %v4841 = vpop.permute.xlu0 %4840
        %4842 = vrot.lane.b32.xlu0 %v4763, 64
        %v4843 = vpop.permute.xlu0 %4842
        %4844 = vrot.lane.b32.xlu0 %v4764, 64
        %v4845 = vpop.permute.xlu0 %4844
        %4846 = vrot.lane.b32.xlu0 %v4765, 64
        %v4847 = vpop.permute.xlu0 %4846
        %4848 = vrot.lane.b32.xlu0 %v4766, 64
        %v4849 = vpop.permute.xlu0 %4848
        %4850 = vrot.lane.b32.xlu0 %v4767, 64
        %v4851 = vpop.permute.xlu0 %4850
        %4852 = vrot.lane.b32.xlu0 %v4768, 64
        %v4853 = vpop.permute.xlu0 %4852
        %4854 = vrot.lane.b32.xlu0 %v4769, 64
        %v4855 = vpop.permute.xlu0 %4854
        %4856 = vrot.lane.b32.xlu0 %v4770, 64
        %v4857 = vpop.permute.xlu0 %4856
        %4858 = vrot.lane.b32.xlu0 %v4771, 64
        %v4859 = vpop.permute.xlu0 %4858
        %4860 = vrot.lane.b32.xlu0 %v4772, 64
        %v4861 = vpop.permute.xlu0 %4860
        %4862 = vrot.lane.b32.xlu0 %v4773, 64
        %v4863 = vpop.permute.xlu0 %4862
        %4864 = vrot.lane.b32.xlu0 %v4774, 64
        %v4865 = vpop.permute.xlu0 %4864
        %4866 = vrot.lane.b32.xlu0 %v4775, 64
        %v4867 = vpop.permute.xlu0 %4866
        %4868 = vrot.lane.b32.xlu0 %v4776, 64
        %v4869 = vpop.permute.xlu0 %4868
        %4870 = vrot.lane.b32.xlu0 %v4777, 64
        %v4871 = vpop.permute.xlu0 %4870
        %4872 = vrot.lane.b32.xlu0 %v4778, 64
        %v4873 = vpop.permute.xlu0 %4872
        %4874 = vrot.lane.b32.xlu0 %v4779, 64
        %v4875 = vpop.permute.xlu0 %4874
        %vm4908 = vcmask 785920
        %4909 = vst.msk [vmem:[#allocation6] sm:$0xff] %vm4908, %v4813
        %4910 = vst.msk [vmem:[#allocation6 + $0x18] sm:$0xff] %vm4908, %v4815
        %4911 = vst.msk [vmem:[#allocation6 + $0x30] sm:$0xff] %vm4908, %v4817
        %4912 = vst.msk [vmem:[#allocation6 + $0x48] sm:$0xff] %vm4908, %v4819
        %4913 = vst.msk [vmem:[#allocation6 + $0x60] sm:$0xff] %vm4908, %v4821
        %4914 = vst.msk [vmem:[#allocation6 + $0x78] sm:$0xff] %vm4908, %v4823
        %4915 = vst.msk [vmem:[#allocation6 + $0x90] sm:$0xff] %vm4908, %v4825
        %4916 = vst.msk [vmem:[#allocation6 + $0xa8] sm:$0xff] %vm4908, %v4827
        %4917 = vst.msk [vmem:[#allocation6 + $0xc0] sm:$0xff] %vm4908, %v4829
        %4918 = vst.msk [vmem:[#allocation6 + $0xd8] sm:$0xff] %vm4908, %v4831
        %4919 = vst.msk [vmem:[#allocation6 + $0xf0] sm:$0xff] %vm4908, %v4833
        %4920 = vst.msk [vmem:[#allocation6 + $0x108] sm:$0xff] %vm4908, %v4835
        %4921 = vst.msk [vmem:[#allocation6 + $0x120] sm:$0xff] %vm4908, %v4837
        %4922 = vst.msk [vmem:[#allocation6 + $0x138] sm:$0xff] %vm4908, %v4839
        %4923 = vst.msk [vmem:[#allocation6 + $0x150] sm:$0xff] %vm4908, %v4841
        %4924 = vst.msk [vmem:[#allocation6 + $0x168] sm:$0xff] %vm4908, %v4843
        %4925 = vst.msk [vmem:[#allocation6 + $0x180] sm:$0xff] %vm4908, %v4845
        %4926 = vst.msk [vmem:[#allocation6 + $0x198] sm:$0xff] %vm4908, %v4847
        %4927 = vst.msk [vmem:[#allocation6 + $0x1b0] sm:$0xff] %vm4908, %v4849
        %4928 = vst.msk [vmem:[#allocation6 + $0x1c8] sm:$0xff] %vm4908, %v4851
        %4929 = vst.msk [vmem:[#allocation6 + $0x1e0] sm:$0xff] %vm4908, %v4853
        %4930 = vst.msk [vmem:[#allocation6 + $0x1f8] sm:$0xff] %vm4908, %v4855
        %4931 = vst.msk [vmem:[#allocation6 + $0x210] sm:$0xff] %vm4908, %v4857
        %4932 = vst.msk [vmem:[#allocation6 + $0x228] sm:$0xff] %vm4908, %v4859
        %4933 = vst.msk [vmem:[#allocation6 + $0x240] sm:$0xff] %vm4908, %v4861
        %4934 = vst.msk [vmem:[#allocation6 + $0x258] sm:$0xff] %vm4908, %v4863
        %4935 = vst.msk [vmem:[#allocation6 + $0x270] sm:$0xff] %vm4908, %v4865
        %4936 = vst.msk [vmem:[#allocation6 + $0x288] sm:$0xff] %vm4908, %v4867
        %4937 = vst.msk [vmem:[#allocation6 + $0x2a0] sm:$0xff] %vm4908, %v4869
        %4938 = vst.msk [vmem:[#allocation6 + $0x2b8] sm:$0xff] %vm4908, %v4871
        %4939 = vst.msk [vmem:[#allocation6 + $0x2d0] sm:$0xff] %vm4908, %v4873
        %4940 = vst.msk [vmem:[#allocation6 + $0x2e8] sm:$0xff] %vm4908, %v4875
        %v4941 = vld [vmem:[%s4379] sm:$0xff]
        %v4942 = vld [vmem:[%s4379 + $0x8] sm:$0xff]
        %v4943 = vld [vmem:[%s4379 + $0x18] sm:$0xff]
        %v4944 = vld [vmem:[%s4379 + $0x20] sm:$0xff]
        %v4945 = vld [vmem:[%s4379 + $0x30] sm:$0xff]
        %v4946 = vld [vmem:[%s4379 + $0x38] sm:$0xff]
        %v4947 = vld [vmem:[%s4379 + $0x48] sm:$0xff]
        %v4948 = vld [vmem:[%s4379 + $0x50] sm:$0xff]
        %v4949 = vld [vmem:[%s4379 + $0x60] sm:$0xff]
        %v4950 = vld [vmem:[%s4379 + $0x68] sm:$0xff]
        %v4951 = vld [vmem:[%s4379 + $0x78] sm:$0xff]
        %v4952 = vld [vmem:[%s4379 + $0x80] sm:$0xff]
        %v4953 = vld [vmem:[%s4379 + $0x90] sm:$0xff]
        %v4954 = vld [vmem:[%s4379 + $0x98] sm:$0xff]
        %v4955 = vld [vmem:[%s4379 + $0xa8] sm:$0xff]
        %v4956 = vld [vmem:[%s4379 + $0xb0] sm:$0xff]
        %v4957 = vld [vmem:[%s4379 + $0xc0] sm:$0xff]
        %v4958 = vld [vmem:[%s4379 + $0xc8] sm:$0xff]
        %v4959 = vld [vmem:[%s4379 + $0xd8] sm:$0xff]
        %v4960 = vld [vmem:[%s4379 + $0xe0] sm:$0xff]
        %v4961 = vld [vmem:[%s4379 + $0xf0] sm:$0xff]
        %v4962 = vld [vmem:[%s4379 + $0xf8] sm:$0xff]
        %v4963 = vld [vmem:[%s4379 + $0x108] sm:$0xff]
        %v4964 = vld [vmem:[%s4379 + $0x110] sm:$0xff]
        %v4965 = vld [vmem:[%s4379 + $0x120] sm:$0xff]
        %v4966 = vld [vmem:[%s4379 + $0x128] sm:$0xff]
        %v4967 = vld [vmem:[%s4379 + $0x138] sm:$0xff]
        %v4968 = vld [vmem:[%s4379 + $0x140] sm:$0xff]
        %v4969 = vld [vmem:[%s4379 + $0x150] sm:$0xff]
        %v4970 = vld [vmem:[%s4379 + $0x158] sm:$0xff]
        %v4971 = vld [vmem:[%s4379 + $0x168] sm:$0xff]
        %v4972 = vld [vmem:[%s4379 + $0x170] sm:$0xff]
        %5005 = vrot.lane.b32.xlu0 %v4941, 96
        %v5006 = vpop.permute.xlu0 %5005
        %5007 = vrot.lane.b32.xlu0 %v4942, 96
        %v5008 = vpop.permute.xlu0 %5007
        %5009 = vrot.lane.b32.xlu0 %v4943, 96
        %v5010 = vpop.permute.xlu0 %5009
        %5011 = vrot.lane.b32.xlu0 %v4944, 96
        %v5012 = vpop.permute.xlu0 %5011
        %5013 = vrot.lane.b32.xlu0 %v4945, 96
        %v5014 = vpop.permute.xlu0 %5013
        %5015 = vrot.lane.b32.xlu0 %v4946, 96
        %v5016 = vpop.permute.xlu0 %5015
        %5017 = vrot.lane.b32.xlu0 %v4947, 96
        %v5018 = vpop.permute.xlu0 %5017
        %5019 = vrot.lane.b32.xlu0 %v4948, 96
        %v5020 = vpop.permute.xlu0 %5019
        %5021 = vrot.lane.b32.xlu0 %v4949, 96
        %v5022 = vpop.permute.xlu0 %5021
        %5023 = vrot.lane.b32.xlu0 %v4950, 96
        %v5024 = vpop.permute.xlu0 %5023
        %5025 = vrot.lane.b32.xlu0 %v4951, 96
        %v5026 = vpop.permute.xlu0 %5025
        %5027 = vrot.lane.b32.xlu0 %v4952, 96
        %v5028 = vpop.permute.xlu0 %5027
        %5029 = vrot.lane.b32.xlu0 %v4953, 96
        %v5030 = vpop.permute.xlu0 %5029
        %5031 = vrot.lane.b32.xlu0 %v4954, 96
        %v5032 = vpop.permute.xlu0 %5031
        %5033 = vrot.lane.b32.xlu0 %v4955, 96
        %v5034 = vpop.permute.xlu0 %5033
        %5035 = vrot.lane.b32.xlu0 %v4956, 96
        %v5036 = vpop.permute.xlu0 %5035
        %5037 = vrot.lane.b32.xlu0 %v4957, 96
        %v5038 = vpop.permute.xlu0 %5037
        %5039 = vrot.lane.b32.xlu0 %v4958, 96
        %v5040 = vpop.permute.xlu0 %5039
        %5041 = vrot.lane.b32.xlu0 %v4959, 96
        %v5042 = vpop.permute.xlu0 %5041
        %5043 = vrot.lane.b32.xlu0 %v4960, 96
        %v5044 = vpop.permute.xlu0 %5043
        %5045 = vrot.lane.b32.xlu0 %v4961, 96
        %v5046 = vpop.permute.xlu0 %5045
        %5047 = vrot.lane.b32.xlu0 %v4962, 96
        %v5048 = vpop.permute.xlu0 %5047
        %5049 = vrot.lane.b32.xlu0 %v4963, 96
        %v5050 = vpop.permute.xlu0 %5049
        %5051 = vrot.lane.b32.xlu0 %v4964, 96
        %v5052 = vpop.permute.xlu0 %5051
        %5053 = vrot.lane.b32.xlu0 %v4965, 96
        %v5054 = vpop.permute.xlu0 %5053
        %5055 = vrot.lane.b32.xlu0 %v4966, 96
        %v5056 = vpop.permute.xlu0 %5055
        %5057 = vrot.lane.b32.xlu0 %v4967, 96
        %v5058 = vpop.permute.xlu0 %5057
        %5059 = vrot.lane.b32.xlu0 %v4968, 96
        %v5060 = vpop.permute.xlu0 %5059
        %5061 = vrot.lane.b32.xlu0 %v4969, 96
        %v5062 = vpop.permute.xlu0 %5061
        %5063 = vrot.lane.b32.xlu0 %v4970, 96
        %v5064 = vpop.permute.xlu0 %5063
        %5065 = vrot.lane.b32.xlu0 %v4971, 96
        %v5066 = vpop.permute.xlu0 %5065
        %5067 = vrot.lane.b32.xlu0 %v4972, 96
        %v5068 = vpop.permute.xlu0 %5067
        %vm5101 = vcmask 1048320
        %5102 = vst.msk [vmem:[#allocation6] sm:$0xff] %vm5101, %v5006
        %5103 = vst.msk [vmem:[#allocation6 + $0x18] sm:$0xff] %vm5101, %v5008
        %5104 = vst.msk [vmem:[#allocation6 + $0x30] sm:$0xff] %vm5101, %v5010
        %5105 = vst.msk [vmem:[#allocation6 + $0x48] sm:$0xff] %vm5101, %v5012
        %5106 = vst.msk [vmem:[#allocation6 + $0x60] sm:$0xff] %vm5101, %v5014
        %5107 = vst.msk [vmem:[#allocation6 + $0x78] sm:$0xff] %vm5101, %v5016
        %5108 = vst.msk [vmem:[#allocation6 + $0x90] sm:$0xff] %vm5101, %v5018
        %5109 = vst.msk [vmem:[#allocation6 + $0xa8] sm:$0xff] %vm5101, %v5020
        %5110 = vst.msk [vmem:[#allocation6 + $0xc0] sm:$0xff] %vm5101, %v5022
        %5111 = vst.msk [vmem:[#allocation6 + $0xd8] sm:$0xff] %vm5101, %v5024
        %5112 = vst.msk [vmem:[#allocation6 + $0xf0] sm:$0xff] %vm5101, %v5026
        %5113 = vst.msk [vmem:[#allocation6 + $0x108] sm:$0xff] %vm5101, %v5028
        %5114 = vst.msk [vmem:[#allocation6 + $0x120] sm:$0xff] %vm5101, %v5030
        %5115 = vst.msk [vmem:[#allocation6 + $0x138] sm:$0xff] %vm5101, %v5032
        %5116 = vst.msk [vmem:[#allocation6 + $0x150] sm:$0xff] %vm5101, %v5034
        %5117 = vst.msk [vmem:[#allocation6 + $0x168] sm:$0xff] %vm5101, %v5036
        %5118 = vst.msk [vmem:[#allocation6 + $0x180] sm:$0xff] %vm5101, %v5038
        %5119 = vst.msk [vmem:[#allocation6 + $0x198] sm:$0xff] %vm5101, %v5040
        %5120 = vst.msk [vmem:[#allocation6 + $0x1b0] sm:$0xff] %vm5101, %v5042
        %5121 = vst.msk [vmem:[#allocation6 + $0x1c8] sm:$0xff] %vm5101, %v5044
        %5122 = vst.msk [vmem:[#allocation6 + $0x1e0] sm:$0xff] %vm5101, %v5046
        %5123 = vst.msk [vmem:[#allocation6 + $0x1f8] sm:$0xff] %vm5101, %v5048
        %5124 = vst.msk [vmem:[#allocation6 + $0x210] sm:$0xff] %vm5101, %v5050
        %5125 = vst.msk [vmem:[#allocation6 + $0x228] sm:$0xff] %vm5101, %v5052
        %5126 = vst.msk [vmem:[#allocation6 + $0x240] sm:$0xff] %vm5101, %v5054
        %5127 = vst.msk [vmem:[#allocation6 + $0x258] sm:$0xff] %vm5101, %v5056
        %5128 = vst.msk [vmem:[#allocation6 + $0x270] sm:$0xff] %vm5101, %v5058
        %5129 = vst.msk [vmem:[#allocation6 + $0x288] sm:$0xff] %vm5101, %v5060
        %5130 = vst.msk [vmem:[#allocation6 + $0x2a0] sm:$0xff] %vm5101, %v5062
        %5131 = vst.msk [vmem:[#allocation6 + $0x2b8] sm:$0xff] %vm5101, %v5064
        %5132 = vst.msk [vmem:[#allocation6 + $0x2d0] sm:$0xff] %vm5101, %v5066
        %5133 = vst.msk [vmem:[#allocation6 + $0x2e8] sm:$0xff] %vm5101, %v5068
        %v5134 = vld [vmem:[%s4379 + $0x1] sm:$0xff]
        %v5135 = vld [vmem:[%s4379 + $0x9] sm:$0xff]
        %v5136 = vld [vmem:[%s4379 + $0x19] sm:$0xff]
        %v5137 = vld [vmem:[%s4379 + $0x21] sm:$0xff]
        %v5138 = vld [vmem:[%s4379 + $0x31] sm:$0xff]
        %v5139 = vld [vmem:[%s4379 + $0x39] sm:$0xff]
        %v5140 = vld [vmem:[%s4379 + $0x49] sm:$0xff]
        %v5141 = vld [vmem:[%s4379 + $0x51] sm:$0xff]
        %v5142 = vld [vmem:[%s4379 + $0x61] sm:$0xff]
        %v5143 = vld [vmem:[%s4379 + $0x69] sm:$0xff]
        %v5144 = vld [vmem:[%s4379 + $0x79] sm:$0xff]
        %v5145 = vld [vmem:[%s4379 + $0x81] sm:$0xff]
        %v5146 = vld [vmem:[%s4379 + $0x91] sm:$0xff]
        %v5147 = vld [vmem:[%s4379 + $0x99] sm:$0xff]
        %v5148 = vld [vmem:[%s4379 + $0xa9] sm:$0xff]
        %v5149 = vld [vmem:[%s4379 + $0xb1] sm:$0xff]
        %v5150 = vld [vmem:[%s4379 + $0xc1] sm:$0xff]
        %v5151 = vld [vmem:[%s4379 + $0xc9] sm:$0xff]
        %v5152 = vld [vmem:[%s4379 + $0xd9] sm:$0xff]
        %v5153 = vld [vmem:[%s4379 + $0xe1] sm:$0xff]
        %v5154 = vld [vmem:[%s4379 + $0xf1] sm:$0xff]
        %v5155 = vld [vmem:[%s4379 + $0xf9] sm:$0xff]
        %v5156 = vld [vmem:[%s4379 + $0x109] sm:$0xff]
        %v5157 = vld [vmem:[%s4379 + $0x111] sm:$0xff]
        %v5158 = vld [vmem:[%s4379 + $0x121] sm:$0xff]
        %v5159 = vld [vmem:[%s4379 + $0x129] sm:$0xff]
        %v5160 = vld [vmem:[%s4379 + $0x139] sm:$0xff]
        %v5161 = vld [vmem:[%s4379 + $0x141] sm:$0xff]
        %v5162 = vld [vmem:[%s4379 + $0x151] sm:$0xff]
        %v5163 = vld [vmem:[%s4379 + $0x159] sm:$0xff]
        %v5164 = vld [vmem:[%s4379 + $0x169] sm:$0xff]
        %v5165 = vld [vmem:[%s4379 + $0x171] sm:$0xff]
        %5166 = vst.msk [vmem:[#allocation6 + $0x8] sm:$0xff] %vm4380, %v5134
        %5167 = vst.msk [vmem:[#allocation6 + $0x20] sm:$0xff] %vm4380, %v5135
        %5168 = vst.msk [vmem:[#allocation6 + $0x38] sm:$0xff] %vm4380, %v5136
        %5169 = vst.msk [vmem:[#allocation6 + $0x50] sm:$0xff] %vm4380, %v5137
        %5170 = vst.msk [vmem:[#allocation6 + $0x68] sm:$0xff] %vm4380, %v5138
        %5171 = vst.msk [vmem:[#allocation6 + $0x80] sm:$0xff] %vm4380, %v5139
        %5172 = vst.msk [vmem:[#allocation6 + $0x98] sm:$0xff] %vm4380, %v5140
        %5173 = vst.msk [vmem:[#allocation6 + $0xb0] sm:$0xff] %vm4380, %v5141
        %5174 = vst.msk [vmem:[#allocation6 + $0xc8] sm:$0xff] %vm4380, %v5142
        %5175 = vst.msk [vmem:[#allocation6 + $0xe0] sm:$0xff] %vm4380, %v5143
        %5176 = vst.msk [vmem:[#allocation6 + $0xf8] sm:$0xff] %vm4380, %v5144
        %5177 = vst.msk [vmem:[#allocation6 + $0x110] sm:$0xff] %vm4380, %v5145
        %5178 = vst.msk [vmem:[#allocation6 + $0x128] sm:$0xff] %vm4380, %v5146
        %5179 = vst.msk [vmem:[#allocation6 + $0x140] sm:$0xff] %vm4380, %v5147
        %5180 = vst.msk [vmem:[#allocation6 + $0x158] sm:$0xff] %vm4380, %v5148
        %5181 = vst.msk [vmem:[#allocation6 + $0x170] sm:$0xff] %vm4380, %v5149
        %5182 = vst.msk [vmem:[#allocation6 + $0x188] sm:$0xff] %vm4380, %v5150
        %5183 = vst.msk [vmem:[#allocation6 + $0x1a0] sm:$0xff] %vm4380, %v5151
        %5184 = vst.msk [vmem:[#allocation6 + $0x1b8] sm:$0xff] %vm4380, %v5152
        %5185 = vst.msk [vmem:[#allocation6 + $0x1d0] sm:$0xff] %vm4380, %v5153
        %5186 = vst.msk [vmem:[#allocation6 + $0x1e8] sm:$0xff] %vm4380, %v5154
        %5187 = vst.msk [vmem:[#allocation6 + $0x200] sm:$0xff] %vm4380, %v5155
        %5188 = vst.msk [vmem:[#allocation6 + $0x218] sm:$0xff] %vm4380, %v5156
        %5189 = vst.msk [vmem:[#allocation6 + $0x230] sm:$0xff] %vm4380, %v5157
        %5190 = vst.msk [vmem:[#allocation6 + $0x248] sm:$0xff] %vm4380, %v5158
        %5191 = vst.msk [vmem:[#allocation6 + $0x260] sm:$0xff] %vm4380, %v5159
        %5192 = vst.msk [vmem:[#allocation6 + $0x278] sm:$0xff] %vm4380, %v5160
        %5193 = vst.msk [vmem:[#allocation6 + $0x290] sm:$0xff] %vm4380, %v5161
        %5194 = vst.msk [vmem:[#allocation6 + $0x2a8] sm:$0xff] %vm4380, %v5162
        %5195 = vst.msk [vmem:[#allocation6 + $0x2c0] sm:$0xff] %vm4380, %v5163
        %5196 = vst.msk [vmem:[#allocation6 + $0x2d8] sm:$0xff] %vm4380, %v5164
        %5197 = vst.msk [vmem:[#allocation6 + $0x2f0] sm:$0xff] %vm4380, %v5165
        %v5198 = vld [vmem:[%s4379 + $0x2] sm:$0xff]
        %v5199 = vld [vmem:[%s4379 + $0xa] sm:$0xff]
        %v5200 = vld [vmem:[%s4379 + $0x1a] sm:$0xff]
        %v5201 = vld [vmem:[%s4379 + $0x22] sm:$0xff]
        %v5202 = vld [vmem:[%s4379 + $0x32] sm:$0xff]
        %v5203 = vld [vmem:[%s4379 + $0x3a] sm:$0xff]
        %v5204 = vld [vmem:[%s4379 + $0x4a] sm:$0xff]
        %v5205 = vld [vmem:[%s4379 + $0x52] sm:$0xff]
        %v5206 = vld [vmem:[%s4379 + $0x62] sm:$0xff]
        %v5207 = vld [vmem:[%s4379 + $0x6a] sm:$0xff]
        %v5208 = vld [vmem:[%s4379 + $0x7a] sm:$0xff]
        %v5209 = vld [vmem:[%s4379 + $0x82] sm:$0xff]
        %v5210 = vld [vmem:[%s4379 + $0x92] sm:$0xff]
        %v5211 = vld [vmem:[%s4379 + $0x9a] sm:$0xff]
        %v5212 = vld [vmem:[%s4379 + $0xaa] sm:$0xff]
        %v5213 = vld [vmem:[%s4379 + $0xb2] sm:$0xff]
        %v5214 = vld [vmem:[%s4379 + $0xc2] sm:$0xff]
        %v5215 = vld [vmem:[%s4379 + $0xca] sm:$0xff]
        %v5216 = vld [vmem:[%s4379 + $0xda] sm:$0xff]
        %v5217 = vld [vmem:[%s4379 + $0xe2] sm:$0xff]
        %v5218 = vld [vmem:[%s4379 + $0xf2] sm:$0xff]
        %v5219 = vld [vmem:[%s4379 + $0xfa] sm:$0xff]
        %v5220 = vld [vmem:[%s4379 + $0x10a] sm:$0xff]
        %v5221 = vld [vmem:[%s4379 + $0x112] sm:$0xff]
        %v5222 = vld [vmem:[%s4379 + $0x122] sm:$0xff]
        %v5223 = vld [vmem:[%s4379 + $0x12a] sm:$0xff]
        %v5224 = vld [vmem:[%s4379 + $0x13a] sm:$0xff]
        %v5225 = vld [vmem:[%s4379 + $0x142] sm:$0xff]
        %v5226 = vld [vmem:[%s4379 + $0x152] sm:$0xff]
        %v5227 = vld [vmem:[%s4379 + $0x15a] sm:$0xff]
        %v5228 = vld [vmem:[%s4379 + $0x16a] sm:$0xff]
        %v5229 = vld [vmem:[%s4379 + $0x172] sm:$0xff]
        %5262 = vrot.lane.b32.xlu0 %v5198, 32
        %v5263 = vpop.permute.xlu0 %5262
        %5264 = vrot.lane.b32.xlu0 %v5199, 32
        %v5265 = vpop.permute.xlu0 %5264
        %5266 = vrot.lane.b32.xlu0 %v5200, 32
        %v5267 = vpop.permute.xlu0 %5266
        %5268 = vrot.lane.b32.xlu0 %v5201, 32
        %v5269 = vpop.permute.xlu0 %5268
        %5270 = vrot.lane.b32.xlu0 %v5202, 32
        %v5271 = vpop.permute.xlu0 %5270
        %5272 = vrot.lane.b32.xlu0 %v5203, 32
        %v5273 = vpop.permute.xlu0 %5272
        %5274 = vrot.lane.b32.xlu0 %v5204, 32
        %v5275 = vpop.permute.xlu0 %5274
        %5276 = vrot.lane.b32.xlu0 %v5205, 32
        %v5277 = vpop.permute.xlu0 %5276
        %5278 = vrot.lane.b32.xlu0 %v5206, 32
        %v5279 = vpop.permute.xlu0 %5278
        %5280 = vrot.lane.b32.xlu0 %v5207, 32
        %v5281 = vpop.permute.xlu0 %5280
        %5282 = vrot.lane.b32.xlu0 %v5208, 32
        %v5283 = vpop.permute.xlu0 %5282
        %5284 = vrot.lane.b32.xlu0 %v5209, 32
        %v5285 = vpop.permute.xlu0 %5284
        %5286 = vrot.lane.b32.xlu0 %v5210, 32
        %v5287 = vpop.permute.xlu0 %5286
        %5288 = vrot.lane.b32.xlu0 %v5211, 32
        %v5289 = vpop.permute.xlu0 %5288
        %5290 = vrot.lane.b32.xlu0 %v5212, 32
        %v5291 = vpop.permute.xlu0 %5290
        %5292 = vrot.lane.b32.xlu0 %v5213, 32
        %v5293 = vpop.permute.xlu0 %5292
        %5294 = vrot.lane.b32.xlu0 %v5214, 32
        %v5295 = vpop.permute.xlu0 %5294
        %5296 = vrot.lane.b32.xlu0 %v5215, 32
        %v5297 = vpop.permute.xlu0 %5296
        %5298 = vrot.lane.b32.xlu0 %v5216, 32
        %v5299 = vpop.permute.xlu0 %5298
        %5300 = vrot.lane.b32.xlu0 %v5217, 32
        %v5301 = vpop.permute.xlu0 %5300
        %5302 = vrot.lane.b32.xlu0 %v5218, 32
        %v5303 = vpop.permute.xlu0 %5302
        %5304 = vrot.lane.b32.xlu0 %v5219, 32
        %v5305 = vpop.permute.xlu0 %5304
        %5306 = vrot.lane.b32.xlu0 %v5220, 32
        %v5307 = vpop.permute.xlu0 %5306
        %5308 = vrot.lane.b32.xlu0 %v5221, 32
        %v5309 = vpop.permute.xlu0 %5308
        %5310 = vrot.lane.b32.xlu0 %v5222, 32
        %v5311 = vpop.permute.xlu0 %5310
        %5312 = vrot.lane.b32.xlu0 %v5223, 32
        %v5313 = vpop.permute.xlu0 %5312
        %5314 = vrot.lane.b32.xlu0 %v5224, 32
        %v5315 = vpop.permute.xlu0 %5314
        %5316 = vrot.lane.b32.xlu0 %v5225, 32
        %v5317 = vpop.permute.xlu0 %5316
        %5318 = vrot.lane.b32.xlu0 %v5226, 32
        %v5319 = vpop.permute.xlu0 %5318
        %5320 = vrot.lane.b32.xlu0 %v5227, 32
        %v5321 = vpop.permute.xlu0 %5320
        %5322 = vrot.lane.b32.xlu0 %v5228, 32
        %v5323 = vpop.permute.xlu0 %5322
        %5324 = vrot.lane.b32.xlu0 %v5229, 32
        %v5325 = vpop.permute.xlu0 %5324
        %5358 = vst.msk [vmem:[#allocation6 + $0x8] sm:$0xff] %vm4715, %v5263
        %5359 = vst.msk [vmem:[#allocation6 + $0x20] sm:$0xff] %vm4715, %v5265
        %5360 = vst.msk [vmem:[#allocation6 + $0x38] sm:$0xff] %vm4715, %v5267
        %5361 = vst.msk [vmem:[#allocation6 + $0x50] sm:$0xff] %vm4715, %v5269
        %5362 = vst.msk [vmem:[#allocation6 + $0x68] sm:$0xff] %vm4715, %v5271
        %5363 = vst.msk [vmem:[#allocation6 + $0x80] sm:$0xff] %vm4715, %v5273
        %5364 = vst.msk [vmem:[#allocation6 + $0x98] sm:$0xff] %vm4715, %v5275
        %5365 = vst.msk [vmem:[#allocation6 + $0xb0] sm:$0xff] %vm4715, %v5277
        %5366 = vst.msk [vmem:[#allocation6 + $0xc8] sm:$0xff] %vm4715, %v5279
        %5367 = vst.msk [vmem:[#allocation6 + $0xe0] sm:$0xff] %vm4715, %v5281
        %5368 = vst.msk [vmem:[#allocation6 + $0xf8] sm:$0xff] %vm4715, %v5283
        %5369 = vst.msk [vmem:[#allocation6 + $0x110] sm:$0xff] %vm4715, %v5285
        %5370 = vst.msk [vmem:[#allocation6 + $0x128] sm:$0xff] %vm4715, %v5287
        %5371 = vst.msk [vmem:[#allocation6 + $0x140] sm:$0xff] %vm4715, %v5289
        %5372 = vst.msk [vmem:[#allocation6 + $0x158] sm:$0xff] %vm4715, %v5291
        %5373 = vst.msk [vmem:[#allocation6 + $0x170] sm:$0xff] %vm4715, %v5293
        %5374 = vst.msk [vmem:[#allocation6 + $0x188] sm:$0xff] %vm4715, %v5295
        %5375 = vst.msk [vmem:[#allocation6 + $0x1a0] sm:$0xff] %vm4715, %v5297
        %5376 = vst.msk [vmem:[#allocation6 + $0x1b8] sm:$0xff] %vm4715, %v5299
        %5377 = vst.msk [vmem:[#allocation6 + $0x1d0] sm:$0xff] %vm4715, %v5301
        %5378 = vst.msk [vmem:[#allocation6 + $0x1e8] sm:$0xff] %vm4715, %v5303
        %5379 = vst.msk [vmem:[#allocation6 + $0x200] sm:$0xff] %vm4715, %v5305
        %5380 = vst.msk [vmem:[#allocation6 + $0x218] sm:$0xff] %vm4715, %v5307
        %5381 = vst.msk [vmem:[#allocation6 + $0x230] sm:$0xff] %vm4715, %v5309
        %5382 = vst.msk [vmem:[#allocation6 + $0x248] sm:$0xff] %vm4715, %v5311
        %5383 = vst.msk [vmem:[#allocation6 + $0x260] sm:$0xff] %vm4715, %v5313
        %5384 = vst.msk [vmem:[#allocation6 + $0x278] sm:$0xff] %vm4715, %v5315
        %5385 = vst.msk [vmem:[#allocation6 + $0x290] sm:$0xff] %vm4715, %v5317
        %5386 = vst.msk [vmem:[#allocation6 + $0x2a8] sm:$0xff] %vm4715, %v5319
        %5387 = vst.msk [vmem:[#allocation6 + $0x2c0] sm:$0xff] %vm4715, %v5321
        %5388 = vst.msk [vmem:[#allocation6 + $0x2d8] sm:$0xff] %vm4715, %v5323
        %5389 = vst.msk [vmem:[#allocation6 + $0x2f0] sm:$0xff] %vm4715, %v5325
        %s5390 = scalar_lea.vmem [#allocation4], 48
        %v5391 = vld [vmem:[%s5390] sm:$0xff]
        %v5392 = vld [vmem:[%s5390 + $0x8] sm:$0xff]
        %v5393 = vld [vmem:[%s5390 + $0x18] sm:$0xff]
        %v5394 = vld [vmem:[%s5390 + $0x20] sm:$0xff]
        %v5395 = vld [vmem:[%s5390 + $0x30] sm:$0xff]
        %v5396 = vld [vmem:[%s5390 + $0x38] sm:$0xff]
        %v5397 = vld [vmem:[%s5390 + $0x48] sm:$0xff]
        %v5398 = vld [vmem:[%s5390 + $0x50] sm:$0xff]
        %v5399 = vld [vmem:[%s5390 + $0x60] sm:$0xff]
        %v5400 = vld [vmem:[%s5390 + $0x68] sm:$0xff]
        %v5401 = vld [vmem:[%s5390 + $0x78] sm:$0xff]
        %v5402 = vld [vmem:[%s5390 + $0x80] sm:$0xff]
        %v5403 = vld [vmem:[%s5390 + $0x90] sm:$0xff]
        %v5404 = vld [vmem:[%s5390 + $0x98] sm:$0xff]
        %v5405 = vld [vmem:[%s5390 + $0xa8] sm:$0xff]
        %v5406 = vld [vmem:[%s5390 + $0xb0] sm:$0xff]
        %v5407 = vld [vmem:[%s5390 + $0xc0] sm:$0xff]
        %v5408 = vld [vmem:[%s5390 + $0xc8] sm:$0xff]
        %v5409 = vld [vmem:[%s5390 + $0xd8] sm:$0xff]
        %v5410 = vld [vmem:[%s5390 + $0xe0] sm:$0xff]
        %v5411 = vld [vmem:[%s5390 + $0xf0] sm:$0xff]
        %v5412 = vld [vmem:[%s5390 + $0xf8] sm:$0xff]
        %v5413 = vld [vmem:[%s5390 + $0x108] sm:$0xff]
        %v5414 = vld [vmem:[%s5390 + $0x110] sm:$0xff]
        %v5415 = vld [vmem:[%s5390 + $0x120] sm:$0xff]
        %v5416 = vld [vmem:[%s5390 + $0x128] sm:$0xff]
        %v5417 = vld [vmem:[%s5390 + $0x138] sm:$0xff]
        %v5418 = vld [vmem:[%s5390 + $0x140] sm:$0xff]
        %v5419 = vld [vmem:[%s5390 + $0x150] sm:$0xff]
        %v5420 = vld [vmem:[%s5390 + $0x158] sm:$0xff]
        %v5421 = vld [vmem:[%s5390 + $0x168] sm:$0xff]
        %v5422 = vld [vmem:[%s5390 + $0x170] sm:$0xff]
        %5455 = vrot.lane.b32.xlu0 %v5391, 64
        %v5456 = vpop.permute.xlu0 %5455
        %5457 = vrot.lane.b32.xlu0 %v5392, 64
        %v5458 = vpop.permute.xlu0 %5457
        %5459 = vrot.lane.b32.xlu0 %v5393, 64
        %v5460 = vpop.permute.xlu0 %5459
        %5461 = vrot.lane.b32.xlu0 %v5394, 64
        %v5462 = vpop.permute.xlu0 %5461
        %5463 = vrot.lane.b32.xlu0 %v5395, 64
        %v5464 = vpop.permute.xlu0 %5463
        %5465 = vrot.lane.b32.xlu0 %v5396, 64
        %v5466 = vpop.permute.xlu0 %5465
        %5467 = vrot.lane.b32.xlu0 %v5397, 64
        %v5468 = vpop.permute.xlu0 %5467
        %5469 = vrot.lane.b32.xlu0 %v5398, 64
        %v5470 = vpop.permute.xlu0 %5469
        %5471 = vrot.lane.b32.xlu0 %v5399, 64
        %v5472 = vpop.permute.xlu0 %5471
        %5473 = vrot.lane.b32.xlu0 %v5400, 64
        %v5474 = vpop.permute.xlu0 %5473
        %5475 = vrot.lane.b32.xlu0 %v5401, 64
        %v5476 = vpop.permute.xlu0 %5475
        %5477 = vrot.lane.b32.xlu0 %v5402, 64
        %v5478 = vpop.permute.xlu0 %5477
        %5479 = vrot.lane.b32.xlu0 %v5403, 64
        %v5480 = vpop.permute.xlu0 %5479
        %5481 = vrot.lane.b32.xlu0 %v5404, 64
        %v5482 = vpop.permute.xlu0 %5481
        %5483 = vrot.lane.b32.xlu0 %v5405, 64
        %v5484 = vpop.permute.xlu0 %5483
        %5485 = vrot.lane.b32.xlu0 %v5406, 64
        %v5486 = vpop.permute.xlu0 %5485
        %5487 = vrot.lane.b32.xlu0 %v5407, 64
        %v5488 = vpop.permute.xlu0 %5487
        %5489 = vrot.lane.b32.xlu0 %v5408, 64
        %v5490 = vpop.permute.xlu0 %5489
        %5491 = vrot.lane.b32.xlu0 %v5409, 64
        %v5492 = vpop.permute.xlu0 %5491
        %5493 = vrot.lane.b32.xlu0 %v5410, 64
        %v5494 = vpop.permute.xlu0 %5493
        %5495 = vrot.lane.b32.xlu0 %v5411, 64
        %v5496 = vpop.permute.xlu0 %5495
        %5497 = vrot.lane.b32.xlu0 %v5412, 64
        %v5498 = vpop.permute.xlu0 %5497
        %5499 = vrot.lane.b32.xlu0 %v5413, 64
        %v5500 = vpop.permute.xlu0 %5499
        %5501 = vrot.lane.b32.xlu0 %v5414, 64
        %v5502 = vpop.permute.xlu0 %5501
        %5503 = vrot.lane.b32.xlu0 %v5415, 64
        %v5504 = vpop.permute.xlu0 %5503
        %5505 = vrot.lane.b32.xlu0 %v5416, 64
        %v5506 = vpop.permute.xlu0 %5505
        %5507 = vrot.lane.b32.xlu0 %v5417, 64
        %v5508 = vpop.permute.xlu0 %5507
        %5509 = vrot.lane.b32.xlu0 %v5418, 64
        %v5510 = vpop.permute.xlu0 %5509
        %5511 = vrot.lane.b32.xlu0 %v5419, 64
        %v5512 = vpop.permute.xlu0 %5511
        %5513 = vrot.lane.b32.xlu0 %v5420, 64
        %v5514 = vpop.permute.xlu0 %5513
        %5515 = vrot.lane.b32.xlu0 %v5421, 64
        %v5516 = vpop.permute.xlu0 %5515
        %5517 = vrot.lane.b32.xlu0 %v5422, 64
        %v5518 = vpop.permute.xlu0 %5517
        %5551 = vst.msk [vmem:[#allocation6 + $0x8] sm:$0xff] %vm4908, %v5456
        %5552 = vst.msk [vmem:[#allocation6 + $0x20] sm:$0xff] %vm4908, %v5458
        %5553 = vst.msk [vmem:[#allocation6 + $0x38] sm:$0xff] %vm4908, %v5460
        %5554 = vst.msk [vmem:[#allocation6 + $0x50] sm:$0xff] %vm4908, %v5462
        %5555 = vst.msk [vmem:[#allocation6 + $0x68] sm:$0xff] %vm4908, %v5464
        %5556 = vst.msk [vmem:[#allocation6 + $0x80] sm:$0xff] %vm4908, %v5466
        %5557 = vst.msk [vmem:[#allocation6 + $0x98] sm:$0xff] %vm4908, %v5468
        %5558 = vst.msk [vmem:[#allocation6 + $0xb0] sm:$0xff] %vm4908, %v5470
        %5559 = vst.msk [vmem:[#allocation6 + $0xc8] sm:$0xff] %vm4908, %v5472
        %5560 = vst.msk [vmem:[#allocation6 + $0xe0] sm:$0xff] %vm4908, %v5474
        %5561 = vst.msk [vmem:[#allocation6 + $0xf8] sm:$0xff] %vm4908, %v5476
        %5562 = vst.msk [vmem:[#allocation6 + $0x110] sm:$0xff] %vm4908, %v5478
        %5563 = vst.msk [vmem:[#allocation6 + $0x128] sm:$0xff] %vm4908, %v5480
        %5564 = vst.msk [vmem:[#allocation6 + $0x140] sm:$0xff] %vm4908, %v5482
        %5565 = vst.msk [vmem:[#allocation6 + $0x158] sm:$0xff] %vm4908, %v5484
        %5566 = vst.msk [vmem:[#allocation6 + $0x170] sm:$0xff] %vm4908, %v5486
        %5567 = vst.msk [vmem:[#allocation6 + $0x188] sm:$0xff] %vm4908, %v5488
        %5568 = vst.msk [vmem:[#allocation6 + $0x1a0] sm:$0xff] %vm4908, %v5490
        %5569 = vst.msk [vmem:[#allocation6 + $0x1b8] sm:$0xff] %vm4908, %v5492
        %5570 = vst.msk [vmem:[#allocation6 + $0x1d0] sm:$0xff] %vm4908, %v5494
        %5571 = vst.msk [vmem:[#allocation6 + $0x1e8] sm:$0xff] %vm4908, %v5496
        %5572 = vst.msk [vmem:[#allocation6 + $0x200] sm:$0xff] %vm4908, %v5498
        %5573 = vst.msk [vmem:[#allocation6 + $0x218] sm:$0xff] %vm4908, %v5500
        %5574 = vst.msk [vmem:[#allocation6 + $0x230] sm:$0xff] %vm4908, %v5502
        %5575 = vst.msk [vmem:[#allocation6 + $0x248] sm:$0xff] %vm4908, %v5504
        %5576 = vst.msk [vmem:[#allocation6 + $0x260] sm:$0xff] %vm4908, %v5506
        %5577 = vst.msk [vmem:[#allocation6 + $0x278] sm:$0xff] %vm4908, %v5508
        %5578 = vst.msk [vmem:[#allocation6 + $0x290] sm:$0xff] %vm4908, %v5510
        %5579 = vst.msk [vmem:[#allocation6 + $0x2a8] sm:$0xff] %vm4908, %v5512
        %5580 = vst.msk [vmem:[#allocation6 + $0x2c0] sm:$0xff] %vm4908, %v5514
        %5581 = vst.msk [vmem:[#allocation6 + $0x2d8] sm:$0xff] %vm4908, %v5516
        %5582 = vst.msk [vmem:[#allocation6 + $0x2f0] sm:$0xff] %vm4908, %v5518
        %v5583 = vld [vmem:[%s5390 + $0x1] sm:$0xff]
        %v5584 = vld [vmem:[%s5390 + $0x9] sm:$0xff]
        %v5585 = vld [vmem:[%s5390 + $0x19] sm:$0xff]
        %v5586 = vld [vmem:[%s5390 + $0x21] sm:$0xff]
        %v5587 = vld [vmem:[%s5390 + $0x31] sm:$0xff]
        %v5588 = vld [vmem:[%s5390 + $0x39] sm:$0xff]
        %v5589 = vld [vmem:[%s5390 + $0x49] sm:$0xff]
        %v5590 = vld [vmem:[%s5390 + $0x51] sm:$0xff]
        %v5591 = vld [vmem:[%s5390 + $0x61] sm:$0xff]
        %v5592 = vld [vmem:[%s5390 + $0x69] sm:$0xff]
        %v5593 = vld [vmem:[%s5390 + $0x79] sm:$0xff]
        %v5594 = vld [vmem:[%s5390 + $0x81] sm:$0xff]
        %v5595 = vld [vmem:[%s5390 + $0x91] sm:$0xff]
        %v5596 = vld [vmem:[%s5390 + $0x99] sm:$0xff]
        %v5597 = vld [vmem:[%s5390 + $0xa9] sm:$0xff]
        %v5598 = vld [vmem:[%s5390 + $0xb1] sm:$0xff]
        %v5599 = vld [vmem:[%s5390 + $0xc1] sm:$0xff]
        %v5600 = vld [vmem:[%s5390 + $0xc9] sm:$0xff]
        %v5601 = vld [vmem:[%s5390 + $0xd9] sm:$0xff]
        %v5602 = vld [vmem:[%s5390 + $0xe1] sm:$0xff]
        %v5603 = vld [vmem:[%s5390 + $0xf1] sm:$0xff]
        %v5604 = vld [vmem:[%s5390 + $0xf9] sm:$0xff]
        %v5605 = vld [vmem:[%s5390 + $0x109] sm:$0xff]
        %v5606 = vld [vmem:[%s5390 + $0x111] sm:$0xff]
        %v5607 = vld [vmem:[%s5390 + $0x121] sm:$0xff]
        %v5608 = vld [vmem:[%s5390 + $0x129] sm:$0xff]
        %v5609 = vld [vmem:[%s5390 + $0x139] sm:$0xff]
        %v5610 = vld [vmem:[%s5390 + $0x141] sm:$0xff]
        %v5611 = vld [vmem:[%s5390 + $0x151] sm:$0xff]
        %v5612 = vld [vmem:[%s5390 + $0x159] sm:$0xff]
        %v5613 = vld [vmem:[%s5390 + $0x169] sm:$0xff]
        %v5614 = vld [vmem:[%s5390 + $0x171] sm:$0xff]
        %5647 = vrot.lane.b32.xlu0 %v5583, 96
        %v5648 = vpop.permute.xlu0 %5647
        %5649 = vrot.lane.b32.xlu0 %v5584, 96
        %v5650 = vpop.permute.xlu0 %5649
        %5651 = vrot.lane.b32.xlu0 %v5585, 96
        %v5652 = vpop.permute.xlu0 %5651
        %5653 = vrot.lane.b32.xlu0 %v5586, 96
        %v5654 = vpop.permute.xlu0 %5653
        %5655 = vrot.lane.b32.xlu0 %v5587, 96
        %v5656 = vpop.permute.xlu0 %5655
        %5657 = vrot.lane.b32.xlu0 %v5588, 96
        %v5658 = vpop.permute.xlu0 %5657
        %5659 = vrot.lane.b32.xlu0 %v5589, 96
        %v5660 = vpop.permute.xlu0 %5659
        %5661 = vrot.lane.b32.xlu0 %v5590, 96
        %v5662 = vpop.permute.xlu0 %5661
        %5663 = vrot.lane.b32.xlu0 %v5591, 96
        %v5664 = vpop.permute.xlu0 %5663
        %5665 = vrot.lane.b32.xlu0 %v5592, 96
        %v5666 = vpop.permute.xlu0 %5665
        %5667 = vrot.lane.b32.xlu0 %v5593, 96
        %v5668 = vpop.permute.xlu0 %5667
        %5669 = vrot.lane.b32.xlu0 %v5594, 96
        %v5670 = vpop.permute.xlu0 %5669
        %5671 = vrot.lane.b32.xlu0 %v5595, 96
        %v5672 = vpop.permute.xlu0 %5671
        %5673 = vrot.lane.b32.xlu0 %v5596, 96
        %v5674 = vpop.permute.xlu0 %5673
        %5675 = vrot.lane.b32.xlu0 %v5597, 96
        %v5676 = vpop.permute.xlu0 %5675
        %5677 = vrot.lane.b32.xlu0 %v5598, 96
        %v5678 = vpop.permute.xlu0 %5677
        %5679 = vrot.lane.b32.xlu0 %v5599, 96
        %v5680 = vpop.permute.xlu0 %5679
        %5681 = vrot.lane.b32.xlu0 %v5600, 96
        %v5682 = vpop.permute.xlu0 %5681
        %5683 = vrot.lane.b32.xlu0 %v5601, 96
        %v5684 = vpop.permute.xlu0 %5683
        %5685 = vrot.lane.b32.xlu0 %v5602, 96
        %v5686 = vpop.permute.xlu0 %5685
        %5687 = vrot.lane.b32.xlu0 %v5603, 96
        %v5688 = vpop.permute.xlu0 %5687
        %5689 = vrot.lane.b32.xlu0 %v5604, 96
        %v5690 = vpop.permute.xlu0 %5689
        %5691 = vrot.lane.b32.xlu0 %v5605, 96
        %v5692 = vpop.permute.xlu0 %5691
        %5693 = vrot.lane.b32.xlu0 %v5606, 96
        %v5694 = vpop.permute.xlu0 %5693
        %5695 = vrot.lane.b32.xlu0 %v5607, 96
        %v5696 = vpop.permute.xlu0 %5695
        %5697 = vrot.lane.b32.xlu0 %v5608, 96
        %v5698 = vpop.permute.xlu0 %5697
        %5699 = vrot.lane.b32.xlu0 %v5609, 96
        %v5700 = vpop.permute.xlu0 %5699
        %5701 = vrot.lane.b32.xlu0 %v5610, 96
        %v5702 = vpop.permute.xlu0 %5701
        %5703 = vrot.lane.b32.xlu0 %v5611, 96
        %v5704 = vpop.permute.xlu0 %5703
        %5705 = vrot.lane.b32.xlu0 %v5612, 96
        %v5706 = vpop.permute.xlu0 %5705
        %5707 = vrot.lane.b32.xlu0 %v5613, 96
        %v5708 = vpop.permute.xlu0 %5707
        %5709 = vrot.lane.b32.xlu0 %v5614, 96
        %v5710 = vpop.permute.xlu0 %5709
        %5743 = vst.msk [vmem:[#allocation6 + $0x8] sm:$0xff] %vm5101, %v5648
        %5744 = vst.msk [vmem:[#allocation6 + $0x20] sm:$0xff] %vm5101, %v5650
        %5745 = vst.msk [vmem:[#allocation6 + $0x38] sm:$0xff] %vm5101, %v5652
        %5746 = vst.msk [vmem:[#allocation6 + $0x50] sm:$0xff] %vm5101, %v5654
        %5747 = vst.msk [vmem:[#allocation6 + $0x68] sm:$0xff] %vm5101, %v5656
        %5748 = vst.msk [vmem:[#allocation6 + $0x80] sm:$0xff] %vm5101, %v5658
        %5749 = vst.msk [vmem:[#allocation6 + $0x98] sm:$0xff] %vm5101, %v5660
        %5750 = vst.msk [vmem:[#allocation6 + $0xb0] sm:$0xff] %vm5101, %v5662
        %5751 = vst.msk [vmem:[#allocation6 + $0xc8] sm:$0xff] %vm5101, %v5664
        %5752 = vst.msk [vmem:[#allocation6 + $0xe0] sm:$0xff] %vm5101, %v5666
        %5753 = vst.msk [vmem:[#allocation6 + $0xf8] sm:$0xff] %vm5101, %v5668
        %5754 = vst.msk [vmem:[#allocation6 + $0x110] sm:$0xff] %vm5101, %v5670
        %5755 = vst.msk [vmem:[#allocation6 + $0x128] sm:$0xff] %vm5101, %v5672
        %5756 = vst.msk [vmem:[#allocation6 + $0x140] sm:$0xff] %vm5101, %v5674
        %5757 = vst.msk [vmem:[#allocation6 + $0x158] sm:$0xff] %vm5101, %v5676
        %5758 = vst.msk [vmem:[#allocation6 + $0x170] sm:$0xff] %vm5101, %v5678
        %5759 = vst.msk [vmem:[#allocation6 + $0x188] sm:$0xff] %vm5101, %v5680
        %5760 = vst.msk [vmem:[#allocation6 + $0x1a0] sm:$0xff] %vm5101, %v5682
        %5761 = vst.msk [vmem:[#allocation6 + $0x1b8] sm:$0xff] %vm5101, %v5684
        %5762 = vst.msk [vmem:[#allocation6 + $0x1d0] sm:$0xff] %vm5101, %v5686
        %5763 = vst.msk [vmem:[#allocation6 + $0x1e8] sm:$0xff] %vm5101, %v5688
        %5764 = vst.msk [vmem:[#allocation6 + $0x200] sm:$0xff] %vm5101, %v5690
        %5765 = vst.msk [vmem:[#allocation6 + $0x218] sm:$0xff] %vm5101, %v5692
        %5766 = vst.msk [vmem:[#allocation6 + $0x230] sm:$0xff] %vm5101, %v5694
        %5767 = vst.msk [vmem:[#allocation6 + $0x248] sm:$0xff] %vm5101, %v5696
        %5768 = vst.msk [vmem:[#allocation6 + $0x260] sm:$0xff] %vm5101, %v5698
        %5769 = vst.msk [vmem:[#allocation6 + $0x278] sm:$0xff] %vm5101, %v5700
        %5770 = vst.msk [vmem:[#allocation6 + $0x290] sm:$0xff] %vm5101, %v5702
        %5771 = vst.msk [vmem:[#allocation6 + $0x2a8] sm:$0xff] %vm5101, %v5704
        %5772 = vst.msk [vmem:[#allocation6 + $0x2c0] sm:$0xff] %vm5101, %v5706
        %5773 = vst.msk [vmem:[#allocation6 + $0x2d8] sm:$0xff] %vm5101, %v5708
        %5774 = vst.msk [vmem:[#allocation6 + $0x2f0] sm:$0xff] %vm5101, %v5710
        %v5775 = vld [vmem:[%s5390 + $0x2] sm:$0xff]
        %v5776 = vld [vmem:[%s5390 + $0xa] sm:$0xff]
        %v5777 = vld [vmem:[%s5390 + $0x1a] sm:$0xff]
        %v5778 = vld [vmem:[%s5390 + $0x22] sm:$0xff]
        %v5779 = vld [vmem:[%s5390 + $0x32] sm:$0xff]
        %v5780 = vld [vmem:[%s5390 + $0x3a] sm:$0xff]
        %v5781 = vld [vmem:[%s5390 + $0x4a] sm:$0xff]
        %v5782 = vld [vmem:[%s5390 + $0x52] sm:$0xff]
        %v5783 = vld [vmem:[%s5390 + $0x62] sm:$0xff]
        %v5784 = vld [vmem:[%s5390 + $0x6a] sm:$0xff]
        %v5785 = vld [vmem:[%s5390 + $0x7a] sm:$0xff]
        %v5786 = vld [vmem:[%s5390 + $0x82] sm:$0xff]
        %v5787 = vld [vmem:[%s5390 + $0x92] sm:$0xff]
        %v5788 = vld [vmem:[%s5390 + $0x9a] sm:$0xff]
        %v5789 = vld [vmem:[%s5390 + $0xaa] sm:$0xff]
        %v5790 = vld [vmem:[%s5390 + $0xb2] sm:$0xff]
        %v5791 = vld [vmem:[%s5390 + $0xc2] sm:$0xff]
        %v5792 = vld [vmem:[%s5390 + $0xca] sm:$0xff]
        %v5793 = vld [vmem:[%s5390 + $0xda] sm:$0xff]
        %v5794 = vld [vmem:[%s5390 + $0xe2] sm:$0xff]
        %v5795 = vld [vmem:[%s5390 + $0xf2] sm:$0xff]
        %v5796 = vld [vmem:[%s5390 + $0xfa] sm:$0xff]
        %v5797 = vld [vmem:[%s5390 + $0x10a] sm:$0xff]
        %v5798 = vld [vmem:[%s5390 + $0x112] sm:$0xff]
        %v5799 = vld [vmem:[%s5390 + $0x122] sm:$0xff]
        %v5800 = vld [vmem:[%s5390 + $0x12a] sm:$0xff]
        %v5801 = vld [vmem:[%s5390 + $0x13a] sm:$0xff]
        %v5802 = vld [vmem:[%s5390 + $0x142] sm:$0xff]
        %v5803 = vld [vmem:[%s5390 + $0x152] sm:$0xff]
        %v5804 = vld [vmem:[%s5390 + $0x15a] sm:$0xff]
        %v5805 = vld [vmem:[%s5390 + $0x16a] sm:$0xff]
        %v5806 = vld [vmem:[%s5390 + $0x172] sm:$0xff]
        %5807 = vst.msk [vmem:[#allocation6 + $0x10] sm:$0xff] %vm4380, %v5775
        %5808 = vst.msk [vmem:[#allocation6 + $0x28] sm:$0xff] %vm4380, %v5776
        %5809 = vst.msk [vmem:[#allocation6 + $0x40] sm:$0xff] %vm4380, %v5777
        %5810 = vst.msk [vmem:[#allocation6 + $0x58] sm:$0xff] %vm4380, %v5778
        %5811 = vst.msk [vmem:[#allocation6 + $0x70] sm:$0xff] %vm4380, %v5779
        %5812 = vst.msk [vmem:[#allocation6 + $0x88] sm:$0xff] %vm4380, %v5780
        %5813 = vst.msk [vmem:[#allocation6 + $0xa0] sm:$0xff] %vm4380, %v5781
        %5814 = vst.msk [vmem:[#allocation6 + $0xb8] sm:$0xff] %vm4380, %v5782
        %5815 = vst.msk [vmem:[#allocation6 + $0xd0] sm:$0xff] %vm4380, %v5783
        %5816 = vst.msk [vmem:[#allocation6 + $0xe8] sm:$0xff] %vm4380, %v5784
        %5817 = vst.msk [vmem:[#allocation6 + $0x100] sm:$0xff] %vm4380, %v5785
        %5818 = vst.msk [vmem:[#allocation6 + $0x118] sm:$0xff] %vm4380, %v5786
        %5819 = vst.msk [vmem:[#allocation6 + $0x130] sm:$0xff] %vm4380, %v5787
        %5820 = vst.msk [vmem:[#allocation6 + $0x148] sm:$0xff] %vm4380, %v5788
        %5821 = vst.msk [vmem:[#allocation6 + $0x160] sm:$0xff] %vm4380, %v5789
        %5822 = vst.msk [vmem:[#allocation6 + $0x178] sm:$0xff] %vm4380, %v5790
        %5823 = vst.msk [vmem:[#allocation6 + $0x190] sm:$0xff] %vm4380, %v5791
        %5824 = vst.msk [vmem:[#allocation6 + $0x1a8] sm:$0xff] %vm4380, %v5792
        %5825 = vst.msk [vmem:[#allocation6 + $0x1c0] sm:$0xff] %vm4380, %v5793
        %5826 = vst.msk [vmem:[#allocation6 + $0x1d8] sm:$0xff] %vm4380, %v5794
        %5827 = vst.msk [vmem:[#allocation6 + $0x1f0] sm:$0xff] %vm4380, %v5795
        %5828 = vst.msk [vmem:[#allocation6 + $0x208] sm:$0xff] %vm4380, %v5796
        %5829 = vst.msk [vmem:[#allocation6 + $0x220] sm:$0xff] %vm4380, %v5797
        %5830 = vst.msk [vmem:[#allocation6 + $0x238] sm:$0xff] %vm4380, %v5798
        %5831 = vst.msk [vmem:[#allocation6 + $0x250] sm:$0xff] %vm4380, %v5799
        %5832 = vst.msk [vmem:[#allocation6 + $0x268] sm:$0xff] %vm4380, %v5800
        %5833 = vst.msk [vmem:[#allocation6 + $0x280] sm:$0xff] %vm4380, %v5801
        %5834 = vst.msk [vmem:[#allocation6 + $0x298] sm:$0xff] %vm4380, %v5802
        %5835 = vst.msk [vmem:[#allocation6 + $0x2b0] sm:$0xff] %vm4380, %v5803
        %5836 = vst.msk [vmem:[#allocation6 + $0x2c8] sm:$0xff] %vm4380, %v5804
        %5837 = vst.msk [vmem:[#allocation6 + $0x2e0] sm:$0xff] %vm4380, %v5805
        %5838 = vst.msk [vmem:[#allocation6 + $0x2f8] sm:$0xff] %vm4380, %v5806
        %v5839 = vld [vmem:[#allocation6] sm:$0xff]
        %v5840 = vld [vmem:[#allocation6 + $0x8] sm:$0xff]
        %v5841 = vld [vmem:[#allocation6 + $0x10] sm:$0xff]
        %v5842 = vld [vmem:[#allocation6 + $0x18] sm:$0xff]
        %v5843 = vld [vmem:[#allocation6 + $0x20] sm:$0xff]
        %v5844 = vld [vmem:[#allocation6 + $0x28] sm:$0xff]
        %v5845 = vld [vmem:[#allocation6 + $0x30] sm:$0xff]
        %v5846 = vld [vmem:[#allocation6 + $0x38] sm:$0xff]
        %v5847 = vld [vmem:[#allocation6 + $0x40] sm:$0xff]
        %v5848 = vld [vmem:[#allocation6 + $0x48] sm:$0xff]
        %v5849 = vld [vmem:[#allocation6 + $0x50] sm:$0xff]
        %v5850 = vld [vmem:[#allocation6 + $0x58] sm:$0xff]
        %v5851 = vld [vmem:[#allocation6 + $0x60] sm:$0xff]
        %v5852 = vld [vmem:[#allocation6 + $0x68] sm:$0xff]
        %v5853 = vld [vmem:[#allocation6 + $0x70] sm:$0xff]
        %v5854 = vld [vmem:[#allocation6 + $0x78] sm:$0xff]
        %v5855 = vld [vmem:[#allocation6 + $0x80] sm:$0xff]
        %v5856 = vld [vmem:[#allocation6 + $0x88] sm:$0xff]
        %v5857 = vld [vmem:[#allocation6 + $0x90] sm:$0xff]
        %v5858 = vld [vmem:[#allocation6 + $0x98] sm:$0xff]
        %v5859 = vld [vmem:[#allocation6 + $0xa0] sm:$0xff]
        %v5860 = vld [vmem:[#allocation6 + $0xa8] sm:$0xff]
        %v5861 = vld [vmem:[#allocation6 + $0xb0] sm:$0xff]
        %v5862 = vld [vmem:[#allocation6 + $0xb8] sm:$0xff]
        %v5863 = vld [vmem:[#allocation6 + $0xc0] sm:$0xff]
        %v5864 = vld [vmem:[#allocation6 + $0xc8] sm:$0xff]
        %v5865 = vld [vmem:[#allocation6 + $0xd0] sm:$0xff]
        %v5866 = vld [vmem:[#allocation6 + $0xd8] sm:$0xff]
        %v5867 = vld [vmem:[#allocation6 + $0xe0] sm:$0xff]
        %v5868 = vld [vmem:[#allocation6 + $0xe8] sm:$0xff]
        %v5869 = vld [vmem:[#allocation6 + $0xf0] sm:$0xff]
        %v5870 = vld [vmem:[#allocation6 + $0xf8] sm:$0xff]
        %v5871 = vld [vmem:[#allocation6 + $0x100] sm:$0xff]
        %v5872 = vld [vmem:[#allocation6 + $0x108] sm:$0xff]
        %v5873 = vld [vmem:[#allocation6 + $0x110] sm:$0xff]
        %v5874 = vld [vmem:[#allocation6 + $0x118] sm:$0xff]
        %v5875 = vld [vmem:[#allocation6 + $0x120] sm:$0xff]
        %v5876 = vld [vmem:[#allocation6 + $0x128] sm:$0xff]
        %v5877 = vld [vmem:[#allocation6 + $0x130] sm:$0xff]
        %v5878 = vld [vmem:[#allocation6 + $0x138] sm:$0xff]
        %v5879 = vld [vmem:[#allocation6 + $0x140] sm:$0xff]
        %v5880 = vld [vmem:[#allocation6 + $0x148] sm:$0xff]
        %v5881 = vld [vmem:[#allocation6 + $0x150] sm:$0xff]
        %v5882 = vld [vmem:[#allocation6 + $0x158] sm:$0xff]
        %v5883 = vld [vmem:[#allocation6 + $0x160] sm:$0xff]
        %v5884 = vld [vmem:[#allocation6 + $0x168] sm:$0xff]
        %v5885 = vld [vmem:[#allocation6 + $0x170] sm:$0xff]
        %v5886 = vld [vmem:[#allocation6 + $0x178] sm:$0xff]
        %v5887 = vld [vmem:[#allocation6 + $0x180] sm:$0xff]
        %v5888 = vld [vmem:[#allocation6 + $0x188] sm:$0xff]
        %v5889 = vld [vmem:[#allocation6 + $0x190] sm:$0xff]
        %v5890 = vld [vmem:[#allocation6 + $0x198] sm:$0xff]
        %v5891 = vld [vmem:[#allocation6 + $0x1a0] sm:$0xff]
        %v5892 = vld [vmem:[#allocation6 + $0x1a8] sm:$0xff]
        %v5893 = vld [vmem:[#allocation6 + $0x1b0] sm:$0xff]
        %v5894 = vld [vmem:[#allocation6 + $0x1b8] sm:$0xff]
        %v5895 = vld [vmem:[#allocation6 + $0x1c0] sm:$0xff]
        %v5896 = vld [vmem:[#allocation6 + $0x1c8] sm:$0xff]
        %v5897 = vld [vmem:[#allocation6 + $0x1d0] sm:$0xff]
        %v5898 = vld [vmem:[#allocation6 + $0x1d8] sm:$0xff]
        %v5899 = vld [vmem:[#allocation6 + $0x1e0] sm:$0xff]
        %v5900 = vld [vmem:[#allocation6 + $0x1e8] sm:$0xff]
        %v5901 = vld [vmem:[#allocation6 + $0x1f0] sm:$0xff]
        %v5902 = vld [vmem:[#allocation6 + $0x1f8] sm:$0xff]
        %v5903 = vld [vmem:[#allocation6 + $0x200] sm:$0xff]
        %v5904 = vld [vmem:[#allocation6 + $0x208] sm:$0xff]
        %v5905 = vld [vmem:[#allocation6 + $0x210] sm:$0xff]
        %v5906 = vld [vmem:[#allocation6 + $0x218] sm:$0xff]
        %v5907 = vld [vmem:[#allocation6 + $0x220] sm:$0xff]
        %v5908 = vld [vmem:[#allocation6 + $0x228] sm:$0xff]
        %v5909 = vld [vmem:[#allocation6 + $0x230] sm:$0xff]
        %v5910 = vld [vmem:[#allocation6 + $0x238] sm:$0xff]
        %v5911 = vld [vmem:[#allocation6 + $0x240] sm:$0xff]
        %v5912 = vld [vmem:[#allocation6 + $0x248] sm:$0xff]
        %v5913 = vld [vmem:[#allocation6 + $0x250] sm:$0xff]
        %v5914 = vld [vmem:[#allocation6 + $0x258] sm:$0xff]
        %v5915 = vld [vmem:[#allocation6 + $0x260] sm:$0xff]
        %v5916 = vld [vmem:[#allocation6 + $0x268] sm:$0xff]
        %v5917 = vld [vmem:[#allocation6 + $0x270] sm:$0xff]
        %v5918 = vld [vmem:[#allocation6 + $0x278] sm:$0xff]
        %v5919 = vld [vmem:[#allocation6 + $0x280] sm:$0xff]
        %v5920 = vld [vmem:[#allocation6 + $0x288] sm:$0xff]
        %v5921 = vld [vmem:[#allocation6 + $0x290] sm:$0xff]
        %v5922 = vld [vmem:[#allocation6 + $0x298] sm:$0xff]
        %v5923 = vld [vmem:[#allocation6 + $0x2a0] sm:$0xff]
        %v5924 = vld [vmem:[#allocation6 + $0x2a8] sm:$0xff]
        %v5925 = vld [vmem:[#allocation6 + $0x2b0] sm:$0xff]
        %v5926 = vld [vmem:[#allocation6 + $0x2b8] sm:$0xff]
        %v5927 = vld [vmem:[#allocation6 + $0x2c0] sm:$0xff]
        %v5928 = vld [vmem:[#allocation6 + $0x2c8] sm:$0xff]
        %v5929 = vld [vmem:[#allocation6 + $0x2d0] sm:$0xff]
        %v5930 = vld [vmem:[#allocation6 + $0x2d8] sm:$0xff]
        %v5931 = vld [vmem:[#allocation6 + $0x2e0] sm:$0xff]
        %v5932 = vld [vmem:[#allocation6 + $0x2e8] sm:$0xff]
        %v5933 = vld [vmem:[#allocation6 + $0x2f0] sm:$0xff]
        %v5934 = vld [vmem:[#allocation6 + $0x2f8] sm:$0xff]
        %v5935 = vld [vmem:[%s5] sm:$0xff]
        %v5936 = vld [vmem:[%s5 + $0x8] sm:$0xff]
        %v5937 = vld [vmem:[%s5 + $0x10] sm:$0xff]
        %v5938 = vld [vmem:[%s5 + $0x18] sm:$0xff]
        %v5939 = vld [vmem:[%s5 + $0x20] sm:$0xff]
        %v5940 = vld [vmem:[%s5 + $0x28] sm:$0xff]
        %v5941 = vld [vmem:[%s5 + $0x30] sm:$0xff]
        %v5942 = vld [vmem:[%s5 + $0x38] sm:$0xff]
        %v5943 = vld [vmem:[%s5 + $0x40] sm:$0xff]
        %v5944 = vld [vmem:[%s5 + $0x48] sm:$0xff]
        %v5945 = vld [vmem:[%s5 + $0x50] sm:$0xff]
        %v5946 = vld [vmem:[%s5 + $0x58] sm:$0xff]
        %v5947 = vld [vmem:[%s5 + $0x60] sm:$0xff]
        %v5948 = vld [vmem:[%s5 + $0x68] sm:$0xff]
        %v5949 = vld [vmem:[%s5 + $0x70] sm:$0xff]
        %v5950 = vld [vmem:[%s5 + $0x78] sm:$0xff]
        %v5951 = vld [vmem:[%s5 + $0x80] sm:$0xff]
        %v5952 = vld [vmem:[%s5 + $0x88] sm:$0xff]
        %v5953 = vld [vmem:[%s5 + $0x90] sm:$0xff]
        %v5954 = vld [vmem:[%s5 + $0x98] sm:$0xff]
        %v5955 = vld [vmem:[%s5 + $0xa0] sm:$0xff]
        %v5956 = vld [vmem:[%s5 + $0xa8] sm:$0xff]
        %v5957 = vld [vmem:[%s5 + $0xb0] sm:$0xff]
        %v5958 = vld [vmem:[%s5 + $0xb8] sm:$0xff]
        %v5959 = vld [vmem:[%s5 + $0xc0] sm:$0xff]
        %v5960 = vld [vmem:[%s5 + $0xc8] sm:$0xff]
        %v5961 = vld [vmem:[%s5 + $0xd0] sm:$0xff]
        %v5962 = vld [vmem:[%s5 + $0xd8] sm:$0xff]
        %v5963 = vld [vmem:[%s5 + $0xe0] sm:$0xff]
        %v5964 = vld [vmem:[%s5 + $0xe8] sm:$0xff]
        %v5965 = vld [vmem:[%s5 + $0xf0] sm:$0xff]
        %v5966 = vld [vmem:[%s5 + $0xf8] sm:$0xff]
        %v5967 = vld [vmem:[%s5 + $0x100] sm:$0xff]
        %v5968 = vld [vmem:[%s5 + $0x108] sm:$0xff]
        %v5969 = vld [vmem:[%s5 + $0x110] sm:$0xff]
        %v5970 = vld [vmem:[%s5 + $0x118] sm:$0xff]
        %v5971 = vld [vmem:[%s6] sm:$0x1]
        %v5973 = vlaneseq
        %v5974 = vshrl.u32 %v5973, 7
        %v5975 = vsub.s32 0, %v5974
        %v5976 = vrot.slane %v5971, %v5975
        %v5979 = vsel %vm4380, %v5841, 0
        %v5982 = vsel %vm4380, %v5844, 0
        %v5985 = vsel %vm4380, %v5847, 0
        %v5988 = vsel %vm4380, %v5850, 0
        %v5991 = vsel %vm4380, %v5853, 0
        %v5994 = vsel %vm4380, %v5856, 0
        %v5997 = vsel %vm4380, %v5859, 0
        %v6000 = vsel %vm4380, %v5862, 0
        %v6003 = vsel %vm4380, %v5865, 0
        %v6006 = vsel %vm4380, %v5868, 0
        %v6009 = vsel %vm4380, %v5871, 0
        %v6012 = vsel %vm4380, %v5874, 0
        %v6015 = vsel %vm4380, %v5877, 0
        %v6018 = vsel %vm4380, %v5880, 0
        %v6021 = vsel %vm4380, %v5883, 0
        %v6024 = vsel %vm4380, %v5886, 0
        %v6027 = vsel %vm4380, %v5889, 0
        %v6030 = vsel %vm4380, %v5892, 0
        %v6033 = vsel %vm4380, %v5895, 0
        %v6036 = vsel %vm4380, %v5898, 0
        %v6039 = vsel %vm4380, %v5901, 0
        %v6042 = vsel %vm4380, %v5904, 0
        %v6045 = vsel %vm4380, %v5907, 0
        %v6048 = vsel %vm4380, %v5910, 0
        %v6051 = vsel %vm4380, %v5913, 0
        %v6054 = vsel %vm4380, %v5916, 0
        %v6057 = vsel %vm4380, %v5919, 0
        %v6060 = vsel %vm4380, %v5922, 0
        %v6063 = vsel %vm4380, %v5925, 0
        %v6066 = vsel %vm4380, %v5928, 0
        %v6069 = vsel %vm4380, %v5931, 0
        %v6072 = vsel %vm4380, %v5934, 0
        %6074 = vmatprep.subr.mxu0 0.0
        %6075 = vmatpush1.msra.mxu0 %v5950
        %6076 = vmatprep.subr.mxu0 0.0
        %6077 = vmatpush1.msra.mxu0 %v5949
        %6078 = vmatprep.subr.mxu0 0.0
        %6079 = vmatpush1.msra.mxu0 %v5948
        %6080 = vmatprep.subr.mxu0 0.0
        %6081 = vmatpush1.msra.mxu0 %v5947
        %6082 = vmatprep.subr.mxu0 0.0
        %6083 = vmatpush1.msra.mxu0 %v5946
        %6084 = vmatprep.subr.mxu0 0.0
        %6085 = vmatpush1.msra.mxu0 %v5945
        %6086 = vmatprep.subr.mxu0 0.0
        %6087 = vmatpush1.msra.mxu0 %v5944
        %6088 = vmatprep.subr.mxu0 0.0
        %6089 = vmatpush1.msra.mxu0 %v5943
        %6090 = vmatprep.subr.mxu0 0.0
        %6091 = vmatpush1.msra.mxu0 %v5942
        %6092 = vmatprep.subr.mxu0 0.0
        %6093 = vmatpush1.msra.mxu0 %v5941
        %6094 = vmatprep.subr.mxu0 0.0
        %6095 = vmatpush1.msra.mxu0 %v5940
        %6096 = vmatprep.subr.mxu0 0.0
        %6097 = vmatpush1.msra.mxu0 %v5939
        %6098 = vmatprep.subr.mxu0 0.0
        %6099 = vmatpush1.msra.mxu0 %v5938
        %6100 = vmatprep.subr.mxu0 0.0
        %6101 = vmatpush1.msra.mxu0 %v5937
        %6102 = vmatprep.subr.mxu0 0.0
        %6103 = vmatpush1.msra.mxu0 %v5936
        %6104 = vmatprep.subr.mxu0 0.0
        %6105 = vmatpush1.msra.mxu0 %v5935
        %6106 = vmatprep.subr.mxu0 0.0
        %6107 = vmatpush2.msra.mxu0 %v5966
        %6108 = vmatprep.subr.mxu0 0.0
        %6109 = vmatpush2.msra.mxu0 %v5965
        %6110 = vmatprep.subr.mxu0 0.0
        %6111 = vmatpush2.msra.mxu0 %v5964
        %6112 = vmatprep.subr.mxu0 0.0
        %6113 = vmatpush2.msra.mxu0 %v5963
        %6114 = vmatprep.subr.mxu0 0.0
        %6115 = vmatpush2.msra.mxu0 %v5962
        %6116 = vmatprep.subr.mxu0 0.0
        %6117 = vmatpush2.msra.mxu0 %v5961
        %6118 = vmatprep.subr.mxu0 0.0
        %6119 = vmatpush2.msra.mxu0 %v5960
        %6120 = vmatprep.subr.mxu0 0.0
        %6121 = vmatpush2.msra.mxu0 %v5959
        %6122 = vmatprep.subr.mxu0 0.0
        %6123 = vmatpush2.msra.mxu0 %v5958
        %6124 = vmatprep.subr.mxu0 0.0
        %6125 = vmatpush2.msra.mxu0 %v5957
        %6126 = vmatprep.subr.mxu0 0.0
        %6127 = vmatpush2.msra.mxu0 %v5956
        %6128 = vmatprep.subr.mxu0 0.0
        %6129 = vmatpush2.msra.mxu0 %v5955
        %6130 = vmatprep.subr.mxu0 0.0
        %6131 = vmatpush2.msra.mxu0 %v5954
        %6132 = vmatprep.subr.mxu0 0.0
        %6133 = vmatpush2.msra.mxu0 %v5953
        %6134 = vmatprep.subr.mxu0 0.0
        %6135 = vmatpush2.msra.mxu0 %v5952
        %6136 = vmatprep.subr.mxu0 0.0
        %6137 = vmatpush2.msra.mxu0 %v5951
        %6138 = vmatprep.mubr.f32.mxu0 %v5840
        %6139 = vmatmul.mubr.f32.gmra.mxu0 %v5839
        %v6140 = vpop.f32.mrf.mxu0
        %v6141 = vadd.f32 %v5976, %v6140
        %v6142 = vpop.f32.mrf.mxu0
        %6143 = vmatprep.mubr.f32.mxu0 %v5843
        %6144 = vmatmul.mubr.f32.gmra.mxu0 %v5842
        %v6145 = vpop.f32.mrf.mxu0
        %v6146 = vadd.f32 %v5976, %v6145
        %v6147 = vpop.f32.mrf.mxu0
        %6148 = vmatprep.mubr.f32.mxu0 %v5846
        %6149 = vmatmul.mubr.f32.gmra.mxu0 %v5845
        %v6150 = vpop.f32.mrf.mxu0
        %v6151 = vadd.f32 %v5976, %v6150
        %v6152 = vpop.f32.mrf.mxu0
        %6153 = vmatprep.mubr.f32.mxu0 %v5849
        %6154 = vmatmul.mubr.f32.gmra.mxu0 %v5848
        %v6155 = vpop.f32.mrf.mxu0
        %v6156 = vadd.f32 %v5976, %v6155
        %v6157 = vpop.f32.mrf.mxu0
        %6158 = vmatprep.mubr.f32.mxu0 %v5852
        %6159 = vmatmul.mubr.f32.gmra.mxu0 %v5851
        %v6160 = vpop.f32.mrf.mxu0
        %v6161 = vadd.f32 %v5976, %v6160
        %v6162 = vpop.f32.mrf.mxu0
        %6163 = vmatprep.mubr.f32.mxu0 %v5855
        %6164 = vmatmul.mubr.f32.gmra.mxu0 %v5854
        %v6165 = vpop.f32.mrf.mxu0
        %v6166 = vadd.f32 %v5976, %v6165
        %v6167 = vpop.f32.mrf.mxu0
        %6168 = vmatprep.mubr.f32.mxu0 %v5858
        %6169 = vmatmul.mubr.f32.gmra.mxu0 %v5857
        %v6170 = vpop.f32.mrf.mxu0
        %v6171 = vadd.f32 %v5976, %v6170
        %v6172 = vpop.f32.mrf.mxu0
        %6173 = vmatprep.mubr.f32.mxu0 %v5861
        %6174 = vmatmul.mubr.f32.gmra.mxu0 %v5860
        %v6175 = vpop.f32.mrf.mxu0
        %v6176 = vadd.f32 %v5976, %v6175
        %v6177 = vpop.f32.mrf.mxu0
        %6178 = vmatprep.mubr.f32.mxu0 %v5864
        %6179 = vmatmul.mubr.f32.gmra.mxu0 %v5863
        %v6180 = vpop.f32.mrf.mxu0
        %v6181 = vadd.f32 %v5976, %v6180
        %v6182 = vpop.f32.mrf.mxu0
        %6183 = vmatprep.mubr.f32.mxu0 %v5867
        %6184 = vmatmul.mubr.f32.gmra.mxu0 %v5866
        %v6185 = vpop.f32.mrf.mxu0
        %v6186 = vadd.f32 %v5976, %v6185
        %v6187 = vpop.f32.mrf.mxu0
        %6188 = vmatprep.mubr.f32.mxu0 %v5870
        %6189 = vmatmul.mubr.f32.gmra.mxu0 %v5869
        %v6190 = vpop.f32.mrf.mxu0
        %v6191 = vadd.f32 %v5976, %v6190
        %v6192 = vpop.f32.mrf.mxu0
        %6193 = vmatprep.mubr.f32.mxu0 %v5873
        %6194 = vmatmul.mubr.f32.gmra.mxu0 %v5872
        %v6195 = vpop.f32.mrf.mxu0
        %v6196 = vadd.f32 %v5976, %v6195
        %v6197 = vpop.f32.mrf.mxu0
        %6198 = vmatprep.mubr.f32.mxu0 %v5876
        %6199 = vmatmul.mubr.f32.gmra.mxu0 %v5875
        %v6200 = vpop.f32.mrf.mxu0
        %v6201 = vadd.f32 %v5976, %v6200
        %v6202 = vpop.f32.mrf.mxu0
        %6203 = vmatprep.mubr.f32.mxu0 %v5879
        %6204 = vmatmul.mubr.f32.gmra.mxu0 %v5878
        %v6205 = vpop.f32.mrf.mxu0
        %v6206 = vadd.f32 %v5976, %v6205
        %v6207 = vpop.f32.mrf.mxu0
        %6208 = vmatprep.mubr.f32.mxu0 %v5882
        %6209 = vmatmul.mubr.f32.gmra.mxu0 %v5881
        %v6210 = vpop.f32.mrf.mxu0
        %v6211 = vadd.f32 %v5976, %v6210
        %v6212 = vpop.f32.mrf.mxu0
        %6213 = vmatprep.mubr.f32.mxu0 %v5885
        %6214 = vmatmul.mubr.f32.gmra.mxu0 %v5884
        %v6215 = vpop.f32.mrf.mxu0
        %v6216 = vadd.f32 %v5976, %v6215
        %v6217 = vpop.f32.mrf.mxu0
        %6218 = vmatprep.mubr.f32.mxu0 %v5888
        %6219 = vmatmul.mubr.f32.gmra.mxu0 %v5887
        %v6220 = vpop.f32.mrf.mxu0
        %v6221 = vadd.f32 %v5976, %v6220
        %v6222 = vpop.f32.mrf.mxu0
        %6223 = vmatprep.mubr.f32.mxu0 %v5891
        %6224 = vmatmul.mubr.f32.gmra.mxu0 %v5890
        %v6225 = vpop.f32.mrf.mxu0
        %v6226 = vadd.f32 %v5976, %v6225
        %v6227 = vpop.f32.mrf.mxu0
        %6228 = vmatprep.mubr.f32.mxu0 %v5894
        %6229 = vmatmul.mubr.f32.gmra.mxu0 %v5893
        %v6230 = vpop.f32.mrf.mxu0
        %v6231 = vadd.f32 %v5976, %v6230
        %v6232 = vpop.f32.mrf.mxu0
        %6233 = vmatprep.mubr.f32.mxu0 %v5897
        %6234 = vmatmul.mubr.f32.gmra.mxu0 %v5896
        %v6235 = vpop.f32.mrf.mxu0
        %v6236 = vadd.f32 %v5976, %v6235
        %v6237 = vpop.f32.mrf.mxu0
        %6238 = vmatprep.mubr.f32.mxu0 %v5900
        %6239 = vmatmul.mubr.f32.gmra.mxu0 %v5899
        %v6240 = vpop.f32.mrf.mxu0
        %v6241 = vadd.f32 %v5976, %v6240
        %v6242 = vpop.f32.mrf.mxu0
        %6243 = vmatprep.mubr.f32.mxu0 %v5903
        %6244 = vmatmul.mubr.f32.gmra.mxu0 %v5902
        %v6245 = vpop.f32.mrf.mxu0
        %v6246 = vadd.f32 %v5976, %v6245
        %v6247 = vpop.f32.mrf.mxu0
        %6248 = vmatprep.mubr.f32.mxu0 %v5906
        %6249 = vmatmul.mubr.f32.gmra.mxu0 %v5905
        %v6250 = vpop.f32.mrf.mxu0
        %v6251 = vadd.f32 %v5976, %v6250
        %v6252 = vpop.f32.mrf.mxu0
        %6253 = vmatprep.mubr.f32.mxu0 %v5909
        %6254 = vmatmul.mubr.f32.gmra.mxu0 %v5908
        %v6255 = vpop.f32.mrf.mxu0
        %v6256 = vadd.f32 %v5976, %v6255
        %v6257 = vpop.f32.mrf.mxu0
        %6258 = vmatprep.mubr.f32.mxu0 %v5912
        %6259 = vmatmul.mubr.f32.gmra.mxu0 %v5911
        %v6260 = vpop.f32.mrf.mxu0
        %v6261 = vadd.f32 %v5976, %v6260
        %v6262 = vpop.f32.mrf.mxu0
        %6263 = vmatprep.mubr.f32.mxu0 %v5915
        %6264 = vmatmul.mubr.f32.gmra.mxu0 %v5914
        %v6265 = vpop.f32.mrf.mxu0
        %v6266 = vadd.f32 %v5976, %v6265
        %v6267 = vpop.f32.mrf.mxu0
        %6268 = vmatprep.mubr.f32.mxu0 %v5918
        %6269 = vmatmul.mubr.f32.gmra.mxu0 %v5917
        %v6270 = vpop.f32.mrf.mxu0
        %v6271 = vadd.f32 %v5976, %v6270
        %v6272 = vpop.f32.mrf.mxu0
        %6273 = vmatprep.mubr.f32.mxu0 %v5921
        %6274 = vmatmul.mubr.f32.gmra.mxu0 %v5920
        %v6275 = vpop.f32.mrf.mxu0
        %v6276 = vadd.f32 %v5976, %v6275
        %v6277 = vpop.f32.mrf.mxu0
        %6278 = vmatprep.mubr.f32.mxu0 %v5924
        %6279 = vmatmul.mubr.f32.gmra.mxu0 %v5923
        %v6280 = vpop.f32.mrf.mxu0
        %v6281 = vadd.f32 %v5976, %v6280
        %v6282 = vpop.f32.mrf.mxu0
        %6283 = vmatprep.mubr.f32.mxu0 %v5927
        %6284 = vmatmul.mubr.f32.gmra.mxu0 %v5926
        %v6285 = vpop.f32.mrf.mxu0
        %v6286 = vadd.f32 %v5976, %v6285
        %v6287 = vpop.f32.mrf.mxu0
        %6288 = vmatprep.mubr.f32.mxu0 %v5930
        %6289 = vmatmul.mubr.f32.gmra.mxu0 %v5929
        %v6290 = vpop.f32.mrf.mxu0
        %v6291 = vadd.f32 %v5976, %v6290
        %v6292 = vpop.f32.mrf.mxu0
        %6293 = vmatprep.mubr.f32.mxu0 %v5933
        %6294 = vmatmul.mubr.f32.gmra.mxu0 %v5932
        %v6295 = vpop.f32.mrf.mxu0
        %v6296 = vadd.f32 %v5976, %v6295
        %v6297 = vpop.f32.mrf.mxu0
        %6298 = vdwg.mxu0
        %6299 = vmatprep.subr.mxu0 0.0
        %6300 = vmatpush1.msra.mxu0 0.0
        %6301 = vmatprep.subr.mxu0 0.0
        %6302 = vmatpush1.msra.mxu0 0.0
        %6303 = vmatprep.subr.mxu0 0.0
        %6304 = vmatpush1.msra.mxu0 0.0
        %6305 = vmatprep.subr.mxu0 0.0
        %6306 = vmatpush1.msra.mxu0 0.0
        %6307 = vmatprep.subr.mxu0 0.0
        %6308 = vmatpush1.msra.mxu0 0.0
        %6309 = vmatprep.subr.mxu0 0.0
        %6310 = vmatpush1.msra.mxu0 0.0
        %6311 = vmatprep.subr.mxu0 0.0
        %6312 = vmatpush1.msra.mxu0 0.0
        %6313 = vmatprep.subr.mxu0 0.0
        %6314 = vmatpush1.msra.mxu0 0.0
        %6315 = vmatprep.subr.mxu0 0.0
        %6316 = vmatpush1.msra.mxu0 0.0
        %6317 = vmatprep.subr.mxu0 0.0
        %6318 = vmatpush1.msra.mxu0 0.0
        %6319 = vmatprep.subr.mxu0 0.0
        %6320 = vmatpush1.msra.mxu0 0.0
        %6321 = vmatprep.subr.mxu0 0.0
        %6322 = vmatpush1.msra.mxu0 0.0
        %6323 = vmatprep.subr.mxu0 0.0
        %6324 = vmatpush1.msra.mxu0 %v5970
        %6325 = vmatprep.subr.mxu0 0.0
        %6326 = vmatpush1.msra.mxu0 %v5969
        %6327 = vmatprep.subr.mxu0 0.0
        %6328 = vmatpush1.msra.mxu0 %v5968
        %6329 = vmatprep.subr.mxu0 0.0
        %6330 = vmatpush1.msra.mxu0 %v5967
        %6331 = vmatprep.subr.mxu0 0.0
        %6332 = vmatpush2.msra.mxu0 0.0
        %6333 = vmatprep.subr.mxu0 0.0
        %6334 = vmatpush2.msra.mxu0 0.0
        %6335 = vmatprep.subr.mxu0 0.0
        %6336 = vmatpush2.msra.mxu0 0.0
        %6337 = vmatprep.subr.mxu0 0.0
        %6338 = vmatpush2.msra.mxu0 0.0
        %6339 = vmatprep.subr.mxu0 0.0
        %6340 = vmatpush2.msra.mxu0 0.0
        %6341 = vmatprep.subr.mxu0 0.0
        %6342 = vmatpush2.msra.mxu0 0.0
        %6343 = vmatprep.subr.mxu0 0.0
        %6344 = vmatpush2.msra.mxu0 0.0
        %6345 = vmatprep.subr.mxu0 0.0
        %6346 = vmatpush2.msra.mxu0 0.0
        %6347 = vmatprep.subr.mxu0 0.0
        %6348 = vmatpush2.msra.mxu0 0.0
        %6349 = vmatprep.subr.mxu0 0.0
        %6350 = vmatpush2.msra.mxu0 0.0
        %6351 = vmatprep.subr.mxu0 0.0
        %6352 = vmatpush2.msra.mxu0 0.0
        %6353 = vmatprep.subr.mxu0 0.0
        %6354 = vmatpush2.msra.mxu0 0.0
        %6355 = vmatprep.subr.mxu0 0.0
        %6356 = vmatpush2.msra.mxu0 0.0
        %6357 = vmatprep.subr.mxu0 0.0
        %6358 = vmatpush2.msra.mxu0 0.0
        %6359 = vmatprep.subr.mxu0 0.0
        %6360 = vmatpush2.msra.mxu0 0.0
        %6361 = vmatprep.subr.mxu0 0.0
        %6362 = vmatpush2.msra.mxu0 0.0
        %6363 = vmatprep.mubr.f32.mxu0 0.0
        %6364 = vmatmul.mubr.f32.gmra.mxu0 %v5979
        %v6365 = vpop.f32.mrf.mxu0
        %v6366 = vadd.f32 %v6141, %v6365
        %v6367 = vpop.f32.mrf.mxu0
        %6368 = vmatprep.mubr.f32.mxu0 0.0
        %6369 = vmatmul.mubr.f32.gmra.mxu0 %v5982
        %v6370 = vpop.f32.mrf.mxu0
        %v6371 = vadd.f32 %v6146, %v6370
        %v6372 = vpop.f32.mrf.mxu0
        %6373 = vmatprep.mubr.f32.mxu0 0.0
        %6374 = vmatmul.mubr.f32.gmra.mxu0 %v5985
        %v6375 = vpop.f32.mrf.mxu0
        %v6376 = vadd.f32 %v6151, %v6375
        %v6377 = vpop.f32.mrf.mxu0
        %6378 = vmatprep.mubr.f32.mxu0 0.0
        %6379 = vmatmul.mubr.f32.gmra.mxu0 %v5988
        %v6380 = vpop.f32.mrf.mxu0
        %v6381 = vadd.f32 %v6156, %v6380
        %v6382 = vpop.f32.mrf.mxu0
        %6383 = vmatprep.mubr.f32.mxu0 0.0
        %6384 = vmatmul.mubr.f32.gmra.mxu0 %v5991
        %v6385 = vpop.f32.mrf.mxu0
        %v6386 = vadd.f32 %v6161, %v6385
        %v6387 = vpop.f32.mrf.mxu0
        %6388 = vmatprep.mubr.f32.mxu0 0.0
        %6389 = vmatmul.mubr.f32.gmra.mxu0 %v5994
        %v6390 = vpop.f32.mrf.mxu0
        %v6391 = vadd.f32 %v6166, %v6390
        %v6392 = vpop.f32.mrf.mxu0
        %6393 = vmatprep.mubr.f32.mxu0 0.0
        %6394 = vmatmul.mubr.f32.gmra.mxu0 %v5997
        %v6395 = vpop.f32.mrf.mxu0
        %v6396 = vadd.f32 %v6171, %v6395
        %v6397 = vpop.f32.mrf.mxu0
        %6398 = vmatprep.mubr.f32.mxu0 0.0
        %6399 = vmatmul.mubr.f32.gmra.mxu0 %v6000
        %v6400 = vpop.f32.mrf.mxu0
        %v6401 = vadd.f32 %v6176, %v6400
        %v6402 = vpop.f32.mrf.mxu0
        %6403 = vmatprep.mubr.f32.mxu0 0.0
        %6404 = vmatmul.mubr.f32.gmra.mxu0 %v6003
        %v6405 = vpop.f32.mrf.mxu0
        %v6406 = vadd.f32 %v6181, %v6405
        %v6407 = vpop.f32.mrf.mxu0
        %6408 = vmatprep.mubr.f32.mxu0 0.0
        %6409 = vmatmul.mubr.f32.gmra.mxu0 %v6006
        %v6410 = vpop.f32.mrf.mxu0
        %v6411 = vadd.f32 %v6186, %v6410
        %v6412 = vpop.f32.mrf.mxu0
        %6413 = vmatprep.mubr.f32.mxu0 0.0
        %6414 = vmatmul.mubr.f32.gmra.mxu0 %v6009
        %v6415 = vpop.f32.mrf.mxu0
        %v6416 = vadd.f32 %v6191, %v6415
        %v6417 = vpop.f32.mrf.mxu0
        %6418 = vmatprep.mubr.f32.mxu0 0.0
        %6419 = vmatmul.mubr.f32.gmra.mxu0 %v6012
        %v6420 = vpop.f32.mrf.mxu0
        %v6421 = vadd.f32 %v6196, %v6420
        %v6422 = vpop.f32.mrf.mxu0
        %6423 = vmatprep.mubr.f32.mxu0 0.0
        %6424 = vmatmul.mubr.f32.gmra.mxu0 %v6015
        %v6425 = vpop.f32.mrf.mxu0
        %v6426 = vadd.f32 %v6201, %v6425
        %v6427 = vpop.f32.mrf.mxu0
        %6428 = vmatprep.mubr.f32.mxu0 0.0
        %6429 = vmatmul.mubr.f32.gmra.mxu0 %v6018
        %v6430 = vpop.f32.mrf.mxu0
        %v6431 = vadd.f32 %v6206, %v6430
        %v6432 = vpop.f32.mrf.mxu0
        %6433 = vmatprep.mubr.f32.mxu0 0.0
        %6434 = vmatmul.mubr.f32.gmra.mxu0 %v6021
        %v6435 = vpop.f32.mrf.mxu0
        %v6436 = vadd.f32 %v6211, %v6435
        %v6437 = vpop.f32.mrf.mxu0
        %6438 = vmatprep.mubr.f32.mxu0 0.0
        %6439 = vmatmul.mubr.f32.gmra.mxu0 %v6024
        %v6440 = vpop.f32.mrf.mxu0
        %v6441 = vadd.f32 %v6216, %v6440
        %v6442 = vpop.f32.mrf.mxu0
        %6443 = vmatprep.mubr.f32.mxu0 0.0
        %6444 = vmatmul.mubr.f32.gmra.mxu0 %v6027
        %v6445 = vpop.f32.mrf.mxu0
        %v6446 = vadd.f32 %v6221, %v6445
        %v6447 = vpop.f32.mrf.mxu0
        %6448 = vmatprep.mubr.f32.mxu0 0.0
        %6449 = vmatmul.mubr.f32.gmra.mxu0 %v6030
        %v6450 = vpop.f32.mrf.mxu0
        %v6451 = vadd.f32 %v6226, %v6450
        %v6452 = vpop.f32.mrf.mxu0
        %6453 = vmatprep.mubr.f32.mxu0 0.0
        %6454 = vmatmul.mubr.f32.gmra.mxu0 %v6033
        %v6455 = vpop.f32.mrf.mxu0
        %v6456 = vadd.f32 %v6231, %v6455
        %v6457 = vpop.f32.mrf.mxu0
        %6458 = vmatprep.mubr.f32.mxu0 0.0
        %6459 = vmatmul.mubr.f32.gmra.mxu0 %v6036
        %v6460 = vpop.f32.mrf.mxu0
        %v6461 = vadd.f32 %v6236, %v6460
        %v6462 = vpop.f32.mrf.mxu0
        %6463 = vmatprep.mubr.f32.mxu0 0.0
        %6464 = vmatmul.mubr.f32.gmra.mxu0 %v6039
        %v6465 = vpop.f32.mrf.mxu0
        %v6466 = vadd.f32 %v6241, %v6465
        %v6467 = vpop.f32.mrf.mxu0
        %6468 = vmatprep.mubr.f32.mxu0 0.0
        %6469 = vmatmul.mubr.f32.gmra.mxu0 %v6042
        %v6470 = vpop.f32.mrf.mxu0
        %v6471 = vadd.f32 %v6246, %v6470
        %v6472 = vpop.f32.mrf.mxu0
        %6473 = vmatprep.mubr.f32.mxu0 0.0
        %6474 = vmatmul.mubr.f32.gmra.mxu0 %v6045
        %v6475 = vpop.f32.mrf.mxu0
        %v6476 = vadd.f32 %v6251, %v6475
        %v6477 = vpop.f32.mrf.mxu0
        %6478 = vmatprep.mubr.f32.mxu0 0.0
        %6479 = vmatmul.mubr.f32.gmra.mxu0 %v6048
        %v6480 = vpop.f32.mrf.mxu0
        %v6481 = vadd.f32 %v6256, %v6480
        %v6482 = vpop.f32.mrf.mxu0
        %6483 = vmatprep.mubr.f32.mxu0 0.0
        %6484 = vmatmul.mubr.f32.gmra.mxu0 %v6051
        %v6485 = vpop.f32.mrf.mxu0
        %v6486 = vadd.f32 %v6261, %v6485
        %v6487 = vpop.f32.mrf.mxu0
        %6488 = vmatprep.mubr.f32.mxu0 0.0
        %6489 = vmatmul.mubr.f32.gmra.mxu0 %v6054
        %v6490 = vpop.f32.mrf.mxu0
        %v6491 = vadd.f32 %v6266, %v6490
        %v6492 = vpop.f32.mrf.mxu0
        %6493 = vmatprep.mubr.f32.mxu0 0.0
        %6494 = vmatmul.mubr.f32.gmra.mxu0 %v6057
        %v6495 = vpop.f32.mrf.mxu0
        %v6496 = vadd.f32 %v6271, %v6495
        %v6497 = vpop.f32.mrf.mxu0
        %6498 = vmatprep.mubr.f32.mxu0 0.0
        %6499 = vmatmul.mubr.f32.gmra.mxu0 %v6060
        %v6500 = vpop.f32.mrf.mxu0
        %v6501 = vadd.f32 %v6276, %v6500
        %v6502 = vpop.f32.mrf.mxu0
        %6503 = vmatprep.mubr.f32.mxu0 0.0
        %6504 = vmatmul.mubr.f32.gmra.mxu0 %v6063
        %v6505 = vpop.f32.mrf.mxu0
        %v6506 = vadd.f32 %v6281, %v6505
        %v6507 = vpop.f32.mrf.mxu0
        %6508 = vmatprep.mubr.f32.mxu0 0.0
        %6509 = vmatmul.mubr.f32.gmra.mxu0 %v6066
        %v6510 = vpop.f32.mrf.mxu0
        %v6511 = vadd.f32 %v6286, %v6510
        %v6512 = vpop.f32.mrf.mxu0
        %6513 = vmatprep.mubr.f32.mxu0 0.0
        %6514 = vmatmul.mubr.f32.gmra.mxu0 %v6069
        %v6515 = vpop.f32.mrf.mxu0
        %v6516 = vadd.f32 %v6291, %v6515
        %v6517 = vpop.f32.mrf.mxu0
        %6518 = vmatprep.mubr.f32.mxu0 0.0
        %6519 = vmatmul.mubr.f32.gmra.mxu0 %v6072
        %v6520 = vpop.f32.mrf.mxu0
        %v6521 = vadd.f32 %v6296, %v6520
        %v6522 = vpop.f32.mrf.mxu0
        %6523 = vdwg.mxu0
        %v6524 = vmax.f32 %v6366, 0.0
        %v6525 = vmax.f32 %v6371, 0.0
        %v6526 = vmax.f32 %v6376, 0.0
        %v6527 = vmax.f32 %v6381, 0.0
        %v6528 = vmax.f32 %v6386, 0.0
        %v6529 = vmax.f32 %v6391, 0.0
        %v6530 = vmax.f32 %v6396, 0.0
        %v6531 = vmax.f32 %v6401, 0.0
        %v6532 = vmax.f32 %v6406, 0.0
        %v6533 = vmax.f32 %v6411, 0.0
        %v6534 = vmax.f32 %v6416, 0.0
        %v6535 = vmax.f32 %v6421, 0.0
        %v6536 = vmax.f32 %v6426, 0.0
        %v6537 = vmax.f32 %v6431, 0.0
        %v6538 = vmax.f32 %v6436, 0.0
        %v6539 = vmax.f32 %v6441, 0.0
        %v6540 = vmax.f32 %v6446, 0.0
        %v6541 = vmax.f32 %v6451, 0.0
        %v6542 = vmax.f32 %v6456, 0.0
        %v6543 = vmax.f32 %v6461, 0.0
        %v6544 = vmax.f32 %v6466, 0.0
        %v6545 = vmax.f32 %v6471, 0.0
        %v6546 = vmax.f32 %v6476, 0.0
        %v6547 = vmax.f32 %v6481, 0.0
        %v6548 = vmax.f32 %v6486, 0.0
        %v6549 = vmax.f32 %v6491, 0.0
        %v6550 = vmax.f32 %v6496, 0.0
        %v6551 = vmax.f32 %v6501, 0.0
        %v6552 = vmax.f32 %v6506, 0.0
        %v6553 = vmax.f32 %v6511, 0.0
        %v6554 = vmax.f32 %v6516, 0.0
        %v6555 = vmax.f32 %v6521, 0.0
        %6556 = vst.msk [vmem:[%s2345 + $0x1] sm:$0xff] %vm2346, %v6524
        %6557 = vst.msk [vmem:[%s2345 + $0x9] sm:$0xff] %vm2346, %v6525
        %6558 = vst.msk [vmem:[%s2345 + $0x19] sm:$0xff] %vm2346, %v6526
        %6559 = vst.msk [vmem:[%s2345 + $0x21] sm:$0xff] %vm2346, %v6527
        %6560 = vst.msk [vmem:[%s2345 + $0x31] sm:$0xff] %vm2346, %v6528
        %6561 = vst.msk [vmem:[%s2345 + $0x39] sm:$0xff] %vm2346, %v6529
        %6562 = vst.msk [vmem:[%s2345 + $0x49] sm:$0xff] %vm2346, %v6530
        %6563 = vst.msk [vmem:[%s2345 + $0x51] sm:$0xff] %vm2346, %v6531
        %6564 = vst.msk [vmem:[%s2345 + $0x61] sm:$0xff] %vm2346, %v6532
        %6565 = vst.msk [vmem:[%s2345 + $0x69] sm:$0xff] %vm2346, %v6533
        %6566 = vst.msk [vmem:[%s2345 + $0x79] sm:$0xff] %vm2346, %v6534
        %6567 = vst.msk [vmem:[%s2345 + $0x81] sm:$0xff] %vm2346, %v6535
        %6568 = vst.msk [vmem:[%s2345 + $0x91] sm:$0xff] %vm2346, %v6536
        %6569 = vst.msk [vmem:[%s2345 + $0x99] sm:$0xff] %vm2346, %v6537
        %6570 = vst.msk [vmem:[%s2345 + $0xa9] sm:$0xff] %vm2346, %v6538
        %6571 = vst.msk [vmem:[%s2345 + $0xb1] sm:$0xff] %vm2346, %v6539
        %6572 = vst.msk [vmem:[%s2345 + $0xc1] sm:$0xff] %vm2346, %v6540
        %6573 = vst.msk [vmem:[%s2345 + $0xc9] sm:$0xff] %vm2346, %v6541
        %6574 = vst.msk [vmem:[%s2345 + $0xd9] sm:$0xff] %vm2346, %v6542
        %6575 = vst.msk [vmem:[%s2345 + $0xe1] sm:$0xff] %vm2346, %v6543
        %6576 = vst.msk [vmem:[%s2345 + $0xf1] sm:$0xff] %vm2346, %v6544
        %6577 = vst.msk [vmem:[%s2345 + $0xf9] sm:$0xff] %vm2346, %v6545
        %6578 = vst.msk [vmem:[%s2345 + $0x109] sm:$0xff] %vm2346, %v6546
        %6579 = vst.msk [vmem:[%s2345 + $0x111] sm:$0xff] %vm2346, %v6547
        %6580 = vst.msk [vmem:[%s2345 + $0x121] sm:$0xff] %vm2346, %v6548
        %6581 = vst.msk [vmem:[%s2345 + $0x129] sm:$0xff] %vm2346, %v6549
        %6582 = vst.msk [vmem:[%s2345 + $0x139] sm:$0xff] %vm2346, %v6550
        %6583 = vst.msk [vmem:[%s2345 + $0x141] sm:$0xff] %vm2346, %v6551
        %6584 = vst.msk [vmem:[%s2345 + $0x151] sm:$0xff] %vm2346, %v6552
        %6585 = vst.msk [vmem:[%s2345 + $0x159] sm:$0xff] %vm2346, %v6553
        %6586 = vst.msk [vmem:[%s2345 + $0x169] sm:$0xff] %vm2346, %v6554
        %6587 = vst.msk [vmem:[%s2345 + $0x171] sm:$0xff] %vm2346, %v6555
        %6588 = vst.msk [vmem:[#allocation3 + $0x1] sm:$0xff] %vm2346, %v6526
        %6589 = vst.msk [vmem:[#allocation3 + $0x9] sm:$0xff] %vm2346, %v6527
        %6590 = vst.msk [vmem:[%s2381 + $0x1] sm:$0xff] %vm2346, %v6552
        %6591 = vst.msk [vmem:[%s2381 + $0x9] sm:$0xff] %vm2346, %v6553
        %v6592 = vld [vmem:[#allocation3 + $0x2] sm:$0x1]
        %v6593 = vld [vmem:[#allocation3 + $0x1a] sm:$0x1]
        %v6594 = vld [vmem:[#allocation3 + $0x32] sm:$0x1]
        %v6595 = vld [vmem:[#allocation3 + $0x4a] sm:$0x1]
        %v6596 = vld [vmem:[#allocation3 + $0x62] sm:$0x1]
        %v6597 = vld [vmem:[#allocation3 + $0x7a] sm:$0x1]
        %v6598 = vld [vmem:[#allocation3 + $0x92] sm:$0x1]
        %v6599 = vld [vmem:[#allocation3 + $0xaa] sm:$0x1]
        %v6600 = vld [vmem:[#allocation3 + $0xc2] sm:$0x1]
        %v6601 = vld [vmem:[#allocation3 + $0xda] sm:$0x1]
        %v6602 = vld [vmem:[#allocation3 + $0xf2] sm:$0x1]
        %v6603 = vld [vmem:[#allocation3 + $0x10a] sm:$0x1]
        %v6604 = vld [vmem:[#allocation3 + $0x122] sm:$0x1]
        %v6605 = vld [vmem:[#allocation3 + $0x13a] sm:$0x1]
        %v6606 = vld [vmem:[#allocation3 + $0x152] sm:$0x1]
        %v6607 = vld [vmem:[#allocation3 + $0x16a] sm:$0x1]
        %v6608 = vld [vmem:[#allocation3 + $0x182] sm:$0x1]
        %v6609 = vld [vmem:[#allocation3 + $0x19a] sm:$0x1]
        %6610 = vst.msk [vmem:[#allocation3] sm:$0x1] %vm2402, %v6592
        %6611 = vst.msk [vmem:[#allocation3 + $0x18] sm:$0x1] %vm2402, %v6593
        %6612 = vst.msk [vmem:[#allocation3 + $0x30] sm:$0x1] %vm2402, %v6594
        %6613 = vst.msk [vmem:[#allocation3 + $0x48] sm:$0x1] %vm2402, %v6595
        %6614 = vst.msk [vmem:[#allocation3 + $0x60] sm:$0x1] %vm2402, %v6596
        %6615 = vst.msk [vmem:[#allocation3 + $0x78] sm:$0x1] %vm2402, %v6597
        %6616 = vst.msk [vmem:[#allocation3 + $0x90] sm:$0x1] %vm2402, %v6598
        %6617 = vst.msk [vmem:[#allocation3 + $0xa8] sm:$0x1] %vm2402, %v6599
        %6618 = vst.msk [vmem:[#allocation3 + $0xc0] sm:$0x1] %vm2402, %v6600
        %6619 = vst.msk [vmem:[#allocation3 + $0xd8] sm:$0x1] %vm2402, %v6601
        %6620 = vst.msk [vmem:[#allocation3 + $0xf0] sm:$0x1] %vm2402, %v6602
        %6621 = vst.msk [vmem:[#allocation3 + $0x108] sm:$0x1] %vm2402, %v6603
        %6622 = vst.msk [vmem:[#allocation3 + $0x120] sm:$0x1] %vm2402, %v6604
        %6623 = vst.msk [vmem:[#allocation3 + $0x138] sm:$0x1] %vm2402, %v6605
        %6624 = vst.msk [vmem:[#allocation3 + $0x150] sm:$0x1] %vm2402, %v6606
        %6625 = vst.msk [vmem:[#allocation3 + $0x168] sm:$0x1] %vm2402, %v6607
        %6626 = vst.msk [vmem:[#allocation3 + $0x180] sm:$0x1] %vm2402, %v6608
        %6627 = vst.msk [vmem:[#allocation3 + $0x198] sm:$0x1] %vm2402, %v6609
        %v6628 = vld [vmem:[#allocation3 + $0xf] sm:$0x1]
        %v6629 = vld [vmem:[#allocation3 + $0x27] sm:$0x1]
        %v6630 = vld [vmem:[#allocation3 + $0x3f] sm:$0x1]
        %v6631 = vld [vmem:[#allocation3 + $0x57] sm:$0x1]
        %v6632 = vld [vmem:[#allocation3 + $0x6f] sm:$0x1]
        %v6633 = vld [vmem:[#allocation3 + $0x87] sm:$0x1]
        %v6634 = vld [vmem:[#allocation3 + $0x9f] sm:$0x1]
        %v6635 = vld [vmem:[#allocation3 + $0xb7] sm:$0x1]
        %v6636 = vld [vmem:[#allocation3 + $0xcf] sm:$0x1]
        %v6637 = vld [vmem:[#allocation3 + $0xe7] sm:$0x1]
        %v6638 = vld [vmem:[#allocation3 + $0xff] sm:$0x1]
        %v6639 = vld [vmem:[#allocation3 + $0x117] sm:$0x1]
        %v6640 = vld [vmem:[#allocation3 + $0x12f] sm:$0x1]
        %v6641 = vld [vmem:[#allocation3 + $0x147] sm:$0x1]
        %v6642 = vld [vmem:[#allocation3 + $0x15f] sm:$0x1]
        %v6643 = vld [vmem:[#allocation3 + $0x177] sm:$0x1]
        %v6644 = vld [vmem:[#allocation3 + $0x18f] sm:$0x1]
        %v6645 = vld [vmem:[#allocation3 + $0x1a7] sm:$0x1]
        %6646 = vst.msk [vmem:[#allocation3 + $0x11] sm:$0x1] %vm2402, %v6628
        %6647 = vst.msk [vmem:[#allocation3 + $0x29] sm:$0x1] %vm2402, %v6629
        %6648 = vst.msk [vmem:[#allocation3 + $0x41] sm:$0x1] %vm2402, %v6630
        %6649 = vst.msk [vmem:[#allocation3 + $0x59] sm:$0x1] %vm2402, %v6631
        %6650 = vst.msk [vmem:[#allocation3 + $0x71] sm:$0x1] %vm2402, %v6632
        %6651 = vst.msk [vmem:[#allocation3 + $0x89] sm:$0x1] %vm2402, %v6633
        %6652 = vst.msk [vmem:[#allocation3 + $0xa1] sm:$0x1] %vm2402, %v6634
        %6653 = vst.msk [vmem:[#allocation3 + $0xb9] sm:$0x1] %vm2402, %v6635
        %6654 = vst.msk [vmem:[#allocation3 + $0xd1] sm:$0x1] %vm2402, %v6636
        %6655 = vst.msk [vmem:[#allocation3 + $0xe9] sm:$0x1] %vm2402, %v6637
        %6656 = vst.msk [vmem:[#allocation3 + $0x101] sm:$0x1] %vm2402, %v6638
        %6657 = vst.msk [vmem:[#allocation3 + $0x119] sm:$0x1] %vm2402, %v6639
        %6658 = vst.msk [vmem:[#allocation3 + $0x131] sm:$0x1] %vm2402, %v6640
        %6659 = vst.msk [vmem:[#allocation3 + $0x149] sm:$0x1] %vm2402, %v6641
        %6660 = vst.msk [vmem:[#allocation3 + $0x161] sm:$0x1] %vm2402, %v6642
        %6661 = vst.msk [vmem:[#allocation3 + $0x179] sm:$0x1] %vm2402, %v6643
        %6662 = vst.msk [vmem:[#allocation3 + $0x191] sm:$0x1] %vm2402, %v6644
        %6663 = vst.msk [vmem:[#allocation3 + $0x1a9] sm:$0x1] %vm2402, %v6645
        %v6664 = vld [vmem:[%s7] sm:$0xff]
        %v6665 = vld [vmem:[%s7 + $0x8] sm:$0x1]
        %v6666 = vld [vmem:[#allocation3] sm:$0xff]
        %v6667 = vld [vmem:[#allocation3 + $0x8] sm:$0xff]
        %v6668 = vld [vmem:[#allocation3 + $0x18] sm:$0xff]
        %v6669 = vld [vmem:[#allocation3 + $0x20] sm:$0xff]
        %v6670 = vld [vmem:[#allocation3 + $0x30] sm:$0xff]
        %v6671 = vld [vmem:[#allocation3 + $0x38] sm:$0xff]
        %v6672 = vld [vmem:[#allocation3 + $0x48] sm:$0xff]
        %v6673 = vld [vmem:[#allocation3 + $0x50] sm:$0xff]
        %v6674 = vld [vmem:[#allocation3 + $0x60] sm:$0xff]
        %v6675 = vld [vmem:[#allocation3 + $0x68] sm:$0xff]
        %v6676 = vld [vmem:[#allocation3 + $0x78] sm:$0xff]
        %v6677 = vld [vmem:[#allocation3 + $0x80] sm:$0xff]
        %v6678 = vld [vmem:[#allocation3 + $0x90] sm:$0xff]
        %v6679 = vld [vmem:[#allocation3 + $0x98] sm:$0xff]
        %v6680 = vld [vmem:[#allocation3 + $0xa8] sm:$0xff]
        %v6681 = vld [vmem:[#allocation3 + $0xb0] sm:$0xff]
        %v6682 = vld [vmem:[#allocation3 + $0xc0] sm:$0xff]
        %v6683 = vld [vmem:[#allocation3 + $0xc8] sm:$0xff]
        %v6684 = vld [vmem:[#allocation3 + $0xd8] sm:$0xff]
        %v6685 = vld [vmem:[#allocation3 + $0xe0] sm:$0xff]
        %v6686 = vld [vmem:[#allocation3 + $0xf0] sm:$0xff]
        %v6687 = vld [vmem:[#allocation3 + $0xf8] sm:$0xff]
        %v6688 = vld [vmem:[#allocation3 + $0x108] sm:$0xff]
        %v6689 = vld [vmem:[#allocation3 + $0x110] sm:$0xff]
        %v6690 = vld [vmem:[#allocation3 + $0x120] sm:$0xff]
        %v6691 = vld [vmem:[#allocation3 + $0x128] sm:$0xff]
        %v6692 = vld [vmem:[#allocation3 + $0x138] sm:$0xff]
        %v6693 = vld [vmem:[#allocation3 + $0x140] sm:$0xff]
        %v6694 = vld [vmem:[#allocation3 + $0x150] sm:$0xff]
        %v6695 = vld [vmem:[#allocation3 + $0x158] sm:$0xff]
        %v6696 = vld [vmem:[#allocation3 + $0x168] sm:$0xff]
        %v6697 = vld [vmem:[#allocation3 + $0x170] sm:$0xff]
        %v6698 = vlaneseq
        %v6699 = vshrl.u32 %v6698, 7
        %v6700 = vsub.s32 0, %v6699
        %v6701 = vrot.slane %v6664, %v6700
        %v6702 = vmul.f32 %v6666, %v6701
        %v6703 = vmul.f32 %v6667, %v6701
        %v6704 = vmul.f32 %v6668, %v6701
        %v6705 = vmul.f32 %v6669, %v6701
        %v6706 = vmul.f32 %v6670, %v6701
        %v6707 = vmul.f32 %v6671, %v6701
        %v6708 = vmul.f32 %v6672, %v6701
        %v6709 = vmul.f32 %v6673, %v6701
        %v6710 = vmul.f32 %v6674, %v6701
        %v6711 = vmul.f32 %v6675, %v6701
        %v6712 = vmul.f32 %v6676, %v6701
        %v6713 = vmul.f32 %v6677, %v6701
        %v6714 = vmul.f32 %v6678, %v6701
        %v6715 = vmul.f32 %v6679, %v6701
        %v6716 = vmul.f32 %v6680, %v6701
        %v6717 = vmul.f32 %v6681, %v6701
        %v6718 = vmul.f32 %v6682, %v6701
        %v6719 = vmul.f32 %v6683, %v6701
        %v6720 = vmul.f32 %v6684, %v6701
        %v6721 = vmul.f32 %v6685, %v6701
        %v6722 = vmul.f32 %v6686, %v6701
        %v6723 = vmul.f32 %v6687, %v6701
        %v6724 = vmul.f32 %v6688, %v6701
        %v6725 = vmul.f32 %v6689, %v6701
        %v6726 = vmul.f32 %v6690, %v6701
        %v6727 = vmul.f32 %v6691, %v6701
        %v6728 = vmul.f32 %v6692, %v6701
        %v6729 = vmul.f32 %v6693, %v6701
        %v6730 = vmul.f32 %v6694, %v6701
        %v6731 = vmul.f32 %v6695, %v6701
        %v6732 = vmul.f32 %v6696, %v6701
        %v6733 = vmul.f32 %v6697, %v6701
        %v6734 = vld [vmem:[#allocation3 + $0x1] sm:$0xff]
        %v6735 = vld [vmem:[#allocation3 + $0x9] sm:$0xff]
        %v6736 = vld [vmem:[#allocation3 + $0x19] sm:$0xff]
        %v6737 = vld [vmem:[#allocation3 + $0x21] sm:$0xff]
        %v6738 = vld [vmem:[#allocation3 + $0x31] sm:$0xff]
        %v6739 = vld [vmem:[#allocation3 + $0x39] sm:$0xff]
        %v6740 = vld [vmem:[#allocation3 + $0x49] sm:$0xff]
        %v6741 = vld [vmem:[#allocation3 + $0x51] sm:$0xff]
        %v6742 = vld [vmem:[#allocation3 + $0x61] sm:$0xff]
        %v6743 = vld [vmem:[#allocation3 + $0x69] sm:$0xff]
        %v6744 = vld [vmem:[#allocation3 + $0x79] sm:$0xff]
        %v6745 = vld [vmem:[#allocation3 + $0x81] sm:$0xff]
        %v6746 = vld [vmem:[#allocation3 + $0x91] sm:$0xff]
        %v6747 = vld [vmem:[#allocation3 + $0x99] sm:$0xff]
        %v6748 = vld [vmem:[#allocation3 + $0xa9] sm:$0xff]
        %v6749 = vld [vmem:[#allocation3 + $0xb1] sm:$0xff]
        %v6750 = vld [vmem:[#allocation3 + $0xc1] sm:$0xff]
        %v6751 = vld [vmem:[#allocation3 + $0xc9] sm:$0xff]
        %v6752 = vld [vmem:[#allocation3 + $0xd9] sm:$0xff]
        %v6753 = vld [vmem:[#allocation3 + $0xe1] sm:$0xff]
        %v6754 = vld [vmem:[#allocation3 + $0xf1] sm:$0xff]
        %v6755 = vld [vmem:[#allocation3 + $0xf9] sm:$0xff]
        %v6756 = vld [vmem:[#allocation3 + $0x109] sm:$0xff]
        %v6757 = vld [vmem:[#allocation3 + $0x111] sm:$0xff]
        %v6758 = vld [vmem:[#allocation3 + $0x121] sm:$0xff]
        %v6759 = vld [vmem:[#allocation3 + $0x129] sm:$0xff]
        %v6760 = vld [vmem:[#allocation3 + $0x139] sm:$0xff]
        %v6761 = vld [vmem:[#allocation3 + $0x141] sm:$0xff]
        %v6762 = vld [vmem:[#allocation3 + $0x151] sm:$0xff]
        %v6763 = vld [vmem:[#allocation3 + $0x159] sm:$0xff]
        %v6764 = vld [vmem:[#allocation3 + $0x169] sm:$0xff]
        %v6765 = vld [vmem:[#allocation3 + $0x171] sm:$0xff]
        %v6766 = vlaneseq
        %v6767 = vshrl.u32 %v6766, 7
        %v6768 = vsub.s32 1, %v6767
        %v6769 = vrot.slane %v6664, %v6768
        %v6770 = vmul.f32 %v6734, %v6769
        %v6771 = vmul.f32 %v6735, %v6769
        %v6772 = vmul.f32 %v6736, %v6769
        %v6773 = vmul.f32 %v6737, %v6769
        %v6774 = vmul.f32 %v6738, %v6769
        %v6775 = vmul.f32 %v6739, %v6769
        %v6776 = vmul.f32 %v6740, %v6769
        %v6777 = vmul.f32 %v6741, %v6769
        %v6778 = vmul.f32 %v6742, %v6769
        %v6779 = vmul.f32 %v6743, %v6769
        %v6780 = vmul.f32 %v6744, %v6769
        %v6781 = vmul.f32 %v6745, %v6769
        %v6782 = vmul.f32 %v6746, %v6769
        %v6783 = vmul.f32 %v6747, %v6769
        %v6784 = vmul.f32 %v6748, %v6769
        %v6785 = vmul.f32 %v6749, %v6769
        %v6786 = vmul.f32 %v6750, %v6769
        %v6787 = vmul.f32 %v6751, %v6769
        %v6788 = vmul.f32 %v6752, %v6769
        %v6789 = vmul.f32 %v6753, %v6769
        %v6790 = vmul.f32 %v6754, %v6769
        %v6791 = vmul.f32 %v6755, %v6769
        %v6792 = vmul.f32 %v6756, %v6769
        %v6793 = vmul.f32 %v6757, %v6769
        %v6794 = vmul.f32 %v6758, %v6769
        %v6795 = vmul.f32 %v6759, %v6769
        %v6796 = vmul.f32 %v6760, %v6769
        %v6797 = vmul.f32 %v6761, %v6769
        %v6798 = vmul.f32 %v6762, %v6769
        %v6799 = vmul.f32 %v6763, %v6769
        %v6800 = vmul.f32 %v6764, %v6769
        %v6801 = vmul.f32 %v6765, %v6769
        %v6802 = vadd.f32 %v6702, %v6770
        %v6803 = vadd.f32 %v6703, %v6771
        %v6804 = vadd.f32 %v6704, %v6772
        %v6805 = vadd.f32 %v6705, %v6773
        %v6806 = vadd.f32 %v6706, %v6774
        %v6807 = vadd.f32 %v6707, %v6775
        %v6808 = vadd.f32 %v6708, %v6776
        %v6809 = vadd.f32 %v6709, %v6777
        %v6810 = vadd.f32 %v6710, %v6778
        %v6811 = vadd.f32 %v6711, %v6779
        %v6812 = vadd.f32 %v6712, %v6780
        %v6813 = vadd.f32 %v6713, %v6781
        %v6814 = vadd.f32 %v6714, %v6782
        %v6815 = vadd.f32 %v6715, %v6783
        %v6816 = vadd.f32 %v6716, %v6784
        %v6817 = vadd.f32 %v6717, %v6785
        %v6818 = vadd.f32 %v6718, %v6786
        %v6819 = vadd.f32 %v6719, %v6787
        %v6820 = vadd.f32 %v6720, %v6788
        %v6821 = vadd.f32 %v6721, %v6789
        %v6822 = vadd.f32 %v6722, %v6790
        %v6823 = vadd.f32 %v6723, %v6791
        %v6824 = vadd.f32 %v6724, %v6792
        %v6825 = vadd.f32 %v6725, %v6793
        %v6826 = vadd.f32 %v6726, %v6794
        %v6827 = vadd.f32 %v6727, %v6795
        %v6828 = vadd.f32 %v6728, %v6796
        %v6829 = vadd.f32 %v6729, %v6797
        %v6830 = vadd.f32 %v6730, %v6798
        %v6831 = vadd.f32 %v6731, %v6799
        %v6832 = vadd.f32 %v6732, %v6800
        %v6833 = vadd.f32 %v6733, %v6801
        %v6834 = vld [vmem:[#allocation3 + $0x2] sm:$0xff]
        %v6835 = vld [vmem:[#allocation3 + $0xa] sm:$0xff]
        %v6836 = vld [vmem:[#allocation3 + $0x1a] sm:$0xff]
        %v6837 = vld [vmem:[#allocation3 + $0x22] sm:$0xff]
        %v6838 = vld [vmem:[#allocation3 + $0x32] sm:$0xff]
        %v6839 = vld [vmem:[#allocation3 + $0x3a] sm:$0xff]
        %v6840 = vld [vmem:[#allocation3 + $0x4a] sm:$0xff]
        %v6841 = vld [vmem:[#allocation3 + $0x52] sm:$0xff]
        %v6842 = vld [vmem:[#allocation3 + $0x62] sm:$0xff]
        %v6843 = vld [vmem:[#allocation3 + $0x6a] sm:$0xff]
        %v6844 = vld [vmem:[#allocation3 + $0x7a] sm:$0xff]
        %v6845 = vld [vmem:[#allocation3 + $0x82] sm:$0xff]
        %v6846 = vld [vmem:[#allocation3 + $0x92] sm:$0xff]
        %v6847 = vld [vmem:[#allocation3 + $0x9a] sm:$0xff]
        %v6848 = vld [vmem:[#allocation3 + $0xaa] sm:$0xff]
        %v6849 = vld [vmem:[#allocation3 + $0xb2] sm:$0xff]
        %v6850 = vld [vmem:[#allocation3 + $0xc2] sm:$0xff]
        %v6851 = vld [vmem:[#allocation3 + $0xca] sm:$0xff]
        %v6852 = vld [vmem:[#allocation3 + $0xda] sm:$0xff]
        %v6853 = vld [vmem:[#allocation3 + $0xe2] sm:$0xff]
        %v6854 = vld [vmem:[#allocation3 + $0xf2] sm:$0xff]
        %v6855 = vld [vmem:[#allocation3 + $0xfa] sm:$0xff]
        %v6856 = vld [vmem:[#allocation3 + $0x10a] sm:$0xff]
        %v6857 = vld [vmem:[#allocation3 + $0x112] sm:$0xff]
        %v6858 = vld [vmem:[#allocation3 + $0x122] sm:$0xff]
        %v6859 = vld [vmem:[#allocation3 + $0x12a] sm:$0xff]
        %v6860 = vld [vmem:[#allocation3 + $0x13a] sm:$0xff]
        %v6861 = vld [vmem:[#allocation3 + $0x142] sm:$0xff]
        %v6862 = vld [vmem:[#allocation3 + $0x152] sm:$0xff]
        %v6863 = vld [vmem:[#allocation3 + $0x15a] sm:$0xff]
        %v6864 = vld [vmem:[#allocation3 + $0x16a] sm:$0xff]
        %v6865 = vld [vmem:[#allocation3 + $0x172] sm:$0xff]
        %v6866 = vlaneseq
        %v6867 = vshrl.u32 %v6866, 7
        %v6868 = vsub.s32 2, %v6867
        %v6869 = vrot.slane %v6664, %v6868
        %v6870 = vmul.f32 %v6834, %v6869
        %v6871 = vmul.f32 %v6835, %v6869
        %v6872 = vmul.f32 %v6836, %v6869
        %v6873 = vmul.f32 %v6837, %v6869
        %v6874 = vmul.f32 %v6838, %v6869
        %v6875 = vmul.f32 %v6839, %v6869
        %v6876 = vmul.f32 %v6840, %v6869
        %v6877 = vmul.f32 %v6841, %v6869
        %v6878 = vmul.f32 %v6842, %v6869
        %v6879 = vmul.f32 %v6843, %v6869
        %v6880 = vmul.f32 %v6844, %v6869
        %v6881 = vmul.f32 %v6845, %v6869
        %v6882 = vmul.f32 %v6846, %v6869
        %v6883 = vmul.f32 %v6847, %v6869
        %v6884 = vmul.f32 %v6848, %v6869
        %v6885 = vmul.f32 %v6849, %v6869
        %v6886 = vmul.f32 %v6850, %v6869
        %v6887 = vmul.f32 %v6851, %v6869
        %v6888 = vmul.f32 %v6852, %v6869
        %v6889 = vmul.f32 %v6853, %v6869
        %v6890 = vmul.f32 %v6854, %v6869
        %v6891 = vmul.f32 %v6855, %v6869
        %v6892 = vmul.f32 %v6856, %v6869
        %v6893 = vmul.f32 %v6857, %v6869
        %v6894 = vmul.f32 %v6858, %v6869
        %v6895 = vmul.f32 %v6859, %v6869
        %v6896 = vmul.f32 %v6860, %v6869
        %v6897 = vmul.f32 %v6861, %v6869
        %v6898 = vmul.f32 %v6862, %v6869
        %v6899 = vmul.f32 %v6863, %v6869
        %v6900 = vmul.f32 %v6864, %v6869
        %v6901 = vmul.f32 %v6865, %v6869
        %v6902 = vadd.f32 %v6802, %v6870
        %v6903 = vadd.f32 %v6803, %v6871
        %v6904 = vadd.f32 %v6804, %v6872
        %v6905 = vadd.f32 %v6805, %v6873
        %v6906 = vadd.f32 %v6806, %v6874
        %v6907 = vadd.f32 %v6807, %v6875
        %v6908 = vadd.f32 %v6808, %v6876
        %v6909 = vadd.f32 %v6809, %v6877
        %v6910 = vadd.f32 %v6810, %v6878
        %v6911 = vadd.f32 %v6811, %v6879
        %v6912 = vadd.f32 %v6812, %v6880
        %v6913 = vadd.f32 %v6813, %v6881
        %v6914 = vadd.f32 %v6814, %v6882
        %v6915 = vadd.f32 %v6815, %v6883
        %v6916 = vadd.f32 %v6816, %v6884
        %v6917 = vadd.f32 %v6817, %v6885
        %v6918 = vadd.f32 %v6818, %v6886
        %v6919 = vadd.f32 %v6819, %v6887
        %v6920 = vadd.f32 %v6820, %v6888
        %v6921 = vadd.f32 %v6821, %v6889
        %v6922 = vadd.f32 %v6822, %v6890
        %v6923 = vadd.f32 %v6823, %v6891
        %v6924 = vadd.f32 %v6824, %v6892
        %v6925 = vadd.f32 %v6825, %v6893
        %v6926 = vadd.f32 %v6826, %v6894
        %v6927 = vadd.f32 %v6827, %v6895
        %v6928 = vadd.f32 %v6828, %v6896
        %v6929 = vadd.f32 %v6829, %v6897
        %v6930 = vadd.f32 %v6830, %v6898
        %v6931 = vadd.f32 %v6831, %v6899
        %v6932 = vadd.f32 %v6832, %v6900
        %v6933 = vadd.f32 %v6833, %v6901
        %v6934 = vld [vmem:[%s2345] sm:$0xff]
        %v6935 = vld [vmem:[%s2345 + $0x8] sm:$0xff]
        %v6936 = vld [vmem:[%s2345 + $0x18] sm:$0xff]
        %v6937 = vld [vmem:[%s2345 + $0x20] sm:$0xff]
        %v6938 = vld [vmem:[%s2345 + $0x30] sm:$0xff]
        %v6939 = vld [vmem:[%s2345 + $0x38] sm:$0xff]
        %v6940 = vld [vmem:[%s2345 + $0x48] sm:$0xff]
        %v6941 = vld [vmem:[%s2345 + $0x50] sm:$0xff]
        %v6942 = vld [vmem:[%s2345 + $0x60] sm:$0xff]
        %v6943 = vld [vmem:[%s2345 + $0x68] sm:$0xff]
        %v6944 = vld [vmem:[%s2345 + $0x78] sm:$0xff]
        %v6945 = vld [vmem:[%s2345 + $0x80] sm:$0xff]
        %v6946 = vld [vmem:[%s2345 + $0x90] sm:$0xff]
        %v6947 = vld [vmem:[%s2345 + $0x98] sm:$0xff]
        %v6948 = vld [vmem:[%s2345 + $0xa8] sm:$0xff]
        %v6949 = vld [vmem:[%s2345 + $0xb0] sm:$0xff]
        %v6950 = vld [vmem:[%s2345 + $0xc0] sm:$0xff]
        %v6951 = vld [vmem:[%s2345 + $0xc8] sm:$0xff]
        %v6952 = vld [vmem:[%s2345 + $0xd8] sm:$0xff]
        %v6953 = vld [vmem:[%s2345 + $0xe0] sm:$0xff]
        %v6954 = vld [vmem:[%s2345 + $0xf0] sm:$0xff]
        %v6955 = vld [vmem:[%s2345 + $0xf8] sm:$0xff]
        %v6956 = vld [vmem:[%s2345 + $0x108] sm:$0xff]
        %v6957 = vld [vmem:[%s2345 + $0x110] sm:$0xff]
        %v6958 = vld [vmem:[%s2345 + $0x120] sm:$0xff]
        %v6959 = vld [vmem:[%s2345 + $0x128] sm:$0xff]
        %v6960 = vld [vmem:[%s2345 + $0x138] sm:$0xff]
        %v6961 = vld [vmem:[%s2345 + $0x140] sm:$0xff]
        %v6962 = vld [vmem:[%s2345 + $0x150] sm:$0xff]
        %v6963 = vld [vmem:[%s2345 + $0x158] sm:$0xff]
        %v6964 = vld [vmem:[%s2345 + $0x168] sm:$0xff]
        %v6965 = vld [vmem:[%s2345 + $0x170] sm:$0xff]
        %v6966 = vlaneseq
        %v6967 = vshrl.u32 %v6966, 7
        %v6968 = vsub.s32 3, %v6967
        %v6969 = vrot.slane %v6664, %v6968
        %v6970 = vmul.f32 %v6934, %v6969
        %v6971 = vmul.f32 %v6935, %v6969
        %v6972 = vmul.f32 %v6936, %v6969
        %v6973 = vmul.f32 %v6937, %v6969
        %v6974 = vmul.f32 %v6938, %v6969
        %v6975 = vmul.f32 %v6939, %v6969
        %v6976 = vmul.f32 %v6940, %v6969
        %v6977 = vmul.f32 %v6941, %v6969
        %v6978 = vmul.f32 %v6942, %v6969
        %v6979 = vmul.f32 %v6943, %v6969
        %v6980 = vmul.f32 %v6944, %v6969
        %v6981 = vmul.f32 %v6945, %v6969
        %v6982 = vmul.f32 %v6946, %v6969
        %v6983 = vmul.f32 %v6947, %v6969
        %v6984 = vmul.f32 %v6948, %v6969
        %v6985 = vmul.f32 %v6949, %v6969
        %v6986 = vmul.f32 %v6950, %v6969
        %v6987 = vmul.f32 %v6951, %v6969
        %v6988 = vmul.f32 %v6952, %v6969
        %v6989 = vmul.f32 %v6953, %v6969
        %v6990 = vmul.f32 %v6954, %v6969
        %v6991 = vmul.f32 %v6955, %v6969
        %v6992 = vmul.f32 %v6956, %v6969
        %v6993 = vmul.f32 %v6957, %v6969
        %v6994 = vmul.f32 %v6958, %v6969
        %v6995 = vmul.f32 %v6959, %v6969
        %v6996 = vmul.f32 %v6960, %v6969
        %v6997 = vmul.f32 %v6961, %v6969
        %v6998 = vmul.f32 %v6962, %v6969
        %v6999 = vmul.f32 %v6963, %v6969
        %v7000 = vmul.f32 %v6964, %v6969
        %v7001 = vmul.f32 %v6965, %v6969
        %v7002 = vadd.f32 %v6902, %v6970
        %v7003 = vadd.f32 %v6903, %v6971
        %v7004 = vadd.f32 %v6904, %v6972
        %v7005 = vadd.f32 %v6905, %v6973
        %v7006 = vadd.f32 %v6906, %v6974
        %v7007 = vadd.f32 %v6907, %v6975
        %v7008 = vadd.f32 %v6908, %v6976
        %v7009 = vadd.f32 %v6909, %v6977
        %v7010 = vadd.f32 %v6910, %v6978
        %v7011 = vadd.f32 %v6911, %v6979
        %v7012 = vadd.f32 %v6912, %v6980
        %v7013 = vadd.f32 %v6913, %v6981
        %v7014 = vadd.f32 %v6914, %v6982
        %v7015 = vadd.f32 %v6915, %v6983
        %v7016 = vadd.f32 %v6916, %v6984
        %v7017 = vadd.f32 %v6917, %v6985
        %v7018 = vadd.f32 %v6918, %v6986
        %v7019 = vadd.f32 %v6919, %v6987
        %v7020 = vadd.f32 %v6920, %v6988
        %v7021 = vadd.f32 %v6921, %v6989
        %v7022 = vadd.f32 %v6922, %v6990
        %v7023 = vadd.f32 %v6923, %v6991
        %v7024 = vadd.f32 %v6924, %v6992
        %v7025 = vadd.f32 %v6925, %v6993
        %v7026 = vadd.f32 %v6926, %v6994
        %v7027 = vadd.f32 %v6927, %v6995
        %v7028 = vadd.f32 %v6928, %v6996
        %v7029 = vadd.f32 %v6929, %v6997
        %v7030 = vadd.f32 %v6930, %v6998
        %v7031 = vadd.f32 %v6931, %v6999
        %v7032 = vadd.f32 %v6932, %v7000
        %v7033 = vadd.f32 %v6933, %v7001
        %v7034 = vld [vmem:[%s2345 + $0x1] sm:$0xff]
        %v7035 = vld [vmem:[%s2345 + $0x9] sm:$0xff]
        %v7036 = vld [vmem:[%s2345 + $0x19] sm:$0xff]
        %v7037 = vld [vmem:[%s2345 + $0x21] sm:$0xff]
        %v7038 = vld [vmem:[%s2345 + $0x31] sm:$0xff]
        %v7039 = vld [vmem:[%s2345 + $0x39] sm:$0xff]
        %v7040 = vld [vmem:[%s2345 + $0x49] sm:$0xff]
        %v7041 = vld [vmem:[%s2345 + $0x51] sm:$0xff]
        %v7042 = vld [vmem:[%s2345 + $0x61] sm:$0xff]
        %v7043 = vld [vmem:[%s2345 + $0x69] sm:$0xff]
        %v7044 = vld [vmem:[%s2345 + $0x79] sm:$0xff]
        %v7045 = vld [vmem:[%s2345 + $0x81] sm:$0xff]
        %v7046 = vld [vmem:[%s2345 + $0x91] sm:$0xff]
        %v7047 = vld [vmem:[%s2345 + $0x99] sm:$0xff]
        %v7048 = vld [vmem:[%s2345 + $0xa9] sm:$0xff]
        %v7049 = vld [vmem:[%s2345 + $0xb1] sm:$0xff]
        %v7050 = vld [vmem:[%s2345 + $0xc1] sm:$0xff]
        %v7051 = vld [vmem:[%s2345 + $0xc9] sm:$0xff]
        %v7052 = vld [vmem:[%s2345 + $0xd9] sm:$0xff]
        %v7053 = vld [vmem:[%s2345 + $0xe1] sm:$0xff]
        %v7054 = vld [vmem:[%s2345 + $0xf1] sm:$0xff]
        %v7055 = vld [vmem:[%s2345 + $0xf9] sm:$0xff]
        %v7056 = vld [vmem:[%s2345 + $0x109] sm:$0xff]
        %v7057 = vld [vmem:[%s2345 + $0x111] sm:$0xff]
        %v7058 = vld [vmem:[%s2345 + $0x121] sm:$0xff]
        %v7059 = vld [vmem:[%s2345 + $0x129] sm:$0xff]
        %v7060 = vld [vmem:[%s2345 + $0x139] sm:$0xff]
        %v7061 = vld [vmem:[%s2345 + $0x141] sm:$0xff]
        %v7062 = vld [vmem:[%s2345 + $0x151] sm:$0xff]
        %v7063 = vld [vmem:[%s2345 + $0x159] sm:$0xff]
        %v7064 = vld [vmem:[%s2345 + $0x169] sm:$0xff]
        %v7065 = vld [vmem:[%s2345 + $0x171] sm:$0xff]
        %v7066 = vlaneseq
        %v7067 = vshrl.u32 %v7066, 7
        %v7068 = vsub.s32 4, %v7067
        %v7069 = vrot.slane %v6664, %v7068
        %v7070 = vmul.f32 %v7034, %v7069
        %v7071 = vmul.f32 %v7035, %v7069
        %v7072 = vmul.f32 %v7036, %v7069
        %v7073 = vmul.f32 %v7037, %v7069
        %v7074 = vmul.f32 %v7038, %v7069
        %v7075 = vmul.f32 %v7039, %v7069
        %v7076 = vmul.f32 %v7040, %v7069
        %v7077 = vmul.f32 %v7041, %v7069
        %v7078 = vmul.f32 %v7042, %v7069
        %v7079 = vmul.f32 %v7043, %v7069
        %v7080 = vmul.f32 %v7044, %v7069
        %v7081 = vmul.f32 %v7045, %v7069
        %v7082 = vmul.f32 %v7046, %v7069
        %v7083 = vmul.f32 %v7047, %v7069
        %v7084 = vmul.f32 %v7048, %v7069
        %v7085 = vmul.f32 %v7049, %v7069
        %v7086 = vmul.f32 %v7050, %v7069
        %v7087 = vmul.f32 %v7051, %v7069
        %v7088 = vmul.f32 %v7052, %v7069
        %v7089 = vmul.f32 %v7053, %v7069
        %v7090 = vmul.f32 %v7054, %v7069
        %v7091 = vmul.f32 %v7055, %v7069
        %v7092 = vmul.f32 %v7056, %v7069
        %v7093 = vmul.f32 %v7057, %v7069
        %v7094 = vmul.f32 %v7058, %v7069
        %v7095 = vmul.f32 %v7059, %v7069
        %v7096 = vmul.f32 %v7060, %v7069
        %v7097 = vmul.f32 %v7061, %v7069
        %v7098 = vmul.f32 %v7062, %v7069
        %v7099 = vmul.f32 %v7063, %v7069
        %v7100 = vmul.f32 %v7064, %v7069
        %v7101 = vmul.f32 %v7065, %v7069
        %v7102 = vadd.f32 %v7002, %v7070
        %v7103 = vadd.f32 %v7003, %v7071
        %v7104 = vadd.f32 %v7004, %v7072
        %v7105 = vadd.f32 %v7005, %v7073
        %v7106 = vadd.f32 %v7006, %v7074
        %v7107 = vadd.f32 %v7007, %v7075
        %v7108 = vadd.f32 %v7008, %v7076
        %v7109 = vadd.f32 %v7009, %v7077
        %v7110 = vadd.f32 %v7010, %v7078
        %v7111 = vadd.f32 %v7011, %v7079
        %v7112 = vadd.f32 %v7012, %v7080
        %v7113 = vadd.f32 %v7013, %v7081
        %v7114 = vadd.f32 %v7014, %v7082
        %v7115 = vadd.f32 %v7015, %v7083
        %v7116 = vadd.f32 %v7016, %v7084
        %v7117 = vadd.f32 %v7017, %v7085
        %v7118 = vadd.f32 %v7018, %v7086
        %v7119 = vadd.f32 %v7019, %v7087
        %v7120 = vadd.f32 %v7020, %v7088
        %v7121 = vadd.f32 %v7021, %v7089
        %v7122 = vadd.f32 %v7022, %v7090
        %v7123 = vadd.f32 %v7023, %v7091
        %v7124 = vadd.f32 %v7024, %v7092
        %v7125 = vadd.f32 %v7025, %v7093
        %v7126 = vadd.f32 %v7026, %v7094
        %v7127 = vadd.f32 %v7027, %v7095
        %v7128 = vadd.f32 %v7028, %v7096
        %v7129 = vadd.f32 %v7029, %v7097
        %v7130 = vadd.f32 %v7030, %v7098
        %v7131 = vadd.f32 %v7031, %v7099
        %v7132 = vadd.f32 %v7032, %v7100
        %v7133 = vadd.f32 %v7033, %v7101
        %v7134 = vld [vmem:[%s2345 + $0x2] sm:$0xff]
        %v7135 = vld [vmem:[%s2345 + $0xa] sm:$0xff]
        %v7136 = vld [vmem:[%s2345 + $0x1a] sm:$0xff]
        %v7137 = vld [vmem:[%s2345 + $0x22] sm:$0xff]
        %v7138 = vld [vmem:[%s2345 + $0x32] sm:$0xff]
        %v7139 = vld [vmem:[%s2345 + $0x3a] sm:$0xff]
        %v7140 = vld [vmem:[%s2345 + $0x4a] sm:$0xff]
        %v7141 = vld [vmem:[%s2345 + $0x52] sm:$0xff]
        %v7142 = vld [vmem:[%s2345 + $0x62] sm:$0xff]
        %v7143 = vld [vmem:[%s2345 + $0x6a] sm:$0xff]
        %v7144 = vld [vmem:[%s2345 + $0x7a] sm:$0xff]
        %v7145 = vld [vmem:[%s2345 + $0x82] sm:$0xff]
        %v7146 = vld [vmem:[%s2345 + $0x92] sm:$0xff]
        %v7147 = vld [vmem:[%s2345 + $0x9a] sm:$0xff]
        %v7148 = vld [vmem:[%s2345 + $0xaa] sm:$0xff]
        %v7149 = vld [vmem:[%s2345 + $0xb2] sm:$0xff]
        %v7150 = vld [vmem:[%s2345 + $0xc2] sm:$0xff]
        %v7151 = vld [vmem:[%s2345 + $0xca] sm:$0xff]
        %v7152 = vld [vmem:[%s2345 + $0xda] sm:$0xff]
        %v7153 = vld [vmem:[%s2345 + $0xe2] sm:$0xff]
        %v7154 = vld [vmem:[%s2345 + $0xf2] sm:$0xff]
        %v7155 = vld [vmem:[%s2345 + $0xfa] sm:$0xff]
        %v7156 = vld [vmem:[%s2345 + $0x10a] sm:$0xff]
        %v7157 = vld [vmem:[%s2345 + $0x112] sm:$0xff]
        %v7158 = vld [vmem:[%s2345 + $0x122] sm:$0xff]
        %v7159 = vld [vmem:[%s2345 + $0x12a] sm:$0xff]
        %v7160 = vld [vmem:[%s2345 + $0x13a] sm:$0xff]
        %v7161 = vld [vmem:[%s2345 + $0x142] sm:$0xff]
        %v7162 = vld [vmem:[%s2345 + $0x152] sm:$0xff]
        %v7163 = vld [vmem:[%s2345 + $0x15a] sm:$0xff]
        %v7164 = vld [vmem:[%s2345 + $0x16a] sm:$0xff]
        %v7165 = vld [vmem:[%s2345 + $0x172] sm:$0xff]
        %v7166 = vlaneseq
        %v7167 = vshrl.u32 %v7166, 7
        %v7168 = vsub.s32 5, %v7167
        %v7169 = vrot.slane %v6664, %v7168
        %v7170 = vmul.f32 %v7134, %v7169
        %v7171 = vmul.f32 %v7135, %v7169
        %v7172 = vmul.f32 %v7136, %v7169
        %v7173 = vmul.f32 %v7137, %v7169
        %v7174 = vmul.f32 %v7138, %v7169
        %v7175 = vmul.f32 %v7139, %v7169
        %v7176 = vmul.f32 %v7140, %v7169
        %v7177 = vmul.f32 %v7141, %v7169
        %v7178 = vmul.f32 %v7142, %v7169
        %v7179 = vmul.f32 %v7143, %v7169
        %v7180 = vmul.f32 %v7144, %v7169
        %v7181 = vmul.f32 %v7145, %v7169
        %v7182 = vmul.f32 %v7146, %v7169
        %v7183 = vmul.f32 %v7147, %v7169
        %v7184 = vmul.f32 %v7148, %v7169
        %v7185 = vmul.f32 %v7149, %v7169
        %v7186 = vmul.f32 %v7150, %v7169
        %v7187 = vmul.f32 %v7151, %v7169
        %v7188 = vmul.f32 %v7152, %v7169
        %v7189 = vmul.f32 %v7153, %v7169
        %v7190 = vmul.f32 %v7154, %v7169
        %v7191 = vmul.f32 %v7155, %v7169
        %v7192 = vmul.f32 %v7156, %v7169
        %v7193 = vmul.f32 %v7157, %v7169
        %v7194 = vmul.f32 %v7158, %v7169
        %v7195 = vmul.f32 %v7159, %v7169
        %v7196 = vmul.f32 %v7160, %v7169
        %v7197 = vmul.f32 %v7161, %v7169
        %v7198 = vmul.f32 %v7162, %v7169
        %v7199 = vmul.f32 %v7163, %v7169
        %v7200 = vmul.f32 %v7164, %v7169
        %v7201 = vmul.f32 %v7165, %v7169
        %v7202 = vadd.f32 %v7102, %v7170
        %v7203 = vadd.f32 %v7103, %v7171
        %v7204 = vadd.f32 %v7104, %v7172
        %v7205 = vadd.f32 %v7105, %v7173
        %v7206 = vadd.f32 %v7106, %v7174
        %v7207 = vadd.f32 %v7107, %v7175
        %v7208 = vadd.f32 %v7108, %v7176
        %v7209 = vadd.f32 %v7109, %v7177
        %v7210 = vadd.f32 %v7110, %v7178
        %v7211 = vadd.f32 %v7111, %v7179
        %v7212 = vadd.f32 %v7112, %v7180
        %v7213 = vadd.f32 %v7113, %v7181
        %v7214 = vadd.f32 %v7114, %v7182
        %v7215 = vadd.f32 %v7115, %v7183
        %v7216 = vadd.f32 %v7116, %v7184
        %v7217 = vadd.f32 %v7117, %v7185
        %v7218 = vadd.f32 %v7118, %v7186
        %v7219 = vadd.f32 %v7119, %v7187
        %v7220 = vadd.f32 %v7120, %v7188
        %v7221 = vadd.f32 %v7121, %v7189
        %v7222 = vadd.f32 %v7122, %v7190
        %v7223 = vadd.f32 %v7123, %v7191
        %v7224 = vadd.f32 %v7124, %v7192
        %v7225 = vadd.f32 %v7125, %v7193
        %v7226 = vadd.f32 %v7126, %v7194
        %v7227 = vadd.f32 %v7127, %v7195
        %v7228 = vadd.f32 %v7128, %v7196
        %v7229 = vadd.f32 %v7129, %v7197
        %v7230 = vadd.f32 %v7130, %v7198
        %v7231 = vadd.f32 %v7131, %v7199
        %v7232 = vadd.f32 %v7132, %v7200
        %v7233 = vadd.f32 %v7133, %v7201
        %v7234 = vld [vmem:[%s3486] sm:$0xff]
        %v7235 = vld [vmem:[%s3486 + $0x8] sm:$0xff]
        %v7236 = vld [vmem:[%s3486 + $0x18] sm:$0xff]
        %v7237 = vld [vmem:[%s3486 + $0x20] sm:$0xff]
        %v7238 = vld [vmem:[%s3486 + $0x30] sm:$0xff]
        %v7239 = vld [vmem:[%s3486 + $0x38] sm:$0xff]
        %v7240 = vld [vmem:[%s3486 + $0x48] sm:$0xff]
        %v7241 = vld [vmem:[%s3486 + $0x50] sm:$0xff]
        %v7242 = vld [vmem:[%s3486 + $0x60] sm:$0xff]
        %v7243 = vld [vmem:[%s3486 + $0x68] sm:$0xff]
        %v7244 = vld [vmem:[%s3486 + $0x78] sm:$0xff]
        %v7245 = vld [vmem:[%s3486 + $0x80] sm:$0xff]
        %v7246 = vld [vmem:[%s3486 + $0x90] sm:$0xff]
        %v7247 = vld [vmem:[%s3486 + $0x98] sm:$0xff]
        %v7248 = vld [vmem:[%s3486 + $0xa8] sm:$0xff]
        %v7249 = vld [vmem:[%s3486 + $0xb0] sm:$0xff]
        %v7250 = vld [vmem:[%s3486 + $0xc0] sm:$0xff]
        %v7251 = vld [vmem:[%s3486 + $0xc8] sm:$0xff]
        %v7252 = vld [vmem:[%s3486 + $0xd8] sm:$0xff]
        %v7253 = vld [vmem:[%s3486 + $0xe0] sm:$0xff]
        %v7254 = vld [vmem:[%s3486 + $0xf0] sm:$0xff]
        %v7255 = vld [vmem:[%s3486 + $0xf8] sm:$0xff]
        %v7256 = vld [vmem:[%s3486 + $0x108] sm:$0xff]
        %v7257 = vld [vmem:[%s3486 + $0x110] sm:$0xff]
        %v7258 = vld [vmem:[%s3486 + $0x120] sm:$0xff]
        %v7259 = vld [vmem:[%s3486 + $0x128] sm:$0xff]
        %v7260 = vld [vmem:[%s3486 + $0x138] sm:$0xff]
        %v7261 = vld [vmem:[%s3486 + $0x140] sm:$0xff]
        %v7262 = vld [vmem:[%s3486 + $0x150] sm:$0xff]
        %v7263 = vld [vmem:[%s3486 + $0x158] sm:$0xff]
        %v7264 = vld [vmem:[%s3486 + $0x168] sm:$0xff]
        %v7265 = vld [vmem:[%s3486 + $0x170] sm:$0xff]
        %v7266 = vlaneseq
        %v7267 = vshrl.u32 %v7266, 7
        %v7268 = vsub.s32 6, %v7267
        %v7269 = vrot.slane %v6664, %v7268
        %v7270 = vmul.f32 %v7234, %v7269
        %v7271 = vmul.f32 %v7235, %v7269
        %v7272 = vmul.f32 %v7236, %v7269
        %v7273 = vmul.f32 %v7237, %v7269
        %v7274 = vmul.f32 %v7238, %v7269
        %v7275 = vmul.f32 %v7239, %v7269
        %v7276 = vmul.f32 %v7240, %v7269
        %v7277 = vmul.f32 %v7241, %v7269
        %v7278 = vmul.f32 %v7242, %v7269
        %v7279 = vmul.f32 %v7243, %v7269
        %v7280 = vmul.f32 %v7244, %v7269
        %v7281 = vmul.f32 %v7245, %v7269
        %v7282 = vmul.f32 %v7246, %v7269
        %v7283 = vmul.f32 %v7247, %v7269
        %v7284 = vmul.f32 %v7248, %v7269
        %v7285 = vmul.f32 %v7249, %v7269
        %v7286 = vmul.f32 %v7250, %v7269
        %v7287 = vmul.f32 %v7251, %v7269
        %v7288 = vmul.f32 %v7252, %v7269
        %v7289 = vmul.f32 %v7253, %v7269
        %v7290 = vmul.f32 %v7254, %v7269
        %v7291 = vmul.f32 %v7255, %v7269
        %v7292 = vmul.f32 %v7256, %v7269
        %v7293 = vmul.f32 %v7257, %v7269
        %v7294 = vmul.f32 %v7258, %v7269
        %v7295 = vmul.f32 %v7259, %v7269
        %v7296 = vmul.f32 %v7260, %v7269
        %v7297 = vmul.f32 %v7261, %v7269
        %v7298 = vmul.f32 %v7262, %v7269
        %v7299 = vmul.f32 %v7263, %v7269
        %v7300 = vmul.f32 %v7264, %v7269
        %v7301 = vmul.f32 %v7265, %v7269
        %v7302 = vadd.f32 %v7202, %v7270
        %v7303 = vadd.f32 %v7203, %v7271
        %v7304 = vadd.f32 %v7204, %v7272
        %v7305 = vadd.f32 %v7205, %v7273
        %v7306 = vadd.f32 %v7206, %v7274
        %v7307 = vadd.f32 %v7207, %v7275
        %v7308 = vadd.f32 %v7208, %v7276
        %v7309 = vadd.f32 %v7209, %v7277
        %v7310 = vadd.f32 %v7210, %v7278
        %v7311 = vadd.f32 %v7211, %v7279
        %v7312 = vadd.f32 %v7212, %v7280
        %v7313 = vadd.f32 %v7213, %v7281
        %v7314 = vadd.f32 %v7214, %v7282
        %v7315 = vadd.f32 %v7215, %v7283
        %v7316 = vadd.f32 %v7216, %v7284
        %v7317 = vadd.f32 %v7217, %v7285
        %v7318 = vadd.f32 %v7218, %v7286
        %v7319 = vadd.f32 %v7219, %v7287
        %v7320 = vadd.f32 %v7220, %v7288
        %v7321 = vadd.f32 %v7221, %v7289
        %v7322 = vadd.f32 %v7222, %v7290
        %v7323 = vadd.f32 %v7223, %v7291
        %v7324 = vadd.f32 %v7224, %v7292
        %v7325 = vadd.f32 %v7225, %v7293
        %v7326 = vadd.f32 %v7226, %v7294
        %v7327 = vadd.f32 %v7227, %v7295
        %v7328 = vadd.f32 %v7228, %v7296
        %v7329 = vadd.f32 %v7229, %v7297
        %v7330 = vadd.f32 %v7230, %v7298
        %v7331 = vadd.f32 %v7231, %v7299
        %v7332 = vadd.f32 %v7232, %v7300
        %v7333 = vadd.f32 %v7233, %v7301
        %v7334 = vld [vmem:[%s3486 + $0x1] sm:$0xff]
        %v7335 = vld [vmem:[%s3486 + $0x9] sm:$0xff]
        %v7336 = vld [vmem:[%s3486 + $0x19] sm:$0xff]
        %v7337 = vld [vmem:[%s3486 + $0x21] sm:$0xff]
        %v7338 = vld [vmem:[%s3486 + $0x31] sm:$0xff]
        %v7339 = vld [vmem:[%s3486 + $0x39] sm:$0xff]
        %v7340 = vld [vmem:[%s3486 + $0x49] sm:$0xff]
        %v7341 = vld [vmem:[%s3486 + $0x51] sm:$0xff]
        %v7342 = vld [vmem:[%s3486 + $0x61] sm:$0xff]
        %v7343 = vld [vmem:[%s3486 + $0x69] sm:$0xff]
        %v7344 = vld [vmem:[%s3486 + $0x79] sm:$0xff]
        %v7345 = vld [vmem:[%s3486 + $0x81] sm:$0xff]
        %v7346 = vld [vmem:[%s3486 + $0x91] sm:$0xff]
        %v7347 = vld [vmem:[%s3486 + $0x99] sm:$0xff]
        %v7348 = vld [vmem:[%s3486 + $0xa9] sm:$0xff]
        %v7349 = vld [vmem:[%s3486 + $0xb1] sm:$0xff]
        %v7350 = vld [vmem:[%s3486 + $0xc1] sm:$0xff]
        %v7351 = vld [vmem:[%s3486 + $0xc9] sm:$0xff]
        %v7352 = vld [vmem:[%s3486 + $0xd9] sm:$0xff]
        %v7353 = vld [vmem:[%s3486 + $0xe1] sm:$0xff]
        %v7354 = vld [vmem:[%s3486 + $0xf1] sm:$0xff]
        %v7355 = vld [vmem:[%s3486 + $0xf9] sm:$0xff]
        %v7356 = vld [vmem:[%s3486 + $0x109] sm:$0xff]
        %v7357 = vld [vmem:[%s3486 + $0x111] sm:$0xff]
        %v7358 = vld [vmem:[%s3486 + $0x121] sm:$0xff]
        %v7359 = vld [vmem:[%s3486 + $0x129] sm:$0xff]
        %v7360 = vld [vmem:[%s3486 + $0x139] sm:$0xff]
        %v7361 = vld [vmem:[%s3486 + $0x141] sm:$0xff]
        %v7362 = vld [vmem:[%s3486 + $0x151] sm:$0xff]
        %v7363 = vld [vmem:[%s3486 + $0x159] sm:$0xff]
        %v7364 = vld [vmem:[%s3486 + $0x169] sm:$0xff]
        %v7365 = vld [vmem:[%s3486 + $0x171] sm:$0xff]
        %v7366 = vlaneseq
        %v7367 = vshrl.u32 %v7366, 7
        %v7368 = vsub.s32 7, %v7367
        %v7369 = vrot.slane %v6664, %v7368
        %v7370 = vmul.f32 %v7334, %v7369
        %v7371 = vmul.f32 %v7335, %v7369
        %v7372 = vmul.f32 %v7336, %v7369
        %v7373 = vmul.f32 %v7337, %v7369
        %v7374 = vmul.f32 %v7338, %v7369
        %v7375 = vmul.f32 %v7339, %v7369
        %v7376 = vmul.f32 %v7340, %v7369
        %v7377 = vmul.f32 %v7341, %v7369
        %v7378 = vmul.f32 %v7342, %v7369
        %v7379 = vmul.f32 %v7343, %v7369
        %v7380 = vmul.f32 %v7344, %v7369
        %v7381 = vmul.f32 %v7345, %v7369
        %v7382 = vmul.f32 %v7346, %v7369
        %v7383 = vmul.f32 %v7347, %v7369
        %v7384 = vmul.f32 %v7348, %v7369
        %v7385 = vmul.f32 %v7349, %v7369
        %v7386 = vmul.f32 %v7350, %v7369
        %v7387 = vmul.f32 %v7351, %v7369
        %v7388 = vmul.f32 %v7352, %v7369
        %v7389 = vmul.f32 %v7353, %v7369
        %v7390 = vmul.f32 %v7354, %v7369
        %v7391 = vmul.f32 %v7355, %v7369
        %v7392 = vmul.f32 %v7356, %v7369
        %v7393 = vmul.f32 %v7357, %v7369
        %v7394 = vmul.f32 %v7358, %v7369
        %v7395 = vmul.f32 %v7359, %v7369
        %v7396 = vmul.f32 %v7360, %v7369
        %v7397 = vmul.f32 %v7361, %v7369
        %v7398 = vmul.f32 %v7362, %v7369
        %v7399 = vmul.f32 %v7363, %v7369
        %v7400 = vmul.f32 %v7364, %v7369
        %v7401 = vmul.f32 %v7365, %v7369
        %v7402 = vadd.f32 %v7302, %v7370
        %v7403 = vadd.f32 %v7303, %v7371
        %v7404 = vadd.f32 %v7304, %v7372
        %v7405 = vadd.f32 %v7305, %v7373
        %v7406 = vadd.f32 %v7306, %v7374
        %v7407 = vadd.f32 %v7307, %v7375
        %v7408 = vadd.f32 %v7308, %v7376
        %v7409 = vadd.f32 %v7309, %v7377
        %v7410 = vadd.f32 %v7310, %v7378
        %v7411 = vadd.f32 %v7311, %v7379
        %v7412 = vadd.f32 %v7312, %v7380
        %v7413 = vadd.f32 %v7313, %v7381
        %v7414 = vadd.f32 %v7314, %v7382
        %v7415 = vadd.f32 %v7315, %v7383
        %v7416 = vadd.f32 %v7316, %v7384
        %v7417 = vadd.f32 %v7317, %v7385
        %v7418 = vadd.f32 %v7318, %v7386
        %v7419 = vadd.f32 %v7319, %v7387
        %v7420 = vadd.f32 %v7320, %v7388
        %v7421 = vadd.f32 %v7321, %v7389
        %v7422 = vadd.f32 %v7322, %v7390
        %v7423 = vadd.f32 %v7323, %v7391
        %v7424 = vadd.f32 %v7324, %v7392
        %v7425 = vadd.f32 %v7325, %v7393
        %v7426 = vadd.f32 %v7326, %v7394
        %v7427 = vadd.f32 %v7327, %v7395
        %v7428 = vadd.f32 %v7328, %v7396
        %v7429 = vadd.f32 %v7329, %v7397
        %v7430 = vadd.f32 %v7330, %v7398
        %v7431 = vadd.f32 %v7331, %v7399
        %v7432 = vadd.f32 %v7332, %v7400
        %v7433 = vadd.f32 %v7333, %v7401
        %v7434 = vld [vmem:[%s3486 + $0x2] sm:$0xff]
        %v7435 = vld [vmem:[%s3486 + $0xa] sm:$0xff]
        %v7436 = vld [vmem:[%s3486 + $0x1a] sm:$0xff]
        %v7437 = vld [vmem:[%s3486 + $0x22] sm:$0xff]
        %v7438 = vld [vmem:[%s3486 + $0x32] sm:$0xff]
        %v7439 = vld [vmem:[%s3486 + $0x3a] sm:$0xff]
        %v7440 = vld [vmem:[%s3486 + $0x4a] sm:$0xff]
        %v7441 = vld [vmem:[%s3486 + $0x52] sm:$0xff]
        %v7442 = vld [vmem:[%s3486 + $0x62] sm:$0xff]
        %v7443 = vld [vmem:[%s3486 + $0x6a] sm:$0xff]
        %v7444 = vld [vmem:[%s3486 + $0x7a] sm:$0xff]
        %v7445 = vld [vmem:[%s3486 + $0x82] sm:$0xff]
        %v7446 = vld [vmem:[%s3486 + $0x92] sm:$0xff]
        %v7447 = vld [vmem:[%s3486 + $0x9a] sm:$0xff]
        %v7448 = vld [vmem:[%s3486 + $0xaa] sm:$0xff]
        %v7449 = vld [vmem:[%s3486 + $0xb2] sm:$0xff]
        %v7450 = vld [vmem:[%s3486 + $0xc2] sm:$0xff]
        %v7451 = vld [vmem:[%s3486 + $0xca] sm:$0xff]
        %v7452 = vld [vmem:[%s3486 + $0xda] sm:$0xff]
        %v7453 = vld [vmem:[%s3486 + $0xe2] sm:$0xff]
        %v7454 = vld [vmem:[%s3486 + $0xf2] sm:$0xff]
        %v7455 = vld [vmem:[%s3486 + $0xfa] sm:$0xff]
        %v7456 = vld [vmem:[%s3486 + $0x10a] sm:$0xff]
        %v7457 = vld [vmem:[%s3486 + $0x112] sm:$0xff]
        %v7458 = vld [vmem:[%s3486 + $0x122] sm:$0xff]
        %v7459 = vld [vmem:[%s3486 + $0x12a] sm:$0xff]
        %v7460 = vld [vmem:[%s3486 + $0x13a] sm:$0xff]
        %v7461 = vld [vmem:[%s3486 + $0x142] sm:$0xff]
        %v7462 = vld [vmem:[%s3486 + $0x152] sm:$0xff]
        %v7463 = vld [vmem:[%s3486 + $0x15a] sm:$0xff]
        %v7464 = vld [vmem:[%s3486 + $0x16a] sm:$0xff]
        %v7465 = vld [vmem:[%s3486 + $0x172] sm:$0xff]
        %v7466 = vlaneseq
        %v7467 = vshrl.u32 %v7466, 7
        %v7468 = vsub.s32 0, %v7467
        %v7469 = vrot.slane %v6665, %v7468
        %v7470 = vmul.f32 %v7434, %v7469
        %v7471 = vmul.f32 %v7435, %v7469
        %v7472 = vmul.f32 %v7436, %v7469
        %v7473 = vmul.f32 %v7437, %v7469
        %v7474 = vmul.f32 %v7438, %v7469
        %v7475 = vmul.f32 %v7439, %v7469
        %v7476 = vmul.f32 %v7440, %v7469
        %v7477 = vmul.f32 %v7441, %v7469
        %v7478 = vmul.f32 %v7442, %v7469
        %v7479 = vmul.f32 %v7443, %v7469
        %v7480 = vmul.f32 %v7444, %v7469
        %v7481 = vmul.f32 %v7445, %v7469
        %v7482 = vmul.f32 %v7446, %v7469
        %v7483 = vmul.f32 %v7447, %v7469
        %v7484 = vmul.f32 %v7448, %v7469
        %v7485 = vmul.f32 %v7449, %v7469
        %v7486 = vmul.f32 %v7450, %v7469
        %v7487 = vmul.f32 %v7451, %v7469
        %v7488 = vmul.f32 %v7452, %v7469
        %v7489 = vmul.f32 %v7453, %v7469
        %v7490 = vmul.f32 %v7454, %v7469
        %v7491 = vmul.f32 %v7455, %v7469
        %v7492 = vmul.f32 %v7456, %v7469
        %v7493 = vmul.f32 %v7457, %v7469
        %v7494 = vmul.f32 %v7458, %v7469
        %v7495 = vmul.f32 %v7459, %v7469
        %v7496 = vmul.f32 %v7460, %v7469
        %v7497 = vmul.f32 %v7461, %v7469
        %v7498 = vmul.f32 %v7462, %v7469
        %v7499 = vmul.f32 %v7463, %v7469
        %v7500 = vmul.f32 %v7464, %v7469
        %v7501 = vmul.f32 %v7465, %v7469
        %v7502 = vadd.f32 %v7402, %v7470
        %v7503 = vadd.f32 %v7403, %v7471
        %v7504 = vadd.f32 %v7404, %v7472
        %v7505 = vadd.f32 %v7405, %v7473
        %v7506 = vadd.f32 %v7406, %v7474
        %v7507 = vadd.f32 %v7407, %v7475
        %v7508 = vadd.f32 %v7408, %v7476
        %v7509 = vadd.f32 %v7409, %v7477
        %v7510 = vadd.f32 %v7410, %v7478
        %v7511 = vadd.f32 %v7411, %v7479
        %v7512 = vadd.f32 %v7412, %v7480
        %v7513 = vadd.f32 %v7413, %v7481
        %v7514 = vadd.f32 %v7414, %v7482
        %v7515 = vadd.f32 %v7415, %v7483
        %v7516 = vadd.f32 %v7416, %v7484
        %v7517 = vadd.f32 %v7417, %v7485
        %v7518 = vadd.f32 %v7418, %v7486
        %v7519 = vadd.f32 %v7419, %v7487
        %v7520 = vadd.f32 %v7420, %v7488
        %v7521 = vadd.f32 %v7421, %v7489
        %v7522 = vadd.f32 %v7422, %v7490
        %v7523 = vadd.f32 %v7423, %v7491
        %v7524 = vadd.f32 %v7424, %v7492
        %v7525 = vadd.f32 %v7425, %v7493
        %v7526 = vadd.f32 %v7426, %v7494
        %v7527 = vadd.f32 %v7427, %v7495
        %v7528 = vadd.f32 %v7428, %v7496
        %v7529 = vadd.f32 %v7429, %v7497
        %v7530 = vadd.f32 %v7430, %v7498
        %v7531 = vadd.f32 %v7431, %v7499
        %v7532 = vadd.f32 %v7432, %v7500
        %v7533 = vadd.f32 %v7433, %v7501
        %v7534 = vsel %vm2346, %v7502, 0.0
        %7535 = vadd.xlane.f32.xlu0 %v7534
        %v7536 = vpop.xlane.xlu0 %7535
        %v7537 = vsel %vm2346, %v7503, 0.0
        %7538 = vadd.xlane.f32.xlu0 %v7537
        %v7539 = vpop.xlane.xlu0 %7538
        %v7540 = vsel %vm2346, %v7504, 0.0
        %7541 = vadd.xlane.f32.xlu0 %v7540
        %v7542 = vpop.xlane.xlu0 %7541
        %v7543 = vsel %vm2346, %v7505, 0.0
        %7544 = vadd.xlane.f32.xlu0 %v7543
        %v7545 = vpop.xlane.xlu0 %7544
        %v7546 = vsel %vm2346, %v7506, 0.0
        %7547 = vadd.xlane.f32.xlu0 %v7546
        %v7548 = vpop.xlane.xlu0 %7547
        %v7549 = vsel %vm2346, %v7507, 0.0
        %7550 = vadd.xlane.f32.xlu0 %v7549
        %v7551 = vpop.xlane.xlu0 %7550
        %v7552 = vsel %vm2346, %v7508, 0.0
        %7553 = vadd.xlane.f32.xlu0 %v7552
        %v7554 = vpop.xlane.xlu0 %7553
        %v7555 = vsel %vm2346, %v7509, 0.0
        %7556 = vadd.xlane.f32.xlu0 %v7555
        %v7557 = vpop.xlane.xlu0 %7556
        %v7558 = vsel %vm2346, %v7510, 0.0
        %7559 = vadd.xlane.f32.xlu0 %v7558
        %v7560 = vpop.xlane.xlu0 %7559
        %v7561 = vsel %vm2346, %v7511, 0.0
        %7562 = vadd.xlane.f32.xlu0 %v7561
        %v7563 = vpop.xlane.xlu0 %7562
        %v7564 = vsel %vm2346, %v7512, 0.0
        %7565 = vadd.xlane.f32.xlu0 %v7564
        %v7566 = vpop.xlane.xlu0 %7565
        %v7567 = vsel %vm2346, %v7513, 0.0
        %7568 = vadd.xlane.f32.xlu0 %v7567
        %v7569 = vpop.xlane.xlu0 %7568
        %v7570 = vsel %vm2346, %v7514, 0.0
        %7571 = vadd.xlane.f32.xlu0 %v7570
        %v7572 = vpop.xlane.xlu0 %7571
        %v7573 = vsel %vm2346, %v7515, 0.0
        %7574 = vadd.xlane.f32.xlu0 %v7573
        %v7575 = vpop.xlane.xlu0 %7574
        %v7576 = vsel %vm2346, %v7516, 0.0
        %7577 = vadd.xlane.f32.xlu0 %v7576
        %v7578 = vpop.xlane.xlu0 %7577
        %v7579 = vsel %vm2346, %v7517, 0.0
        %7580 = vadd.xlane.f32.xlu0 %v7579
        %v7581 = vpop.xlane.xlu0 %7580
        %v7582 = vsel %vm2346, %v7518, 0.0
        %7583 = vadd.xlane.f32.xlu0 %v7582
        %v7584 = vpop.xlane.xlu0 %7583
        %v7585 = vsel %vm2346, %v7519, 0.0
        %7586 = vadd.xlane.f32.xlu0 %v7585
        %v7587 = vpop.xlane.xlu0 %7586
        %v7588 = vsel %vm2346, %v7520, 0.0
        %7589 = vadd.xlane.f32.xlu0 %v7588
        %v7590 = vpop.xlane.xlu0 %7589
        %v7591 = vsel %vm2346, %v7521, 0.0
        %7592 = vadd.xlane.f32.xlu0 %v7591
        %v7593 = vpop.xlane.xlu0 %7592
        %v7594 = vsel %vm2346, %v7522, 0.0
        %7595 = vadd.xlane.f32.xlu0 %v7594
        %v7596 = vpop.xlane.xlu0 %7595
        %v7597 = vsel %vm2346, %v7523, 0.0
        %7598 = vadd.xlane.f32.xlu0 %v7597
        %v7599 = vpop.xlane.xlu0 %7598
        %v7600 = vsel %vm2346, %v7524, 0.0
        %7601 = vadd.xlane.f32.xlu0 %v7600
        %v7602 = vpop.xlane.xlu0 %7601
        %v7603 = vsel %vm2346, %v7525, 0.0
        %7604 = vadd.xlane.f32.xlu0 %v7603
        %v7605 = vpop.xlane.xlu0 %7604
        %v7606 = vsel %vm2346, %v7526, 0.0
        %7607 = vadd.xlane.f32.xlu0 %v7606
        %v7608 = vpop.xlane.xlu0 %7607
        %v7609 = vsel %vm2346, %v7527, 0.0
        %7610 = vadd.xlane.f32.xlu0 %v7609
        %v7611 = vpop.xlane.xlu0 %7610
        %v7612 = vsel %vm2346, %v7528, 0.0
        %7613 = vadd.xlane.f32.xlu0 %v7612
        %v7614 = vpop.xlane.xlu0 %7613
        %v7615 = vsel %vm2346, %v7529, 0.0
        %7616 = vadd.xlane.f32.xlu0 %v7615
        %v7617 = vpop.xlane.xlu0 %7616
        %v7618 = vsel %vm2346, %v7530, 0.0
        %7619 = vadd.xlane.f32.xlu0 %v7618
        %v7620 = vpop.xlane.xlu0 %7619
        %v7621 = vsel %vm2346, %v7531, 0.0
        %7622 = vadd.xlane.f32.xlu0 %v7621
        %v7623 = vpop.xlane.xlu0 %7622
        %v7624 = vsel %vm2346, %v7532, 0.0
        %7625 = vadd.xlane.f32.xlu0 %v7624
        %v7626 = vpop.xlane.xlu0 %7625
        %v7627 = vsel %vm2346, %v7533, 0.0
        %7628 = vadd.xlane.f32.xlu0 %v7627
        %v7629 = vpop.xlane.xlu0 %7628
        %v7630 = vld [vmem:[#allocation7] sm:$0x1]
        %v7632 = vlaneseq
        %v7633 = vshrl.u32 %v7632, 7
        %v7634 = vsub.s32 0, %v7633
        %v7635 = vrot.slane %v7630, %v7634
        %7636 = vset.pattern.permute.xlu0 0
        %7637 = vperm.xlu0 %7636, %v7635
        %v7638 = vpop.permute.xlu0 %7637
        %v7640 = vadd.f32 %v7536, %v7638
        %v7641 = vadd.f32 %v7539, %v7638
        %v7642 = vadd.f32 %v7542, %v7638
        %v7643 = vadd.f32 %v7545, %v7638
        %v7644 = vadd.f32 %v7548, %v7638
        %v7645 = vadd.f32 %v7551, %v7638
        %v7646 = vadd.f32 %v7554, %v7638
        %v7647 = vadd.f32 %v7557, %v7638
        %v7648 = vadd.f32 %v7560, %v7638
        %v7649 = vadd.f32 %v7563, %v7638
        %v7650 = vadd.f32 %v7566, %v7638
        %v7651 = vadd.f32 %v7569, %v7638
        %v7652 = vadd.f32 %v7572, %v7638
        %v7653 = vadd.f32 %v7575, %v7638
        %v7654 = vadd.f32 %v7578, %v7638
        %v7655 = vadd.f32 %v7581, %v7638
        %v7656 = vadd.f32 %v7584, %v7638
        %v7657 = vadd.f32 %v7587, %v7638
        %v7658 = vadd.f32 %v7590, %v7638
        %v7659 = vadd.f32 %v7593, %v7638
        %v7660 = vadd.f32 %v7596, %v7638
        %v7661 = vadd.f32 %v7599, %v7638
        %v7662 = vadd.f32 %v7602, %v7638
        %v7663 = vadd.f32 %v7605, %v7638
        %v7664 = vadd.f32 %v7608, %v7638
        %v7665 = vadd.f32 %v7611, %v7638
        %v7666 = vadd.f32 %v7614, %v7638
        %v7667 = vadd.f32 %v7617, %v7638
        %v7668 = vadd.f32 %v7620, %v7638
        %v7669 = vadd.f32 %v7623, %v7638
        %v7670 = vadd.f32 %v7626, %v7638
        %v7671 = vadd.f32 %v7629, %v7638
        %v7672 = vtanh.pop %v7640
        %v7673 = vtanh.pop %v7641
        %v7674 = vtanh.pop %v7642
        %v7675 = vtanh.pop %v7643
        %v7676 = vtanh.pop %v7644
        %v7677 = vtanh.pop %v7645
        %v7678 = vtanh.pop %v7646
        %v7679 = vtanh.pop %v7647
        %v7680 = vtanh.pop %v7648
        %v7681 = vtanh.pop %v7649
        %v7682 = vtanh.pop %v7650
        %v7683 = vtanh.pop %v7651
        %v7684 = vtanh.pop %v7652
        %v7685 = vtanh.pop %v7653
        %v7686 = vtanh.pop %v7654
        %v7687 = vtanh.pop %v7655
        %v7688 = vtanh.pop %v7656
        %v7689 = vtanh.pop %v7657
        %v7690 = vtanh.pop %v7658
        %v7691 = vtanh.pop %v7659
        %v7692 = vtanh.pop %v7660
        %v7693 = vtanh.pop %v7661
        %v7694 = vtanh.pop %v7662
        %v7695 = vtanh.pop %v7663
        %v7696 = vtanh.pop %v7664
        %v7697 = vtanh.pop %v7665
        %v7698 = vtanh.pop %v7666
        %v7699 = vtanh.pop %v7667
        %v7700 = vtanh.pop %v7668
        %v7701 = vtanh.pop %v7669
        %v7702 = vtanh.pop %v7670
        %v7703 = vtanh.pop %v7671
        %v7704 = vmul.f32 %v7672, 0.5
        %v7705 = vmul.f32 %v7673, 0.5
        %v7706 = vmul.f32 %v7674, 0.5
        %v7707 = vmul.f32 %v7675, 0.5
        %v7708 = vmul.f32 %v7676, 0.5
        %v7709 = vmul.f32 %v7677, 0.5
        %v7710 = vmul.f32 %v7678, 0.5
        %v7711 = vmul.f32 %v7679, 0.5
        %v7712 = vmul.f32 %v7680, 0.5
        %v7713 = vmul.f32 %v7681, 0.5
        %v7714 = vmul.f32 %v7682, 0.5
        %v7715 = vmul.f32 %v7683, 0.5
        %v7716 = vmul.f32 %v7684, 0.5
        %v7717 = vmul.f32 %v7685, 0.5
        %v7718 = vmul.f32 %v7686, 0.5
        %v7719 = vmul.f32 %v7687, 0.5
        %v7720 = vmul.f32 %v7688, 0.5
        %v7721 = vmul.f32 %v7689, 0.5
        %v7722 = vmul.f32 %v7690, 0.5
        %v7723 = vmul.f32 %v7691, 0.5
        %v7724 = vmul.f32 %v7692, 0.5
        %v7725 = vmul.f32 %v7693, 0.5
        %v7726 = vmul.f32 %v7694, 0.5
        %v7727 = vmul.f32 %v7695, 0.5
        %v7728 = vmul.f32 %v7696, 0.5
        %v7729 = vmul.f32 %v7697, 0.5
        %v7730 = vmul.f32 %v7698, 0.5
        %v7731 = vmul.f32 %v7699, 0.5
        %v7732 = vmul.f32 %v7700, 0.5
        %v7733 = vmul.f32 %v7701, 0.5
        %v7734 = vmul.f32 %v7702, 0.5
        %v7735 = vmul.f32 %v7703, 0.5
        %v7736 = vadd.f32 %v7704, 0.5
        %v7737 = vadd.f32 %v7705, 0.5
        %v7738 = vadd.f32 %v7706, 0.5
        %v7739 = vadd.f32 %v7707, 0.5
        %v7740 = vadd.f32 %v7708, 0.5
        %v7741 = vadd.f32 %v7709, 0.5
        %v7742 = vadd.f32 %v7710, 0.5
        %v7743 = vadd.f32 %v7711, 0.5
        %v7744 = vadd.f32 %v7712, 0.5
        %v7745 = vadd.f32 %v7713, 0.5
        %v7746 = vadd.f32 %v7714, 0.5
        %v7747 = vadd.f32 %v7715, 0.5
        %v7748 = vadd.f32 %v7716, 0.5
        %v7749 = vadd.f32 %v7717, 0.5
        %v7750 = vadd.f32 %v7718, 0.5
        %v7751 = vadd.f32 %v7719, 0.5
        %v7752 = vadd.f32 %v7720, 0.5
        %v7753 = vadd.f32 %v7721, 0.5
        %v7754 = vadd.f32 %v7722, 0.5
        %v7755 = vadd.f32 %v7723, 0.5
        %v7756 = vadd.f32 %v7724, 0.5
        %v7757 = vadd.f32 %v7725, 0.5
        %v7758 = vadd.f32 %v7726, 0.5
        %v7759 = vadd.f32 %v7727, 0.5
        %v7760 = vadd.f32 %v7728, 0.5
        %v7761 = vadd.f32 %v7729, 0.5
        %v7762 = vadd.f32 %v7730, 0.5
        %v7763 = vadd.f32 %v7731, 0.5
        %v7764 = vadd.f32 %v7732, 0.5
        %v7765 = vadd.f32 %v7733, 0.5
        %v7766 = vadd.f32 %v7734, 0.5
        %v7767 = vadd.f32 %v7735, 0.5
        %v7800 = vlaneseq
        %v7801 = vand.u32 %v7800, 127
        %v7802 = vlaneseq
        %v7803 = vshrl.u32 %v7802, 7
        %v7804 = vsub.s32 %v7801, %v7803
        %v7805 = vrot.slane %v7736, %v7804
        %v7806 = vadd.s32 %v7801, 4294967288
        %v7807 = vlaneseq
        %v7808 = vshrl.u32 %v7807, 7
        %v7809 = vsub.s32 %v7806, %v7808
        %v7810 = vrot.slane %v7737, %v7809
        %vm7811 = vcmask 130112
        %v7812 = vsel %vm7811, %v7810, %v7805
        %v7813 = vlaneseq
        %v7814 = vshrl.u32 %v7813, 7
        %v7815 = vsub.s32 %v7801, %v7814
        %v7816 = vrot.slane %v7738, %v7815
        %v7817 = vlaneseq
        %v7818 = vshrl.u32 %v7817, 7
        %v7819 = vsub.s32 %v7806, %v7818
        %v7820 = vrot.slane %v7739, %v7819
        %v7821 = vsel %vm7811, %v7820, %v7816
        %v7822 = vlaneseq
        %v7823 = vshrl.u32 %v7822, 7
        %v7824 = vsub.s32 %v7801, %v7823
        %v7825 = vrot.slane %v7740, %v7824
        %v7826 = vlaneseq
        %v7827 = vshrl.u32 %v7826, 7
        %v7828 = vsub.s32 %v7806, %v7827
        %v7829 = vrot.slane %v7741, %v7828
        %v7830 = vsel %vm7811, %v7829, %v7825
        %v7831 = vlaneseq
        %v7832 = vshrl.u32 %v7831, 7
        %v7833 = vsub.s32 %v7801, %v7832
        %v7834 = vrot.slane %v7742, %v7833
        %v7835 = vlaneseq
        %v7836 = vshrl.u32 %v7835, 7
        %v7837 = vsub.s32 %v7806, %v7836
        %v7838 = vrot.slane %v7743, %v7837
        %v7839 = vsel %vm7811, %v7838, %v7834
        %v7840 = vlaneseq
        %v7841 = vshrl.u32 %v7840, 7
        %v7842 = vsub.s32 %v7801, %v7841
        %v7843 = vrot.slane %v7744, %v7842
        %v7844 = vlaneseq
        %v7845 = vshrl.u32 %v7844, 7
        %v7846 = vsub.s32 %v7806, %v7845
        %v7847 = vrot.slane %v7745, %v7846
        %v7848 = vsel %vm7811, %v7847, %v7843
        %v7849 = vlaneseq
        %v7850 = vshrl.u32 %v7849, 7
        %v7851 = vsub.s32 %v7801, %v7850
        %v7852 = vrot.slane %v7746, %v7851
        %v7853 = vlaneseq
        %v7854 = vshrl.u32 %v7853, 7
        %v7855 = vsub.s32 %v7806, %v7854
        %v7856 = vrot.slane %v7747, %v7855
        %v7857 = vsel %vm7811, %v7856, %v7852
        %v7858 = vlaneseq
        %v7859 = vshrl.u32 %v7858, 7
        %v7860 = vsub.s32 %v7801, %v7859
        %v7861 = vrot.slane %v7748, %v7860
        %v7862 = vlaneseq
        %v7863 = vshrl.u32 %v7862, 7
        %v7864 = vsub.s32 %v7806, %v7863
        %v7865 = vrot.slane %v7749, %v7864
        %v7866 = vsel %vm7811, %v7865, %v7861
        %v7867 = vlaneseq
        %v7868 = vshrl.u32 %v7867, 7
        %v7869 = vsub.s32 %v7801, %v7868
        %v7870 = vrot.slane %v7750, %v7869
        %v7871 = vlaneseq
        %v7872 = vshrl.u32 %v7871, 7
        %v7873 = vsub.s32 %v7806, %v7872
        %v7874 = vrot.slane %v7751, %v7873
        %v7875 = vsel %vm7811, %v7874, %v7870
        %v7876 = vlaneseq
        %v7877 = vshrl.u32 %v7876, 7
        %v7878 = vsub.s32 %v7801, %v7877
        %v7879 = vrot.slane %v7752, %v7878
        %v7880 = vlaneseq
        %v7881 = vshrl.u32 %v7880, 7
        %v7882 = vsub.s32 %v7806, %v7881
        %v7883 = vrot.slane %v7753, %v7882
        %v7884 = vsel %vm7811, %v7883, %v7879
        %v7885 = vlaneseq
        %v7886 = vshrl.u32 %v7885, 7
        %v7887 = vsub.s32 %v7801, %v7886
        %v7888 = vrot.slane %v7754, %v7887
        %v7889 = vlaneseq
        %v7890 = vshrl.u32 %v7889, 7
        %v7891 = vsub.s32 %v7806, %v7890
        %v7892 = vrot.slane %v7755, %v7891
        %v7893 = vsel %vm7811, %v7892, %v7888
        %v7894 = vlaneseq
        %v7895 = vshrl.u32 %v7894, 7
        %v7896 = vsub.s32 %v7801, %v7895
        %v7897 = vrot.slane %v7756, %v7896
        %v7898 = vlaneseq
        %v7899 = vshrl.u32 %v7898, 7
        %v7900 = vsub.s32 %v7806, %v7899
        %v7901 = vrot.slane %v7757, %v7900
        %v7902 = vsel %vm7811, %v7901, %v7897
        %v7903 = vlaneseq
        %v7904 = vshrl.u32 %v7903, 7
        %v7905 = vsub.s32 %v7801, %v7904
        %v7906 = vrot.slane %v7758, %v7905
        %v7907 = vlaneseq
        %v7908 = vshrl.u32 %v7907, 7
        %v7909 = vsub.s32 %v7806, %v7908
        %v7910 = vrot.slane %v7759, %v7909
        %v7911 = vsel %vm7811, %v7910, %v7906
        %v7912 = vlaneseq
        %v7913 = vshrl.u32 %v7912, 7
        %v7914 = vsub.s32 %v7801, %v7913
        %v7915 = vrot.slane %v7760, %v7914
        %v7916 = vlaneseq
        %v7917 = vshrl.u32 %v7916, 7
        %v7918 = vsub.s32 %v7806, %v7917
        %v7919 = vrot.slane %v7761, %v7918
        %v7920 = vsel %vm7811, %v7919, %v7915
        %v7921 = vlaneseq
        %v7922 = vshrl.u32 %v7921, 7
        %v7923 = vsub.s32 %v7801, %v7922
        %v7924 = vrot.slane %v7762, %v7923
        %v7925 = vlaneseq
        %v7926 = vshrl.u32 %v7925, 7
        %v7927 = vsub.s32 %v7806, %v7926
        %v7928 = vrot.slane %v7763, %v7927
        %v7929 = vsel %vm7811, %v7928, %v7924
        %v7930 = vlaneseq
        %v7931 = vshrl.u32 %v7930, 7
        %v7932 = vsub.s32 %v7801, %v7931
        %v7933 = vrot.slane %v7764, %v7932
        %v7934 = vlaneseq
        %v7935 = vshrl.u32 %v7934, 7
        %v7936 = vsub.s32 %v7806, %v7935
        %v7937 = vrot.slane %v7765, %v7936
        %v7938 = vsel %vm7811, %v7937, %v7933
        %v7939 = vlaneseq
        %v7940 = vshrl.u32 %v7939, 7
        %v7941 = vsub.s32 %v7801, %v7940
        %v7942 = vrot.slane %v7766, %v7941
        %v7943 = vlaneseq
        %v7944 = vshrl.u32 %v7943, 7
        %v7945 = vsub.s32 %v7806, %v7944
        %v7946 = vrot.slane %v7767, %v7945
        %v7947 = vsel %vm7811, %v7946, %v7942
        %vm7948 = vcmask 1041409
        %v7949 = vsel %vm7948, %v7821, %v7812
        %vm7950 = vcmask 1042434
        %v7951 = vsel %vm7950, %v7830, %v7949
        %vm7952 = vcmask 1043459
        %v7953 = vsel %vm7952, %v7839, %v7951
        %vm7954 = vcmask 1044484
        %v7955 = vsel %vm7954, %v7848, %v7953
        %vm7956 = vcmask 1045509
        %v7957 = vsel %vm7956, %v7857, %v7955
        %vm7958 = vcmask 1046534
        %v7959 = vsel %vm7958, %v7866, %v7957
        %vm7960 = vcmask 1047559
        %v7961 = vsel %vm7960, %v7875, %v7959
        %v7962 = vsel %vm7948, %v7893, %v7884
        %v7963 = vsel %vm7950, %v7902, %v7962
        %v7964 = vsel %vm7952, %v7911, %v7963
        %v7965 = vsel %vm7954, %v7920, %v7964
        %v7966 = vsel %vm7956, %v7929, %v7965
        %v7967 = vsel %vm7958, %v7938, %v7966
        %v7968 = vsel %vm7960, %v7947, %v7967
        %7971 = vst.msk [vmem:[%s327] sm:$0xff] %vm2346, %v7961
        %7972 = vst.msk [vmem:[%s327 + $0x8] sm:$0xff] %vm2346, %v7968
        %s7973 = sand.u32 %s227, 1
        %s7974 = scalar_lea.sflag [#allocation9], %s7973
        %s7975 = sand.u32 %s227, 1
        %s7976 = smul.addr %s7975, 16
        %s7977 = scalar_lea.vmem [#allocation8], %s7976
        // Predicated region
        $region57: #{tpu_custom_call.1} parent=55 // pred_check
          %p7978 = pneg %p237
        $region58: #{tpu_custom_call.1} parent=55 // pred_check_branch
          %7980 = sbr.rel (%p7978) target = $region60
        $region59: #{tpu_custom_call.1} parent=55 // pred_region
          %s7982 = ssub.s32 256, 256
          %7983 = vsyncadd %s7974, %s7982
          %s7984 = smul.addr %s25, 2
          %s7985 = smul.addr %s7984, 128
          %s7986 = scalar_lea.hbm %s9, %s7985
          %s7987 = sshll.u32 %s7977, 4
          %s7988 = int_to_ptr.vmem [resolvable:$true] %s7987
          %7993 = dma.vmem_to_hbm [thread:$0]  %s7988, 256, %s7986, %s7974, 128, 128, 8
        $region60: #{tpu_custom_call.1} parent=55 // pred_fallthru
          _
      $region56: #{tpu_custom_call.1} parent=5 // pred_fallthru
        _
      %p7994 = scmp.le.s32.totalorder 2, %s20
      // Predicated region
      $region61: #{tpu_custom_call.1} parent=5 // pred_check
        %p7995 = pneg %p7994
      $region62: #{tpu_custom_call.1} parent=5 // pred_check_branch
        %7997 = sbr.rel (%p7995) target = $region64
      $region63: #{tpu_custom_call.1} parent=5 // pred_region
        %s7998 = ssub.s32 %s20, 2
        // Predicated region
        $region65: #{tpu_custom_call.1} parent=63 // pred_check
          %p7999 = pneg %p243
        $region66: #{tpu_custom_call.1} parent=63 // pred_check_branch
          %8001 = sbr.rel (%p7999) target = $region68
        $region67: #{tpu_custom_call.1} parent=63 // pred_region
          %s8002 = sand.u32 %s228, 1
          %s8003 = scalar_lea.sflag [#allocation9], %s8002
          %s8004 = sand.u32 %s228, 1
          %s8005 = smul.addr %s8004, 16
          %s8006 = scalar_lea.vmem [#allocation8], %s8005
          %8007 = dma.done %s8003, 256
        $region68: #{tpu_custom_call.1} parent=63 // pred_fallthru
          _
      $region64: #{tpu_custom_call.1} parent=5 // pred_fallthru
        _
    $region6: #{tpu_custom_call.1} parent=1 // loop_footer
      %s24 = sadd.s32 1, %s20
    $region7: #{tpu_custom_call.1} parent=1 // loop_footer_branch
      %19 = sbr.rel target = $region3
    $region8: #{tpu_custom_call.1} parent=1 // loop_exit
      _
    %8008 = vsyncpa [#allocation9], 1
    %s8009 = scalar_lea.sflag [#allocation9], 1
    %8010 = vsyncpa %s8009, 1

</llo_original>
